<compile_context>
chip_gen: v7x
topology: tpu7x:2x2x1
jax: 0.10.0
libtpu: 0.0.40
codegen_flags: <defaults>
</compile_context>

<pallas_src>
import math
import jax
import jax.numpy as jnp
from jax import lax
from jax.experimental import pallas as pl
from jax.experimental.pallas import tpu as pltpu

# ---------------- configuration ----------------
B = 2          # batch
S = 8          # sequence length
D = 32         # d_model
H = 4          # n_heads
HD = D // H    # head dim
DFF = 64       # feed-forward hidden dim
N = B * S      # total rows processed in one program
EPS = 1e-5     # LayerNorm eps (PyTorch default)
SCALE = 1.0 / math.sqrt(HD)
NEG_INF = -1e30
HP = lax.Precision.HIGHEST
# dropout_rate = 0.0  -> dropout is identity (eval semantics). No randomness in fwd.

# ---- fused parameter slab layout: (ROWS, 128) f32, one DMA, all offsets % 8 == 0 ----
R_WQ = 0                 # rows   0:32   Wq^T * SCALE             lanes 0:D
R_WK = R_WQ + D          # rows  32:64   Wk^T                     lanes 0:D
R_WV = R_WK + D          # rows  64:96   Wv^T                     lanes 0:D
R_WO = R_WV + D          # rows  96:128  Wo^T                     lanes 0:D
R_W1 = R_WO + D          # rows 128:160  W1^T                     lanes 0:DFF
R_W2 = R_W1 + D          # rows 160:224  W2^T                     lanes 0:D
R_VEC = R_W2 + DFF       # rows 224:240  packed bias / LN rows    (10 used)
R_MASK = R_VEC + 16      # rows 240:256  additive attn mask (N,N) lanes 0:N
R_HMASK = R_MASK + N     # rows 256:260  per-head 0/1 lane masks  lanes 0:D
ROWS = 264               # padded to a multiple of 8
LANES = 128

# sub-rows inside the R_VEC block
V_LN1W, V_LN1B, V_LN2W, V_LN2B, V_BO, V_B2, V_B1, V_BQ, V_BK, V_BV = range(10)


def _layernorm(x, w, b):
    # PyTorch LayerNorm over last dim, biased variance, eps inside sqrt.
    mu = jnp.mean(x, axis=-1, keepdims=True)
    xc = x - mu
    var = jnp.mean(xc * xc, axis=-1, keepdims=True)
    inv = lax.rsqrt(var + EPS)
    return xc * inv * w + b


def encoder_block_kernel(x_ref, p_ref, o_ref):
    x = x_ref[...]                                     # (N, D)

    # ---- hoist all parameters from the fused slab (tile-aligned sublane offsets) ----
    wq = p_ref[R_WQ:R_WQ + D, 0:D]                     # (D, D)  (scale pre-folded)
    wk = p_ref[R_WK:R_WK + D, 0:D]                     # (D, D)
    wv = p_ref[R_WV:R_WV + D, 0:D]                     # (D, D)
    wo = p_ref[R_WO:R_WO + D, 0:D]                     # (D, D)
    w1 = p_ref[R_W1:R_W1 + D, 0:DFF]                   # (D, DFF)
    w2 = p_ref[R_W2:R_W2 + DFF, 0:D]                   # (DFF, D)

    ln1w = p_ref[R_VEC + V_LN1W:R_VEC + V_LN1W + 1, 0:D]
    ln1b = p_ref[R_VEC + V_LN1B:R_VEC + V_LN1B + 1, 0:D]
    ln2w = p_ref[R_VEC + V_LN2W:R_VEC + V_LN2W + 1, 0:D]
    ln2b = p_ref[R_VEC + V_LN2B:R_VEC + V_LN2B + 1, 0:D]
    bo   = p_ref[R_VEC + V_BO:R_VEC + V_BO + 1, 0:D]
    b2   = p_ref[R_VEC + V_B2:R_VEC + V_B2 + 1, 0:D]
    b1   = p_ref[R_VEC + V_B1:R_VEC + V_B1 + 1, 0:DFF]
    bq   = p_ref[R_VEC + V_BQ:R_VEC + V_BQ + 1, 0:D]   # already * SCALE
    bk   = p_ref[R_VEC + V_BK:R_VEC + V_BK + 1, 0:D]
    bv   = p_ref[R_VEC + V_BV:R_VEC + V_BV + 1, 0:D]

    amask = p_ref[R_MASK:R_MASK + N, 0:N]              # (N, N) additive 0 / -1e30

    # ---- sub-block 1: x = x + SelfAttn(LN1(x)) ----
    xn = _layernorm(x, ln1w, ln1b)

    q = jnp.dot(xn, wq, preferred_element_type=jnp.float32, precision=HP) + bq  # (N, D)
    k = jnp.dot(xn, wk, preferred_element_type=jnp.float32, precision=HP) + bk  # (N, D)
    v = jnp.dot(xn, wv, preferred_element_type=jnp.float32, precision=HP) + bv  # (N, D)

    # Per-head 0/1 lane masks select each head's columns without any lane-misaligned
    # slicing; zeroed columns contribute nothing to the full-width contraction.
    ctx = jnp.zeros((N, D), jnp.float32)
    for h in range(H):
        hm = p_ref[R_HMASK + h:R_HMASK + h + 1, 0:D]    # (1, D) 0/1 mask for head h

        # scores: q_h . k_h^T  (contract all D lanes; mask annihilates other heads)
        s = lax.dot_general(q, k * hm, (((1,), (1,)), ((), ())),
                            preferred_element_type=jnp.float32, precision=HP)   # (N, N)
        s = s + amask                                   # block-diagonal batch mask

        m = jnp.max(s, axis=-1, keepdims=True)
        p = jnp.exp(s - m)
        p = p / jnp.sum(p, axis=-1, keepdims=True)      # exact normalization

        # P_h @ (v masked to head h): lands in head-h lanes, zero elsewhere -> lane-packed
        ctx = ctx + jnp.dot(p, v * hm,
                            preferred_element_type=jnp.float32, precision=HP)   # (N, D)

    # single out-projection matmul over the lane-packed concat of all heads
    attn = jnp.dot(ctx, wo, preferred_element_type=jnp.float32, precision=HP) + bo
    x1 = x + attn

    # ---- sub-block 2: x = x + FFN(LN2(x)) ----
    xn2 = _layernorm(x1, ln2w, ln2b)
    hdn = jnp.dot(xn2, w1, preferred_element_type=jnp.float32, precision=HP) + b1
    hdn = jnp.maximum(hdn, 0.0)                         # ReLU
    ff = jnp.dot(hdn, w2, preferred_element_type=jnp.float32, precision=HP) + b2

    o_ref[...] = (x1 + ff).astype(o_ref.dtype)


def _build_param_slab(p):
    """Pack every parameter (plus precomputed masks) into one (ROWS, 128) f32 slab."""
    wq = p["in_proj_weight"][0:D, :]            # (D, D)
    wk = p["in_proj_weight"][D:2 * D, :]
    wv = p["in_proj_weight"][2 * D:3 * D, :]
    bq = p["in_proj_bias"][0:D] * SCALE         # fold attention scale into q path
    bk = p["in_proj_bias"][D:2 * D]
    bv = p["in_proj_bias"][2 * D:3 * D]

    slab = jnp.zeros((ROWS, LANES), jnp.float32)
    slab = slab.at[R_WQ:R_WQ + D, 0:D].set(wq.T * SCALE)
    slab = slab.at[R_WK:R_WK + D, 0:D].set(wk.T)
    slab = slab.at[R_WV:R_WV + D, 0:D].set(wv.T)
    slab = slab.at[R_WO:R_WO + D, 0:D].set(p["out_proj_weight"].T)
    slab = slab.at[R_W1:R_W1 + D, 0:DFF].set(p["ff_w1"].T)
    slab = slab.at[R_W2:R_W2 + DFF, 0:D].set(p["ff_w2"].T)

    slab = slab.at[R_VEC + V_LN1W, 0:D].set(p["ln1_w"])
    slab = slab.at[R_VEC + V_LN1B, 0:D].set(p["ln1_b"])
    slab = slab.at[R_VEC + V_LN2W, 0:D].set(p["ln2_w"])
    slab = slab.at[R_VEC + V_LN2B, 0:D].set(p["ln2_b"])
    slab = slab.at[R_VEC + V_BO, 0:D].set(p["out_proj_bias"])
    slab = slab.at[R_VEC + V_B2, 0:D].set(p["ff_b2"])
    slab = slab.at[R_VEC + V_B1, 0:DFF].set(p["ff_b1"])
    slab = slab.at[R_VEC + V_BQ, 0:D].set(bq)
    slab = slab.at[R_VEC + V_BK, 0:D].set(bk)
    slab = slab.at[R_VEC + V_BV, 0:D].set(bv)

    # additive block-diagonal attention mask (rows of different batches never attend)
    rb = jnp.arange(N) // S
    amask = jnp.where(rb[:, None] == rb[None, :], 0.0, NEG_INF).astype(jnp.float32)
    slab = slab.at[R_MASK:R_MASK + N, 0:N].set(amask)

    # per-head 0/1 lane masks
    lane_head = jnp.arange(D) // HD
    hmask = (lane_head[None, :] == jnp.arange(H)[:, None]).astype(jnp.float32)  # (H, D)
    slab = slab.at[R_HMASK:R_HMASK + H, 0:D].set(hmask)
    return slab


def encoder_block_pallas(x, params):
    """x: (B, S, D) float32. params: dict of PyTorch-convention weights."""
    slab = _build_param_slab(params)
    x2d = x.reshape(N, D).astype(jnp.float32)

    out2d = pl.pallas_call(
        encoder_block_kernel,
        out_shape=jax.ShapeDtypeStruct((N, D), x.dtype),
        grid=(1,),
        in_specs=[
            pl.BlockSpec((N, D), lambda i: (0, 0)),
            pl.BlockSpec((ROWS, LANES), lambda i: (0, 0)),
        ],
        out_specs=pl.BlockSpec((N, D), lambda i: (0, 0)),
        compiler_params=pltpu.CompilerParams(dimension_semantics=("arbitrary",)),
    )(x2d, slab)

    return out2d.reshape(B, S, D)


# ---------------- pure-JAX reference (for verification) ----------------
def encoder_block_ref(x, p):
    def ln(v, w, b):
        mu = jnp.mean(v, axis=-1, keepdims=True)
        var = jnp.mean((v - mu) ** 2, axis=-1, keepdims=True)
        return (v - mu) / jnp.sqrt(var + EPS) * w + b

    xn = ln(x, p["ln1_w"], p["ln1_b"])
    qkv = xn @ p["in_proj_weight"].T + p["in_proj_bias"]
    q, k, v = qkv[..., :D], qkv[..., D:2 * D], qkv[..., 2 * D:]
    q = q.reshape(B, S, H, HD).transpose(0, 2, 1, 3) * SCALE
    k = k.reshape(B, S, H, HD).transpose(0, 2, 1, 3)
    v = v.reshape(B, S, H, HD).transpose(0, 2, 1, 3)
    s = jnp.einsum("bhqd,bhkd->bhqk", q, k)
    a = jax.nn.softmax(s, axis=-1)
    o = jnp.einsum("bhqk,bhkd->bhqd", a, v).transpose(0, 2, 1, 3).reshape(B, S, D)
    o = o @ p["out_proj_weight"].T + p["out_proj_bias"]
    x1 = x + o
    xn2 = ln(x1, p["ln2_w"], p["ln2_b"])
    hdn = jnp.maximum(xn2 @ p["ff_w1"].T + p["ff_b1"], 0.0)
    return x1 + (hdn @ p["ff_w2"].T + p["ff_b2"])


if __name__ == "__main__":
    # fp32-parity matmuls in the reference too (kernel already passes precision=HIGHEST).
    jax.config.update("jax_default_matmul_precision", "highest")

    key = jax.random.PRNGKey(0)
    keys = jax.random.split(key, 16)

    def rnd(k, shape, scale=0.05):
        return (scale * jax.random.normal(k, shape)).astype(jnp.float32)

    params = {
        "ln1_w": rnd(keys[0], (D,)) + 1.0,
        "ln1_b": rnd(keys[1], (D,)),
        "in_proj_weight": rnd(keys[2], (3 * D, D)),
        "in_proj_bias": rnd(keys[3], (3 * D,)),
        "out_proj_weight": rnd(keys[4], (D, D)),
        "out_proj_bias": rnd(keys[5], (D,)),
        "ln2_w": rnd(keys[6], (D,)) + 1.0,
        "ln2_b": rnd(keys[7], (D,)),
        "ff_w1": rnd(keys[8], (DFF, D)),
        "ff_b1": rnd(keys[9], (DFF,)),
        "ff_w2": rnd(keys[10], (D, DFF)),
        "ff_b2": rnd(keys[11], (D,)),
    }
    x = jax.random.normal(keys[12], (B, S, D), dtype=jnp.float32)

    out = encoder_block_pallas(x, params)
    out = jax.block_until_ready(out)

    ref = encoder_block_ref(x, params)
    assert out.shape == (B, S, D)
    assert jnp.allclose(out, ref, atol=1e-4, rtol=1e-4), float(jnp.max(jnp.abs(out - ref)))

    print("KERNEL_OK")
</pallas_src>

<mosaic_0001>
module attributes {stable_mosaic.version = 11 : i64} {
  func.func @encoder_block_kernel(%arg0: i32, %arg1: memref<16x32xf32, #tpu.memory_space<vmem>>, %arg2: memref<264x128xf32, #tpu.memory_space<vmem>>, %arg3: memref<16x32xf32, #tpu.memory_space<vmem>>) attributes {dimension_semantics = [#tpu.dimension_semantics<arbitrary>], iteration_bounds = array<i64: 1>, scalar_prefetch = 0 : i64, scratch_operands = 0 : i64, tpu.core_type = #tpu.core_type<tc>, window_params = [{pipeline_mode = #tpu.pipeline_mode<synchronous>, transform_indices = @transform_0, window_bounds = array<i64: 16, 32>}, {pipeline_mode = #tpu.pipeline_mode<synchronous>, transform_indices = @transform_1, window_bounds = array<i64: 264, 128>}, {pipeline_mode = #tpu.pipeline_mode<synchronous>, transform_indices = @transform_2, window_bounds = array<i64: 16, 32>}]} {
    %c0 = arith.constant 0 : index
    %c0_0 = arith.constant 0 : index
    %0 = vector.load %arg1[%c0, %c0_0] : memref<16x32xf32, #tpu.memory_space<vmem>>, vector<16x32xf32>
    %c0_1 = arith.constant 0 : index
    %c0_2 = arith.constant 0 : index
    %1 = vector.load %arg2[%c0_1, %c0_2] : memref<264x128xf32, #tpu.memory_space<vmem>>, vector<32x32xf32>
    %c32 = arith.constant 32 : index
    %c0_3 = arith.constant 0 : index
    %2 = vector.load %arg2[%c32, %c0_3] : memref<264x128xf32, #tpu.memory_space<vmem>>, vector<32x32xf32>
    %c64 = arith.constant 64 : index
    %c0_4 = arith.constant 0 : index
    %3 = vector.load %arg2[%c64, %c0_4] : memref<264x128xf32, #tpu.memory_space<vmem>>, vector<32x32xf32>
    %c96 = arith.constant 96 : index
    %c0_5 = arith.constant 0 : index
    %4 = vector.load %arg2[%c96, %c0_5] : memref<264x128xf32, #tpu.memory_space<vmem>>, vector<32x32xf32>
    %c128 = arith.constant 128 : index
    %c0_6 = arith.constant 0 : index
    %5 = vector.load %arg2[%c128, %c0_6] : memref<264x128xf32, #tpu.memory_space<vmem>>, vector<32x64xf32>
    %c160 = arith.constant 160 : index
    %c0_7 = arith.constant 0 : index
    %6 = vector.load %arg2[%c160, %c0_7] : memref<264x128xf32, #tpu.memory_space<vmem>>, vector<64x32xf32>
    %c224 = arith.constant 224 : index
    %c0_8 = arith.constant 0 : index
    %7 = vector.load %arg2[%c224, %c0_8] : memref<264x128xf32, #tpu.memory_space<vmem>>, vector<1x32xf32>
    %c225 = arith.constant 225 : index
    %c0_9 = arith.constant 0 : index
    %8 = vector.load %arg2[%c225, %c0_9] : memref<264x128xf32, #tpu.memory_space<vmem>>, vector<1x32xf32>
    %c226 = arith.constant 226 : index
    %c0_10 = arith.constant 0 : index
    %9 = vector.load %arg2[%c226, %c0_10] : memref<264x128xf32, #tpu.memory_space<vmem>>, vector<1x32xf32>
    %c227 = arith.constant 227 : index
    %c0_11 = arith.constant 0 : index
    %10 = vector.load %arg2[%c227, %c0_11] : memref<264x128xf32, #tpu.memory_space<vmem>>, vector<1x32xf32>
    %c228 = arith.constant 228 : index
    %c0_12 = arith.constant 0 : index
    %11 = vector.load %arg2[%c228, %c0_12] : memref<264x128xf32, #tpu.memory_space<vmem>>, vector<1x32xf32>
    %c229 = arith.constant 229 : index
    %c0_13 = arith.constant 0 : index
    %12 = vector.load %arg2[%c229, %c0_13] : memref<264x128xf32, #tpu.memory_space<vmem>>, vector<1x32xf32>
    %c230 = arith.constant 230 : index
    %c0_14 = arith.constant 0 : index
    %13 = vector.load %arg2[%c230, %c0_14] : memref<264x128xf32, #tpu.memory_space<vmem>>, vector<1x64xf32>
    %c231 = arith.constant 231 : index
    %c0_15 = arith.constant 0 : index
    %14 = vector.load %arg2[%c231, %c0_15] : memref<264x128xf32, #tpu.memory_space<vmem>>, vector<1x32xf32>
    %c232 = arith.constant 232 : index
    %c0_16 = arith.constant 0 : index
    %15 = vector.load %arg2[%c232, %c0_16] : memref<264x128xf32, #tpu.memory_space<vmem>>, vector<1x32xf32>
    %c233 = arith.constant 233 : index
    %c0_17 = arith.constant 0 : index
    %16 = vector.load %arg2[%c233, %c0_17] : memref<264x128xf32, #tpu.memory_space<vmem>>, vector<1x32xf32>
    %c240 = arith.constant 240 : index
    %c0_18 = arith.constant 0 : index
    %17 = vector.load %arg2[%c240, %c0_18] : memref<264x128xf32, #tpu.memory_space<vmem>>, vector<16x16xf32>
    %cst = arith.constant dense<0.000000e+00> : vector<16xf32>
    %18 = vector.multi_reduction <add>, %0, %cst [1] : vector<16x32xf32> to vector<16xf32>
    %19 = vector.shape_cast %18 : vector<16xf32> to vector<16x1xf32>
    %cst_19 = arith.constant 3.200000e+01 : f32
    %20 = vector.broadcast %cst_19 : f32 to vector<16x1xf32>
    %21 = arith.divf %19, %20 : vector<16x1xf32>
    %22 = vector.broadcast %21 : vector<16x1xf32> to vector<16x32xf32>
    %23 = arith.subf %0, %22 : vector<16x32xf32>
    %24 = arith.mulf %23, %23 : vector<16x32xf32>
    %cst_20 = arith.constant dense<0.000000e+00> : vector<16xf32>
    %25 = vector.multi_reduction <add>, %24, %cst_20 [1] : vector<16x32xf32> to vector<16xf32>
    %26 = vector.shape_cast %25 : vector<16xf32> to vector<16x1xf32>
    %cst_21 = arith.constant 3.200000e+01 : f32
    %27 = vector.broadcast %cst_21 : f32 to vector<16x1xf32>
    %28 = arith.divf %26, %27 : vector<16x1xf32>
    %cst_22 = arith.constant 9.99999974E-6 : f32
    %29 = vector.broadcast %cst_22 : f32 to vector<16x1xf32>
    %30 = arith.addf %28, %29 : vector<16x1xf32>
    %31 = math.rsqrt %30 : vector<16x1xf32>
    %32 = vector.broadcast %31 : vector<16x1xf32> to vector<16x32xf32>
    %33 = arith.mulf %23, %32 : vector<16x32xf32>
    %34 = vector.broadcast %7 : vector<1x32xf32> to vector<16x32xf32>
    %35 = arith.mulf %33, %34 : vector<16x32xf32>
    %36 = vector.broadcast %8 : vector<1x32xf32> to vector<16x32xf32>
    %37 = arith.addf %35, %36 : vector<16x32xf32>
    %cst_23 = arith.constant dense<0.000000e+00> : vector<16x32xf32>
    %38 = tpu.matmul %37, %1, %cst_23 {dimension_numbers = #tpu.dot_dimension_numbers<[1], [0], [0], [1], [0, 0, 1, 1], [], []>, precision = #tpu.contract_precision<fp32>} : vector<16x32xf32>, vector<32x32xf32>, vector<16x32xf32> -> vector<16x32xf32>
    %39 = vector.broadcast %14 : vector<1x32xf32> to vector<16x32xf32>
    %40 = arith.addf %38, %39 : vector<16x32xf32>
    %cst_24 = arith.constant dense<0.000000e+00> : vector<16x32xf32>
    %41 = tpu.matmul %37, %2, %cst_24 {dimension_numbers = #tpu.dot_dimension_numbers<[1], [0], [0], [1], [0, 0, 1, 1], [], []>, precision = #tpu.contract_precision<fp32>} : vector<16x32xf32>, vector<32x32xf32>, vector<16x32xf32> -> vector<16x32xf32>
    %42 = vector.broadcast %15 : vector<1x32xf32> to vector<16x32xf32>
    %43 = arith.addf %41, %42 : vector<16x32xf32>
    %cst_25 = arith.constant dense<0.000000e+00> : vector<16x32xf32>
    %44 = tpu.matmul %37, %3, %cst_25 {dimension_numbers = #tpu.dot_dimension_numbers<[1], [0], [0], [1], [0, 0, 1, 1], [], []>, precision = #tpu.contract_precision<fp32>} : vector<16x32xf32>, vector<32x32xf32>, vector<16x32xf32> -> vector<16x32xf32>
    %45 = vector.broadcast %16 : vector<1x32xf32> to vector<16x32xf32>
    %46 = arith.addf %44, %45 : vector<16x32xf32>
    %cst_26 = arith.constant 0.000000e+00 : f32
    %47 = vector.broadcast %cst_26 : f32 to vector<16x32xf32>
    %c256 = arith.constant 256 : index
    %c0_27 = arith.constant 0 : index
    %48 = vector.load %arg2[%c256, %c0_27] : memref<264x128xf32, #tpu.memory_space<vmem>>, vector<1x32xf32>
    %49 = vector.broadcast %48 : vector<1x32xf32> to vector<16x32xf32>
    %50 = arith.mulf %43, %49 : vector<16x32xf32>
    %cst_28 = arith.constant dense<0.000000e+00> : vector<16x16xf32>
    %51 = tpu.matmul %40, %50, %cst_28 {dimension_numbers = #tpu.dot_dimension_numbers<[1], [1], [0], [0], [0, 0, 1, 0], [], []>, precision = #tpu.contract_precision<fp32>} : vector<16x32xf32>, vector<16x32xf32>, vector<16x16xf32> -> vector<16x16xf32>
    %52 = arith.addf %51, %17 : vector<16x16xf32>
    %cst_29 = arith.constant dense<0xFF800000> : vector<16xf32>
    %53 = vector.multi_reduction <maximumf>, %52, %cst_29 [1] : vector<16x16xf32> to vector<16xf32>
    %54 = vector.shape_cast %53 : vector<16xf32> to vector<16x1xf32>
    %55 = vector.broadcast %54 : vector<16x1xf32> to vector<16x16xf32>
    %56 = arith.subf %52, %55 : vector<16x16xf32>
    %57 = math.exp %56 : vector<16x16xf32>
    %cst_30 = arith.constant dense<0.000000e+00> : vector<16xf32>
    %58 = vector.multi_reduction <add>, %57, %cst_30 [1] : vector<16x16xf32> to vector<16xf32>
    %59 = vector.shape_cast %58 : vector<16xf32> to vector<16x1xf32>
    %60 = vector.broadcast %59 : vector<16x1xf32> to vector<16x16xf32>
    %61 = arith.divf %57, %60 : vector<16x16xf32>
    %62 = vector.broadcast %48 : vector<1x32xf32> to vector<16x32xf32>
    %63 = arith.mulf %46, %62 : vector<16x32xf32>
    %cst_31 = arith.constant dense<0.000000e+00> : vector<16x32xf32>
    %64 = tpu.matmul %61, %63, %cst_31 {dimension_numbers = #tpu.dot_dimension_numbers<[1], [0], [0], [1], [0, 0, 1, 1], [], []>, precision = #tpu.contract_precision<fp32>} : vector<16x16xf32>, vector<16x32xf32>, vector<16x32xf32> -> vector<16x32xf32>
    %65 = arith.addf %47, %64 : vector<16x32xf32>
    %c257 = arith.constant 257 : index
    %c0_32 = arith.constant 0 : index
    %66 = vector.load %arg2[%c257, %c0_32] : memref<264x128xf32, #tpu.memory_space<vmem>>, vector<1x32xf32>
    %67 = vector.broadcast %66 : vector<1x32xf32> to vector<16x32xf32>
    %68 = arith.mulf %43, %67 : vector<16x32xf32>
    %cst_33 = arith.constant dense<0.000000e+00> : vector<16x16xf32>
    %69 = tpu.matmul %40, %68, %cst_33 {dimension_numbers = #tpu.dot_dimension_numbers<[1], [1], [0], [0], [0, 0, 1, 0], [], []>, precision = #tpu.contract_precision<fp32>} : vector<16x32xf32>, vector<16x32xf32>, vector<16x16xf32> -> vector<16x16xf32>
    %70 = arith.addf %69, %17 : vector<16x16xf32>
    %cst_34 = arith.constant dense<0xFF800000> : vector<16xf32>
    %71 = vector.multi_reduction <maximumf>, %70, %cst_34 [1] : vector<16x16xf32> to vector<16xf32>
    %72 = vector.shape_cast %71 : vector<16xf32> to vector<16x1xf32>
    %73 = vector.broadcast %72 : vector<16x1xf32> to vector<16x16xf32>
    %74 = arith.subf %70, %73 : vector<16x16xf32>
    %75 = math.exp %74 : vector<16x16xf32>
    %cst_35 = arith.constant dense<0.000000e+00> : vector<16xf32>
    %76 = vector.multi_reduction <add>, %75, %cst_35 [1] : vector<16x16xf32> to vector<16xf32>
    %77 = vector.shape_cast %76 : vector<16xf32> to vector<16x1xf32>
    %78 = vector.broadcast %77 : vector<16x1xf32> to vector<16x16xf32>
    %79 = arith.divf %75, %78 : vector<16x16xf32>
    %80 = vector.broadcast %66 : vector<1x32xf32> to vector<16x32xf32>
    %81 = arith.mulf %46, %80 : vector<16x32xf32>
    %cst_36 = arith.constant dense<0.000000e+00> : vector<16x32xf32>
    %82 = tpu.matmul %79, %81, %cst_36 {dimension_numbers = #tpu.dot_dimension_numbers<[1], [0], [0], [1], [0, 0, 1, 1], [], []>, precision = #tpu.contract_precision<fp32>} : vector<16x16xf32>, vector<16x32xf32>, vector<16x32xf32> -> vector<16x32xf32>
    %83 = arith.addf %65, %82 : vector<16x32xf32>
    %c258 = arith.constant 258 : index
    %c0_37 = arith.constant 0 : index
    %84 = vector.load %arg2[%c258, %c0_37] : memref<264x128xf32, #tpu.memory_space<vmem>>, vector<1x32xf32>
    %85 = vector.broadcast %84 : vector<1x32xf32> to vector<16x32xf32>
    %86 = arith.mulf %43, %85 : vector<16x32xf32>
    %cst_38 = arith.constant dense<0.000000e+00> : vector<16x16xf32>
    %87 = tpu.matmul %40, %86, %cst_38 {dimension_numbers = #tpu.dot_dimension_numbers<[1], [1], [0], [0], [0, 0, 1, 0], [], []>, precision = #tpu.contract_precision<fp32>} : vector<16x32xf32>, vector<16x32xf32>, vector<16x16xf32> -> vector<16x16xf32>
    %88 = arith.addf %87, %17 : vector<16x16xf32>
    %cst_39 = arith.constant dense<0xFF800000> : vector<16xf32>
    %89 = vector.multi_reduction <maximumf>, %88, %cst_39 [1] : vector<16x16xf32> to vector<16xf32>
    %90 = vector.shape_cast %89 : vector<16xf32> to vector<16x1xf32>
    %91 = vector.broadcast %90 : vector<16x1xf32> to vector<16x16xf32>
    %92 = arith.subf %88, %91 : vector<16x16xf32>
    %93 = math.exp %92 : vector<16x16xf32>
    %cst_40 = arith.constant dense<0.000000e+00> : vector<16xf32>
    %94 = vector.multi_reduction <add>, %93, %cst_40 [1] : vector<16x16xf32> to vector<16xf32>
    %95 = vector.shape_cast %94 : vector<16xf32> to vector<16x1xf32>
    %96 = vector.broadcast %95 : vector<16x1xf32> to vector<16x16xf32>
    %97 = arith.divf %93, %96 : vector<16x16xf32>
    %98 = vector.broadcast %84 : vector<1x32xf32> to vector<16x32xf32>
    %99 = arith.mulf %46, %98 : vector<16x32xf32>
    %cst_41 = arith.constant dense<0.000000e+00> : vector<16x32xf32>
    %100 = tpu.matmul %97, %99, %cst_41 {dimension_numbers = #tpu.dot_dimension_numbers<[1], [0], [0], [1], [0, 0, 1, 1], [], []>, precision = #tpu.contract_precision<fp32>} : vector<16x16xf32>, vector<16x32xf32>, vector<16x32xf32> -> vector<16x32xf32>
    %101 = arith.addf %83, %100 : vector<16x32xf32>
    %c259 = arith.constant 259 : index
    %c0_42 = arith.constant 0 : index
    %102 = vector.load %arg2[%c259, %c0_42] : memref<264x128xf32, #tpu.memory_space<vmem>>, vector<1x32xf32>
    %103 = vector.broadcast %102 : vector<1x32xf32> to vector<16x32xf32>
    %104 = arith.mulf %43, %103 : vector<16x32xf32>
    %cst_43 = arith.constant dense<0.000000e+00> : vector<16x16xf32>
    %105 = tpu.matmul %40, %104, %cst_43 {dimension_numbers = #tpu.dot_dimension_numbers<[1], [1], [0], [0], [0, 0, 1, 0], [], []>, precision = #tpu.contract_precision<fp32>} : vector<16x32xf32>, vector<16x32xf32>, vector<16x16xf32> -> vector<16x16xf32>
    %106 = arith.addf %105, %17 : vector<16x16xf32>
    %cst_44 = arith.constant dense<0xFF800000> : vector<16xf32>
    %107 = vector.multi_reduction <maximumf>, %106, %cst_44 [1] : vector<16x16xf32> to vector<16xf32>
    %108 = vector.shape_cast %107 : vector<16xf32> to vector<16x1xf32>
    %109 = vector.broadcast %108 : vector<16x1xf32> to vector<16x16xf32>
    %110 = arith.subf %106, %109 : vector<16x16xf32>
    %111 = math.exp %110 : vector<16x16xf32>
    %cst_45 = arith.constant dense<0.000000e+00> : vector<16xf32>
    %112 = vector.multi_reduction <add>, %111, %cst_45 [1] : vector<16x16xf32> to vector<16xf32>
    %113 = vector.shape_cast %112 : vector<16xf32> to vector<16x1xf32>
    %114 = vector.broadcast %113 : vector<16x1xf32> to vector<16x16xf32>
    %115 = arith.divf %111, %114 : vector<16x16xf32>
    %116 = vector.broadcast %102 : vector<1x32xf32> to vector<16x32xf32>
    %117 = arith.mulf %46, %116 : vector<16x32xf32>
    %cst_46 = arith.constant dense<0.000000e+00> : vector<16x32xf32>
    %118 = tpu.matmul %115, %117, %cst_46 {dimension_numbers = #tpu.dot_dimension_numbers<[1], [0], [0], [1], [0, 0, 1, 1], [], []>, precision = #tpu.contract_precision<fp32>} : vector<16x16xf32>, vector<16x32xf32>, vector<16x32xf32> -> vector<16x32xf32>
    %119 = arith.addf %101, %118 : vector<16x32xf32>
    %cst_47 = arith.constant dense<0.000000e+00> : vector<16x32xf32>
    %120 = tpu.matmul %119, %4, %cst_47 {dimension_numbers = #tpu.dot_dimension_numbers<[1], [0], [0], [1], [0, 0, 1, 1], [], []>, precision = #tpu.contract_precision<fp32>} : vector<16x32xf32>, vector<32x32xf32>, vector<16x32xf32> -> vector<16x32xf32>
    %121 = vector.broadcast %11 : vector<1x32xf32> to vector<16x32xf32>
    %122 = arith.addf %120, %121 : vector<16x32xf32>
    %123 = arith.addf %0, %122 : vector<16x32xf32>
    %cst_48 = arith.constant dense<0.000000e+00> : vector<16xf32>
    %124 = vector.multi_reduction <add>, %123, %cst_48 [1] : vector<16x32xf32> to vector<16xf32>
    %125 = vector.shape_cast %124 : vector<16xf32> to vector<16x1xf32>
    %cst_49 = arith.constant 3.200000e+01 : f32
    %126 = vector.broadcast %cst_49 : f32 to vector<16x1xf32>
    %127 = arith.divf %125, %126 : vector<16x1xf32>
    %128 = vector.broadcast %127 : vector<16x1xf32> to vector<16x32xf32>
    %129 = arith.subf %123, %128 : vector<16x32xf32>
    %130 = arith.mulf %129, %129 : vector<16x32xf32>
    %cst_50 = arith.constant dense<0.000000e+00> : vector<16xf32>
    %131 = vector.multi_reduction <add>, %130, %cst_50 [1] : vector<16x32xf32> to vector<16xf32>
    %132 = vector.shape_cast %131 : vector<16xf32> to vector<16x1xf32>
    %cst_51 = arith.constant 3.200000e+01 : f32
    %133 = vector.broadcast %cst_51 : f32 to vector<16x1xf32>
    %134 = arith.divf %132, %133 : vector<16x1xf32>
    %cst_52 = arith.constant 9.99999974E-6 : f32
    %135 = vector.broadcast %cst_52 : f32 to vector<16x1xf32>
    %136 = arith.addf %134, %135 : vector<16x1xf32>
    %137 = math.rsqrt %136 : vector<16x1xf32>
    %138 = vector.broadcast %137 : vector<16x1xf32> to vector<16x32xf32>
    %139 = arith.mulf %129, %138 : vector<16x32xf32>
    %140 = vector.broadcast %9 : vector<1x32xf32> to vector<16x32xf32>
    %141 = arith.mulf %139, %140 : vector<16x32xf32>
    %142 = vector.broadcast %10 : vector<1x32xf32> to vector<16x32xf32>
    %143 = arith.addf %141, %142 : vector<16x32xf32>
    %cst_53 = arith.constant dense<0.000000e+00> : vector<16x64xf32>
    %144 = tpu.matmul %143, %5, %cst_53 {dimension_numbers = #tpu.dot_dimension_numbers<[1], [0], [0], [1], [0, 0, 1, 1], [], []>, precision = #tpu.contract_precision<fp32>} : vector<16x32xf32>, vector<32x64xf32>, vector<16x64xf32> -> vector<16x64xf32>
    %145 = vector.broadcast %13 : vector<1x64xf32> to vector<16x64xf32>
    %146 = arith.addf %144, %145 : vector<16x64xf32>
    %cst_54 = arith.constant 0.000000e+00 : f32
    %147 = vector.broadcast %cst_54 : f32 to vector<16x64xf32>
    %148 = arith.maximumf %146, %147 : vector<16x64xf32>
    %cst_55 = arith.constant dense<0.000000e+00> : vector<16x32xf32>
    %149 = tpu.matmul %148, %6, %cst_55 {dimension_numbers = #tpu.dot_dimension_numbers<[1], [0], [0], [1], [0, 0, 1, 1], [], []>, precision = #tpu.contract_precision<fp32>} : vector<16x64xf32>, vector<64x32xf32>, vector<16x32xf32> -> vector<16x32xf32>
    %150 = vector.broadcast %12 : vector<1x32xf32> to vector<16x32xf32>
    %151 = arith.addf %149, %150 : vector<16x32xf32>
    %152 = arith.addf %123, %151 : vector<16x32xf32>
    %c0_56 = arith.constant 0 : index
    %c0_57 = arith.constant 0 : index
    %153 = vector.load %arg3[%c0_56, %c0_57] : memref<16x32xf32, #tpu.memory_space<vmem>>, vector<16x32xf32>
    tpu.vector_store %arg3[%c0_56, %c0_57], %152 {strides = array<i32>} : memref<16x32xf32, #tpu.memory_space<vmem>>, vector<16x32xf32>,
    return
  }
  func.func @transform_0(%arg0: i32) -> (i32, i32) {
    %c0_i32 = arith.constant 0 : i32
    %c0_i32_0 = arith.constant 0 : i32
    %c0_i32_1 = arith.constant 0 : i32
    return %c0_i32, %c0_i32_0 : i32, i32
  }
  func.func @transform_1(%arg0: i32) -> (i32, i32) {
    %c0_i32 = arith.constant 0 : i32
    %c0_i32_0 = arith.constant 0 : i32
    %c0_i32_1 = arith.constant 0 : i32
    return %c0_i32, %c0_i32_0 : i32, i32
  }
  func.func @transform_2(%arg0: i32) -> (i32, i32) {
    %c0_i32 = arith.constant 0 : i32
    %c0_i32_0 = arith.constant 0 : i32
    %c0_i32_1 = arith.constant 0 : i32
    return %c0_i32, %c0_i32_0 : i32, i32
  }
}

</mosaic_0001>

<llo_original>
// kernel: tpu_custom_call.1
$region0: #{tpu_custom_call.1}
  #allocation0 [shape = 'u32[]', space=smem, size = 0x4, offset = 0x4, fixed_abs, tag = 'smem constant byte address 0x4 - core index']
  #allocation1 [shape = 'u32[144,128]{1,0:T(1,128)}', space=vmem, size = 0x12000, scoped, tag = 'internal scratch']
  %s0 = inlined_call_operand.hbm [shape: f32[16,32], index: 0, kind: input, shape index: {}]
  %s1 = inlined_call_operand.hbm [shape: f32[264,128], index: 1, kind: input, shape index: {}]
  %s2 = inlined_call_operand.hbm [shape: f32[16,32], index: 2, kind: output, shape index: {}]
  %s3 = sld [smem:[#allocation0]]
  $region26: #{tpu_custom_call.1} parent=0
    _
  %s5 = ssub.s32 1, %s3
  %s6 = scalar_select 0, %s5, %s3
  $region1: #{tpu_custom_call.1} parent=0
    #allocation2 [shape = 'u8[8192]{0}', space=vmem, size = 0x2000, scoped, tag = 'input window, operand 0, single buffered']
    #allocation3 [shape = 's32[1]{0}', space=sflag, size = 0x4, scoped, tag = 'scoped memory for tpu_custom_call.1']
    #allocation4 [shape = 's32[1]{0}', space=sflag, size = 0x4, scoped, tag = 'scoped memory for tpu_custom_call.1']
    #allocation5 [shape = 'u8[135168]{0}', space=vmem, size = 0x21000, scoped, tag = 'input window, operand 1, single buffered']
    #allocation6 [shape = 's32[1]{0}', space=sflag, size = 0x4, scoped, tag = 'scoped memory for tpu_custom_call.1']
    #allocation7 [shape = 'u8[8192]{0}', space=vmem, size = 0x2000, scoped, tag = 'output window, operand 0, single buffered']
    %7 = vsyncpa [#allocation3], 0
    %8 = vsyncpa [#allocation6], 0
    %9 = vsyncpa [#allocation4], 0
    // Predicated region
    $region2: #{tpu_custom_call.1} parent=1 // pred_check
      _
    $region3: #{tpu_custom_call.1} parent=1 // pred_check_branch
      %11 = sbr.rel (0) target = $region5
    $region4: #{tpu_custom_call.1} parent=1 // pred_region
      %s13 = ssub.s32 256, 256
      %14 = vsyncadd [#allocation3], %s13
      %s15 = sshll.u32 [#allocation2], 4
      %s16 = int_to_ptr.vmem [resolvable:$true] %s15
      %21 = dma.hbm_to_vmem [thread:$0]  %s0, 256, %s16, [#allocation3], 128, 128, 8
    $region5: #{tpu_custom_call.1} parent=1 // pred_fallthru
      _
    // Predicated region
    $region6: #{tpu_custom_call.1} parent=1 // pred_check
      _
    $region7: #{tpu_custom_call.1} parent=1 // pred_check_branch
      %23 = sbr.rel (0) target = $region9
    $region8: #{tpu_custom_call.1} parent=1 // pred_region
      %s25 = ssub.s32 4224, 4224
      %26 = vsyncadd [#allocation6], %s25
      %s27 = sshll.u32 [#allocation5], 4
      %s28 = int_to_ptr.vmem [resolvable:$true] %s27
      %33 = dma.hbm_to_vmem [thread:$0]  %s1, 4224, %s28, [#allocation6], 128, 128, 8
    $region9: #{tpu_custom_call.1} parent=1 // pred_fallthru
      _
    // Predicated region
    $region10: #{tpu_custom_call.1} parent=1 // pred_check
      _
    $region11: #{tpu_custom_call.1} parent=1 // pred_check_branch
      %35 = sbr.rel (0) target = $region13
    $region12: #{tpu_custom_call.1} parent=1 // pred_region
      %36 = dma.done [#allocation3], 256
    $region13: #{tpu_custom_call.1} parent=1 // pred_fallthru
      _
    // Predicated region
    $region14: #{tpu_custom_call.1} parent=1 // pred_check
      _
    $region15: #{tpu_custom_call.1} parent=1 // pred_check_branch
      %38 = sbr.rel (0) target = $region17
    $region16: #{tpu_custom_call.1} parent=1 // pred_region
      %39 = dma.done [#allocation6], 4224
    $region17: #{tpu_custom_call.1} parent=1 // pred_fallthru
      _
    %v40 = vld [vmem:[#allocation2] sm:$0xff]
    %v41 = vld [vmem:[#allocation2 + $0x8] sm:$0xff]
    %v42 = vld [vmem:[#allocation5] sm:$0xff]
    %v43 = vld [vmem:[#allocation5 + $0x8] sm:$0xff]
    %v44 = vld [vmem:[#allocation5 + $0x10] sm:$0xff]
    %v45 = vld [vmem:[#allocation5 + $0x18] sm:$0xff]
    %v46 = vld [vmem:[#allocation5 + $0x20] sm:$0xff]
    %v47 = vld [vmem:[#allocation5 + $0x28] sm:$0xff]
    %v48 = vld [vmem:[#allocation5 + $0x30] sm:$0xff]
    %v49 = vld [vmem:[#allocation5 + $0x38] sm:$0xff]
    %v50 = vld [vmem:[#allocation5 + $0x40] sm:$0xff]
    %v51 = vld [vmem:[#allocation5 + $0x48] sm:$0xff]
    %v52 = vld [vmem:[#allocation5 + $0x50] sm:$0xff]
    %v53 = vld [vmem:[#allocation5 + $0x58] sm:$0xff]
    %v54 = vld [vmem:[#allocation5 + $0x60] sm:$0xff]
    %v55 = vld [vmem:[#allocation5 + $0x68] sm:$0xff]
    %v56 = vld [vmem:[#allocation5 + $0x70] sm:$0xff]
    %v57 = vld [vmem:[#allocation5 + $0x78] sm:$0xff]
    %v58 = vld [vmem:[#allocation5 + $0x80] sm:$0xff]
    %v59 = vld [vmem:[#allocation5 + $0x88] sm:$0xff]
    %v60 = vld [vmem:[#allocation5 + $0x90] sm:$0xff]
    %v61 = vld [vmem:[#allocation5 + $0x98] sm:$0xff]
    %v62 = vld [vmem:[#allocation5 + $0xa0] sm:$0xff]
    %v63 = vld [vmem:[#allocation5 + $0xa8] sm:$0xff]
    %v64 = vld [vmem:[#allocation5 + $0xb0] sm:$0xff]
    %v65 = vld [vmem:[#allocation5 + $0xb8] sm:$0xff]
    %v66 = vld [vmem:[#allocation5 + $0xc0] sm:$0xff]
    %v67 = vld [vmem:[#allocation5 + $0xc8] sm:$0xff]
    %v68 = vld [vmem:[#allocation5 + $0xd0] sm:$0xff]
    %v69 = vld [vmem:[#allocation5 + $0xd8] sm:$0xff]
    %v70 = vld [vmem:[#allocation5 + $0xe0] sm:$0x1]
    %v71 = vld [vmem:[#allocation5 + $0xe1] sm:$0x1]
    %v72 = vld [vmem:[#allocation5 + $0xe2] sm:$0x1]
    %v73 = vld [vmem:[#allocation5 + $0xe3] sm:$0x1]
    %v74 = vld [vmem:[#allocation5 + $0xe4] sm:$0x1]
    %v75 = vld [vmem:[#allocation5 + $0xe5] sm:$0x1]
    %v76 = vld [vmem:[#allocation5 + $0xe6] sm:$0x1]
    %v77 = vld [vmem:[#allocation5 + $0xe7] sm:$0x1]
    %v78 = vld [vmem:[#allocation5 + $0xe8] sm:$0x1]
    %v79 = vld [vmem:[#allocation5 + $0xe9] sm:$0x1]
    %v80 = vld [vmem:[#allocation5 + $0xf0] sm:$0xff]
    %v81 = vld [vmem:[#allocation5 + $0xf8] sm:$0xff]
    %vm82 = vcmask 261120
    %v83 = vsel %vm82, %v40, 0.0
    %84 = vadd.xlane.f32.xlu0 %v83
    %v85 = vpop.xlane.xlu0 %84
    %v86 = vsel %vm82, %v41, 0.0
    %87 = vadd.xlane.f32.xlu0 %v86
    %v88 = vpop.xlane.xlu0 %87
    %v89 = vrcp.pop 32.0
    %v90 = vmul.f32 %v85, %v89
    %v91 = vmul.f32 %v88, %v89
    %v92 = vsub.f32 %v40, %v90
    %v93 = vsub.f32 %v41, %v91
    %v94 = vmul.f32 %v92, %v92
    %v95 = vmul.f32 %v93, %v93
    %v96 = vsel %vm82, %v94, 0.0
    %97 = vadd.xlane.f32.xlu0 %v96
    %v98 = vpop.xlane.xlu0 %97
    %v99 = vsel %vm82, %v95, 0.0
    %100 = vadd.xlane.f32.xlu0 %v99
    %v101 = vpop.xlane.xlu0 %100
    %v102 = vmul.f32 %v98, %v89
    %v103 = vmul.f32 %v101, %v89
    %v104 = vadd.f32 %v102, 1e-05
    %v105 = vadd.f32 %v103, 1e-05
    %v106 = vrsqrt.pop %v104
    %v107 = vrsqrt.pop %v105
    %v108 = vmul.f32 %v92, %v106
    %v109 = vmul.f32 %v93, %v107
    %v110 = vlaneseq
    %v111 = vshrl.u32 %v110, 7
    %v112 = vsub.s32 0, %v111
    %v113 = vrot.slane %v70, %v112
    %v114 = vmul.f32 %v108, %v113
    %v115 = vmul.f32 %v109, %v113
    %v116 = vlaneseq
    %v117 = vshrl.u32 %v116, 7
    %v118 = vsub.s32 0, %v117
    %v119 = vrot.slane %v71, %v118
    %v120 = vadd.f32 %v114, %v119
    %v121 = vadd.f32 %v115, %v119
    %v122 = vlaneseq
    %v123 = vshrl.u32 %v122, 7
    %v124 = vsub.s32 0, %v123
    %v125 = vrot.slane %v77, %v124
    %v127 = vsel %vm82, %v120, 0
    %v130 = vsel %vm82, %v121, 0
    %132 = vmatprep.subr.mxu0 0.0
    %v133 = vand.u32 %v42, 4294901760
    %134 = vmatpush1.msra.mxu0 %v133
    %135 = vmatprep.subr.mxu0 0.0
    %v136 = vand.u32 %v43, 4294901760
    %137 = vmatpush1.msra.mxu0 %v136
    %138 = vmatprep.subr.mxu0 0.0
    %v139 = vand.u32 %v44, 4294901760
    %140 = vmatpush1.msra.mxu0 %v139
    %141 = vmatprep.subr.mxu0 0.0
    %v142 = vand.u32 %v45, 4294901760
    %143 = vmatpush1.msra.mxu0 %v142
    %144 = vmatprep.subr.mxu0 0.0
    %145 = vmatpush1.msra.mxu0 0.0
    %146 = vmatprep.subr.mxu0 0.0
    %147 = vmatpush1.msra.mxu0 0.0
    %148 = vmatprep.subr.mxu0 0.0
    %149 = vmatpush1.msra.mxu0 0.0
    %150 = vmatprep.subr.mxu0 0.0
    %151 = vmatpush1.msra.mxu0 0.0
    %152 = vmatprep.subr.mxu0 0.0
    %153 = vmatpush1.msra.mxu0 0.0
    %154 = vmatprep.subr.mxu0 0.0
    %155 = vmatpush1.msra.mxu0 0.0
    %156 = vmatprep.subr.mxu0 0.0
    %157 = vmatpush1.msra.mxu0 0.0
    %158 = vmatprep.subr.mxu0 0.0
    %159 = vmatpush1.msra.mxu0 0.0
    %160 = vmatprep.subr.mxu0 0.0
    %161 = vmatpush1.msra.mxu0 0.0
    %162 = vmatprep.subr.mxu0 0.0
    %163 = vmatpush1.msra.mxu0 0.0
    %164 = vmatprep.subr.mxu0 0.0
    %165 = vmatpush1.msra.mxu0 0.0
    %166 = vmatprep.subr.mxu0 0.0
    %167 = vmatpush1.msra.mxu0 0.0
    %168 = vmatprep.subr.mxu0 0.0
    %169 = vmatpush1.msra.mxu0 0.0
    %170 = vmatprep.subr.mxu0 0.0
    %171 = vmatpush1.msra.mxu0 0.0
    %172 = vmatprep.subr.mxu0 0.0
    %173 = vmatpush1.msra.mxu0 0.0
    %174 = vmatprep.subr.mxu0 0.0
    %175 = vmatpush1.msra.mxu0 0.0
    %176 = vmatprep.subr.mxu0 0.0
    %177 = vmatpush1.msra.mxu0 0.0
    %178 = vmatprep.subr.mxu0 0.0
    %179 = vmatpush1.msra.mxu0 0.0
    %180 = vmatprep.subr.mxu0 0.0
    %181 = vmatpush1.msra.mxu0 0.0
    %182 = vmatprep.subr.mxu0 0.0
    %183 = vmatpush1.msra.mxu0 0.0
    %184 = vmatprep.subr.mxu0 0.0
    %185 = vmatpush1.msra.mxu0 0.0
    %186 = vmatprep.subr.mxu0 0.0
    %187 = vmatpush1.msra.mxu0 0.0
    %188 = vmatprep.subr.mxu0 0.0
    %189 = vmatpush1.msra.mxu0 0.0
    %190 = vmatprep.subr.mxu0 0.0
    %191 = vmatpush1.msra.mxu0 0.0
    %192 = vmatprep.subr.mxu0 0.0
    %193 = vmatpush1.msra.mxu0 0.0
    %194 = vmatprep.subr.mxu0 0.0
    %195 = vmatpush1.msra.mxu0 0.0
    %196 = vmatprep.subr.mxu0 0.0
    %197 = vmatpush1.msra.mxu0 0.0
    %198 = vmatprep.subr.mxu0 0.0
    %199 = vmatpush1.msra.mxu0 0.0
    %200 = vmatprep.mubr.f32.mxu0 0.0
    %v201 = vand.u32 %v127, 4294901760
    %v202 = vsub.f32 %v127, %v201
    %v203 = vand.u32 %v202, 4294901760
    %v204 = vsub.f32 %v202, %v203
    %v205 = vand.u32 %v204, 4294901760
    %206 = vmatmul.mubr.f32.gmra.mrb[0].mxu0 %v205
    %v207 = vpop.f32.mrb[0].mxu0
    %v208 = vadd.f32 %v125, %v207
    %v209 = vpop.f32.mrb[0].mxu0
    %210 = vmatprep.mubr.f32.mxu0 0.0
    %v211 = vand.u32 %v130, 4294901760
    %v212 = vsub.f32 %v130, %v211
    %v213 = vand.u32 %v212, 4294901760
    %v214 = vsub.f32 %v212, %v213
    %v215 = vand.u32 %v214, 4294901760
    %216 = vmatmul.mubr.f32.gmra.mrb[0].mxu0 %v215
    %v217 = vpop.f32.mrb[0].mxu0
    %v218 = vadd.f32 %v125, %v217
    %v219 = vpop.f32.mrb[0].mxu0
    %220 = vdwg.mxu0
    %221 = vmatprep.subr.mxu0 0.0
    %v222 = vand.u32 %v42, 4294901760
    %v223 = vsub.f32 %v42, %v222
    %v224 = vand.u32 %v223, 4294901760
    %v225 = vsub.f32 %v223, %v224
    %v226 = vand.u32 %v225, 4294901760
    %227 = vmatpush1.msra.mxu0 %v226
    %228 = vmatprep.subr.mxu0 0.0
    %v229 = vand.u32 %v43, 4294901760
    %v230 = vsub.f32 %v43, %v229
    %v231 = vand.u32 %v230, 4294901760
    %v232 = vsub.f32 %v230, %v231
    %v233 = vand.u32 %v232, 4294901760
    %234 = vmatpush1.msra.mxu0 %v233
    %235 = vmatprep.subr.mxu0 0.0
    %v236 = vand.u32 %v44, 4294901760
    %v237 = vsub.f32 %v44, %v236
    %v238 = vand.u32 %v237, 4294901760
    %v239 = vsub.f32 %v237, %v238
    %v240 = vand.u32 %v239, 4294901760
    %241 = vmatpush1.msra.mxu0 %v240
    %242 = vmatprep.subr.mxu0 0.0
    %v243 = vand.u32 %v45, 4294901760
    %v244 = vsub.f32 %v45, %v243
    %v245 = vand.u32 %v244, 4294901760
    %v246 = vsub.f32 %v244, %v245
    %v247 = vand.u32 %v246, 4294901760
    %248 = vmatpush1.msra.mxu0 %v247
    %249 = vmatprep.subr.mxu0 0.0
    %250 = vmatpush1.msra.mxu0 0.0
    %251 = vmatprep.subr.mxu0 0.0
    %252 = vmatpush1.msra.mxu0 0.0
    %253 = vmatprep.subr.mxu0 0.0
    %254 = vmatpush1.msra.mxu0 0.0
    %255 = vmatprep.subr.mxu0 0.0
    %256 = vmatpush1.msra.mxu0 0.0
    %257 = vmatprep.subr.mxu0 0.0
    %258 = vmatpush1.msra.mxu0 0.0
    %259 = vmatprep.subr.mxu0 0.0
    %260 = vmatpush1.msra.mxu0 0.0
    %261 = vmatprep.subr.mxu0 0.0
    %262 = vmatpush1.msra.mxu0 0.0
    %263 = vmatprep.subr.mxu0 0.0
    %264 = vmatpush1.msra.mxu0 0.0
    %265 = vmatprep.subr.mxu0 0.0
    %266 = vmatpush1.msra.mxu0 0.0
    %267 = vmatprep.subr.mxu0 0.0
    %268 = vmatpush1.msra.mxu0 0.0
    %269 = vmatprep.subr.mxu0 0.0
    %270 = vmatpush1.msra.mxu0 0.0
    %271 = vmatprep.subr.mxu0 0.0
    %272 = vmatpush1.msra.mxu0 0.0
    %273 = vmatprep.subr.mxu0 0.0
    %274 = vmatpush1.msra.mxu0 0.0
    %275 = vmatprep.subr.mxu0 0.0
    %276 = vmatpush1.msra.mxu0 0.0
    %277 = vmatprep.subr.mxu0 0.0
    %278 = vmatpush1.msra.mxu0 0.0
    %279 = vmatprep.subr.mxu0 0.0
    %280 = vmatpush1.msra.mxu0 0.0
    %281 = vmatprep.subr.mxu0 0.0
    %282 = vmatpush1.msra.mxu0 0.0
    %283 = vmatprep.subr.mxu0 0.0
    %284 = vmatpush1.msra.mxu0 0.0
    %285 = vmatprep.subr.mxu0 0.0
    %286 = vmatpush1.msra.mxu0 0.0
    %287 = vmatprep.subr.mxu0 0.0
    %288 = vmatpush1.msra.mxu0 0.0
    %289 = vmatprep.subr.mxu0 0.0
    %290 = vmatpush1.msra.mxu0 0.0
    %291 = vmatprep.subr.mxu0 0.0
    %292 = vmatpush1.msra.mxu0 0.0
    %293 = vmatprep.subr.mxu0 0.0
    %294 = vmatpush1.msra.mxu0 0.0
    %295 = vmatprep.subr.mxu0 0.0
    %296 = vmatpush1.msra.mxu0 0.0
    %297 = vmatprep.subr.mxu0 0.0
    %298 = vmatpush1.msra.mxu0 0.0
    %299 = vmatprep.subr.mxu0 0.0
    %300 = vmatpush1.msra.mxu0 0.0
    %301 = vmatprep.subr.mxu0 0.0
    %302 = vmatpush1.msra.mxu0 0.0
    %303 = vmatprep.subr.mxu0 0.0
    %304 = vmatpush1.msra.mxu0 0.0
    %305 = vmatprep.mubr.f32.mxu0 0.0
    %v306 = vand.u32 %v127, 4294901760
    %307 = vmatmul.mubr.f32.gmra.mrb[0].mxu0 %v306
    %v308 = vpop.f32.mrb[0].mxu0
    %v309 = vadd.f32 %v208, %v308
    %v310 = vpop.f32.mrb[0].mxu0
    %311 = vmatprep.mubr.f32.mxu0 0.0
    %v312 = vand.u32 %v130, 4294901760
    %313 = vmatmul.mubr.f32.gmra.mrb[0].mxu0 %v312
    %v314 = vpop.f32.mrb[0].mxu0
    %v315 = vadd.f32 %v218, %v314
    %v316 = vpop.f32.mrb[0].mxu0
    %317 = vdwg.mxu0
    %318 = vmatprep.subr.mxu0 0.0
    %v319 = vand.u32 %v42, 4294901760
    %v320 = vsub.f32 %v42, %v319
    %321 = vmatpush1.msra.mxu0 %v320
    %322 = vmatprep.subr.mxu0 0.0
    %v323 = vand.u32 %v43, 4294901760
    %v324 = vsub.f32 %v43, %v323
    %325 = vmatpush1.msra.mxu0 %v324
    %326 = vmatprep.subr.mxu0 0.0
    %v327 = vand.u32 %v44, 4294901760
    %v328 = vsub.f32 %v44, %v327
    %329 = vmatpush1.msra.mxu0 %v328
    %330 = vmatprep.subr.mxu0 0.0
    %v331 = vand.u32 %v45, 4294901760
    %v332 = vsub.f32 %v45, %v331
    %333 = vmatpush1.msra.mxu0 %v332
    %334 = vmatprep.subr.mxu0 0.0
    %335 = vmatpush1.msra.mxu0 0.0
    %336 = vmatprep.subr.mxu0 0.0
    %337 = vmatpush1.msra.mxu0 0.0
    %338 = vmatprep.subr.mxu0 0.0
    %339 = vmatpush1.msra.mxu0 0.0
    %340 = vmatprep.subr.mxu0 0.0
    %341 = vmatpush1.msra.mxu0 0.0
    %342 = vmatprep.subr.mxu0 0.0
    %343 = vmatpush1.msra.mxu0 0.0
    %344 = vmatprep.subr.mxu0 0.0
    %345 = vmatpush1.msra.mxu0 0.0
    %346 = vmatprep.subr.mxu0 0.0
    %347 = vmatpush1.msra.mxu0 0.0
    %348 = vmatprep.subr.mxu0 0.0
    %349 = vmatpush1.msra.mxu0 0.0
    %350 = vmatprep.subr.mxu0 0.0
    %351 = vmatpush1.msra.mxu0 0.0
    %352 = vmatprep.subr.mxu0 0.0
    %353 = vmatpush1.msra.mxu0 0.0
    %354 = vmatprep.subr.mxu0 0.0
    %355 = vmatpush1.msra.mxu0 0.0
    %356 = vmatprep.subr.mxu0 0.0
    %357 = vmatpush1.msra.mxu0 0.0
    %358 = vmatprep.subr.mxu0 0.0
    %359 = vmatpush1.msra.mxu0 0.0
    %360 = vmatprep.subr.mxu0 0.0
    %361 = vmatpush1.msra.mxu0 0.0
    %362 = vmatprep.subr.mxu0 0.0
    %363 = vmatpush1.msra.mxu0 0.0
    %364 = vmatprep.subr.mxu0 0.0
    %365 = vmatpush1.msra.mxu0 0.0
    %366 = vmatprep.subr.mxu0 0.0
    %367 = vmatpush1.msra.mxu0 0.0
    %368 = vmatprep.subr.mxu0 0.0
    %369 = vmatpush1.msra.mxu0 0.0
    %370 = vmatprep.subr.mxu0 0.0
    %371 = vmatpush1.msra.mxu0 0.0
    %372 = vmatprep.subr.mxu0 0.0
    %373 = vmatpush1.msra.mxu0 0.0
    %374 = vmatprep.subr.mxu0 0.0
    %375 = vmatpush1.msra.mxu0 0.0
    %376 = vmatprep.subr.mxu0 0.0
    %377 = vmatpush1.msra.mxu0 0.0
    %378 = vmatprep.subr.mxu0 0.0
    %379 = vmatpush1.msra.mxu0 0.0
    %380 = vmatprep.subr.mxu0 0.0
    %381 = vmatpush1.msra.mxu0 0.0
    %382 = vmatprep.subr.mxu0 0.0
    %383 = vmatpush1.msra.mxu0 0.0
    %384 = vmatprep.subr.mxu0 0.0
    %385 = vmatpush1.msra.mxu0 0.0
    %386 = vmatprep.subr.mxu0 0.0
    %387 = vmatpush1.msra.mxu0 0.0
    %388 = vmatprep.subr.mxu0 0.0
    %389 = vmatpush1.msra.mxu0 0.0
    %390 = vmatprep.mubr.f32.mxu0 0.0
    %v391 = vand.u32 %v127, 4294901760
    %v392 = vsub.f32 %v127, %v391
    %393 = vmatmul.mubr.f32.gmra.mrb[0].mxu0 %v392
    %v394 = vpop.f32.mrb[0].mxu0
    %v395 = vadd.f32 %v309, %v394
    %v396 = vpop.f32.mrb[0].mxu0
    %397 = vmatprep.mubr.f32.mxu0 0.0
    %v398 = vand.u32 %v130, 4294901760
    %v399 = vsub.f32 %v130, %v398
    %400 = vmatmul.mubr.f32.gmra.mrb[0].mxu0 %v399
    %v401 = vpop.f32.mrb[0].mxu0
    %v402 = vadd.f32 %v315, %v401
    %v403 = vpop.f32.mrb[0].mxu0
    %404 = vdwg.mxu0
    %405 = vmatprep.subr.mxu0 0.0
    %v406 = vand.u32 %v42, 4294901760
    %407 = vmatpush1.msra.mxu0 %v406
    %408 = vmatprep.subr.mxu0 0.0
    %v409 = vand.u32 %v43, 4294901760
    %410 = vmatpush1.msra.mxu0 %v409
    %411 = vmatprep.subr.mxu0 0.0
    %v412 = vand.u32 %v44, 4294901760
    %413 = vmatpush1.msra.mxu0 %v412
    %414 = vmatprep.subr.mxu0 0.0
    %v415 = vand.u32 %v45, 4294901760
    %416 = vmatpush1.msra.mxu0 %v415
    %417 = vmatprep.subr.mxu0 0.0
    %418 = vmatpush1.msra.mxu0 0.0
    %419 = vmatprep.subr.mxu0 0.0
    %420 = vmatpush1.msra.mxu0 0.0
    %421 = vmatprep.subr.mxu0 0.0
    %422 = vmatpush1.msra.mxu0 0.0
    %423 = vmatprep.subr.mxu0 0.0
    %424 = vmatpush1.msra.mxu0 0.0
    %425 = vmatprep.subr.mxu0 0.0
    %426 = vmatpush1.msra.mxu0 0.0
    %427 = vmatprep.subr.mxu0 0.0
    %428 = vmatpush1.msra.mxu0 0.0
    %429 = vmatprep.subr.mxu0 0.0
    %430 = vmatpush1.msra.mxu0 0.0
    %431 = vmatprep.subr.mxu0 0.0
    %432 = vmatpush1.msra.mxu0 0.0
    %433 = vmatprep.subr.mxu0 0.0
    %434 = vmatpush1.msra.mxu0 0.0
    %435 = vmatprep.subr.mxu0 0.0
    %436 = vmatpush1.msra.mxu0 0.0
    %437 = vmatprep.subr.mxu0 0.0
    %438 = vmatpush1.msra.mxu0 0.0
    %439 = vmatprep.subr.mxu0 0.0
    %440 = vmatpush1.msra.mxu0 0.0
    %441 = vmatprep.subr.mxu0 0.0
    %442 = vmatpush1.msra.mxu0 0.0
    %443 = vmatprep.subr.mxu0 0.0
    %444 = vmatpush1.msra.mxu0 0.0
    %445 = vmatprep.subr.mxu0 0.0
    %446 = vmatpush1.msra.mxu0 0.0
    %447 = vmatprep.subr.mxu0 0.0
    %448 = vmatpush1.msra.mxu0 0.0
    %449 = vmatprep.subr.mxu0 0.0
    %450 = vmatpush1.msra.mxu0 0.0
    %451 = vmatprep.subr.mxu0 0.0
    %452 = vmatpush1.msra.mxu0 0.0
    %453 = vmatprep.subr.mxu0 0.0
    %454 = vmatpush1.msra.mxu0 0.0
    %455 = vmatprep.subr.mxu0 0.0
    %456 = vmatpush1.msra.mxu0 0.0
    %457 = vmatprep.subr.mxu0 0.0
    %458 = vmatpush1.msra.mxu0 0.0
    %459 = vmatprep.subr.mxu0 0.0
    %460 = vmatpush1.msra.mxu0 0.0
    %461 = vmatprep.subr.mxu0 0.0
    %462 = vmatpush1.msra.mxu0 0.0
    %463 = vmatprep.subr.mxu0 0.0
    %464 = vmatpush1.msra.mxu0 0.0
    %465 = vmatprep.subr.mxu0 0.0
    %466 = vmatpush1.msra.mxu0 0.0
    %467 = vmatprep.subr.mxu0 0.0
    %468 = vmatpush1.msra.mxu0 0.0
    %469 = vmatprep.subr.mxu0 0.0
    %470 = vmatpush1.msra.mxu0 0.0
    %471 = vmatprep.subr.mxu0 0.0
    %472 = vmatpush1.msra.mxu0 0.0
    %473 = vmatprep.mubr.f32.mxu0 0.0
    %v474 = vand.u32 %v127, 4294901760
    %v475 = vsub.f32 %v127, %v474
    %v476 = vand.u32 %v475, 4294901760
    %477 = vmatmul.mubr.f32.gmra.mrb[0].mxu0 %v476
    %v478 = vpop.f32.mrb[0].mxu0
    %v479 = vadd.f32 %v395, %v478
    %v480 = vpop.f32.mrb[0].mxu0
    %481 = vmatprep.mubr.f32.mxu0 0.0
    %v482 = vand.u32 %v130, 4294901760
    %v483 = vsub.f32 %v130, %v482
    %v484 = vand.u32 %v483, 4294901760
    %485 = vmatmul.mubr.f32.gmra.mrb[0].mxu0 %v484
    %v486 = vpop.f32.mrb[0].mxu0
    %v487 = vadd.f32 %v402, %v486
    %v488 = vpop.f32.mrb[0].mxu0
    %489 = vdwg.mxu0
    %490 = vmatprep.subr.mxu0 0.0
    %v491 = vand.u32 %v42, 4294901760
    %v492 = vsub.f32 %v42, %v491
    %v493 = vand.u32 %v492, 4294901760
    %494 = vmatpush1.msra.mxu0 %v493
    %495 = vmatprep.subr.mxu0 0.0
    %v496 = vand.u32 %v43, 4294901760
    %v497 = vsub.f32 %v43, %v496
    %v498 = vand.u32 %v497, 4294901760
    %499 = vmatpush1.msra.mxu0 %v498
    %500 = vmatprep.subr.mxu0 0.0
    %v501 = vand.u32 %v44, 4294901760
    %v502 = vsub.f32 %v44, %v501
    %v503 = vand.u32 %v502, 4294901760
    %504 = vmatpush1.msra.mxu0 %v503
    %505 = vmatprep.subr.mxu0 0.0
    %v506 = vand.u32 %v45, 4294901760
    %v507 = vsub.f32 %v45, %v506
    %v508 = vand.u32 %v507, 4294901760
    %509 = vmatpush1.msra.mxu0 %v508
    %510 = vmatprep.subr.mxu0 0.0
    %511 = vmatpush1.msra.mxu0 0.0
    %512 = vmatprep.subr.mxu0 0.0
    %513 = vmatpush1.msra.mxu0 0.0
    %514 = vmatprep.subr.mxu0 0.0
    %515 = vmatpush1.msra.mxu0 0.0
    %516 = vmatprep.subr.mxu0 0.0
    %517 = vmatpush1.msra.mxu0 0.0
    %518 = vmatprep.subr.mxu0 0.0
    %519 = vmatpush1.msra.mxu0 0.0
    %520 = vmatprep.subr.mxu0 0.0
    %521 = vmatpush1.msra.mxu0 0.0
    %522 = vmatprep.subr.mxu0 0.0
    %523 = vmatpush1.msra.mxu0 0.0
    %524 = vmatprep.subr.mxu0 0.0
    %525 = vmatpush1.msra.mxu0 0.0
    %526 = vmatprep.subr.mxu0 0.0
    %527 = vmatpush1.msra.mxu0 0.0
    %528 = vmatprep.subr.mxu0 0.0
    %529 = vmatpush1.msra.mxu0 0.0
    %530 = vmatprep.subr.mxu0 0.0
    %531 = vmatpush1.msra.mxu0 0.0
    %532 = vmatprep.subr.mxu0 0.0
    %533 = vmatpush1.msra.mxu0 0.0
    %534 = vmatprep.subr.mxu0 0.0
    %535 = vmatpush1.msra.mxu0 0.0
    %536 = vmatprep.subr.mxu0 0.0
    %537 = vmatpush1.msra.mxu0 0.0
    %538 = vmatprep.subr.mxu0 0.0
    %539 = vmatpush1.msra.mxu0 0.0
    %540 = vmatprep.subr.mxu0 0.0
    %541 = vmatpush1.msra.mxu0 0.0
    %542 = vmatprep.subr.mxu0 0.0
    %543 = vmatpush1.msra.mxu0 0.0
    %544 = vmatprep.subr.mxu0 0.0
    %545 = vmatpush1.msra.mxu0 0.0
    %546 = vmatprep.subr.mxu0 0.0
    %547 = vmatpush1.msra.mxu0 0.0
    %548 = vmatprep.subr.mxu0 0.0
    %549 = vmatpush1.msra.mxu0 0.0
    %550 = vmatprep.subr.mxu0 0.0
    %551 = vmatpush1.msra.mxu0 0.0
    %552 = vmatprep.subr.mxu0 0.0
    %553 = vmatpush1.msra.mxu0 0.0
    %554 = vmatprep.subr.mxu0 0.0
    %555 = vmatpush1.msra.mxu0 0.0
    %556 = vmatprep.subr.mxu0 0.0
    %557 = vmatpush1.msra.mxu0 0.0
    %558 = vmatprep.subr.mxu0 0.0
    %559 = vmatpush1.msra.mxu0 0.0
    %560 = vmatprep.subr.mxu0 0.0
    %561 = vmatpush1.msra.mxu0 0.0
    %562 = vmatprep.subr.mxu0 0.0
    %563 = vmatpush1.msra.mxu0 0.0
    %564 = vmatprep.subr.mxu0 0.0
    %565 = vmatpush1.msra.mxu0 0.0
    %566 = vmatprep.mubr.f32.mxu0 0.0
    %v567 = vand.u32 %v127, 4294901760
    %568 = vmatmul.mubr.f32.gmra.mrb[0].mxu0 %v567
    %v569 = vpop.f32.mrb[0].mxu0
    %v570 = vadd.f32 %v479, %v569
    %v571 = vpop.f32.mrb[0].mxu0
    %572 = vmatprep.mubr.f32.mxu0 0.0
    %v573 = vand.u32 %v130, 4294901760
    %574 = vmatmul.mubr.f32.gmra.mrb[0].mxu0 %v573
    %v575 = vpop.f32.mrb[0].mxu0
    %v576 = vadd.f32 %v487, %v575
    %v577 = vpop.f32.mrb[0].mxu0
    %578 = vdwg.mxu0
    %579 = vmatprep.subr.mxu0 0.0
    %v580 = vand.u32 %v42, 4294901760
    %581 = vmatpush1.msra.mxu0 %v580
    %582 = vmatprep.subr.mxu0 0.0
    %v583 = vand.u32 %v43, 4294901760
    %584 = vmatpush1.msra.mxu0 %v583
    %585 = vmatprep.subr.mxu0 0.0
    %v586 = vand.u32 %v44, 4294901760
    %587 = vmatpush1.msra.mxu0 %v586
    %588 = vmatprep.subr.mxu0 0.0
    %v589 = vand.u32 %v45, 4294901760
    %590 = vmatpush1.msra.mxu0 %v589
    %591 = vmatprep.subr.mxu0 0.0
    %592 = vmatpush1.msra.mxu0 0.0
    %593 = vmatprep.subr.mxu0 0.0
    %594 = vmatpush1.msra.mxu0 0.0
    %595 = vmatprep.subr.mxu0 0.0
    %596 = vmatpush1.msra.mxu0 0.0
    %597 = vmatprep.subr.mxu0 0.0
    %598 = vmatpush1.msra.mxu0 0.0
    %599 = vmatprep.subr.mxu0 0.0
    %600 = vmatpush1.msra.mxu0 0.0
    %601 = vmatprep.subr.mxu0 0.0
    %602 = vmatpush1.msra.mxu0 0.0
    %603 = vmatprep.subr.mxu0 0.0
    %604 = vmatpush1.msra.mxu0 0.0
    %605 = vmatprep.subr.mxu0 0.0
    %606 = vmatpush1.msra.mxu0 0.0
    %607 = vmatprep.subr.mxu0 0.0
    %608 = vmatpush1.msra.mxu0 0.0
    %609 = vmatprep.subr.mxu0 0.0
    %610 = vmatpush1.msra.mxu0 0.0
    %611 = vmatprep.subr.mxu0 0.0
    %612 = vmatpush1.msra.mxu0 0.0
    %613 = vmatprep.subr.mxu0 0.0
    %614 = vmatpush1.msra.mxu0 0.0
    %615 = vmatprep.subr.mxu0 0.0
    %616 = vmatpush1.msra.mxu0 0.0
    %617 = vmatprep.subr.mxu0 0.0
    %618 = vmatpush1.msra.mxu0 0.0
    %619 = vmatprep.subr.mxu0 0.0
    %620 = vmatpush1.msra.mxu0 0.0
    %621 = vmatprep.subr.mxu0 0.0
    %622 = vmatpush1.msra.mxu0 0.0
    %623 = vmatprep.subr.mxu0 0.0
    %624 = vmatpush1.msra.mxu0 0.0
    %625 = vmatprep.subr.mxu0 0.0
    %626 = vmatpush1.msra.mxu0 0.0
    %627 = vmatprep.subr.mxu0 0.0
    %628 = vmatpush1.msra.mxu0 0.0
    %629 = vmatprep.subr.mxu0 0.0
    %630 = vmatpush1.msra.mxu0 0.0
    %631 = vmatprep.subr.mxu0 0.0
    %632 = vmatpush1.msra.mxu0 0.0
    %633 = vmatprep.subr.mxu0 0.0
    %634 = vmatpush1.msra.mxu0 0.0
    %635 = vmatprep.subr.mxu0 0.0
    %636 = vmatpush1.msra.mxu0 0.0
    %637 = vmatprep.subr.mxu0 0.0
    %638 = vmatpush1.msra.mxu0 0.0
    %639 = vmatprep.subr.mxu0 0.0
    %640 = vmatpush1.msra.mxu0 0.0
    %641 = vmatprep.subr.mxu0 0.0
    %642 = vmatpush1.msra.mxu0 0.0
    %643 = vmatprep.subr.mxu0 0.0
    %644 = vmatpush1.msra.mxu0 0.0
    %645 = vmatprep.subr.mxu0 0.0
    %646 = vmatpush1.msra.mxu0 0.0
    %647 = vmatprep.mubr.f32.mxu0 0.0
    %v648 = vand.u32 %v127, 4294901760
    %649 = vmatmul.mubr.f32.gmra.mrb[0].mxu0 %v648
    %v650 = vpop.f32.mrb[0].mxu0
    %v651 = vadd.f32 %v570, %v650
    %v652 = vpop.f32.mrb[0].mxu0
    %653 = vmatprep.mubr.f32.mxu0 0.0
    %v654 = vand.u32 %v130, 4294901760
    %655 = vmatmul.mubr.f32.gmra.mrb[0].mxu0 %v654
    %v656 = vpop.f32.mrb[0].mxu0
    %v657 = vadd.f32 %v576, %v656
    %v658 = vpop.f32.mrb[0].mxu0
    %659 = vdwg.mxu0
    %v660 = vlaneseq
    %v661 = vshrl.u32 %v660, 7
    %v662 = vsub.s32 0, %v661
    %v663 = vrot.slane %v78, %v662
    %664 = vmatprep.subr.mxu0 0.0
    %v665 = vand.u32 %v46, 4294901760
    %666 = vmatpush1.msra.mxu0 %v665
    %667 = vmatprep.subr.mxu0 0.0
    %v668 = vand.u32 %v47, 4294901760
    %669 = vmatpush1.msra.mxu0 %v668
    %670 = vmatprep.subr.mxu0 0.0
    %v671 = vand.u32 %v48, 4294901760
    %672 = vmatpush1.msra.mxu0 %v671
    %673 = vmatprep.subr.mxu0 0.0
    %v674 = vand.u32 %v49, 4294901760
    %675 = vmatpush1.msra.mxu0 %v674
    %676 = vmatprep.subr.mxu0 0.0
    %677 = vmatpush1.msra.mxu0 0.0
    %678 = vmatprep.subr.mxu0 0.0
    %679 = vmatpush1.msra.mxu0 0.0
    %680 = vmatprep.subr.mxu0 0.0
    %681 = vmatpush1.msra.mxu0 0.0
    %682 = vmatprep.subr.mxu0 0.0
    %683 = vmatpush1.msra.mxu0 0.0
    %684 = vmatprep.subr.mxu0 0.0
    %685 = vmatpush1.msra.mxu0 0.0
    %686 = vmatprep.subr.mxu0 0.0
    %687 = vmatpush1.msra.mxu0 0.0
    %688 = vmatprep.subr.mxu0 0.0
    %689 = vmatpush1.msra.mxu0 0.0
    %690 = vmatprep.subr.mxu0 0.0
    %691 = vmatpush1.msra.mxu0 0.0
    %692 = vmatprep.subr.mxu0 0.0
    %693 = vmatpush1.msra.mxu0 0.0
    %694 = vmatprep.subr.mxu0 0.0
    %695 = vmatpush1.msra.mxu0 0.0
    %696 = vmatprep.subr.mxu0 0.0
    %697 = vmatpush1.msra.mxu0 0.0
    %698 = vmatprep.subr.mxu0 0.0
    %699 = vmatpush1.msra.mxu0 0.0
    %700 = vmatprep.subr.mxu0 0.0
    %701 = vmatpush1.msra.mxu0 0.0
    %702 = vmatprep.subr.mxu0 0.0
    %703 = vmatpush1.msra.mxu0 0.0
    %704 = vmatprep.subr.mxu0 0.0
    %705 = vmatpush1.msra.mxu0 0.0
    %706 = vmatprep.subr.mxu0 0.0
    %707 = vmatpush1.msra.mxu0 0.0
    %708 = vmatprep.subr.mxu0 0.0
    %709 = vmatpush1.msra.mxu0 0.0
    %710 = vmatprep.subr.mxu0 0.0
    %711 = vmatpush1.msra.mxu0 0.0
    %712 = vmatprep.subr.mxu0 0.0
    %713 = vmatpush1.msra.mxu0 0.0
    %714 = vmatprep.subr.mxu0 0.0
    %715 = vmatpush1.msra.mxu0 0.0
    %716 = vmatprep.subr.mxu0 0.0
    %717 = vmatpush1.msra.mxu0 0.0
    %718 = vmatprep.subr.mxu0 0.0
    %719 = vmatpush1.msra.mxu0 0.0
    %720 = vmatprep.subr.mxu0 0.0
    %721 = vmatpush1.msra.mxu0 0.0
    %722 = vmatprep.subr.mxu0 0.0
    %723 = vmatpush1.msra.mxu0 0.0
    %724 = vmatprep.subr.mxu0 0.0
    %725 = vmatpush1.msra.mxu0 0.0
    %726 = vmatprep.subr.mxu0 0.0
    %727 = vmatpush1.msra.mxu0 0.0
    %728 = vmatprep.subr.mxu0 0.0
    %729 = vmatpush1.msra.mxu0 0.0
    %730 = vmatprep.subr.mxu0 0.0
    %731 = vmatpush1.msra.mxu0 0.0
    %732 = vmatprep.mubr.f32.mxu0 0.0
    %v733 = vand.u32 %v127, 4294901760
    %v734 = vsub.f32 %v127, %v733
    %v735 = vand.u32 %v734, 4294901760
    %v736 = vsub.f32 %v734, %v735
    %v737 = vand.u32 %v736, 4294901760
    %738 = vmatmul.mubr.f32.gmra.mrb[0].mxu0 %v737
    %v739 = vpop.f32.mrb[0].mxu0
    %v740 = vadd.f32 %v663, %v739
    %v741 = vpop.f32.mrb[0].mxu0
    %742 = vmatprep.mubr.f32.mxu0 0.0
    %v743 = vand.u32 %v130, 4294901760
    %v744 = vsub.f32 %v130, %v743
    %v745 = vand.u32 %v744, 4294901760
    %v746 = vsub.f32 %v744, %v745
    %v747 = vand.u32 %v746, 4294901760
    %748 = vmatmul.mubr.f32.gmra.mrb[0].mxu0 %v747
    %v749 = vpop.f32.mrb[0].mxu0
    %v750 = vadd.f32 %v663, %v749
    %v751 = vpop.f32.mrb[0].mxu0
    %752 = vdwg.mxu0
    %753 = vmatprep.subr.mxu0 0.0
    %v754 = vand.u32 %v46, 4294901760
    %v755 = vsub.f32 %v46, %v754
    %v756 = vand.u32 %v755, 4294901760
    %v757 = vsub.f32 %v755, %v756
    %v758 = vand.u32 %v757, 4294901760
    %759 = vmatpush1.msra.mxu0 %v758
    %760 = vmatprep.subr.mxu0 0.0
    %v761 = vand.u32 %v47, 4294901760
    %v762 = vsub.f32 %v47, %v761
    %v763 = vand.u32 %v762, 4294901760
    %v764 = vsub.f32 %v762, %v763
    %v765 = vand.u32 %v764, 4294901760
    %766 = vmatpush1.msra.mxu0 %v765
    %767 = vmatprep.subr.mxu0 0.0
    %v768 = vand.u32 %v48, 4294901760
    %v769 = vsub.f32 %v48, %v768
    %v770 = vand.u32 %v769, 4294901760
    %v771 = vsub.f32 %v769, %v770
    %v772 = vand.u32 %v771, 4294901760
    %773 = vmatpush1.msra.mxu0 %v772
    %774 = vmatprep.subr.mxu0 0.0
    %v775 = vand.u32 %v49, 4294901760
    %v776 = vsub.f32 %v49, %v775
    %v777 = vand.u32 %v776, 4294901760
    %v778 = vsub.f32 %v776, %v777
    %v779 = vand.u32 %v778, 4294901760
    %780 = vmatpush1.msra.mxu0 %v779
    %781 = vmatprep.subr.mxu0 0.0
    %782 = vmatpush1.msra.mxu0 0.0
    %783 = vmatprep.subr.mxu0 0.0
    %784 = vmatpush1.msra.mxu0 0.0
    %785 = vmatprep.subr.mxu0 0.0
    %786 = vmatpush1.msra.mxu0 0.0
    %787 = vmatprep.subr.mxu0 0.0
    %788 = vmatpush1.msra.mxu0 0.0
    %789 = vmatprep.subr.mxu0 0.0
    %790 = vmatpush1.msra.mxu0 0.0
    %791 = vmatprep.subr.mxu0 0.0
    %792 = vmatpush1.msra.mxu0 0.0
    %793 = vmatprep.subr.mxu0 0.0
    %794 = vmatpush1.msra.mxu0 0.0
    %795 = vmatprep.subr.mxu0 0.0
    %796 = vmatpush1.msra.mxu0 0.0
    %797 = vmatprep.subr.mxu0 0.0
    %798 = vmatpush1.msra.mxu0 0.0
    %799 = vmatprep.subr.mxu0 0.0
    %800 = vmatpush1.msra.mxu0 0.0
    %801 = vmatprep.subr.mxu0 0.0
    %802 = vmatpush1.msra.mxu0 0.0
    %803 = vmatprep.subr.mxu0 0.0
    %804 = vmatpush1.msra.mxu0 0.0
    %805 = vmatprep.subr.mxu0 0.0
    %806 = vmatpush1.msra.mxu0 0.0
    %807 = vmatprep.subr.mxu0 0.0
    %808 = vmatpush1.msra.mxu0 0.0
    %809 = vmatprep.subr.mxu0 0.0
    %810 = vmatpush1.msra.mxu0 0.0
    %811 = vmatprep.subr.mxu0 0.0
    %812 = vmatpush1.msra.mxu0 0.0
    %813 = vmatprep.subr.mxu0 0.0
    %814 = vmatpush1.msra.mxu0 0.0
    %815 = vmatprep.subr.mxu0 0.0
    %816 = vmatpush1.msra.mxu0 0.0
    %817 = vmatprep.subr.mxu0 0.0
    %818 = vmatpush1.msra.mxu0 0.0
    %819 = vmatprep.subr.mxu0 0.0
    %820 = vmatpush1.msra.mxu0 0.0
    %821 = vmatprep.subr.mxu0 0.0
    %822 = vmatpush1.msra.mxu0 0.0
    %823 = vmatprep.subr.mxu0 0.0
    %824 = vmatpush1.msra.mxu0 0.0
    %825 = vmatprep.subr.mxu0 0.0
    %826 = vmatpush1.msra.mxu0 0.0
    %827 = vmatprep.subr.mxu0 0.0
    %828 = vmatpush1.msra.mxu0 0.0
    %829 = vmatprep.subr.mxu0 0.0
    %830 = vmatpush1.msra.mxu0 0.0
    %831 = vmatprep.subr.mxu0 0.0
    %832 = vmatpush1.msra.mxu0 0.0
    %833 = vmatprep.subr.mxu0 0.0
    %834 = vmatpush1.msra.mxu0 0.0
    %835 = vmatprep.subr.mxu0 0.0
    %836 = vmatpush1.msra.mxu0 0.0
    %837 = vmatprep.mubr.f32.mxu0 0.0
    %v838 = vand.u32 %v127, 4294901760
    %839 = vmatmul.mubr.f32.gmra.mrb[0].mxu0 %v838
    %v840 = vpop.f32.mrb[0].mxu0
    %v841 = vadd.f32 %v740, %v840
    %v842 = vpop.f32.mrb[0].mxu0
    %843 = vmatprep.mubr.f32.mxu0 0.0
    %v844 = vand.u32 %v130, 4294901760
    %845 = vmatmul.mubr.f32.gmra.mrb[0].mxu0 %v844
    %v846 = vpop.f32.mrb[0].mxu0
    %v847 = vadd.f32 %v750, %v846
    %v848 = vpop.f32.mrb[0].mxu0
    %849 = vdwg.mxu0
    %850 = vmatprep.subr.mxu0 0.0
    %v851 = vand.u32 %v46, 4294901760
    %v852 = vsub.f32 %v46, %v851
    %853 = vmatpush1.msra.mxu0 %v852
    %854 = vmatprep.subr.mxu0 0.0
    %v855 = vand.u32 %v47, 4294901760
    %v856 = vsub.f32 %v47, %v855
    %857 = vmatpush1.msra.mxu0 %v856
    %858 = vmatprep.subr.mxu0 0.0
    %v859 = vand.u32 %v48, 4294901760
    %v860 = vsub.f32 %v48, %v859
    %861 = vmatpush1.msra.mxu0 %v860
    %862 = vmatprep.subr.mxu0 0.0
    %v863 = vand.u32 %v49, 4294901760
    %v864 = vsub.f32 %v49, %v863
    %865 = vmatpush1.msra.mxu0 %v864
    %866 = vmatprep.subr.mxu0 0.0
    %867 = vmatpush1.msra.mxu0 0.0
    %868 = vmatprep.subr.mxu0 0.0
    %869 = vmatpush1.msra.mxu0 0.0
    %870 = vmatprep.subr.mxu0 0.0
    %871 = vmatpush1.msra.mxu0 0.0
    %872 = vmatprep.subr.mxu0 0.0
    %873 = vmatpush1.msra.mxu0 0.0
    %874 = vmatprep.subr.mxu0 0.0
    %875 = vmatpush1.msra.mxu0 0.0
    %876 = vmatprep.subr.mxu0 0.0
    %877 = vmatpush1.msra.mxu0 0.0
    %878 = vmatprep.subr.mxu0 0.0
    %879 = vmatpush1.msra.mxu0 0.0
    %880 = vmatprep.subr.mxu0 0.0
    %881 = vmatpush1.msra.mxu0 0.0
    %882 = vmatprep.subr.mxu0 0.0
    %883 = vmatpush1.msra.mxu0 0.0
    %884 = vmatprep.subr.mxu0 0.0
    %885 = vmatpush1.msra.mxu0 0.0
    %886 = vmatprep.subr.mxu0 0.0
    %887 = vmatpush1.msra.mxu0 0.0
    %888 = vmatprep.subr.mxu0 0.0
    %889 = vmatpush1.msra.mxu0 0.0
    %890 = vmatprep.subr.mxu0 0.0
    %891 = vmatpush1.msra.mxu0 0.0
    %892 = vmatprep.subr.mxu0 0.0
    %893 = vmatpush1.msra.mxu0 0.0
    %894 = vmatprep.subr.mxu0 0.0
    %895 = vmatpush1.msra.mxu0 0.0
    %896 = vmatprep.subr.mxu0 0.0
    %897 = vmatpush1.msra.mxu0 0.0
    %898 = vmatprep.subr.mxu0 0.0
    %899 = vmatpush1.msra.mxu0 0.0
    %900 = vmatprep.subr.mxu0 0.0
    %901 = vmatpush1.msra.mxu0 0.0
    %902 = vmatprep.subr.mxu0 0.0
    %903 = vmatpush1.msra.mxu0 0.0
    %904 = vmatprep.subr.mxu0 0.0
    %905 = vmatpush1.msra.mxu0 0.0
    %906 = vmatprep.subr.mxu0 0.0
    %907 = vmatpush1.msra.mxu0 0.0
    %908 = vmatprep.subr.mxu0 0.0
    %909 = vmatpush1.msra.mxu0 0.0
    %910 = vmatprep.subr.mxu0 0.0
    %911 = vmatpush1.msra.mxu0 0.0
    %912 = vmatprep.subr.mxu0 0.0
    %913 = vmatpush1.msra.mxu0 0.0
    %914 = vmatprep.subr.mxu0 0.0
    %915 = vmatpush1.msra.mxu0 0.0
    %916 = vmatprep.subr.mxu0 0.0
    %917 = vmatpush1.msra.mxu0 0.0
    %918 = vmatprep.subr.mxu0 0.0
    %919 = vmatpush1.msra.mxu0 0.0
    %920 = vmatprep.subr.mxu0 0.0
    %921 = vmatpush1.msra.mxu0 0.0
    %922 = vmatprep.mubr.f32.mxu0 0.0
    %v923 = vand.u32 %v127, 4294901760
    %v924 = vsub.f32 %v127, %v923
    %925 = vmatmul.mubr.f32.gmra.mrb[0].mxu0 %v924
    %v926 = vpop.f32.mrb[0].mxu0
    %v927 = vadd.f32 %v841, %v926
    %v928 = vpop.f32.mrb[0].mxu0
    %929 = vmatprep.mubr.f32.mxu0 0.0
    %v930 = vand.u32 %v130, 4294901760
    %v931 = vsub.f32 %v130, %v930
    %932 = vmatmul.mubr.f32.gmra.mrb[0].mxu0 %v931
    %v933 = vpop.f32.mrb[0].mxu0
    %v934 = vadd.f32 %v847, %v933
    %v935 = vpop.f32.mrb[0].mxu0
    %936 = vdwg.mxu0
    %937 = vmatprep.subr.mxu0 0.0
    %v938 = vand.u32 %v46, 4294901760
    %939 = vmatpush1.msra.mxu0 %v938
    %940 = vmatprep.subr.mxu0 0.0
    %v941 = vand.u32 %v47, 4294901760
    %942 = vmatpush1.msra.mxu0 %v941
    %943 = vmatprep.subr.mxu0 0.0
    %v944 = vand.u32 %v48, 4294901760
    %945 = vmatpush1.msra.mxu0 %v944
    %946 = vmatprep.subr.mxu0 0.0
    %v947 = vand.u32 %v49, 4294901760
    %948 = vmatpush1.msra.mxu0 %v947
    %949 = vmatprep.subr.mxu0 0.0
    %950 = vmatpush1.msra.mxu0 0.0
    %951 = vmatprep.subr.mxu0 0.0
    %952 = vmatpush1.msra.mxu0 0.0
    %953 = vmatprep.subr.mxu0 0.0
    %954 = vmatpush1.msra.mxu0 0.0
    %955 = vmatprep.subr.mxu0 0.0
    %956 = vmatpush1.msra.mxu0 0.0
    %957 = vmatprep.subr.mxu0 0.0
    %958 = vmatpush1.msra.mxu0 0.0
    %959 = vmatprep.subr.mxu0 0.0
    %960 = vmatpush1.msra.mxu0 0.0
    %961 = vmatprep.subr.mxu0 0.0
    %962 = vmatpush1.msra.mxu0 0.0
    %963 = vmatprep.subr.mxu0 0.0
    %964 = vmatpush1.msra.mxu0 0.0
    %965 = vmatprep.subr.mxu0 0.0
    %966 = vmatpush1.msra.mxu0 0.0
    %967 = vmatprep.subr.mxu0 0.0
    %968 = vmatpush1.msra.mxu0 0.0
    %969 = vmatprep.subr.mxu0 0.0
    %970 = vmatpush1.msra.mxu0 0.0
    %971 = vmatprep.subr.mxu0 0.0
    %972 = vmatpush1.msra.mxu0 0.0
    %973 = vmatprep.subr.mxu0 0.0
    %974 = vmatpush1.msra.mxu0 0.0
    %975 = vmatprep.subr.mxu0 0.0
    %976 = vmatpush1.msra.mxu0 0.0
    %977 = vmatprep.subr.mxu0 0.0
    %978 = vmatpush1.msra.mxu0 0.0
    %979 = vmatprep.subr.mxu0 0.0
    %980 = vmatpush1.msra.mxu0 0.0
    %981 = vmatprep.subr.mxu0 0.0
    %982 = vmatpush1.msra.mxu0 0.0
    %983 = vmatprep.subr.mxu0 0.0
    %984 = vmatpush1.msra.mxu0 0.0
    %985 = vmatprep.subr.mxu0 0.0
    %986 = vmatpush1.msra.mxu0 0.0
    %987 = vmatprep.subr.mxu0 0.0
    %988 = vmatpush1.msra.mxu0 0.0
    %989 = vmatprep.subr.mxu0 0.0
    %990 = vmatpush1.msra.mxu0 0.0
    %991 = vmatprep.subr.mxu0 0.0
    %992 = vmatpush1.msra.mxu0 0.0
    %993 = vmatprep.subr.mxu0 0.0
    %994 = vmatpush1.msra.mxu0 0.0
    %995 = vmatprep.subr.mxu0 0.0
    %996 = vmatpush1.msra.mxu0 0.0
    %997 = vmatprep.subr.mxu0 0.0
    %998 = vmatpush1.msra.mxu0 0.0
    %999 = vmatprep.subr.mxu0 0.0
    %1000 = vmatpush1.msra.mxu0 0.0
    %1001 = vmatprep.subr.mxu0 0.0
    %1002 = vmatpush1.msra.mxu0 0.0
    %1003 = vmatprep.subr.mxu0 0.0
    %1004 = vmatpush1.msra.mxu0 0.0
    %1005 = vmatprep.mubr.f32.mxu0 0.0
    %v1006 = vand.u32 %v127, 4294901760
    %v1007 = vsub.f32 %v127, %v1006
    %v1008 = vand.u32 %v1007, 4294901760
    %1009 = vmatmul.mubr.f32.gmra.mrb[0].mxu0 %v1008
    %v1010 = vpop.f32.mrb[0].mxu0
    %v1011 = vadd.f32 %v927, %v1010
    %v1012 = vpop.f32.mrb[0].mxu0
    %1013 = vmatprep.mubr.f32.mxu0 0.0
    %v1014 = vand.u32 %v130, 4294901760
    %v1015 = vsub.f32 %v130, %v1014
    %v1016 = vand.u32 %v1015, 4294901760
    %1017 = vmatmul.mubr.f32.gmra.mrb[0].mxu0 %v1016
    %v1018 = vpop.f32.mrb[0].mxu0
    %v1019 = vadd.f32 %v934, %v1018
    %v1020 = vpop.f32.mrb[0].mxu0
    %1021 = vdwg.mxu0
    %1022 = vmatprep.subr.mxu0 0.0
    %v1023 = vand.u32 %v46, 4294901760
    %v1024 = vsub.f32 %v46, %v1023
    %v1025 = vand.u32 %v1024, 4294901760
    %1026 = vmatpush1.msra.mxu0 %v1025
    %1027 = vmatprep.subr.mxu0 0.0
    %v1028 = vand.u32 %v47, 4294901760
    %v1029 = vsub.f32 %v47, %v1028
    %v1030 = vand.u32 %v1029, 4294901760
    %1031 = vmatpush1.msra.mxu0 %v1030
    %1032 = vmatprep.subr.mxu0 0.0
    %v1033 = vand.u32 %v48, 4294901760
    %v1034 = vsub.f32 %v48, %v1033
    %v1035 = vand.u32 %v1034, 4294901760
    %1036 = vmatpush1.msra.mxu0 %v1035
    %1037 = vmatprep.subr.mxu0 0.0
    %v1038 = vand.u32 %v49, 4294901760
    %v1039 = vsub.f32 %v49, %v1038
    %v1040 = vand.u32 %v1039, 4294901760
    %1041 = vmatpush1.msra.mxu0 %v1040
    %1042 = vmatprep.subr.mxu0 0.0
    %1043 = vmatpush1.msra.mxu0 0.0
    %1044 = vmatprep.subr.mxu0 0.0
    %1045 = vmatpush1.msra.mxu0 0.0
    %1046 = vmatprep.subr.mxu0 0.0
    %1047 = vmatpush1.msra.mxu0 0.0
    %1048 = vmatprep.subr.mxu0 0.0
    %1049 = vmatpush1.msra.mxu0 0.0
    %1050 = vmatprep.subr.mxu0 0.0
    %1051 = vmatpush1.msra.mxu0 0.0
    %1052 = vmatprep.subr.mxu0 0.0
    %1053 = vmatpush1.msra.mxu0 0.0
    %1054 = vmatprep.subr.mxu0 0.0
    %1055 = vmatpush1.msra.mxu0 0.0
    %1056 = vmatprep.subr.mxu0 0.0
    %1057 = vmatpush1.msra.mxu0 0.0
    %1058 = vmatprep.subr.mxu0 0.0
    %1059 = vmatpush1.msra.mxu0 0.0
    %1060 = vmatprep.subr.mxu0 0.0
    %1061 = vmatpush1.msra.mxu0 0.0
    %1062 = vmatprep.subr.mxu0 0.0
    %1063 = vmatpush1.msra.mxu0 0.0
    %1064 = vmatprep.subr.mxu0 0.0
    %1065 = vmatpush1.msra.mxu0 0.0
    %1066 = vmatprep.subr.mxu0 0.0
    %1067 = vmatpush1.msra.mxu0 0.0
    %1068 = vmatprep.subr.mxu0 0.0
    %1069 = vmatpush1.msra.mxu0 0.0
    %1070 = vmatprep.subr.mxu0 0.0
    %1071 = vmatpush1.msra.mxu0 0.0
    %1072 = vmatprep.subr.mxu0 0.0
    %1073 = vmatpush1.msra.mxu0 0.0
    %1074 = vmatprep.subr.mxu0 0.0
    %1075 = vmatpush1.msra.mxu0 0.0
    %1076 = vmatprep.subr.mxu0 0.0
    %1077 = vmatpush1.msra.mxu0 0.0
    %1078 = vmatprep.subr.mxu0 0.0
    %1079 = vmatpush1.msra.mxu0 0.0
    %1080 = vmatprep.subr.mxu0 0.0
    %1081 = vmatpush1.msra.mxu0 0.0
    %1082 = vmatprep.subr.mxu0 0.0
    %1083 = vmatpush1.msra.mxu0 0.0
    %1084 = vmatprep.subr.mxu0 0.0
    %1085 = vmatpush1.msra.mxu0 0.0
    %1086 = vmatprep.subr.mxu0 0.0
    %1087 = vmatpush1.msra.mxu0 0.0
    %1088 = vmatprep.subr.mxu0 0.0
    %1089 = vmatpush1.msra.mxu0 0.0
    %1090 = vmatprep.subr.mxu0 0.0
    %1091 = vmatpush1.msra.mxu0 0.0
    %1092 = vmatprep.subr.mxu0 0.0
    %1093 = vmatpush1.msra.mxu0 0.0
    %1094 = vmatprep.subr.mxu0 0.0
    %1095 = vmatpush1.msra.mxu0 0.0
    %1096 = vmatprep.subr.mxu0 0.0
    %1097 = vmatpush1.msra.mxu0 0.0
    %1098 = vmatprep.mubr.f32.mxu0 0.0
    %v1099 = vand.u32 %v127, 4294901760
    %1100 = vmatmul.mubr.f32.gmra.mrb[0].mxu0 %v1099
    %v1101 = vpop.f32.mrb[0].mxu0
    %v1102 = vadd.f32 %v1011, %v1101
    %v1103 = vpop.f32.mrb[0].mxu0
    %1104 = vmatprep.mubr.f32.mxu0 0.0
    %v1105 = vand.u32 %v130, 4294901760
    %1106 = vmatmul.mubr.f32.gmra.mrb[0].mxu0 %v1105
    %v1107 = vpop.f32.mrb[0].mxu0
    %v1108 = vadd.f32 %v1019, %v1107
    %v1109 = vpop.f32.mrb[0].mxu0
    %1110 = vdwg.mxu0
    %1111 = vmatprep.subr.mxu0 0.0
    %v1112 = vand.u32 %v46, 4294901760
    %1113 = vmatpush1.msra.mxu0 %v1112
    %1114 = vmatprep.subr.mxu0 0.0
    %v1115 = vand.u32 %v47, 4294901760
    %1116 = vmatpush1.msra.mxu0 %v1115
    %1117 = vmatprep.subr.mxu0 0.0
    %v1118 = vand.u32 %v48, 4294901760
    %1119 = vmatpush1.msra.mxu0 %v1118
    %1120 = vmatprep.subr.mxu0 0.0
    %v1121 = vand.u32 %v49, 4294901760
    %1122 = vmatpush1.msra.mxu0 %v1121
    %1123 = vmatprep.subr.mxu0 0.0
    %1124 = vmatpush1.msra.mxu0 0.0
    %1125 = vmatprep.subr.mxu0 0.0
    %1126 = vmatpush1.msra.mxu0 0.0
    %1127 = vmatprep.subr.mxu0 0.0
    %1128 = vmatpush1.msra.mxu0 0.0
    %1129 = vmatprep.subr.mxu0 0.0
    %1130 = vmatpush1.msra.mxu0 0.0
    %1131 = vmatprep.subr.mxu0 0.0
    %1132 = vmatpush1.msra.mxu0 0.0
    %1133 = vmatprep.subr.mxu0 0.0
    %1134 = vmatpush1.msra.mxu0 0.0
    %1135 = vmatprep.subr.mxu0 0.0
    %1136 = vmatpush1.msra.mxu0 0.0
    %1137 = vmatprep.subr.mxu0 0.0
    %1138 = vmatpush1.msra.mxu0 0.0
    %1139 = vmatprep.subr.mxu0 0.0
    %1140 = vmatpush1.msra.mxu0 0.0
    %1141 = vmatprep.subr.mxu0 0.0
    %1142 = vmatpush1.msra.mxu0 0.0
    %1143 = vmatprep.subr.mxu0 0.0
    %1144 = vmatpush1.msra.mxu0 0.0
    %1145 = vmatprep.subr.mxu0 0.0
    %1146 = vmatpush1.msra.mxu0 0.0
    %1147 = vmatprep.subr.mxu0 0.0
    %1148 = vmatpush1.msra.mxu0 0.0
    %1149 = vmatprep.subr.mxu0 0.0
    %1150 = vmatpush1.msra.mxu0 0.0
    %1151 = vmatprep.subr.mxu0 0.0
    %1152 = vmatpush1.msra.mxu0 0.0
    %1153 = vmatprep.subr.mxu0 0.0
    %1154 = vmatpush1.msra.mxu0 0.0
    %1155 = vmatprep.subr.mxu0 0.0
    %1156 = vmatpush1.msra.mxu0 0.0
    %1157 = vmatprep.subr.mxu0 0.0
    %1158 = vmatpush1.msra.mxu0 0.0
    %1159 = vmatprep.subr.mxu0 0.0
    %1160 = vmatpush1.msra.mxu0 0.0
    %1161 = vmatprep.subr.mxu0 0.0
    %1162 = vmatpush1.msra.mxu0 0.0
    %1163 = vmatprep.subr.mxu0 0.0
    %1164 = vmatpush1.msra.mxu0 0.0
    %1165 = vmatprep.subr.mxu0 0.0
    %1166 = vmatpush1.msra.mxu0 0.0
    %1167 = vmatprep.subr.mxu0 0.0
    %1168 = vmatpush1.msra.mxu0 0.0
    %1169 = vmatprep.subr.mxu0 0.0
    %1170 = vmatpush1.msra.mxu0 0.0
    %1171 = vmatprep.subr.mxu0 0.0
    %1172 = vmatpush1.msra.mxu0 0.0
    %1173 = vmatprep.subr.mxu0 0.0
    %1174 = vmatpush1.msra.mxu0 0.0
    %1175 = vmatprep.subr.mxu0 0.0
    %1176 = vmatpush1.msra.mxu0 0.0
    %1177 = vmatprep.subr.mxu0 0.0
    %1178 = vmatpush1.msra.mxu0 0.0
    %1179 = vmatprep.mubr.f32.mxu0 0.0
    %v1180 = vand.u32 %v127, 4294901760
    %1181 = vmatmul.mubr.f32.gmra.mrb[0].mxu0 %v1180
    %v1182 = vpop.f32.mrb[0].mxu0
    %v1183 = vadd.f32 %v1102, %v1182
    %v1184 = vpop.f32.mrb[0].mxu0
    %1185 = vmatprep.mubr.f32.mxu0 0.0
    %v1186 = vand.u32 %v130, 4294901760
    %1187 = vmatmul.mubr.f32.gmra.mrb[0].mxu0 %v1186
    %v1188 = vpop.f32.mrb[0].mxu0
    %v1189 = vadd.f32 %v1108, %v1188
    %v1190 = vpop.f32.mrb[0].mxu0
    %1191 = vdwg.mxu0
    %v1192 = vlaneseq
    %v1193 = vshrl.u32 %v1192, 7
    %v1194 = vsub.s32 0, %v1193
    %v1195 = vrot.slane %v79, %v1194
    %1196 = vmatprep.subr.mxu0 0.0
    %v1197 = vand.u32 %v50, 4294901760
    %1198 = vmatpush1.msra.mxu0 %v1197
    %1199 = vmatprep.subr.mxu0 0.0
    %v1200 = vand.u32 %v51, 4294901760
    %1201 = vmatpush1.msra.mxu0 %v1200
    %1202 = vmatprep.subr.mxu0 0.0
    %v1203 = vand.u32 %v52, 4294901760
    %1204 = vmatpush1.msra.mxu0 %v1203
    %1205 = vmatprep.subr.mxu0 0.0
    %v1206 = vand.u32 %v53, 4294901760
    %1207 = vmatpush1.msra.mxu0 %v1206
    %1208 = vmatprep.subr.mxu0 0.0
    %1209 = vmatpush1.msra.mxu0 0.0
    %1210 = vmatprep.subr.mxu0 0.0
    %1211 = vmatpush1.msra.mxu0 0.0
    %1212 = vmatprep.subr.mxu0 0.0
    %1213 = vmatpush1.msra.mxu0 0.0
    %1214 = vmatprep.subr.mxu0 0.0
    %1215 = vmatpush1.msra.mxu0 0.0
    %1216 = vmatprep.subr.mxu0 0.0
    %1217 = vmatpush1.msra.mxu0 0.0
    %1218 = vmatprep.subr.mxu0 0.0
    %1219 = vmatpush1.msra.mxu0 0.0
    %1220 = vmatprep.subr.mxu0 0.0
    %1221 = vmatpush1.msra.mxu0 0.0
    %1222 = vmatprep.subr.mxu0 0.0
    %1223 = vmatpush1.msra.mxu0 0.0
    %1224 = vmatprep.subr.mxu0 0.0
    %1225 = vmatpush1.msra.mxu0 0.0
    %1226 = vmatprep.subr.mxu0 0.0
    %1227 = vmatpush1.msra.mxu0 0.0
    %1228 = vmatprep.subr.mxu0 0.0
    %1229 = vmatpush1.msra.mxu0 0.0
    %1230 = vmatprep.subr.mxu0 0.0
    %1231 = vmatpush1.msra.mxu0 0.0
    %1232 = vmatprep.subr.mxu0 0.0
    %1233 = vmatpush1.msra.mxu0 0.0
    %1234 = vmatprep.subr.mxu0 0.0
    %1235 = vmatpush1.msra.mxu0 0.0
    %1236 = vmatprep.subr.mxu0 0.0
    %1237 = vmatpush1.msra.mxu0 0.0
    %1238 = vmatprep.subr.mxu0 0.0
    %1239 = vmatpush1.msra.mxu0 0.0
    %1240 = vmatprep.subr.mxu0 0.0
    %1241 = vmatpush1.msra.mxu0 0.0
    %1242 = vmatprep.subr.mxu0 0.0
    %1243 = vmatpush1.msra.mxu0 0.0
    %1244 = vmatprep.subr.mxu0 0.0
    %1245 = vmatpush1.msra.mxu0 0.0
    %1246 = vmatprep.subr.mxu0 0.0
    %1247 = vmatpush1.msra.mxu0 0.0
    %1248 = vmatprep.subr.mxu0 0.0
    %1249 = vmatpush1.msra.mxu0 0.0
    %1250 = vmatprep.subr.mxu0 0.0
    %1251 = vmatpush1.msra.mxu0 0.0
    %1252 = vmatprep.subr.mxu0 0.0
    %1253 = vmatpush1.msra.mxu0 0.0
    %1254 = vmatprep.subr.mxu0 0.0
    %1255 = vmatpush1.msra.mxu0 0.0
    %1256 = vmatprep.subr.mxu0 0.0
    %1257 = vmatpush1.msra.mxu0 0.0
    %1258 = vmatprep.subr.mxu0 0.0
    %1259 = vmatpush1.msra.mxu0 0.0
    %1260 = vmatprep.subr.mxu0 0.0
    %1261 = vmatpush1.msra.mxu0 0.0
    %1262 = vmatprep.subr.mxu0 0.0
    %1263 = vmatpush1.msra.mxu0 0.0
    %1264 = vmatprep.mubr.f32.mxu0 0.0
    %v1265 = vand.u32 %v127, 4294901760
    %v1266 = vsub.f32 %v127, %v1265
    %v1267 = vand.u32 %v1266, 4294901760
    %v1268 = vsub.f32 %v1266, %v1267
    %v1269 = vand.u32 %v1268, 4294901760
    %1270 = vmatmul.mubr.f32.gmra.mrb[0].mxu0 %v1269
    %v1271 = vpop.f32.mrb[0].mxu0
    %v1272 = vadd.f32 %v1195, %v1271
    %v1273 = vpop.f32.mrb[0].mxu0
    %1274 = vmatprep.mubr.f32.mxu0 0.0
    %v1275 = vand.u32 %v130, 4294901760
    %v1276 = vsub.f32 %v130, %v1275
    %v1277 = vand.u32 %v1276, 4294901760
    %v1278 = vsub.f32 %v1276, %v1277
    %v1279 = vand.u32 %v1278, 4294901760
    %1280 = vmatmul.mubr.f32.gmra.mrb[0].mxu0 %v1279
    %v1281 = vpop.f32.mrb[0].mxu0
    %v1282 = vadd.f32 %v1195, %v1281
    %v1283 = vpop.f32.mrb[0].mxu0
    %1284 = vdwg.mxu0
    %1285 = vmatprep.subr.mxu0 0.0
    %v1286 = vand.u32 %v50, 4294901760
    %v1287 = vsub.f32 %v50, %v1286
    %v1288 = vand.u32 %v1287, 4294901760
    %v1289 = vsub.f32 %v1287, %v1288
    %v1290 = vand.u32 %v1289, 4294901760
    %1291 = vmatpush1.msra.mxu0 %v1290
    %1292 = vmatprep.subr.mxu0 0.0
    %v1293 = vand.u32 %v51, 4294901760
    %v1294 = vsub.f32 %v51, %v1293
    %v1295 = vand.u32 %v1294, 4294901760
    %v1296 = vsub.f32 %v1294, %v1295
    %v1297 = vand.u32 %v1296, 4294901760
    %1298 = vmatpush1.msra.mxu0 %v1297
    %1299 = vmatprep.subr.mxu0 0.0
    %v1300 = vand.u32 %v52, 4294901760
    %v1301 = vsub.f32 %v52, %v1300
    %v1302 = vand.u32 %v1301, 4294901760
    %v1303 = vsub.f32 %v1301, %v1302
    %v1304 = vand.u32 %v1303, 4294901760
    %1305 = vmatpush1.msra.mxu0 %v1304
    %1306 = vmatprep.subr.mxu0 0.0
    %v1307 = vand.u32 %v53, 4294901760
    %v1308 = vsub.f32 %v53, %v1307
    %v1309 = vand.u32 %v1308, 4294901760
    %v1310 = vsub.f32 %v1308, %v1309
    %v1311 = vand.u32 %v1310, 4294901760
    %1312 = vmatpush1.msra.mxu0 %v1311
    %1313 = vmatprep.subr.mxu0 0.0
    %1314 = vmatpush1.msra.mxu0 0.0
    %1315 = vmatprep.subr.mxu0 0.0
    %1316 = vmatpush1.msra.mxu0 0.0
    %1317 = vmatprep.subr.mxu0 0.0
    %1318 = vmatpush1.msra.mxu0 0.0
    %1319 = vmatprep.subr.mxu0 0.0
    %1320 = vmatpush1.msra.mxu0 0.0
    %1321 = vmatprep.subr.mxu0 0.0
    %1322 = vmatpush1.msra.mxu0 0.0
    %1323 = vmatprep.subr.mxu0 0.0
    %1324 = vmatpush1.msra.mxu0 0.0
    %1325 = vmatprep.subr.mxu0 0.0
    %1326 = vmatpush1.msra.mxu0 0.0
    %1327 = vmatprep.subr.mxu0 0.0
    %1328 = vmatpush1.msra.mxu0 0.0
    %1329 = vmatprep.subr.mxu0 0.0
    %1330 = vmatpush1.msra.mxu0 0.0
    %1331 = vmatprep.subr.mxu0 0.0
    %1332 = vmatpush1.msra.mxu0 0.0
    %1333 = vmatprep.subr.mxu0 0.0
    %1334 = vmatpush1.msra.mxu0 0.0
    %1335 = vmatprep.subr.mxu0 0.0
    %1336 = vmatpush1.msra.mxu0 0.0
    %1337 = vmatprep.subr.mxu0 0.0
    %1338 = vmatpush1.msra.mxu0 0.0
    %1339 = vmatprep.subr.mxu0 0.0
    %1340 = vmatpush1.msra.mxu0 0.0
    %1341 = vmatprep.subr.mxu0 0.0
    %1342 = vmatpush1.msra.mxu0 0.0
    %1343 = vmatprep.subr.mxu0 0.0
    %1344 = vmatpush1.msra.mxu0 0.0
    %1345 = vmatprep.subr.mxu0 0.0
    %1346 = vmatpush1.msra.mxu0 0.0
    %1347 = vmatprep.subr.mxu0 0.0
    %1348 = vmatpush1.msra.mxu0 0.0
    %1349 = vmatprep.subr.mxu0 0.0
    %1350 = vmatpush1.msra.mxu0 0.0
    %1351 = vmatprep.subr.mxu0 0.0
    %1352 = vmatpush1.msra.mxu0 0.0
    %1353 = vmatprep.subr.mxu0 0.0
    %1354 = vmatpush1.msra.mxu0 0.0
    %1355 = vmatprep.subr.mxu0 0.0
    %1356 = vmatpush1.msra.mxu0 0.0
    %1357 = vmatprep.subr.mxu0 0.0
    %1358 = vmatpush1.msra.mxu0 0.0
    %1359 = vmatprep.subr.mxu0 0.0
    %1360 = vmatpush1.msra.mxu0 0.0
    %1361 = vmatprep.subr.mxu0 0.0
    %1362 = vmatpush1.msra.mxu0 0.0
    %1363 = vmatprep.subr.mxu0 0.0
    %1364 = vmatpush1.msra.mxu0 0.0
    %1365 = vmatprep.subr.mxu0 0.0
    %1366 = vmatpush1.msra.mxu0 0.0
    %1367 = vmatprep.subr.mxu0 0.0
    %1368 = vmatpush1.msra.mxu0 0.0
    %1369 = vmatprep.mubr.f32.mxu0 0.0
    %v1370 = vand.u32 %v127, 4294901760
    %1371 = vmatmul.mubr.f32.gmra.mrb[0].mxu0 %v1370
    %v1372 = vpop.f32.mrb[0].mxu0
    %v1373 = vadd.f32 %v1272, %v1372
    %v1374 = vpop.f32.mrb[0].mxu0
    %1375 = vmatprep.mubr.f32.mxu0 0.0
    %v1376 = vand.u32 %v130, 4294901760
    %1377 = vmatmul.mubr.f32.gmra.mrb[0].mxu0 %v1376
    %v1378 = vpop.f32.mrb[0].mxu0
    %v1379 = vadd.f32 %v1282, %v1378
    %v1380 = vpop.f32.mrb[0].mxu0
    %1381 = vdwg.mxu0
    %1382 = vmatprep.subr.mxu0 0.0
    %v1383 = vand.u32 %v50, 4294901760
    %v1384 = vsub.f32 %v50, %v1383
    %1385 = vmatpush1.msra.mxu0 %v1384
    %1386 = vmatprep.subr.mxu0 0.0
    %v1387 = vand.u32 %v51, 4294901760
    %v1388 = vsub.f32 %v51, %v1387
    %1389 = vmatpush1.msra.mxu0 %v1388
    %1390 = vmatprep.subr.mxu0 0.0
    %v1391 = vand.u32 %v52, 4294901760
    %v1392 = vsub.f32 %v52, %v1391
    %1393 = vmatpush1.msra.mxu0 %v1392
    %1394 = vmatprep.subr.mxu0 0.0
    %v1395 = vand.u32 %v53, 4294901760
    %v1396 = vsub.f32 %v53, %v1395
    %1397 = vmatpush1.msra.mxu0 %v1396
    %1398 = vmatprep.subr.mxu0 0.0
    %1399 = vmatpush1.msra.mxu0 0.0
    %1400 = vmatprep.subr.mxu0 0.0
    %1401 = vmatpush1.msra.mxu0 0.0
    %1402 = vmatprep.subr.mxu0 0.0
    %1403 = vmatpush1.msra.mxu0 0.0
    %1404 = vmatprep.subr.mxu0 0.0
    %1405 = vmatpush1.msra.mxu0 0.0
    %1406 = vmatprep.subr.mxu0 0.0
    %1407 = vmatpush1.msra.mxu0 0.0
    %1408 = vmatprep.subr.mxu0 0.0
    %1409 = vmatpush1.msra.mxu0 0.0
    %1410 = vmatprep.subr.mxu0 0.0
    %1411 = vmatpush1.msra.mxu0 0.0
    %1412 = vmatprep.subr.mxu0 0.0
    %1413 = vmatpush1.msra.mxu0 0.0
    %1414 = vmatprep.subr.mxu0 0.0
    %1415 = vmatpush1.msra.mxu0 0.0
    %1416 = vmatprep.subr.mxu0 0.0
    %1417 = vmatpush1.msra.mxu0 0.0
    %1418 = vmatprep.subr.mxu0 0.0
    %1419 = vmatpush1.msra.mxu0 0.0
    %1420 = vmatprep.subr.mxu0 0.0
    %1421 = vmatpush1.msra.mxu0 0.0
    %1422 = vmatprep.subr.mxu0 0.0
    %1423 = vmatpush1.msra.mxu0 0.0
    %1424 = vmatprep.subr.mxu0 0.0
    %1425 = vmatpush1.msra.mxu0 0.0
    %1426 = vmatprep.subr.mxu0 0.0
    %1427 = vmatpush1.msra.mxu0 0.0
    %1428 = vmatprep.subr.mxu0 0.0
    %1429 = vmatpush1.msra.mxu0 0.0
    %1430 = vmatprep.subr.mxu0 0.0
    %1431 = vmatpush1.msra.mxu0 0.0
    %1432 = vmatprep.subr.mxu0 0.0
    %1433 = vmatpush1.msra.mxu0 0.0
    %1434 = vmatprep.subr.mxu0 0.0
    %1435 = vmatpush1.msra.mxu0 0.0
    %1436 = vmatprep.subr.mxu0 0.0
    %1437 = vmatpush1.msra.mxu0 0.0
    %1438 = vmatprep.subr.mxu0 0.0
    %1439 = vmatpush1.msra.mxu0 0.0
    %1440 = vmatprep.subr.mxu0 0.0
    %1441 = vmatpush1.msra.mxu0 0.0
    %1442 = vmatprep.subr.mxu0 0.0
    %1443 = vmatpush1.msra.mxu0 0.0
    %1444 = vmatprep.subr.mxu0 0.0
    %1445 = vmatpush1.msra.mxu0 0.0
    %1446 = vmatprep.subr.mxu0 0.0
    %1447 = vmatpush1.msra.mxu0 0.0
    %1448 = vmatprep.subr.mxu0 0.0
    %1449 = vmatpush1.msra.mxu0 0.0
    %1450 = vmatprep.subr.mxu0 0.0
    %1451 = vmatpush1.msra.mxu0 0.0
    %1452 = vmatprep.subr.mxu0 0.0
    %1453 = vmatpush1.msra.mxu0 0.0
    %1454 = vmatprep.mubr.f32.mxu0 0.0
    %v1455 = vand.u32 %v127, 4294901760
    %v1456 = vsub.f32 %v127, %v1455
    %1457 = vmatmul.mubr.f32.gmra.mrb[0].mxu0 %v1456
    %v1458 = vpop.f32.mrb[0].mxu0
    %v1459 = vadd.f32 %v1373, %v1458
    %v1460 = vpop.f32.mrb[0].mxu0
    %1461 = vmatprep.mubr.f32.mxu0 0.0
    %v1462 = vand.u32 %v130, 4294901760
    %v1463 = vsub.f32 %v130, %v1462
    %1464 = vmatmul.mubr.f32.gmra.mrb[0].mxu0 %v1463
    %v1465 = vpop.f32.mrb[0].mxu0
    %v1466 = vadd.f32 %v1379, %v1465
    %v1467 = vpop.f32.mrb[0].mxu0
    %1468 = vdwg.mxu0
    %1469 = vmatprep.subr.mxu0 0.0
    %v1470 = vand.u32 %v50, 4294901760
    %1471 = vmatpush1.msra.mxu0 %v1470
    %1472 = vmatprep.subr.mxu0 0.0
    %v1473 = vand.u32 %v51, 4294901760
    %1474 = vmatpush1.msra.mxu0 %v1473
    %1475 = vmatprep.subr.mxu0 0.0
    %v1476 = vand.u32 %v52, 4294901760
    %1477 = vmatpush1.msra.mxu0 %v1476
    %1478 = vmatprep.subr.mxu0 0.0
    %v1479 = vand.u32 %v53, 4294901760
    %1480 = vmatpush1.msra.mxu0 %v1479
    %1481 = vmatprep.subr.mxu0 0.0
    %1482 = vmatpush1.msra.mxu0 0.0
    %1483 = vmatprep.subr.mxu0 0.0
    %1484 = vmatpush1.msra.mxu0 0.0
    %1485 = vmatprep.subr.mxu0 0.0
    %1486 = vmatpush1.msra.mxu0 0.0
    %1487 = vmatprep.subr.mxu0 0.0
    %1488 = vmatpush1.msra.mxu0 0.0
    %1489 = vmatprep.subr.mxu0 0.0
    %1490 = vmatpush1.msra.mxu0 0.0
    %1491 = vmatprep.subr.mxu0 0.0
    %1492 = vmatpush1.msra.mxu0 0.0
    %1493 = vmatprep.subr.mxu0 0.0
    %1494 = vmatpush1.msra.mxu0 0.0
    %1495 = vmatprep.subr.mxu0 0.0
    %1496 = vmatpush1.msra.mxu0 0.0
    %1497 = vmatprep.subr.mxu0 0.0
    %1498 = vmatpush1.msra.mxu0 0.0
    %1499 = vmatprep.subr.mxu0 0.0
    %1500 = vmatpush1.msra.mxu0 0.0
    %1501 = vmatprep.subr.mxu0 0.0
    %1502 = vmatpush1.msra.mxu0 0.0
    %1503 = vmatprep.subr.mxu0 0.0
    %1504 = vmatpush1.msra.mxu0 0.0
    %1505 = vmatprep.subr.mxu0 0.0
    %1506 = vmatpush1.msra.mxu0 0.0
    %1507 = vmatprep.subr.mxu0 0.0
    %1508 = vmatpush1.msra.mxu0 0.0
    %1509 = vmatprep.subr.mxu0 0.0
    %1510 = vmatpush1.msra.mxu0 0.0
    %1511 = vmatprep.subr.mxu0 0.0
    %1512 = vmatpush1.msra.mxu0 0.0
    %1513 = vmatprep.subr.mxu0 0.0
    %1514 = vmatpush1.msra.mxu0 0.0
    %1515 = vmatprep.subr.mxu0 0.0
    %1516 = vmatpush1.msra.mxu0 0.0
    %1517 = vmatprep.subr.mxu0 0.0
    %1518 = vmatpush1.msra.mxu0 0.0
    %1519 = vmatprep.subr.mxu0 0.0
    %1520 = vmatpush1.msra.mxu0 0.0
    %1521 = vmatprep.subr.mxu0 0.0
    %1522 = vmatpush1.msra.mxu0 0.0
    %1523 = vmatprep.subr.mxu0 0.0
    %1524 = vmatpush1.msra.mxu0 0.0
    %1525 = vmatprep.subr.mxu0 0.0
    %1526 = vmatpush1.msra.mxu0 0.0
    %1527 = vmatprep.subr.mxu0 0.0
    %1528 = vmatpush1.msra.mxu0 0.0
    %1529 = vmatprep.subr.mxu0 0.0
    %1530 = vmatpush1.msra.mxu0 0.0
    %1531 = vmatprep.subr.mxu0 0.0
    %1532 = vmatpush1.msra.mxu0 0.0
    %1533 = vmatprep.subr.mxu0 0.0
    %1534 = vmatpush1.msra.mxu0 0.0
    %1535 = vmatprep.subr.mxu0 0.0
    %1536 = vmatpush1.msra.mxu0 0.0
    %1537 = vmatprep.mubr.f32.mxu0 0.0
    %v1538 = vand.u32 %v127, 4294901760
    %v1539 = vsub.f32 %v127, %v1538
    %v1540 = vand.u32 %v1539, 4294901760
    %1541 = vmatmul.mubr.f32.gmra.mrb[0].mxu0 %v1540
    %v1542 = vpop.f32.mrb[0].mxu0
    %v1543 = vadd.f32 %v1459, %v1542
    %v1544 = vpop.f32.mrb[0].mxu0
    %1545 = vmatprep.mubr.f32.mxu0 0.0
    %v1546 = vand.u32 %v130, 4294901760
    %v1547 = vsub.f32 %v130, %v1546
    %v1548 = vand.u32 %v1547, 4294901760
    %1549 = vmatmul.mubr.f32.gmra.mrb[0].mxu0 %v1548
    %v1550 = vpop.f32.mrb[0].mxu0
    %v1551 = vadd.f32 %v1466, %v1550
    %v1552 = vpop.f32.mrb[0].mxu0
    %1553 = vdwg.mxu0
    %1554 = vmatprep.subr.mxu0 0.0
    %v1555 = vand.u32 %v50, 4294901760
    %v1556 = vsub.f32 %v50, %v1555
    %v1557 = vand.u32 %v1556, 4294901760
    %1558 = vmatpush1.msra.mxu0 %v1557
    %1559 = vmatprep.subr.mxu0 0.0
    %v1560 = vand.u32 %v51, 4294901760
    %v1561 = vsub.f32 %v51, %v1560
    %v1562 = vand.u32 %v1561, 4294901760
    %1563 = vmatpush1.msra.mxu0 %v1562
    %1564 = vmatprep.subr.mxu0 0.0
    %v1565 = vand.u32 %v52, 4294901760
    %v1566 = vsub.f32 %v52, %v1565
    %v1567 = vand.u32 %v1566, 4294901760
    %1568 = vmatpush1.msra.mxu0 %v1567
    %1569 = vmatprep.subr.mxu0 0.0
    %v1570 = vand.u32 %v53, 4294901760
    %v1571 = vsub.f32 %v53, %v1570
    %v1572 = vand.u32 %v1571, 4294901760
    %1573 = vmatpush1.msra.mxu0 %v1572
    %1574 = vmatprep.subr.mxu0 0.0
    %1575 = vmatpush1.msra.mxu0 0.0
    %1576 = vmatprep.subr.mxu0 0.0
    %1577 = vmatpush1.msra.mxu0 0.0
    %1578 = vmatprep.subr.mxu0 0.0
    %1579 = vmatpush1.msra.mxu0 0.0
    %1580 = vmatprep.subr.mxu0 0.0
    %1581 = vmatpush1.msra.mxu0 0.0
    %1582 = vmatprep.subr.mxu0 0.0
    %1583 = vmatpush1.msra.mxu0 0.0
    %1584 = vmatprep.subr.mxu0 0.0
    %1585 = vmatpush1.msra.mxu0 0.0
    %1586 = vmatprep.subr.mxu0 0.0
    %1587 = vmatpush1.msra.mxu0 0.0
    %1588 = vmatprep.subr.mxu0 0.0
    %1589 = vmatpush1.msra.mxu0 0.0
    %1590 = vmatprep.subr.mxu0 0.0
    %1591 = vmatpush1.msra.mxu0 0.0
    %1592 = vmatprep.subr.mxu0 0.0
    %1593 = vmatpush1.msra.mxu0 0.0
    %1594 = vmatprep.subr.mxu0 0.0
    %1595 = vmatpush1.msra.mxu0 0.0
    %1596 = vmatprep.subr.mxu0 0.0
    %1597 = vmatpush1.msra.mxu0 0.0
    %1598 = vmatprep.subr.mxu0 0.0
    %1599 = vmatpush1.msra.mxu0 0.0
    %1600 = vmatprep.subr.mxu0 0.0
    %1601 = vmatpush1.msra.mxu0 0.0
    %1602 = vmatprep.subr.mxu0 0.0
    %1603 = vmatpush1.msra.mxu0 0.0
    %1604 = vmatprep.subr.mxu0 0.0
    %1605 = vmatpush1.msra.mxu0 0.0
    %1606 = vmatprep.subr.mxu0 0.0
    %1607 = vmatpush1.msra.mxu0 0.0
    %1608 = vmatprep.subr.mxu0 0.0
    %1609 = vmatpush1.msra.mxu0 0.0
    %1610 = vmatprep.subr.mxu0 0.0
    %1611 = vmatpush1.msra.mxu0 0.0
    %1612 = vmatprep.subr.mxu0 0.0
    %1613 = vmatpush1.msra.mxu0 0.0
    %1614 = vmatprep.subr.mxu0 0.0
    %1615 = vmatpush1.msra.mxu0 0.0
    %1616 = vmatprep.subr.mxu0 0.0
    %1617 = vmatpush1.msra.mxu0 0.0
    %1618 = vmatprep.subr.mxu0 0.0
    %1619 = vmatpush1.msra.mxu0 0.0
    %1620 = vmatprep.subr.mxu0 0.0
    %1621 = vmatpush1.msra.mxu0 0.0
    %1622 = vmatprep.subr.mxu0 0.0
    %1623 = vmatpush1.msra.mxu0 0.0
    %1624 = vmatprep.subr.mxu0 0.0
    %1625 = vmatpush1.msra.mxu0 0.0
    %1626 = vmatprep.subr.mxu0 0.0
    %1627 = vmatpush1.msra.mxu0 0.0
    %1628 = vmatprep.subr.mxu0 0.0
    %1629 = vmatpush1.msra.mxu0 0.0
    %1630 = vmatprep.mubr.f32.mxu0 0.0
    %v1631 = vand.u32 %v127, 4294901760
    %1632 = vmatmul.mubr.f32.gmra.mrb[0].mxu0 %v1631
    %v1633 = vpop.f32.mrb[0].mxu0
    %v1634 = vadd.f32 %v1543, %v1633
    %v1635 = vpop.f32.mrb[0].mxu0
    %1636 = vmatprep.mubr.f32.mxu0 0.0
    %v1637 = vand.u32 %v130, 4294901760
    %1638 = vmatmul.mubr.f32.gmra.mrb[0].mxu0 %v1637
    %v1639 = vpop.f32.mrb[0].mxu0
    %v1640 = vadd.f32 %v1551, %v1639
    %v1641 = vpop.f32.mrb[0].mxu0
    %1642 = vdwg.mxu0
    %1643 = vmatprep.subr.mxu0 0.0
    %v1644 = vand.u32 %v50, 4294901760
    %1645 = vmatpush1.msra.mxu0 %v1644
    %1646 = vmatprep.subr.mxu0 0.0
    %v1647 = vand.u32 %v51, 4294901760
    %1648 = vmatpush1.msra.mxu0 %v1647
    %1649 = vmatprep.subr.mxu0 0.0
    %v1650 = vand.u32 %v52, 4294901760
    %1651 = vmatpush1.msra.mxu0 %v1650
    %1652 = vmatprep.subr.mxu0 0.0
    %v1653 = vand.u32 %v53, 4294901760
    %1654 = vmatpush1.msra.mxu0 %v1653
    %1655 = vmatprep.subr.mxu0 0.0
    %1656 = vmatpush1.msra.mxu0 0.0
    %1657 = vmatprep.subr.mxu0 0.0
    %1658 = vmatpush1.msra.mxu0 0.0
    %1659 = vmatprep.subr.mxu0 0.0
    %1660 = vmatpush1.msra.mxu0 0.0
    %1661 = vmatprep.subr.mxu0 0.0
    %1662 = vmatpush1.msra.mxu0 0.0
    %1663 = vmatprep.subr.mxu0 0.0
    %1664 = vmatpush1.msra.mxu0 0.0
    %1665 = vmatprep.subr.mxu0 0.0
    %1666 = vmatpush1.msra.mxu0 0.0
    %1667 = vmatprep.subr.mxu0 0.0
    %1668 = vmatpush1.msra.mxu0 0.0
    %1669 = vmatprep.subr.mxu0 0.0
    %1670 = vmatpush1.msra.mxu0 0.0
    %1671 = vmatprep.subr.mxu0 0.0
    %1672 = vmatpush1.msra.mxu0 0.0
    %1673 = vmatprep.subr.mxu0 0.0
    %1674 = vmatpush1.msra.mxu0 0.0
    %1675 = vmatprep.subr.mxu0 0.0
    %1676 = vmatpush1.msra.mxu0 0.0
    %1677 = vmatprep.subr.mxu0 0.0
    %1678 = vmatpush1.msra.mxu0 0.0
    %1679 = vmatprep.subr.mxu0 0.0
    %1680 = vmatpush1.msra.mxu0 0.0
    %1681 = vmatprep.subr.mxu0 0.0
    %1682 = vmatpush1.msra.mxu0 0.0
    %1683 = vmatprep.subr.mxu0 0.0
    %1684 = vmatpush1.msra.mxu0 0.0
    %1685 = vmatprep.subr.mxu0 0.0
    %1686 = vmatpush1.msra.mxu0 0.0
    %1687 = vmatprep.subr.mxu0 0.0
    %1688 = vmatpush1.msra.mxu0 0.0
    %1689 = vmatprep.subr.mxu0 0.0
    %1690 = vmatpush1.msra.mxu0 0.0
    %1691 = vmatprep.subr.mxu0 0.0
    %1692 = vmatpush1.msra.mxu0 0.0
    %1693 = vmatprep.subr.mxu0 0.0
    %1694 = vmatpush1.msra.mxu0 0.0
    %1695 = vmatprep.subr.mxu0 0.0
    %1696 = vmatpush1.msra.mxu0 0.0
    %1697 = vmatprep.subr.mxu0 0.0
    %1698 = vmatpush1.msra.mxu0 0.0
    %1699 = vmatprep.subr.mxu0 0.0
    %1700 = vmatpush1.msra.mxu0 0.0
    %1701 = vmatprep.subr.mxu0 0.0
    %1702 = vmatpush1.msra.mxu0 0.0
    %1703 = vmatprep.subr.mxu0 0.0
    %1704 = vmatpush1.msra.mxu0 0.0
    %1705 = vmatprep.subr.mxu0 0.0
    %1706 = vmatpush1.msra.mxu0 0.0
    %1707 = vmatprep.subr.mxu0 0.0
    %1708 = vmatpush1.msra.mxu0 0.0
    %1709 = vmatprep.subr.mxu0 0.0
    %1710 = vmatpush1.msra.mxu0 0.0
    %1711 = vmatprep.mubr.f32.mxu0 0.0
    %v1712 = vand.u32 %v127, 4294901760
    %1713 = vmatmul.mubr.f32.gmra.mrb[0].mxu0 %v1712
    %v1714 = vpop.f32.mrb[0].mxu0
    %v1715 = vadd.f32 %v1634, %v1714
    %v1716 = vpop.f32.mrb[0].mxu0
    %1717 = vmatprep.mubr.f32.mxu0 0.0
    %v1718 = vand.u32 %v130, 4294901760
    %1719 = vmatmul.mubr.f32.gmra.mrb[0].mxu0 %v1718
    %v1720 = vpop.f32.mrb[0].mxu0
    %v1721 = vadd.f32 %v1640, %v1720
    %v1722 = vpop.f32.mrb[0].mxu0
    %1723 = vdwg.mxu0
    %v1724 = vld [vmem:[#allocation5 + $0x100] sm:$0x1]
    %v1725 = vlaneseq
    %v1726 = vshrl.u32 %v1725, 7
    %v1727 = vsub.s32 0, %v1726
    %v1728 = vrot.slane %v1724, %v1727
    %v1729 = vmul.f32 %v1183, %v1728
    %v1730 = vmul.f32 %v1189, %v1728
    %v1732 = vsel %vm82, %v651, 0
    %v1735 = vsel %vm82, %v657, 0
    %v1738 = vsel %vm82, %v1729, 0
    %v1741 = vsel %vm82, %v1730, 0
    %1743 = vmatprep.subr.mxu0 0.0
    %v1744 = vand.u32 %v1738, 4294901760
    %1745 = vmatpush1.xpose.msra.mxu0 %v1744
    %1746 = vmatprep.subr.mxu0 0.0
    %v1747 = vand.u32 %v1741, 4294901760
    %1748 = vmatpush1.xpose.msra.mxu0 %v1747
    %1749 = vmatprep.subr.mxu0 0.0
    %1750 = vmatpush1.xpose.msra.mxu0 0.0
    %1751 = vmatprep.subr.mxu0 0.0
    %1752 = vmatpush1.xpose.msra.mxu0 0.0
    %1753 = vmatprep.subr.mxu0 0.0
    %1754 = vmatpush1.xpose.msra.mxu0 0.0
    %1755 = vmatprep.subr.mxu0 0.0
    %1756 = vmatpush1.xpose.msra.mxu0 0.0
    %1757 = vmatprep.subr.mxu0 0.0
    %1758 = vmatpush1.xpose.msra.mxu0 0.0
    %1759 = vmatprep.subr.mxu0 0.0
    %1760 = vmatpush1.xpose.msra.mxu0 0.0
    %1761 = vmatprep.subr.mxu0 0.0
    %1762 = vmatpush1.xpose.msra.mxu0 0.0
    %1763 = vmatprep.subr.mxu0 0.0
    %1764 = vmatpush1.xpose.msra.mxu0 0.0
    %1765 = vmatprep.subr.mxu0 0.0
    %1766 = vmatpush1.xpose.msra.mxu0 0.0
    %1767 = vmatprep.subr.mxu0 0.0
    %1768 = vmatpush1.xpose.msra.mxu0 0.0
    %1769 = vmatprep.subr.mxu0 0.0
    %1770 = vmatpush1.xpose.msra.mxu0 0.0
    %1771 = vmatprep.subr.mxu0 0.0
    %1772 = vmatpush1.xpose.msra.mxu0 0.0
    %1773 = vmatprep.subr.mxu0 0.0
    %1774 = vmatpush1.xpose.msra.mxu0 0.0
    %1775 = vmatprep.subr.mxu0 0.0
    %1776 = vmatpush1.xpose.msra.mxu0 0.0
    %1777 = vmatprep.subr.mxu0 0.0
    %1778 = vmatpush1.xpose.msra.mxu0 0.0
    %1779 = vmatprep.subr.mxu0 0.0
    %1780 = vmatpush1.xpose.msra.mxu0 0.0
    %1781 = vmatprep.subr.mxu0 0.0
    %1782 = vmatpush1.xpose.msra.mxu0 0.0
    %1783 = vmatprep.subr.mxu0 0.0
    %1784 = vmatpush1.xpose.msra.mxu0 0.0
    %1785 = vmatprep.subr.mxu0 0.0
    %1786 = vmatpush1.xpose.msra.mxu0 0.0
    %1787 = vmatprep.subr.mxu0 0.0
    %1788 = vmatpush1.xpose.msra.mxu0 0.0
    %1789 = vmatprep.subr.mxu0 0.0
    %1790 = vmatpush1.xpose.msra.mxu0 0.0
    %1791 = vmatprep.subr.mxu0 0.0
    %1792 = vmatpush1.xpose.msra.mxu0 0.0
    %1793 = vmatprep.subr.mxu0 0.0
    %1794 = vmatpush1.xpose.msra.mxu0 0.0
    %1795 = vmatprep.subr.mxu0 0.0
    %1796 = vmatpush1.xpose.msra.mxu0 0.0
    %1797 = vmatprep.subr.mxu0 0.0
    %1798 = vmatpush1.xpose.msra.mxu0 0.0
    %1799 = vmatprep.subr.mxu0 0.0
    %1800 = vmatpush1.xpose.msra.mxu0 0.0
    %1801 = vmatprep.subr.mxu0 0.0
    %1802 = vmatpush1.xpose.msra.mxu0 0.0
    %1803 = vmatprep.subr.mxu0 0.0
    %1804 = vmatpush1.xpose.msra.mxu0 0.0
    %1805 = vmatprep.subr.mxu0 0.0
    %1806 = vmatpush1.xpose.msra.mxu0 0.0
    %1807 = vmatprep.subr.mxu0 0.0
    %1808 = vmatpush1.xpose.msra.mxu0 0.0
    %1809 = vmatprep.mubr.f32.mxu0 0.0
    %v1810 = vand.u32 %v1732, 4294901760
    %v1811 = vsub.f32 %v1732, %v1810
    %v1812 = vand.u32 %v1811, 4294901760
    %v1813 = vsub.f32 %v1811, %v1812
    %v1814 = vand.u32 %v1813, 4294901760
    %1815 = vmatmul.mubr.f32.gmra.mrb[0].mxu0 %v1814
    %v1816 = vpop.f32.mrb[0].mxu0
    %v1817 = vadd.f32 %v80, %v1816
    %v1818 = vpop.f32.mrb[0].mxu0
    %1819 = vmatprep.mubr.f32.mxu0 0.0
    %v1820 = vand.u32 %v1735, 4294901760
    %v1821 = vsub.f32 %v1735, %v1820
    %v1822 = vand.u32 %v1821, 4294901760
    %v1823 = vsub.f32 %v1821, %v1822
    %v1824 = vand.u32 %v1823, 4294901760
    %1825 = vmatmul.mubr.f32.gmra.mrb[0].mxu0 %v1824
    %v1826 = vpop.f32.mrb[0].mxu0
    %v1827 = vadd.f32 %v81, %v1826
    %v1828 = vpop.f32.mrb[0].mxu0
    %1829 = vdwg.mxu0
    %1830 = vmatprep.subr.mxu0 0.0
    %v1831 = vand.u32 %v1738, 4294901760
    %v1832 = vsub.f32 %v1738, %v1831
    %v1833 = vand.u32 %v1832, 4294901760
    %v1834 = vsub.f32 %v1832, %v1833
    %v1835 = vand.u32 %v1834, 4294901760
    %1836 = vmatpush1.xpose.msra.mxu0 %v1835
    %1837 = vmatprep.subr.mxu0 0.0
    %v1838 = vand.u32 %v1741, 4294901760
    %v1839 = vsub.f32 %v1741, %v1838
    %v1840 = vand.u32 %v1839, 4294901760
    %v1841 = vsub.f32 %v1839, %v1840
    %v1842 = vand.u32 %v1841, 4294901760
    %1843 = vmatpush1.xpose.msra.mxu0 %v1842
    %1844 = vmatprep.subr.mxu0 0.0
    %1845 = vmatpush1.xpose.msra.mxu0 0.0
    %1846 = vmatprep.subr.mxu0 0.0
    %1847 = vmatpush1.xpose.msra.mxu0 0.0
    %1848 = vmatprep.subr.mxu0 0.0
    %1849 = vmatpush1.xpose.msra.mxu0 0.0
    %1850 = vmatprep.subr.mxu0 0.0
    %1851 = vmatpush1.xpose.msra.mxu0 0.0
    %1852 = vmatprep.subr.mxu0 0.0
    %1853 = vmatpush1.xpose.msra.mxu0 0.0
    %1854 = vmatprep.subr.mxu0 0.0
    %1855 = vmatpush1.xpose.msra.mxu0 0.0
    %1856 = vmatprep.subr.mxu0 0.0
    %1857 = vmatpush1.xpose.msra.mxu0 0.0
    %1858 = vmatprep.subr.mxu0 0.0
    %1859 = vmatpush1.xpose.msra.mxu0 0.0
    %1860 = vmatprep.subr.mxu0 0.0
    %1861 = vmatpush1.xpose.msra.mxu0 0.0
    %1862 = vmatprep.subr.mxu0 0.0
    %1863 = vmatpush1.xpose.msra.mxu0 0.0
    %1864 = vmatprep.subr.mxu0 0.0
    %1865 = vmatpush1.xpose.msra.mxu0 0.0
    %1866 = vmatprep.subr.mxu0 0.0
    %1867 = vmatpush1.xpose.msra.mxu0 0.0
    %1868 = vmatprep.subr.mxu0 0.0
    %1869 = vmatpush1.xpose.msra.mxu0 0.0
    %1870 = vmatprep.subr.mxu0 0.0
    %1871 = vmatpush1.xpose.msra.mxu0 0.0
    %1872 = vmatprep.subr.mxu0 0.0
    %1873 = vmatpush1.xpose.msra.mxu0 0.0
    %1874 = vmatprep.subr.mxu0 0.0
    %1875 = vmatpush1.xpose.msra.mxu0 0.0
    %1876 = vmatprep.subr.mxu0 0.0
    %1877 = vmatpush1.xpose.msra.mxu0 0.0
    %1878 = vmatprep.subr.mxu0 0.0
    %1879 = vmatpush1.xpose.msra.mxu0 0.0
    %1880 = vmatprep.subr.mxu0 0.0
    %1881 = vmatpush1.xpose.msra.mxu0 0.0
    %1882 = vmatprep.subr.mxu0 0.0
    %1883 = vmatpush1.xpose.msra.mxu0 0.0
    %1884 = vmatprep.subr.mxu0 0.0
    %1885 = vmatpush1.xpose.msra.mxu0 0.0
    %1886 = vmatprep.subr.mxu0 0.0
    %1887 = vmatpush1.xpose.msra.mxu0 0.0
    %1888 = vmatprep.subr.mxu0 0.0
    %1889 = vmatpush1.xpose.msra.mxu0 0.0
    %1890 = vmatprep.subr.mxu0 0.0
    %1891 = vmatpush1.xpose.msra.mxu0 0.0
    %1892 = vmatprep.subr.mxu0 0.0
    %1893 = vmatpush1.xpose.msra.mxu0 0.0
    %1894 = vmatprep.subr.mxu0 0.0
    %1895 = vmatpush1.xpose.msra.mxu0 0.0
    %1896 = vmatprep.subr.mxu0 0.0
    %1897 = vmatpush1.xpose.msra.mxu0 0.0
    %1898 = vmatprep.subr.mxu0 0.0
    %1899 = vmatpush1.xpose.msra.mxu0 0.0
    %1900 = vmatprep.subr.mxu0 0.0
    %1901 = vmatpush1.xpose.msra.mxu0 0.0
    %1902 = vmatprep.subr.mxu0 0.0
    %1903 = vmatpush1.xpose.msra.mxu0 0.0
    %1904 = vmatprep.mubr.f32.mxu0 0.0
    %v1905 = vand.u32 %v1732, 4294901760
    %1906 = vmatmul.mubr.f32.gmra.mrb[0].mxu0 %v1905
    %v1907 = vpop.f32.mrb[0].mxu0
    %v1908 = vadd.f32 %v1817, %v1907
    %v1909 = vpop.f32.mrb[0].mxu0
    %1910 = vmatprep.mubr.f32.mxu0 0.0
    %v1911 = vand.u32 %v1735, 4294901760
    %1912 = vmatmul.mubr.f32.gmra.mrb[0].mxu0 %v1911
    %v1913 = vpop.f32.mrb[0].mxu0
    %v1914 = vadd.f32 %v1827, %v1913
    %v1915 = vpop.f32.mrb[0].mxu0
    %1916 = vdwg.mxu0
    %1917 = vmatprep.subr.mxu0 0.0
    %v1918 = vand.u32 %v1738, 4294901760
    %v1919 = vsub.f32 %v1738, %v1918
    %1920 = vmatpush1.xpose.msra.mxu0 %v1919
    %1921 = vmatprep.subr.mxu0 0.0
    %v1922 = vand.u32 %v1741, 4294901760
    %v1923 = vsub.f32 %v1741, %v1922
    %1924 = vmatpush1.xpose.msra.mxu0 %v1923
    %1925 = vmatprep.subr.mxu0 0.0
    %1926 = vmatpush1.xpose.msra.mxu0 0.0
    %1927 = vmatprep.subr.mxu0 0.0
    %1928 = vmatpush1.xpose.msra.mxu0 0.0
    %1929 = vmatprep.subr.mxu0 0.0
    %1930 = vmatpush1.xpose.msra.mxu0 0.0
    %1931 = vmatprep.subr.mxu0 0.0
    %1932 = vmatpush1.xpose.msra.mxu0 0.0
    %1933 = vmatprep.subr.mxu0 0.0
    %1934 = vmatpush1.xpose.msra.mxu0 0.0
    %1935 = vmatprep.subr.mxu0 0.0
    %1936 = vmatpush1.xpose.msra.mxu0 0.0
    %1937 = vmatprep.subr.mxu0 0.0
    %1938 = vmatpush1.xpose.msra.mxu0 0.0
    %1939 = vmatprep.subr.mxu0 0.0
    %1940 = vmatpush1.xpose.msra.mxu0 0.0
    %1941 = vmatprep.subr.mxu0 0.0
    %1942 = vmatpush1.xpose.msra.mxu0 0.0
    %1943 = vmatprep.subr.mxu0 0.0
    %1944 = vmatpush1.xpose.msra.mxu0 0.0
    %1945 = vmatprep.subr.mxu0 0.0
    %1946 = vmatpush1.xpose.msra.mxu0 0.0
    %1947 = vmatprep.subr.mxu0 0.0
    %1948 = vmatpush1.xpose.msra.mxu0 0.0
    %1949 = vmatprep.subr.mxu0 0.0
    %1950 = vmatpush1.xpose.msra.mxu0 0.0
    %1951 = vmatprep.subr.mxu0 0.0
    %1952 = vmatpush1.xpose.msra.mxu0 0.0
    %1953 = vmatprep.subr.mxu0 0.0
    %1954 = vmatpush1.xpose.msra.mxu0 0.0
    %1955 = vmatprep.subr.mxu0 0.0
    %1956 = vmatpush1.xpose.msra.mxu0 0.0
    %1957 = vmatprep.subr.mxu0 0.0
    %1958 = vmatpush1.xpose.msra.mxu0 0.0
    %1959 = vmatprep.subr.mxu0 0.0
    %1960 = vmatpush1.xpose.msra.mxu0 0.0
    %1961 = vmatprep.subr.mxu0 0.0
    %1962 = vmatpush1.xpose.msra.mxu0 0.0
    %1963 = vmatprep.subr.mxu0 0.0
    %1964 = vmatpush1.xpose.msra.mxu0 0.0
    %1965 = vmatprep.subr.mxu0 0.0
    %1966 = vmatpush1.xpose.msra.mxu0 0.0
    %1967 = vmatprep.subr.mxu0 0.0
    %1968 = vmatpush1.xpose.msra.mxu0 0.0
    %1969 = vmatprep.subr.mxu0 0.0
    %1970 = vmatpush1.xpose.msra.mxu0 0.0
    %1971 = vmatprep.subr.mxu0 0.0
    %1972 = vmatpush1.xpose.msra.mxu0 0.0
    %1973 = vmatprep.subr.mxu0 0.0
    %1974 = vmatpush1.xpose.msra.mxu0 0.0
    %1975 = vmatprep.subr.mxu0 0.0
    %1976 = vmatpush1.xpose.msra.mxu0 0.0
    %1977 = vmatprep.subr.mxu0 0.0
    %1978 = vmatpush1.xpose.msra.mxu0 0.0
    %1979 = vmatprep.subr.mxu0 0.0
    %1980 = vmatpush1.xpose.msra.mxu0 0.0
    %1981 = vmatprep.subr.mxu0 0.0
    %1982 = vmatpush1.xpose.msra.mxu0 0.0
    %1983 = vmatprep.subr.mxu0 0.0
    %1984 = vmatpush1.xpose.msra.mxu0 0.0
    %1985 = vmatprep.mubr.f32.mxu0 0.0
    %v1986 = vand.u32 %v1732, 4294901760
    %v1987 = vsub.f32 %v1732, %v1986
    %1988 = vmatmul.mubr.f32.gmra.mrb[0].mxu0 %v1987
    %v1989 = vpop.f32.mrb[0].mxu0
    %v1990 = vadd.f32 %v1908, %v1989
    %v1991 = vpop.f32.mrb[0].mxu0
    %1992 = vmatprep.mubr.f32.mxu0 0.0
    %v1993 = vand.u32 %v1735, 4294901760
    %v1994 = vsub.f32 %v1735, %v1993
    %1995 = vmatmul.mubr.f32.gmra.mrb[0].mxu0 %v1994
    %v1996 = vpop.f32.mrb[0].mxu0
    %v1997 = vadd.f32 %v1914, %v1996
    %v1998 = vpop.f32.mrb[0].mxu0
    %1999 = vdwg.mxu0
    %2000 = vmatprep.subr.mxu0 0.0
    %v2001 = vand.u32 %v1738, 4294901760
    %2002 = vmatpush1.xpose.msra.mxu0 %v2001
    %2003 = vmatprep.subr.mxu0 0.0
    %v2004 = vand.u32 %v1741, 4294901760
    %2005 = vmatpush1.xpose.msra.mxu0 %v2004
    %2006 = vmatprep.subr.mxu0 0.0
    %2007 = vmatpush1.xpose.msra.mxu0 0.0
    %2008 = vmatprep.subr.mxu0 0.0
    %2009 = vmatpush1.xpose.msra.mxu0 0.0
    %2010 = vmatprep.subr.mxu0 0.0
    %2011 = vmatpush1.xpose.msra.mxu0 0.0
    %2012 = vmatprep.subr.mxu0 0.0
    %2013 = vmatpush1.xpose.msra.mxu0 0.0
    %2014 = vmatprep.subr.mxu0 0.0
    %2015 = vmatpush1.xpose.msra.mxu0 0.0
    %2016 = vmatprep.subr.mxu0 0.0
    %2017 = vmatpush1.xpose.msra.mxu0 0.0
    %2018 = vmatprep.subr.mxu0 0.0
    %2019 = vmatpush1.xpose.msra.mxu0 0.0
    %2020 = vmatprep.subr.mxu0 0.0
    %2021 = vmatpush1.xpose.msra.mxu0 0.0
    %2022 = vmatprep.subr.mxu0 0.0
    %2023 = vmatpush1.xpose.msra.mxu0 0.0
    %2024 = vmatprep.subr.mxu0 0.0
    %2025 = vmatpush1.xpose.msra.mxu0 0.0
    %2026 = vmatprep.subr.mxu0 0.0
    %2027 = vmatpush1.xpose.msra.mxu0 0.0
    %2028 = vmatprep.subr.mxu0 0.0
    %2029 = vmatpush1.xpose.msra.mxu0 0.0
    %2030 = vmatprep.subr.mxu0 0.0
    %2031 = vmatpush1.xpose.msra.mxu0 0.0
    %2032 = vmatprep.subr.mxu0 0.0
    %2033 = vmatpush1.xpose.msra.mxu0 0.0
    %2034 = vmatprep.subr.mxu0 0.0
    %2035 = vmatpush1.xpose.msra.mxu0 0.0
    %2036 = vmatprep.subr.mxu0 0.0
    %2037 = vmatpush1.xpose.msra.mxu0 0.0
    %2038 = vmatprep.subr.mxu0 0.0
    %2039 = vmatpush1.xpose.msra.mxu0 0.0
    %2040 = vmatprep.subr.mxu0 0.0
    %2041 = vmatpush1.xpose.msra.mxu0 0.0
    %2042 = vmatprep.subr.mxu0 0.0
    %2043 = vmatpush1.xpose.msra.mxu0 0.0
    %2044 = vmatprep.subr.mxu0 0.0
    %2045 = vmatpush1.xpose.msra.mxu0 0.0
    %2046 = vmatprep.subr.mxu0 0.0
    %2047 = vmatpush1.xpose.msra.mxu0 0.0
    %2048 = vmatprep.subr.mxu0 0.0
    %2049 = vmatpush1.xpose.msra.mxu0 0.0
    %2050 = vmatprep.subr.mxu0 0.0
    %2051 = vmatpush1.xpose.msra.mxu0 0.0
    %2052 = vmatprep.subr.mxu0 0.0
    %2053 = vmatpush1.xpose.msra.mxu0 0.0
    %2054 = vmatprep.subr.mxu0 0.0
    %2055 = vmatpush1.xpose.msra.mxu0 0.0
    %2056 = vmatprep.subr.mxu0 0.0
    %2057 = vmatpush1.xpose.msra.mxu0 0.0
    %2058 = vmatprep.subr.mxu0 0.0
    %2059 = vmatpush1.xpose.msra.mxu0 0.0
    %2060 = vmatprep.subr.mxu0 0.0
    %2061 = vmatpush1.xpose.msra.mxu0 0.0
    %2062 = vmatprep.subr.mxu0 0.0
    %2063 = vmatpush1.xpose.msra.mxu0 0.0
    %2064 = vmatprep.subr.mxu0 0.0
    %2065 = vmatpush1.xpose.msra.mxu0 0.0
    %2066 = vmatprep.mubr.f32.mxu0 0.0
    %v2067 = vand.u32 %v1732, 4294901760
    %v2068 = vsub.f32 %v1732, %v2067
    %v2069 = vand.u32 %v2068, 4294901760
    %2070 = vmatmul.mubr.f32.gmra.mrb[0].mxu0 %v2069
    %v2071 = vpop.f32.mrb[0].mxu0
    %v2072 = vadd.f32 %v1990, %v2071
    %v2073 = vpop.f32.mrb[0].mxu0
    %2074 = vmatprep.mubr.f32.mxu0 0.0
    %v2075 = vand.u32 %v1735, 4294901760
    %v2076 = vsub.f32 %v1735, %v2075
    %v2077 = vand.u32 %v2076, 4294901760
    %2078 = vmatmul.mubr.f32.gmra.mrb[0].mxu0 %v2077
    %v2079 = vpop.f32.mrb[0].mxu0
    %v2080 = vadd.f32 %v1997, %v2079
    %v2081 = vpop.f32.mrb[0].mxu0
    %2082 = vdwg.mxu0
    %2083 = vmatprep.subr.mxu0 0.0
    %v2084 = vand.u32 %v1738, 4294901760
    %v2085 = vsub.f32 %v1738, %v2084
    %v2086 = vand.u32 %v2085, 4294901760
    %2087 = vmatpush1.xpose.msra.mxu0 %v2086
    %2088 = vmatprep.subr.mxu0 0.0
    %v2089 = vand.u32 %v1741, 4294901760
    %v2090 = vsub.f32 %v1741, %v2089
    %v2091 = vand.u32 %v2090, 4294901760
    %2092 = vmatpush1.xpose.msra.mxu0 %v2091
    %2093 = vmatprep.subr.mxu0 0.0
    %2094 = vmatpush1.xpose.msra.mxu0 0.0
    %2095 = vmatprep.subr.mxu0 0.0
    %2096 = vmatpush1.xpose.msra.mxu0 0.0
    %2097 = vmatprep.subr.mxu0 0.0
    %2098 = vmatpush1.xpose.msra.mxu0 0.0
    %2099 = vmatprep.subr.mxu0 0.0
    %2100 = vmatpush1.xpose.msra.mxu0 0.0
    %2101 = vmatprep.subr.mxu0 0.0
    %2102 = vmatpush1.xpose.msra.mxu0 0.0
    %2103 = vmatprep.subr.mxu0 0.0
    %2104 = vmatpush1.xpose.msra.mxu0 0.0
    %2105 = vmatprep.subr.mxu0 0.0
    %2106 = vmatpush1.xpose.msra.mxu0 0.0
    %2107 = vmatprep.subr.mxu0 0.0
    %2108 = vmatpush1.xpose.msra.mxu0 0.0
    %2109 = vmatprep.subr.mxu0 0.0
    %2110 = vmatpush1.xpose.msra.mxu0 0.0
    %2111 = vmatprep.subr.mxu0 0.0
    %2112 = vmatpush1.xpose.msra.mxu0 0.0
    %2113 = vmatprep.subr.mxu0 0.0
    %2114 = vmatpush1.xpose.msra.mxu0 0.0
    %2115 = vmatprep.subr.mxu0 0.0
    %2116 = vmatpush1.xpose.msra.mxu0 0.0
    %2117 = vmatprep.subr.mxu0 0.0
    %2118 = vmatpush1.xpose.msra.mxu0 0.0
    %2119 = vmatprep.subr.mxu0 0.0
    %2120 = vmatpush1.xpose.msra.mxu0 0.0
    %2121 = vmatprep.subr.mxu0 0.0
    %2122 = vmatpush1.xpose.msra.mxu0 0.0
    %2123 = vmatprep.subr.mxu0 0.0
    %2124 = vmatpush1.xpose.msra.mxu0 0.0
    %2125 = vmatprep.subr.mxu0 0.0
    %2126 = vmatpush1.xpose.msra.mxu0 0.0
    %2127 = vmatprep.subr.mxu0 0.0
    %2128 = vmatpush1.xpose.msra.mxu0 0.0
    %2129 = vmatprep.subr.mxu0 0.0
    %2130 = vmatpush1.xpose.msra.mxu0 0.0
    %2131 = vmatprep.subr.mxu0 0.0
    %2132 = vmatpush1.xpose.msra.mxu0 0.0
    %2133 = vmatprep.subr.mxu0 0.0
    %2134 = vmatpush1.xpose.msra.mxu0 0.0
    %2135 = vmatprep.subr.mxu0 0.0
    %2136 = vmatpush1.xpose.msra.mxu0 0.0
    %2137 = vmatprep.subr.mxu0 0.0
    %2138 = vmatpush1.xpose.msra.mxu0 0.0
    %2139 = vmatprep.subr.mxu0 0.0
    %2140 = vmatpush1.xpose.msra.mxu0 0.0
    %2141 = vmatprep.subr.mxu0 0.0
    %2142 = vmatpush1.xpose.msra.mxu0 0.0
    %2143 = vmatprep.subr.mxu0 0.0
    %2144 = vmatpush1.xpose.msra.mxu0 0.0
    %2145 = vmatprep.subr.mxu0 0.0
    %2146 = vmatpush1.xpose.msra.mxu0 0.0
    %2147 = vmatprep.subr.mxu0 0.0
    %2148 = vmatpush1.xpose.msra.mxu0 0.0
    %2149 = vmatprep.subr.mxu0 0.0
    %2150 = vmatpush1.xpose.msra.mxu0 0.0
    %2151 = vmatprep.subr.mxu0 0.0
    %2152 = vmatpush1.xpose.msra.mxu0 0.0
    %2153 = vmatprep.mubr.f32.mxu0 0.0
    %v2154 = vand.u32 %v1732, 4294901760
    %2155 = vmatmul.mubr.f32.gmra.mrb[0].mxu0 %v2154
    %v2156 = vpop.f32.mrb[0].mxu0
    %v2157 = vadd.f32 %v2072, %v2156
    %v2158 = vpop.f32.mrb[0].mxu0
    %2159 = vmatprep.mubr.f32.mxu0 0.0
    %v2160 = vand.u32 %v1735, 4294901760
    %2161 = vmatmul.mubr.f32.gmra.mrb[0].mxu0 %v2160
    %v2162 = vpop.f32.mrb[0].mxu0
    %v2163 = vadd.f32 %v2080, %v2162
    %v2164 = vpop.f32.mrb[0].mxu0
    %2165 = vdwg.mxu0
    %2166 = vmatprep.subr.mxu0 0.0
    %v2167 = vand.u32 %v1738, 4294901760
    %2168 = vmatpush1.xpose.msra.mxu0 %v2167
    %2169 = vmatprep.subr.mxu0 0.0
    %v2170 = vand.u32 %v1741, 4294901760
    %2171 = vmatpush1.xpose.msra.mxu0 %v2170
    %2172 = vmatprep.subr.mxu0 0.0
    %2173 = vmatpush1.xpose.msra.mxu0 0.0
    %2174 = vmatprep.subr.mxu0 0.0
    %2175 = vmatpush1.xpose.msra.mxu0 0.0
    %2176 = vmatprep.subr.mxu0 0.0
    %2177 = vmatpush1.xpose.msra.mxu0 0.0
    %2178 = vmatprep.subr.mxu0 0.0
    %2179 = vmatpush1.xpose.msra.mxu0 0.0
    %2180 = vmatprep.subr.mxu0 0.0
    %2181 = vmatpush1.xpose.msra.mxu0 0.0
    %2182 = vmatprep.subr.mxu0 0.0
    %2183 = vmatpush1.xpose.msra.mxu0 0.0
    %2184 = vmatprep.subr.mxu0 0.0
    %2185 = vmatpush1.xpose.msra.mxu0 0.0
    %2186 = vmatprep.subr.mxu0 0.0
    %2187 = vmatpush1.xpose.msra.mxu0 0.0
    %2188 = vmatprep.subr.mxu0 0.0
    %2189 = vmatpush1.xpose.msra.mxu0 0.0
    %2190 = vmatprep.subr.mxu0 0.0
    %2191 = vmatpush1.xpose.msra.mxu0 0.0
    %2192 = vmatprep.subr.mxu0 0.0
    %2193 = vmatpush1.xpose.msra.mxu0 0.0
    %2194 = vmatprep.subr.mxu0 0.0
    %2195 = vmatpush1.xpose.msra.mxu0 0.0
    %2196 = vmatprep.subr.mxu0 0.0
    %2197 = vmatpush1.xpose.msra.mxu0 0.0
    %2198 = vmatprep.subr.mxu0 0.0
    %2199 = vmatpush1.xpose.msra.mxu0 0.0
    %2200 = vmatprep.subr.mxu0 0.0
    %2201 = vmatpush1.xpose.msra.mxu0 0.0
    %2202 = vmatprep.subr.mxu0 0.0
    %2203 = vmatpush1.xpose.msra.mxu0 0.0
    %2204 = vmatprep.subr.mxu0 0.0
    %2205 = vmatpush1.xpose.msra.mxu0 0.0
    %2206 = vmatprep.subr.mxu0 0.0
    %2207 = vmatpush1.xpose.msra.mxu0 0.0
    %2208 = vmatprep.subr.mxu0 0.0
    %2209 = vmatpush1.xpose.msra.mxu0 0.0
    %2210 = vmatprep.subr.mxu0 0.0
    %2211 = vmatpush1.xpose.msra.mxu0 0.0
    %2212 = vmatprep.subr.mxu0 0.0
    %2213 = vmatpush1.xpose.msra.mxu0 0.0
    %2214 = vmatprep.subr.mxu0 0.0
    %2215 = vmatpush1.xpose.msra.mxu0 0.0
    %2216 = vmatprep.subr.mxu0 0.0
    %2217 = vmatpush1.xpose.msra.mxu0 0.0
    %2218 = vmatprep.subr.mxu0 0.0
    %2219 = vmatpush1.xpose.msra.mxu0 0.0
    %2220 = vmatprep.subr.mxu0 0.0
    %2221 = vmatpush1.xpose.msra.mxu0 0.0
    %2222 = vmatprep.subr.mxu0 0.0
    %2223 = vmatpush1.xpose.msra.mxu0 0.0
    %2224 = vmatprep.subr.mxu0 0.0
    %2225 = vmatpush1.xpose.msra.mxu0 0.0
    %2226 = vmatprep.subr.mxu0 0.0
    %2227 = vmatpush1.xpose.msra.mxu0 0.0
    %2228 = vmatprep.subr.mxu0 0.0
    %2229 = vmatpush1.xpose.msra.mxu0 0.0
    %2230 = vmatprep.subr.mxu0 0.0
    %2231 = vmatpush1.xpose.msra.mxu0 0.0
    %2232 = vmatprep.mubr.f32.mxu0 0.0
    %v2233 = vand.u32 %v1732, 4294901760
    %2234 = vmatmul.mubr.f32.gmra.mrb[0].mxu0 %v2233
    %v2235 = vpop.f32.mrb[0].mxu0
    %v2236 = vadd.f32 %v2157, %v2235
    %v2237 = vpop.f32.mrb[0].mxu0
    %2238 = vmatprep.mubr.f32.mxu0 0.0
    %v2239 = vand.u32 %v1735, 4294901760
    %2240 = vmatmul.mubr.f32.gmra.mrb[0].mxu0 %v2239
    %v2241 = vpop.f32.mrb[0].mxu0
    %v2242 = vadd.f32 %v2163, %v2241
    %v2243 = vpop.f32.mrb[0].mxu0
    %2244 = vdwg.mxu0
    %vm2245 = vcmask 130048
    %v2246 = vsel %vm2245, %v2236, -inf
    %2247 = vmax.xlane.f32.xlu0 %v2246
    %v2248 = vpop.xlane.xlu0 %2247
    %v2249 = vsel %vm2245, %v2242, -inf
    %2250 = vmax.xlane.f32.xlu0 %v2249
    %v2251 = vpop.xlane.xlu0 %2250
    %v2252 = vsub.f32 %v2236, %v2248
    %v2253 = vsub.f32 %v2242, %v2251
    %v2254 = vmul.f32 %v2252, 1.442695
    %v2255 = vpow.pop %v2254
    %v2256 = vmul.f32 %v2253, 1.442695
    %v2257 = vpow.pop %v2256
    %v2258 = vsel %vm2245, %v2255, 0.0
    %2259 = vadd.xlane.f32.xlu0 %v2258
    %v2260 = vpop.xlane.xlu0 %2259
    %v2261 = vsel %vm2245, %v2257, 0.0
    %2262 = vadd.xlane.f32.xlu0 %v2261
    %v2263 = vpop.xlane.xlu0 %2262
    %v2264 = vrcp.pop %v2260
    %v2265 = vmul.f32 %v2255, %v2264
    %v2266 = vrcp.pop %v2263
    %v2267 = vmul.f32 %v2257, %v2266
    %v2268 = vmul.f32 %v1715, %v1728
    %v2269 = vmul.f32 %v1721, %v1728
    %v2270 = vld [vmem:[#allocation5 + $0x101] sm:$0x1]
    %v2271 = vlaneseq
    %v2272 = vshrl.u32 %v2271, 7
    %v2273 = vsub.s32 0, %v2272
    %v2274 = vrot.slane %v2270, %v2273
    %v2275 = vmul.f32 %v1183, %v2274
    %v2276 = vmul.f32 %v1189, %v2274
    %v2278 = vsel %vm82, %v2275, 0
    %v2281 = vsel %vm82, %v2276, 0
    %2283 = vmatprep.subr.mxu0 0.0
    %v2284 = vand.u32 %v2278, 4294901760
    %2285 = vmatpush1.xpose.msra.mxu0 %v2284
    %2286 = vmatprep.subr.mxu0 0.0
    %v2287 = vand.u32 %v2281, 4294901760
    %2288 = vmatpush1.xpose.msra.mxu0 %v2287
    %2289 = vmatprep.subr.mxu0 0.0
    %2290 = vmatpush1.xpose.msra.mxu0 0.0
    %2291 = vmatprep.subr.mxu0 0.0
    %2292 = vmatpush1.xpose.msra.mxu0 0.0
    %2293 = vmatprep.subr.mxu0 0.0
    %2294 = vmatpush1.xpose.msra.mxu0 0.0
    %2295 = vmatprep.subr.mxu0 0.0
    %2296 = vmatpush1.xpose.msra.mxu0 0.0
    %2297 = vmatprep.subr.mxu0 0.0
    %2298 = vmatpush1.xpose.msra.mxu0 0.0
    %2299 = vmatprep.subr.mxu0 0.0
    %2300 = vmatpush1.xpose.msra.mxu0 0.0
    %2301 = vmatprep.subr.mxu0 0.0
    %2302 = vmatpush1.xpose.msra.mxu0 0.0
    %2303 = vmatprep.subr.mxu0 0.0
    %2304 = vmatpush1.xpose.msra.mxu0 0.0
    %2305 = vmatprep.subr.mxu0 0.0
    %2306 = vmatpush1.xpose.msra.mxu0 0.0
    %2307 = vmatprep.subr.mxu0 0.0
    %2308 = vmatpush1.xpose.msra.mxu0 0.0
    %2309 = vmatprep.subr.mxu0 0.0
    %2310 = vmatpush1.xpose.msra.mxu0 0.0
    %2311 = vmatprep.subr.mxu0 0.0
    %2312 = vmatpush1.xpose.msra.mxu0 0.0
    %2313 = vmatprep.subr.mxu0 0.0
    %2314 = vmatpush1.xpose.msra.mxu0 0.0
    %2315 = vmatprep.subr.mxu0 0.0
    %2316 = vmatpush1.xpose.msra.mxu0 0.0
    %2317 = vmatprep.subr.mxu0 0.0
    %2318 = vmatpush1.xpose.msra.mxu0 0.0
    %2319 = vmatprep.subr.mxu0 0.0
    %2320 = vmatpush1.xpose.msra.mxu0 0.0
    %2321 = vmatprep.subr.mxu0 0.0
    %2322 = vmatpush1.xpose.msra.mxu0 0.0
    %2323 = vmatprep.subr.mxu0 0.0
    %2324 = vmatpush1.xpose.msra.mxu0 0.0
    %2325 = vmatprep.subr.mxu0 0.0
    %2326 = vmatpush1.xpose.msra.mxu0 0.0
    %2327 = vmatprep.subr.mxu0 0.0
    %2328 = vmatpush1.xpose.msra.mxu0 0.0
    %2329 = vmatprep.subr.mxu0 0.0
    %2330 = vmatpush1.xpose.msra.mxu0 0.0
    %2331 = vmatprep.subr.mxu0 0.0
    %2332 = vmatpush1.xpose.msra.mxu0 0.0
    %2333 = vmatprep.subr.mxu0 0.0
    %2334 = vmatpush1.xpose.msra.mxu0 0.0
    %2335 = vmatprep.subr.mxu0 0.0
    %2336 = vmatpush1.xpose.msra.mxu0 0.0
    %2337 = vmatprep.subr.mxu0 0.0
    %2338 = vmatpush1.xpose.msra.mxu0 0.0
    %2339 = vmatprep.subr.mxu0 0.0
    %2340 = vmatpush1.xpose.msra.mxu0 0.0
    %2341 = vmatprep.subr.mxu0 0.0
    %2342 = vmatpush1.xpose.msra.mxu0 0.0
    %2343 = vmatprep.subr.mxu0 0.0
    %2344 = vmatpush1.xpose.msra.mxu0 0.0
    %2345 = vmatprep.subr.mxu0 0.0
    %2346 = vmatpush1.xpose.msra.mxu0 0.0
    %2347 = vmatprep.subr.mxu0 0.0
    %2348 = vmatpush1.xpose.msra.mxu0 0.0
    %2349 = vmatprep.mubr.f32.mxu0 0.0
    %v2350 = vand.u32 %v1732, 4294901760
    %v2351 = vsub.f32 %v1732, %v2350
    %v2352 = vand.u32 %v2351, 4294901760
    %v2353 = vsub.f32 %v2351, %v2352
    %v2354 = vand.u32 %v2353, 4294901760
    %2355 = vmatmul.mubr.f32.gmra.mrb[0].mxu0 %v2354
    %v2356 = vpop.f32.mrb[0].mxu0
    %v2357 = vadd.f32 %v80, %v2356
    %v2358 = vpop.f32.mrb[0].mxu0
    %2359 = vmatprep.mubr.f32.mxu0 0.0
    %v2360 = vand.u32 %v1735, 4294901760
    %v2361 = vsub.f32 %v1735, %v2360
    %v2362 = vand.u32 %v2361, 4294901760
    %v2363 = vsub.f32 %v2361, %v2362
    %v2364 = vand.u32 %v2363, 4294901760
    %2365 = vmatmul.mubr.f32.gmra.mrb[0].mxu0 %v2364
    %v2366 = vpop.f32.mrb[0].mxu0
    %v2367 = vadd.f32 %v81, %v2366
    %v2368 = vpop.f32.mrb[0].mxu0
    %2369 = vdwg.mxu0
    %2370 = vmatprep.subr.mxu0 0.0
    %v2371 = vand.u32 %v2278, 4294901760
    %v2372 = vsub.f32 %v2278, %v2371
    %v2373 = vand.u32 %v2372, 4294901760
    %v2374 = vsub.f32 %v2372, %v2373
    %v2375 = vand.u32 %v2374, 4294901760
    %2376 = vmatpush1.xpose.msra.mxu0 %v2375
    %2377 = vmatprep.subr.mxu0 0.0
    %v2378 = vand.u32 %v2281, 4294901760
    %v2379 = vsub.f32 %v2281, %v2378
    %v2380 = vand.u32 %v2379, 4294901760
    %v2381 = vsub.f32 %v2379, %v2380
    %v2382 = vand.u32 %v2381, 4294901760
    %2383 = vmatpush1.xpose.msra.mxu0 %v2382
    %2384 = vmatprep.subr.mxu0 0.0
    %2385 = vmatpush1.xpose.msra.mxu0 0.0
    %2386 = vmatprep.subr.mxu0 0.0
    %2387 = vmatpush1.xpose.msra.mxu0 0.0
    %2388 = vmatprep.subr.mxu0 0.0
    %2389 = vmatpush1.xpose.msra.mxu0 0.0
    %2390 = vmatprep.subr.mxu0 0.0
    %2391 = vmatpush1.xpose.msra.mxu0 0.0
    %2392 = vmatprep.subr.mxu0 0.0
    %2393 = vmatpush1.xpose.msra.mxu0 0.0
    %2394 = vmatprep.subr.mxu0 0.0
    %2395 = vmatpush1.xpose.msra.mxu0 0.0
    %2396 = vmatprep.subr.mxu0 0.0
    %2397 = vmatpush1.xpose.msra.mxu0 0.0
    %2398 = vmatprep.subr.mxu0 0.0
    %2399 = vmatpush1.xpose.msra.mxu0 0.0
    %2400 = vmatprep.subr.mxu0 0.0
    %2401 = vmatpush1.xpose.msra.mxu0 0.0
    %2402 = vmatprep.subr.mxu0 0.0
    %2403 = vmatpush1.xpose.msra.mxu0 0.0
    %2404 = vmatprep.subr.mxu0 0.0
    %2405 = vmatpush1.xpose.msra.mxu0 0.0
    %2406 = vmatprep.subr.mxu0 0.0
    %2407 = vmatpush1.xpose.msra.mxu0 0.0
    %2408 = vmatprep.subr.mxu0 0.0
    %2409 = vmatpush1.xpose.msra.mxu0 0.0
    %2410 = vmatprep.subr.mxu0 0.0
    %2411 = vmatpush1.xpose.msra.mxu0 0.0
    %2412 = vmatprep.subr.mxu0 0.0
    %2413 = vmatpush1.xpose.msra.mxu0 0.0
    %2414 = vmatprep.subr.mxu0 0.0
    %2415 = vmatpush1.xpose.msra.mxu0 0.0
    %2416 = vmatprep.subr.mxu0 0.0
    %2417 = vmatpush1.xpose.msra.mxu0 0.0
    %2418 = vmatprep.subr.mxu0 0.0
    %2419 = vmatpush1.xpose.msra.mxu0 0.0
    %2420 = vmatprep.subr.mxu0 0.0
    %2421 = vmatpush1.xpose.msra.mxu0 0.0
    %2422 = vmatprep.subr.mxu0 0.0
    %2423 = vmatpush1.xpose.msra.mxu0 0.0
    %2424 = vmatprep.subr.mxu0 0.0
    %2425 = vmatpush1.xpose.msra.mxu0 0.0
    %2426 = vmatprep.subr.mxu0 0.0
    %2427 = vmatpush1.xpose.msra.mxu0 0.0
    %2428 = vmatprep.subr.mxu0 0.0
    %2429 = vmatpush1.xpose.msra.mxu0 0.0
    %2430 = vmatprep.subr.mxu0 0.0
    %2431 = vmatpush1.xpose.msra.mxu0 0.0
    %2432 = vmatprep.subr.mxu0 0.0
    %2433 = vmatpush1.xpose.msra.mxu0 0.0
    %2434 = vmatprep.subr.mxu0 0.0
    %2435 = vmatpush1.xpose.msra.mxu0 0.0
    %2436 = vmatprep.subr.mxu0 0.0
    %2437 = vmatpush1.xpose.msra.mxu0 0.0
    %2438 = vmatprep.subr.mxu0 0.0
    %2439 = vmatpush1.xpose.msra.mxu0 0.0
    %2440 = vmatprep.subr.mxu0 0.0
    %2441 = vmatpush1.xpose.msra.mxu0 0.0
    %2442 = vmatprep.subr.mxu0 0.0
    %2443 = vmatpush1.xpose.msra.mxu0 0.0
    %2444 = vmatprep.mubr.f32.mxu0 0.0
    %v2445 = vand.u32 %v1732, 4294901760
    %2446 = vmatmul.mubr.f32.gmra.mrb[0].mxu0 %v2445
    %v2447 = vpop.f32.mrb[0].mxu0
    %v2448 = vadd.f32 %v2357, %v2447
    %v2449 = vpop.f32.mrb[0].mxu0
    %2450 = vmatprep.mubr.f32.mxu0 0.0
    %v2451 = vand.u32 %v1735, 4294901760
    %2452 = vmatmul.mubr.f32.gmra.mrb[0].mxu0 %v2451
    %v2453 = vpop.f32.mrb[0].mxu0
    %v2454 = vadd.f32 %v2367, %v2453
    %v2455 = vpop.f32.mrb[0].mxu0
    %2456 = vdwg.mxu0
    %2457 = vmatprep.subr.mxu0 0.0
    %v2458 = vand.u32 %v2278, 4294901760
    %v2459 = vsub.f32 %v2278, %v2458
    %2460 = vmatpush1.xpose.msra.mxu0 %v2459
    %2461 = vmatprep.subr.mxu0 0.0
    %v2462 = vand.u32 %v2281, 4294901760
    %v2463 = vsub.f32 %v2281, %v2462
    %2464 = vmatpush1.xpose.msra.mxu0 %v2463
    %2465 = vmatprep.subr.mxu0 0.0
    %2466 = vmatpush1.xpose.msra.mxu0 0.0
    %2467 = vmatprep.subr.mxu0 0.0
    %2468 = vmatpush1.xpose.msra.mxu0 0.0
    %2469 = vmatprep.subr.mxu0 0.0
    %2470 = vmatpush1.xpose.msra.mxu0 0.0
    %2471 = vmatprep.subr.mxu0 0.0
    %2472 = vmatpush1.xpose.msra.mxu0 0.0
    %2473 = vmatprep.subr.mxu0 0.0
    %2474 = vmatpush1.xpose.msra.mxu0 0.0
    %2475 = vmatprep.subr.mxu0 0.0
    %2476 = vmatpush1.xpose.msra.mxu0 0.0
    %2477 = vmatprep.subr.mxu0 0.0
    %2478 = vmatpush1.xpose.msra.mxu0 0.0
    %2479 = vmatprep.subr.mxu0 0.0
    %2480 = vmatpush1.xpose.msra.mxu0 0.0
    %2481 = vmatprep.subr.mxu0 0.0
    %2482 = vmatpush1.xpose.msra.mxu0 0.0
    %2483 = vmatprep.subr.mxu0 0.0
    %2484 = vmatpush1.xpose.msra.mxu0 0.0
    %2485 = vmatprep.subr.mxu0 0.0
    %2486 = vmatpush1.xpose.msra.mxu0 0.0
    %2487 = vmatprep.subr.mxu0 0.0
    %2488 = vmatpush1.xpose.msra.mxu0 0.0
    %2489 = vmatprep.subr.mxu0 0.0
    %2490 = vmatpush1.xpose.msra.mxu0 0.0
    %2491 = vmatprep.subr.mxu0 0.0
    %2492 = vmatpush1.xpose.msra.mxu0 0.0
    %2493 = vmatprep.subr.mxu0 0.0
    %2494 = vmatpush1.xpose.msra.mxu0 0.0
    %2495 = vmatprep.subr.mxu0 0.0
    %2496 = vmatpush1.xpose.msra.mxu0 0.0
    %2497 = vmatprep.subr.mxu0 0.0
    %2498 = vmatpush1.xpose.msra.mxu0 0.0
    %2499 = vmatprep.subr.mxu0 0.0
    %2500 = vmatpush1.xpose.msra.mxu0 0.0
    %2501 = vmatprep.subr.mxu0 0.0
    %2502 = vmatpush1.xpose.msra.mxu0 0.0
    %2503 = vmatprep.subr.mxu0 0.0
    %2504 = vmatpush1.xpose.msra.mxu0 0.0
    %2505 = vmatprep.subr.mxu0 0.0
    %2506 = vmatpush1.xpose.msra.mxu0 0.0
    %2507 = vmatprep.subr.mxu0 0.0
    %2508 = vmatpush1.xpose.msra.mxu0 0.0
    %2509 = vmatprep.subr.mxu0 0.0
    %2510 = vmatpush1.xpose.msra.mxu0 0.0
    %2511 = vmatprep.subr.mxu0 0.0
    %2512 = vmatpush1.xpose.msra.mxu0 0.0
    %2513 = vmatprep.subr.mxu0 0.0
    %2514 = vmatpush1.xpose.msra.mxu0 0.0
    %2515 = vmatprep.subr.mxu0 0.0
    %2516 = vmatpush1.xpose.msra.mxu0 0.0
    %2517 = vmatprep.subr.mxu0 0.0
    %2518 = vmatpush1.xpose.msra.mxu0 0.0
    %2519 = vmatprep.subr.mxu0 0.0
    %2520 = vmatpush1.xpose.msra.mxu0 0.0
    %2521 = vmatprep.subr.mxu0 0.0
    %2522 = vmatpush1.xpose.msra.mxu0 0.0
    %2523 = vmatprep.subr.mxu0 0.0
    %2524 = vmatpush1.xpose.msra.mxu0 0.0
    %2525 = vmatprep.mubr.f32.mxu0 0.0
    %v2526 = vand.u32 %v1732, 4294901760
    %v2527 = vsub.f32 %v1732, %v2526
    %2528 = vmatmul.mubr.f32.gmra.mrb[0].mxu0 %v2527
    %v2529 = vpop.f32.mrb[0].mxu0
    %v2530 = vadd.f32 %v2448, %v2529
    %v2531 = vpop.f32.mrb[0].mxu0
    %2532 = vmatprep.mubr.f32.mxu0 0.0
    %v2533 = vand.u32 %v1735, 4294901760
    %v2534 = vsub.f32 %v1735, %v2533
    %2535 = vmatmul.mubr.f32.gmra.mrb[0].mxu0 %v2534
    %v2536 = vpop.f32.mrb[0].mxu0
    %v2537 = vadd.f32 %v2454, %v2536
    %v2538 = vpop.f32.mrb[0].mxu0
    %2539 = vdwg.mxu0
    %2540 = vmatprep.subr.mxu0 0.0
    %v2541 = vand.u32 %v2278, 4294901760
    %2542 = vmatpush1.xpose.msra.mxu0 %v2541
    %2543 = vmatprep.subr.mxu0 0.0
    %v2544 = vand.u32 %v2281, 4294901760
    %2545 = vmatpush1.xpose.msra.mxu0 %v2544
    %2546 = vmatprep.subr.mxu0 0.0
    %2547 = vmatpush1.xpose.msra.mxu0 0.0
    %2548 = vmatprep.subr.mxu0 0.0
    %2549 = vmatpush1.xpose.msra.mxu0 0.0
    %2550 = vmatprep.subr.mxu0 0.0
    %2551 = vmatpush1.xpose.msra.mxu0 0.0
    %2552 = vmatprep.subr.mxu0 0.0
    %2553 = vmatpush1.xpose.msra.mxu0 0.0
    %2554 = vmatprep.subr.mxu0 0.0
    %2555 = vmatpush1.xpose.msra.mxu0 0.0
    %2556 = vmatprep.subr.mxu0 0.0
    %2557 = vmatpush1.xpose.msra.mxu0 0.0
    %2558 = vmatprep.subr.mxu0 0.0
    %2559 = vmatpush1.xpose.msra.mxu0 0.0
    %2560 = vmatprep.subr.mxu0 0.0
    %2561 = vmatpush1.xpose.msra.mxu0 0.0
    %2562 = vmatprep.subr.mxu0 0.0
    %2563 = vmatpush1.xpose.msra.mxu0 0.0
    %2564 = vmatprep.subr.mxu0 0.0
    %2565 = vmatpush1.xpose.msra.mxu0 0.0
    %2566 = vmatprep.subr.mxu0 0.0
    %2567 = vmatpush1.xpose.msra.mxu0 0.0
    %2568 = vmatprep.subr.mxu0 0.0
    %2569 = vmatpush1.xpose.msra.mxu0 0.0
    %2570 = vmatprep.subr.mxu0 0.0
    %2571 = vmatpush1.xpose.msra.mxu0 0.0
    %2572 = vmatprep.subr.mxu0 0.0
    %2573 = vmatpush1.xpose.msra.mxu0 0.0
    %2574 = vmatprep.subr.mxu0 0.0
    %2575 = vmatpush1.xpose.msra.mxu0 0.0
    %2576 = vmatprep.subr.mxu0 0.0
    %2577 = vmatpush1.xpose.msra.mxu0 0.0
    %2578 = vmatprep.subr.mxu0 0.0
    %2579 = vmatpush1.xpose.msra.mxu0 0.0
    %2580 = vmatprep.subr.mxu0 0.0
    %2581 = vmatpush1.xpose.msra.mxu0 0.0
    %2582 = vmatprep.subr.mxu0 0.0
    %2583 = vmatpush1.xpose.msra.mxu0 0.0
    %2584 = vmatprep.subr.mxu0 0.0
    %2585 = vmatpush1.xpose.msra.mxu0 0.0
    %2586 = vmatprep.subr.mxu0 0.0
    %2587 = vmatpush1.xpose.msra.mxu0 0.0
    %2588 = vmatprep.subr.mxu0 0.0
    %2589 = vmatpush1.xpose.msra.mxu0 0.0
    %2590 = vmatprep.subr.mxu0 0.0
    %2591 = vmatpush1.xpose.msra.mxu0 0.0
    %2592 = vmatprep.subr.mxu0 0.0
    %2593 = vmatpush1.xpose.msra.mxu0 0.0
    %2594 = vmatprep.subr.mxu0 0.0
    %2595 = vmatpush1.xpose.msra.mxu0 0.0
    %2596 = vmatprep.subr.mxu0 0.0
    %2597 = vmatpush1.xpose.msra.mxu0 0.0
    %2598 = vmatprep.subr.mxu0 0.0
    %2599 = vmatpush1.xpose.msra.mxu0 0.0
    %2600 = vmatprep.subr.mxu0 0.0
    %2601 = vmatpush1.xpose.msra.mxu0 0.0
    %2602 = vmatprep.subr.mxu0 0.0
    %2603 = vmatpush1.xpose.msra.mxu0 0.0
    %2604 = vmatprep.subr.mxu0 0.0
    %2605 = vmatpush1.xpose.msra.mxu0 0.0
    %2606 = vmatprep.mubr.f32.mxu0 0.0
    %v2607 = vand.u32 %v1732, 4294901760
    %v2608 = vsub.f32 %v1732, %v2607
    %v2609 = vand.u32 %v2608, 4294901760
    %2610 = vmatmul.mubr.f32.gmra.mrb[0].mxu0 %v2609
    %v2611 = vpop.f32.mrb[0].mxu0
    %v2612 = vadd.f32 %v2530, %v2611
    %v2613 = vpop.f32.mrb[0].mxu0
    %2614 = vmatprep.mubr.f32.mxu0 0.0
    %v2615 = vand.u32 %v1735, 4294901760
    %v2616 = vsub.f32 %v1735, %v2615
    %v2617 = vand.u32 %v2616, 4294901760
    %2618 = vmatmul.mubr.f32.gmra.mrb[0].mxu0 %v2617
    %v2619 = vpop.f32.mrb[0].mxu0
    %v2620 = vadd.f32 %v2537, %v2619
    %v2621 = vpop.f32.mrb[0].mxu0
    %2622 = vdwg.mxu0
    %2623 = vmatprep.subr.mxu0 0.0
    %v2624 = vand.u32 %v2278, 4294901760
    %v2625 = vsub.f32 %v2278, %v2624
    %v2626 = vand.u32 %v2625, 4294901760
    %2627 = vmatpush1.xpose.msra.mxu0 %v2626
    %2628 = vmatprep.subr.mxu0 0.0
    %v2629 = vand.u32 %v2281, 4294901760
    %v2630 = vsub.f32 %v2281, %v2629
    %v2631 = vand.u32 %v2630, 4294901760
    %2632 = vmatpush1.xpose.msra.mxu0 %v2631
    %2633 = vmatprep.subr.mxu0 0.0
    %2634 = vmatpush1.xpose.msra.mxu0 0.0
    %2635 = vmatprep.subr.mxu0 0.0
    %2636 = vmatpush1.xpose.msra.mxu0 0.0
    %2637 = vmatprep.subr.mxu0 0.0
    %2638 = vmatpush1.xpose.msra.mxu0 0.0
    %2639 = vmatprep.subr.mxu0 0.0
    %2640 = vmatpush1.xpose.msra.mxu0 0.0
    %2641 = vmatprep.subr.mxu0 0.0
    %2642 = vmatpush1.xpose.msra.mxu0 0.0
    %2643 = vmatprep.subr.mxu0 0.0
    %2644 = vmatpush1.xpose.msra.mxu0 0.0
    %2645 = vmatprep.subr.mxu0 0.0
    %2646 = vmatpush1.xpose.msra.mxu0 0.0
    %2647 = vmatprep.subr.mxu0 0.0
    %2648 = vmatpush1.xpose.msra.mxu0 0.0
    %2649 = vmatprep.subr.mxu0 0.0
    %2650 = vmatpush1.xpose.msra.mxu0 0.0
    %2651 = vmatprep.subr.mxu0 0.0
    %2652 = vmatpush1.xpose.msra.mxu0 0.0
    %2653 = vmatprep.subr.mxu0 0.0
    %2654 = vmatpush1.xpose.msra.mxu0 0.0
    %2655 = vmatprep.subr.mxu0 0.0
    %2656 = vmatpush1.xpose.msra.mxu0 0.0
    %2657 = vmatprep.subr.mxu0 0.0
    %2658 = vmatpush1.xpose.msra.mxu0 0.0
    %2659 = vmatprep.subr.mxu0 0.0
    %2660 = vmatpush1.xpose.msra.mxu0 0.0
    %2661 = vmatprep.subr.mxu0 0.0
    %2662 = vmatpush1.xpose.msra.mxu0 0.0
    %2663 = vmatprep.subr.mxu0 0.0
    %2664 = vmatpush1.xpose.msra.mxu0 0.0
    %2665 = vmatprep.subr.mxu0 0.0
    %2666 = vmatpush1.xpose.msra.mxu0 0.0
    %2667 = vmatprep.subr.mxu0 0.0
    %2668 = vmatpush1.xpose.msra.mxu0 0.0
    %2669 = vmatprep.subr.mxu0 0.0
    %2670 = vmatpush1.xpose.msra.mxu0 0.0
    %2671 = vmatprep.subr.mxu0 0.0
    %2672 = vmatpush1.xpose.msra.mxu0 0.0
    %2673 = vmatprep.subr.mxu0 0.0
    %2674 = vmatpush1.xpose.msra.mxu0 0.0
    %2675 = vmatprep.subr.mxu0 0.0
    %2676 = vmatpush1.xpose.msra.mxu0 0.0
    %2677 = vmatprep.subr.mxu0 0.0
    %2678 = vmatpush1.xpose.msra.mxu0 0.0
    %2679 = vmatprep.subr.mxu0 0.0
    %2680 = vmatpush1.xpose.msra.mxu0 0.0
    %2681 = vmatprep.subr.mxu0 0.0
    %2682 = vmatpush1.xpose.msra.mxu0 0.0
    %2683 = vmatprep.subr.mxu0 0.0
    %2684 = vmatpush1.xpose.msra.mxu0 0.0
    %2685 = vmatprep.subr.mxu0 0.0
    %2686 = vmatpush1.xpose.msra.mxu0 0.0
    %2687 = vmatprep.subr.mxu0 0.0
    %2688 = vmatpush1.xpose.msra.mxu0 0.0
    %2689 = vmatprep.subr.mxu0 0.0
    %2690 = vmatpush1.xpose.msra.mxu0 0.0
    %2691 = vmatprep.subr.mxu0 0.0
    %2692 = vmatpush1.xpose.msra.mxu0 0.0
    %2693 = vmatprep.mubr.f32.mxu0 0.0
    %v2694 = vand.u32 %v1732, 4294901760
    %2695 = vmatmul.mubr.f32.gmra.mrb[0].mxu0 %v2694
    %v2696 = vpop.f32.mrb[0].mxu0
    %v2697 = vadd.f32 %v2612, %v2696
    %v2698 = vpop.f32.mrb[0].mxu0
    %2699 = vmatprep.mubr.f32.mxu0 0.0
    %v2700 = vand.u32 %v1735, 4294901760
    %2701 = vmatmul.mubr.f32.gmra.mrb[0].mxu0 %v2700
    %v2702 = vpop.f32.mrb[0].mxu0
    %v2703 = vadd.f32 %v2620, %v2702
    %v2704 = vpop.f32.mrb[0].mxu0
    %2705 = vdwg.mxu0
    %2706 = vmatprep.subr.mxu0 0.0
    %v2707 = vand.u32 %v2278, 4294901760
    %2708 = vmatpush1.xpose.msra.mxu0 %v2707
    %2709 = vmatprep.subr.mxu0 0.0
    %v2710 = vand.u32 %v2281, 4294901760
    %2711 = vmatpush1.xpose.msra.mxu0 %v2710
    %2712 = vmatprep.subr.mxu0 0.0
    %2713 = vmatpush1.xpose.msra.mxu0 0.0
    %2714 = vmatprep.subr.mxu0 0.0
    %2715 = vmatpush1.xpose.msra.mxu0 0.0
    %2716 = vmatprep.subr.mxu0 0.0
    %2717 = vmatpush1.xpose.msra.mxu0 0.0
    %2718 = vmatprep.subr.mxu0 0.0
    %2719 = vmatpush1.xpose.msra.mxu0 0.0
    %2720 = vmatprep.subr.mxu0 0.0
    %2721 = vmatpush1.xpose.msra.mxu0 0.0
    %2722 = vmatprep.subr.mxu0 0.0
    %2723 = vmatpush1.xpose.msra.mxu0 0.0
    %2724 = vmatprep.subr.mxu0 0.0
    %2725 = vmatpush1.xpose.msra.mxu0 0.0
    %2726 = vmatprep.subr.mxu0 0.0
    %2727 = vmatpush1.xpose.msra.mxu0 0.0
    %2728 = vmatprep.subr.mxu0 0.0
    %2729 = vmatpush1.xpose.msra.mxu0 0.0
    %2730 = vmatprep.subr.mxu0 0.0
    %2731 = vmatpush1.xpose.msra.mxu0 0.0
    %2732 = vmatprep.subr.mxu0 0.0
    %2733 = vmatpush1.xpose.msra.mxu0 0.0
    %2734 = vmatprep.subr.mxu0 0.0
    %2735 = vmatpush1.xpose.msra.mxu0 0.0
    %2736 = vmatprep.subr.mxu0 0.0
    %2737 = vmatpush1.xpose.msra.mxu0 0.0
    %2738 = vmatprep.subr.mxu0 0.0
    %2739 = vmatpush1.xpose.msra.mxu0 0.0
    %2740 = vmatprep.subr.mxu0 0.0
    %2741 = vmatpush1.xpose.msra.mxu0 0.0
    %2742 = vmatprep.subr.mxu0 0.0
    %2743 = vmatpush1.xpose.msra.mxu0 0.0
    %2744 = vmatprep.subr.mxu0 0.0
    %2745 = vmatpush1.xpose.msra.mxu0 0.0
    %2746 = vmatprep.subr.mxu0 0.0
    %2747 = vmatpush1.xpose.msra.mxu0 0.0
    %2748 = vmatprep.subr.mxu0 0.0
    %2749 = vmatpush1.xpose.msra.mxu0 0.0
    %2750 = vmatprep.subr.mxu0 0.0
    %2751 = vmatpush1.xpose.msra.mxu0 0.0
    %2752 = vmatprep.subr.mxu0 0.0
    %2753 = vmatpush1.xpose.msra.mxu0 0.0
    %2754 = vmatprep.subr.mxu0 0.0
    %2755 = vmatpush1.xpose.msra.mxu0 0.0
    %2756 = vmatprep.subr.mxu0 0.0
    %2757 = vmatpush1.xpose.msra.mxu0 0.0
    %2758 = vmatprep.subr.mxu0 0.0
    %2759 = vmatpush1.xpose.msra.mxu0 0.0
    %2760 = vmatprep.subr.mxu0 0.0
    %2761 = vmatpush1.xpose.msra.mxu0 0.0
    %2762 = vmatprep.subr.mxu0 0.0
    %2763 = vmatpush1.xpose.msra.mxu0 0.0
    %2764 = vmatprep.subr.mxu0 0.0
    %2765 = vmatpush1.xpose.msra.mxu0 0.0
    %2766 = vmatprep.subr.mxu0 0.0
    %2767 = vmatpush1.xpose.msra.mxu0 0.0
    %2768 = vmatprep.subr.mxu0 0.0
    %2769 = vmatpush1.xpose.msra.mxu0 0.0
    %2770 = vmatprep.subr.mxu0 0.0
    %2771 = vmatpush1.xpose.msra.mxu0 0.0
    %2772 = vmatprep.mubr.f32.mxu0 0.0
    %v2773 = vand.u32 %v1732, 4294901760
    %2774 = vmatmul.mubr.f32.gmra.mrb[0].mxu0 %v2773
    %v2775 = vpop.f32.mrb[0].mxu0
    %v2776 = vadd.f32 %v2697, %v2775
    %v2777 = vpop.f32.mrb[0].mxu0
    %2778 = vmatprep.mubr.f32.mxu0 0.0
    %v2779 = vand.u32 %v1735, 4294901760
    %2780 = vmatmul.mubr.f32.gmra.mrb[0].mxu0 %v2779
    %v2781 = vpop.f32.mrb[0].mxu0
    %v2782 = vadd.f32 %v2703, %v2781
    %v2783 = vpop.f32.mrb[0].mxu0
    %2784 = vdwg.mxu0
    %v2785 = vsel %vm2245, %v2776, -inf
    %2786 = vmax.xlane.f32.xlu0 %v2785
    %v2787 = vpop.xlane.xlu0 %2786
    %v2788 = vsel %vm2245, %v2782, -inf
    %2789 = vmax.xlane.f32.xlu0 %v2788
    %v2790 = vpop.xlane.xlu0 %2789
    %v2791 = vsub.f32 %v2776, %v2787
    %v2792 = vsub.f32 %v2782, %v2790
    %v2793 = vmul.f32 %v2791, 1.442695
    %v2794 = vpow.pop %v2793
    %v2795 = vmul.f32 %v2792, 1.442695
    %v2796 = vpow.pop %v2795
    %v2797 = vsel %vm2245, %v2794, 0.0
    %2798 = vadd.xlane.f32.xlu0 %v2797
    %v2799 = vpop.xlane.xlu0 %2798
    %v2800 = vsel %vm2245, %v2796, 0.0
    %2801 = vadd.xlane.f32.xlu0 %v2800
    %v2802 = vpop.xlane.xlu0 %2801
    %v2803 = vrcp.pop %v2799
    %v2804 = vmul.f32 %v2794, %v2803
    %v2805 = vrcp.pop %v2802
    %v2806 = vmul.f32 %v2796, %v2805
    %v2807 = vmul.f32 %v1715, %v2274
    %v2808 = vmul.f32 %v1721, %v2274
    %v2810 = vsel %vm2245, %v2804, 0
    %v2813 = vsel %vm2245, %v2806, 0
    %2815 = vmatprep.subr.mxu0 0.0
    %v2816 = vand.u32 %v2807, 4294901760
    %2817 = vmatpush1.msra.mxu0 %v2816
    %2818 = vmatprep.subr.mxu0 0.0
    %v2819 = vand.u32 %v2808, 4294901760
    %2820 = vmatpush1.msra.mxu0 %v2819
    %2821 = vmatprep.subr.mxu0 0.0
    %2822 = vmatpush1.msra.mxu0 0.0
    %2823 = vmatprep.subr.mxu0 0.0
    %2824 = vmatpush1.msra.mxu0 0.0
    %2825 = vmatprep.subr.mxu0 0.0
    %2826 = vmatpush1.msra.mxu0 0.0
    %2827 = vmatprep.subr.mxu0 0.0
    %2828 = vmatpush1.msra.mxu0 0.0
    %2829 = vmatprep.subr.mxu0 0.0
    %2830 = vmatpush1.msra.mxu0 0.0
    %2831 = vmatprep.subr.mxu0 0.0
    %2832 = vmatpush1.msra.mxu0 0.0
    %2833 = vmatprep.subr.mxu0 0.0
    %2834 = vmatpush1.msra.mxu0 0.0
    %2835 = vmatprep.subr.mxu0 0.0
    %2836 = vmatpush1.msra.mxu0 0.0
    %2837 = vmatprep.subr.mxu0 0.0
    %2838 = vmatpush1.msra.mxu0 0.0
    %2839 = vmatprep.subr.mxu0 0.0
    %2840 = vmatpush1.msra.mxu0 0.0
    %2841 = vmatprep.subr.mxu0 0.0
    %2842 = vmatpush1.msra.mxu0 0.0
    %2843 = vmatprep.subr.mxu0 0.0
    %2844 = vmatpush1.msra.mxu0 0.0
    %2845 = vmatprep.subr.mxu0 0.0
    %2846 = vmatpush1.msra.mxu0 0.0
    %2847 = vmatprep.subr.mxu0 0.0
    %2848 = vmatpush1.msra.mxu0 0.0
    %2849 = vmatprep.subr.mxu0 0.0
    %2850 = vmatpush1.msra.mxu0 0.0
    %2851 = vmatprep.subr.mxu0 0.0
    %2852 = vmatpush1.msra.mxu0 0.0
    %2853 = vmatprep.subr.mxu0 0.0
    %2854 = vmatpush1.msra.mxu0 0.0
    %2855 = vmatprep.subr.mxu0 0.0
    %2856 = vmatpush1.msra.mxu0 0.0
    %2857 = vmatprep.subr.mxu0 0.0
    %2858 = vmatpush1.msra.mxu0 0.0
    %2859 = vmatprep.subr.mxu0 0.0
    %2860 = vmatpush1.msra.mxu0 0.0
    %2861 = vmatprep.subr.mxu0 0.0
    %2862 = vmatpush1.msra.mxu0 0.0
    %2863 = vmatprep.subr.mxu0 0.0
    %2864 = vmatpush1.msra.mxu0 0.0
    %2865 = vmatprep.subr.mxu0 0.0
    %2866 = vmatpush1.msra.mxu0 0.0
    %2867 = vmatprep.subr.mxu0 0.0
    %2868 = vmatpush1.msra.mxu0 0.0
    %2869 = vmatprep.subr.mxu0 0.0
    %2870 = vmatpush1.msra.mxu0 0.0
    %2871 = vmatprep.subr.mxu0 0.0
    %2872 = vmatpush1.msra.mxu0 0.0
    %2873 = vmatprep.subr.mxu0 0.0
    %2874 = vmatpush1.msra.mxu0 0.0
    %2875 = vmatprep.subr.mxu0 0.0
    %2876 = vmatpush1.msra.mxu0 0.0
    %2877 = vmatprep.subr.mxu0 0.0
    %2878 = vmatpush1.msra.mxu0 0.0
    %2879 = vmatprep.subr.mxu0 0.0
    %2880 = vmatpush1.msra.mxu0 0.0
    %2881 = vmatprep.mubr.f32.mxu0 0.0
    %v2882 = vand.u32 %v2810, 4294901760
    %v2883 = vsub.f32 %v2810, %v2882
    %v2884 = vand.u32 %v2883, 4294901760
    %v2885 = vsub.f32 %v2883, %v2884
    %v2886 = vand.u32 %v2885, 4294901760
    %2887 = vmatmul.mubr.f32.gmra.mrb[0].mxu0 %v2886
    %v2888 = vpop.f32.mrb[0].mxu0
    %v2889 = vadd.f32 0.0, %v2888
    %v2890 = vpop.f32.mrb[0].mxu0
    %2891 = vmatprep.mubr.f32.mxu0 0.0
    %v2892 = vand.u32 %v2813, 4294901760
    %v2893 = vsub.f32 %v2813, %v2892
    %v2894 = vand.u32 %v2893, 4294901760
    %v2895 = vsub.f32 %v2893, %v2894
    %v2896 = vand.u32 %v2895, 4294901760
    %2897 = vmatmul.mubr.f32.gmra.mrb[0].mxu0 %v2896
    %v2898 = vpop.f32.mrb[0].mxu0
    %v2899 = vadd.f32 0.0, %v2898
    %v2900 = vpop.f32.mrb[0].mxu0
    %2901 = vdwg.mxu0
    %2902 = vmatprep.subr.mxu0 0.0
    %v2903 = vand.u32 %v2807, 4294901760
    %v2904 = vsub.f32 %v2807, %v2903
    %v2905 = vand.u32 %v2904, 4294901760
    %v2906 = vsub.f32 %v2904, %v2905
    %v2907 = vand.u32 %v2906, 4294901760
    %2908 = vmatpush1.msra.mxu0 %v2907
    %2909 = vmatprep.subr.mxu0 0.0
    %v2910 = vand.u32 %v2808, 4294901760
    %v2911 = vsub.f32 %v2808, %v2910
    %v2912 = vand.u32 %v2911, 4294901760
    %v2913 = vsub.f32 %v2911, %v2912
    %v2914 = vand.u32 %v2913, 4294901760
    %2915 = vmatpush1.msra.mxu0 %v2914
    %2916 = vmatprep.subr.mxu0 0.0
    %2917 = vmatpush1.msra.mxu0 0.0
    %2918 = vmatprep.subr.mxu0 0.0
    %2919 = vmatpush1.msra.mxu0 0.0
    %2920 = vmatprep.subr.mxu0 0.0
    %2921 = vmatpush1.msra.mxu0 0.0
    %2922 = vmatprep.subr.mxu0 0.0
    %2923 = vmatpush1.msra.mxu0 0.0
    %2924 = vmatprep.subr.mxu0 0.0
    %2925 = vmatpush1.msra.mxu0 0.0
    %2926 = vmatprep.subr.mxu0 0.0
    %2927 = vmatpush1.msra.mxu0 0.0
    %2928 = vmatprep.subr.mxu0 0.0
    %2929 = vmatpush1.msra.mxu0 0.0
    %2930 = vmatprep.subr.mxu0 0.0
    %2931 = vmatpush1.msra.mxu0 0.0
    %2932 = vmatprep.subr.mxu0 0.0
    %2933 = vmatpush1.msra.mxu0 0.0
    %2934 = vmatprep.subr.mxu0 0.0
    %2935 = vmatpush1.msra.mxu0 0.0
    %2936 = vmatprep.subr.mxu0 0.0
    %2937 = vmatpush1.msra.mxu0 0.0
    %2938 = vmatprep.subr.mxu0 0.0
    %2939 = vmatpush1.msra.mxu0 0.0
    %2940 = vmatprep.subr.mxu0 0.0
    %2941 = vmatpush1.msra.mxu0 0.0
    %2942 = vmatprep.subr.mxu0 0.0
    %2943 = vmatpush1.msra.mxu0 0.0
    %2944 = vmatprep.subr.mxu0 0.0
    %2945 = vmatpush1.msra.mxu0 0.0
    %2946 = vmatprep.subr.mxu0 0.0
    %2947 = vmatpush1.msra.mxu0 0.0
    %2948 = vmatprep.subr.mxu0 0.0
    %2949 = vmatpush1.msra.mxu0 0.0
    %2950 = vmatprep.subr.mxu0 0.0
    %2951 = vmatpush1.msra.mxu0 0.0
    %2952 = vmatprep.subr.mxu0 0.0
    %2953 = vmatpush1.msra.mxu0 0.0
    %2954 = vmatprep.subr.mxu0 0.0
    %2955 = vmatpush1.msra.mxu0 0.0
    %2956 = vmatprep.subr.mxu0 0.0
    %2957 = vmatpush1.msra.mxu0 0.0
    %2958 = vmatprep.subr.mxu0 0.0
    %2959 = vmatpush1.msra.mxu0 0.0
    %2960 = vmatprep.subr.mxu0 0.0
    %2961 = vmatpush1.msra.mxu0 0.0
    %2962 = vmatprep.subr.mxu0 0.0
    %2963 = vmatpush1.msra.mxu0 0.0
    %2964 = vmatprep.subr.mxu0 0.0
    %2965 = vmatpush1.msra.mxu0 0.0
    %2966 = vmatprep.subr.mxu0 0.0
    %2967 = vmatpush1.msra.mxu0 0.0
    %2968 = vmatprep.subr.mxu0 0.0
    %2969 = vmatpush1.msra.mxu0 0.0
    %2970 = vmatprep.subr.mxu0 0.0
    %2971 = vmatpush1.msra.mxu0 0.0
    %2972 = vmatprep.subr.mxu0 0.0
    %2973 = vmatpush1.msra.mxu0 0.0
    %2974 = vmatprep.subr.mxu0 0.0
    %2975 = vmatpush1.msra.mxu0 0.0
    %2976 = vmatprep.mubr.f32.mxu0 0.0
    %v2977 = vand.u32 %v2810, 4294901760
    %2978 = vmatmul.mubr.f32.gmra.mrb[0].mxu0 %v2977
    %v2979 = vpop.f32.mrb[0].mxu0
    %v2980 = vadd.f32 %v2889, %v2979
    %v2981 = vpop.f32.mrb[0].mxu0
    %2982 = vmatprep.mubr.f32.mxu0 0.0
    %v2983 = vand.u32 %v2813, 4294901760
    %2984 = vmatmul.mubr.f32.gmra.mrb[0].mxu0 %v2983
    %v2985 = vpop.f32.mrb[0].mxu0
    %v2986 = vadd.f32 %v2899, %v2985
    %v2987 = vpop.f32.mrb[0].mxu0
    %2988 = vdwg.mxu0
    %2989 = vmatprep.subr.mxu0 0.0
    %v2990 = vand.u32 %v2807, 4294901760
    %v2991 = vsub.f32 %v2807, %v2990
    %2992 = vmatpush1.msra.mxu0 %v2991
    %2993 = vmatprep.subr.mxu0 0.0
    %v2994 = vand.u32 %v2808, 4294901760
    %v2995 = vsub.f32 %v2808, %v2994
    %2996 = vmatpush1.msra.mxu0 %v2995
    %2997 = vmatprep.subr.mxu0 0.0
    %2998 = vmatpush1.msra.mxu0 0.0
    %2999 = vmatprep.subr.mxu0 0.0
    %3000 = vmatpush1.msra.mxu0 0.0
    %3001 = vmatprep.subr.mxu0 0.0
    %3002 = vmatpush1.msra.mxu0 0.0
    %3003 = vmatprep.subr.mxu0 0.0
    %3004 = vmatpush1.msra.mxu0 0.0
    %3005 = vmatprep.subr.mxu0 0.0
    %3006 = vmatpush1.msra.mxu0 0.0
    %3007 = vmatprep.subr.mxu0 0.0
    %3008 = vmatpush1.msra.mxu0 0.0
    %3009 = vmatprep.subr.mxu0 0.0
    %3010 = vmatpush1.msra.mxu0 0.0
    %3011 = vmatprep.subr.mxu0 0.0
    %3012 = vmatpush1.msra.mxu0 0.0
    %3013 = vmatprep.subr.mxu0 0.0
    %3014 = vmatpush1.msra.mxu0 0.0
    %3015 = vmatprep.subr.mxu0 0.0
    %3016 = vmatpush1.msra.mxu0 0.0
    %3017 = vmatprep.subr.mxu0 0.0
    %3018 = vmatpush1.msra.mxu0 0.0
    %3019 = vmatprep.subr.mxu0 0.0
    %3020 = vmatpush1.msra.mxu0 0.0
    %3021 = vmatprep.subr.mxu0 0.0
    %3022 = vmatpush1.msra.mxu0 0.0
    %3023 = vmatprep.subr.mxu0 0.0
    %3024 = vmatpush1.msra.mxu0 0.0
    %3025 = vmatprep.subr.mxu0 0.0
    %3026 = vmatpush1.msra.mxu0 0.0
    %3027 = vmatprep.subr.mxu0 0.0
    %3028 = vmatpush1.msra.mxu0 0.0
    %3029 = vmatprep.subr.mxu0 0.0
    %3030 = vmatpush1.msra.mxu0 0.0
    %3031 = vmatprep.subr.mxu0 0.0
    %3032 = vmatpush1.msra.mxu0 0.0
    %3033 = vmatprep.subr.mxu0 0.0
    %3034 = vmatpush1.msra.mxu0 0.0
    %3035 = vmatprep.subr.mxu0 0.0
    %3036 = vmatpush1.msra.mxu0 0.0
    %3037 = vmatprep.subr.mxu0 0.0
    %3038 = vmatpush1.msra.mxu0 0.0
    %3039 = vmatprep.subr.mxu0 0.0
    %3040 = vmatpush1.msra.mxu0 0.0
    %3041 = vmatprep.subr.mxu0 0.0
    %3042 = vmatpush1.msra.mxu0 0.0
    %3043 = vmatprep.subr.mxu0 0.0
    %3044 = vmatpush1.msra.mxu0 0.0
    %3045 = vmatprep.subr.mxu0 0.0
    %3046 = vmatpush1.msra.mxu0 0.0
    %3047 = vmatprep.subr.mxu0 0.0
    %3048 = vmatpush1.msra.mxu0 0.0
    %3049 = vmatprep.subr.mxu0 0.0
    %3050 = vmatpush1.msra.mxu0 0.0
    %3051 = vmatprep.subr.mxu0 0.0
    %3052 = vmatpush1.msra.mxu0 0.0
    %3053 = vmatprep.subr.mxu0 0.0
    %3054 = vmatpush1.msra.mxu0 0.0
    %3055 = vmatprep.subr.mxu0 0.0
    %3056 = vmatpush1.msra.mxu0 0.0
    %3057 = vmatprep.mubr.f32.mxu0 0.0
    %v3058 = vand.u32 %v2810, 4294901760
    %v3059 = vsub.f32 %v2810, %v3058
    %3060 = vmatmul.mubr.f32.gmra.mrb[0].mxu0 %v3059
    %v3061 = vpop.f32.mrb[0].mxu0
    %v3062 = vadd.f32 %v2980, %v3061
    %v3063 = vpop.f32.mrb[0].mxu0
    %3064 = vmatprep.mubr.f32.mxu0 0.0
    %v3065 = vand.u32 %v2813, 4294901760
    %v3066 = vsub.f32 %v2813, %v3065
    %3067 = vmatmul.mubr.f32.gmra.mrb[0].mxu0 %v3066
    %v3068 = vpop.f32.mrb[0].mxu0
    %v3069 = vadd.f32 %v2986, %v3068
    %v3070 = vpop.f32.mrb[0].mxu0
    %3071 = vdwg.mxu0
    %3072 = vmatprep.subr.mxu0 0.0
    %v3073 = vand.u32 %v2807, 4294901760
    %3074 = vmatpush1.msra.mxu0 %v3073
    %3075 = vmatprep.subr.mxu0 0.0
    %v3076 = vand.u32 %v2808, 4294901760
    %3077 = vmatpush1.msra.mxu0 %v3076
    %3078 = vmatprep.subr.mxu0 0.0
    %3079 = vmatpush1.msra.mxu0 0.0
    %3080 = vmatprep.subr.mxu0 0.0
    %3081 = vmatpush1.msra.mxu0 0.0
    %3082 = vmatprep.subr.mxu0 0.0
    %3083 = vmatpush1.msra.mxu0 0.0
    %3084 = vmatprep.subr.mxu0 0.0
    %3085 = vmatpush1.msra.mxu0 0.0
    %3086 = vmatprep.subr.mxu0 0.0
    %3087 = vmatpush1.msra.mxu0 0.0
    %3088 = vmatprep.subr.mxu0 0.0
    %3089 = vmatpush1.msra.mxu0 0.0
    %3090 = vmatprep.subr.mxu0 0.0
    %3091 = vmatpush1.msra.mxu0 0.0
    %3092 = vmatprep.subr.mxu0 0.0
    %3093 = vmatpush1.msra.mxu0 0.0
    %3094 = vmatprep.subr.mxu0 0.0
    %3095 = vmatpush1.msra.mxu0 0.0
    %3096 = vmatprep.subr.mxu0 0.0
    %3097 = vmatpush1.msra.mxu0 0.0
    %3098 = vmatprep.subr.mxu0 0.0
    %3099 = vmatpush1.msra.mxu0 0.0
    %3100 = vmatprep.subr.mxu0 0.0
    %3101 = vmatpush1.msra.mxu0 0.0
    %3102 = vmatprep.subr.mxu0 0.0
    %3103 = vmatpush1.msra.mxu0 0.0
    %3104 = vmatprep.subr.mxu0 0.0
    %3105 = vmatpush1.msra.mxu0 0.0
    %3106 = vmatprep.subr.mxu0 0.0
    %3107 = vmatpush1.msra.mxu0 0.0
    %3108 = vmatprep.subr.mxu0 0.0
    %3109 = vmatpush1.msra.mxu0 0.0
    %3110 = vmatprep.subr.mxu0 0.0
    %3111 = vmatpush1.msra.mxu0 0.0
    %3112 = vmatprep.subr.mxu0 0.0
    %3113 = vmatpush1.msra.mxu0 0.0
    %3114 = vmatprep.subr.mxu0 0.0
    %3115 = vmatpush1.msra.mxu0 0.0
    %3116 = vmatprep.subr.mxu0 0.0
    %3117 = vmatpush1.msra.mxu0 0.0
    %3118 = vmatprep.subr.mxu0 0.0
    %3119 = vmatpush1.msra.mxu0 0.0
    %3120 = vmatprep.subr.mxu0 0.0
    %3121 = vmatpush1.msra.mxu0 0.0
    %3122 = vmatprep.subr.mxu0 0.0
    %3123 = vmatpush1.msra.mxu0 0.0
    %3124 = vmatprep.subr.mxu0 0.0
    %3125 = vmatpush1.msra.mxu0 0.0
    %3126 = vmatprep.subr.mxu0 0.0
    %3127 = vmatpush1.msra.mxu0 0.0
    %3128 = vmatprep.subr.mxu0 0.0
    %3129 = vmatpush1.msra.mxu0 0.0
    %3130 = vmatprep.subr.mxu0 0.0
    %3131 = vmatpush1.msra.mxu0 0.0
    %3132 = vmatprep.subr.mxu0 0.0
    %3133 = vmatpush1.msra.mxu0 0.0
    %3134 = vmatprep.subr.mxu0 0.0
    %3135 = vmatpush1.msra.mxu0 0.0
    %3136 = vmatprep.subr.mxu0 0.0
    %3137 = vmatpush1.msra.mxu0 0.0
    %3138 = vmatprep.mubr.f32.mxu0 0.0
    %v3139 = vand.u32 %v2810, 4294901760
    %v3140 = vsub.f32 %v2810, %v3139
    %v3141 = vand.u32 %v3140, 4294901760
    %3142 = vmatmul.mubr.f32.gmra.mrb[0].mxu0 %v3141
    %v3143 = vpop.f32.mrb[0].mxu0
    %v3144 = vadd.f32 %v3062, %v3143
    %v3145 = vpop.f32.mrb[0].mxu0
    %3146 = vmatprep.mubr.f32.mxu0 0.0
    %v3147 = vand.u32 %v2813, 4294901760
    %v3148 = vsub.f32 %v2813, %v3147
    %v3149 = vand.u32 %v3148, 4294901760
    %3150 = vmatmul.mubr.f32.gmra.mrb[0].mxu0 %v3149
    %v3151 = vpop.f32.mrb[0].mxu0
    %v3152 = vadd.f32 %v3069, %v3151
    %v3153 = vpop.f32.mrb[0].mxu0
    %3154 = vdwg.mxu0
    %3155 = vmatprep.subr.mxu0 0.0
    %v3156 = vand.u32 %v2807, 4294901760
    %v3157 = vsub.f32 %v2807, %v3156
    %v3158 = vand.u32 %v3157, 4294901760
    %3159 = vmatpush1.msra.mxu0 %v3158
    %3160 = vmatprep.subr.mxu0 0.0
    %v3161 = vand.u32 %v2808, 4294901760
    %v3162 = vsub.f32 %v2808, %v3161
    %v3163 = vand.u32 %v3162, 4294901760
    %3164 = vmatpush1.msra.mxu0 %v3163
    %3165 = vmatprep.subr.mxu0 0.0
    %3166 = vmatpush1.msra.mxu0 0.0
    %3167 = vmatprep.subr.mxu0 0.0
    %3168 = vmatpush1.msra.mxu0 0.0
    %3169 = vmatprep.subr.mxu0 0.0
    %3170 = vmatpush1.msra.mxu0 0.0
    %3171 = vmatprep.subr.mxu0 0.0
    %3172 = vmatpush1.msra.mxu0 0.0
    %3173 = vmatprep.subr.mxu0 0.0
    %3174 = vmatpush1.msra.mxu0 0.0
    %3175 = vmatprep.subr.mxu0 0.0
    %3176 = vmatpush1.msra.mxu0 0.0
    %3177 = vmatprep.subr.mxu0 0.0
    %3178 = vmatpush1.msra.mxu0 0.0
    %3179 = vmatprep.subr.mxu0 0.0
    %3180 = vmatpush1.msra.mxu0 0.0
    %3181 = vmatprep.subr.mxu0 0.0
    %3182 = vmatpush1.msra.mxu0 0.0
    %3183 = vmatprep.subr.mxu0 0.0
    %3184 = vmatpush1.msra.mxu0 0.0
    %3185 = vmatprep.subr.mxu0 0.0
    %3186 = vmatpush1.msra.mxu0 0.0
    %3187 = vmatprep.subr.mxu0 0.0
    %3188 = vmatpush1.msra.mxu0 0.0
    %3189 = vmatprep.subr.mxu0 0.0
    %3190 = vmatpush1.msra.mxu0 0.0
    %3191 = vmatprep.subr.mxu0 0.0
    %3192 = vmatpush1.msra.mxu0 0.0
    %3193 = vmatprep.subr.mxu0 0.0
    %3194 = vmatpush1.msra.mxu0 0.0
    %3195 = vmatprep.subr.mxu0 0.0
    %3196 = vmatpush1.msra.mxu0 0.0
    %3197 = vmatprep.subr.mxu0 0.0
    %3198 = vmatpush1.msra.mxu0 0.0
    %3199 = vmatprep.subr.mxu0 0.0
    %3200 = vmatpush1.msra.mxu0 0.0
    %3201 = vmatprep.subr.mxu0 0.0
    %3202 = vmatpush1.msra.mxu0 0.0
    %3203 = vmatprep.subr.mxu0 0.0
    %3204 = vmatpush1.msra.mxu0 0.0
    %3205 = vmatprep.subr.mxu0 0.0
    %3206 = vmatpush1.msra.mxu0 0.0
    %3207 = vmatprep.subr.mxu0 0.0
    %3208 = vmatpush1.msra.mxu0 0.0
    %3209 = vmatprep.subr.mxu0 0.0
    %3210 = vmatpush1.msra.mxu0 0.0
    %3211 = vmatprep.subr.mxu0 0.0
    %3212 = vmatpush1.msra.mxu0 0.0
    %3213 = vmatprep.subr.mxu0 0.0
    %3214 = vmatpush1.msra.mxu0 0.0
    %3215 = vmatprep.subr.mxu0 0.0
    %3216 = vmatpush1.msra.mxu0 0.0
    %3217 = vmatprep.subr.mxu0 0.0
    %3218 = vmatpush1.msra.mxu0 0.0
    %3219 = vmatprep.subr.mxu0 0.0
    %3220 = vmatpush1.msra.mxu0 0.0
    %3221 = vmatprep.subr.mxu0 0.0
    %3222 = vmatpush1.msra.mxu0 0.0
    %3223 = vmatprep.subr.mxu0 0.0
    %3224 = vmatpush1.msra.mxu0 0.0
    %3225 = vmatprep.mubr.f32.mxu0 0.0
    %v3226 = vand.u32 %v2810, 4294901760
    %3227 = vmatmul.mubr.f32.gmra.mrb[0].mxu0 %v3226
    %v3228 = vpop.f32.mrb[0].mxu0
    %v3229 = vadd.f32 %v3144, %v3228
    %v3230 = vpop.f32.mrb[0].mxu0
    %3231 = vmatprep.mubr.f32.mxu0 0.0
    %v3232 = vand.u32 %v2813, 4294901760
    %3233 = vmatmul.mubr.f32.gmra.mrb[0].mxu0 %v3232
    %v3234 = vpop.f32.mrb[0].mxu0
    %v3235 = vadd.f32 %v3152, %v3234
    %v3236 = vpop.f32.mrb[0].mxu0
    %3237 = vdwg.mxu0
    %3238 = vmatprep.subr.mxu0 0.0
    %v3239 = vand.u32 %v2807, 4294901760
    %3240 = vmatpush1.msra.mxu0 %v3239
    %3241 = vmatprep.subr.mxu0 0.0
    %v3242 = vand.u32 %v2808, 4294901760
    %3243 = vmatpush1.msra.mxu0 %v3242
    %3244 = vmatprep.subr.mxu0 0.0
    %3245 = vmatpush1.msra.mxu0 0.0
    %3246 = vmatprep.subr.mxu0 0.0
    %3247 = vmatpush1.msra.mxu0 0.0
    %3248 = vmatprep.subr.mxu0 0.0
    %3249 = vmatpush1.msra.mxu0 0.0
    %3250 = vmatprep.subr.mxu0 0.0
    %3251 = vmatpush1.msra.mxu0 0.0
    %3252 = vmatprep.subr.mxu0 0.0
    %3253 = vmatpush1.msra.mxu0 0.0
    %3254 = vmatprep.subr.mxu0 0.0
    %3255 = vmatpush1.msra.mxu0 0.0
    %3256 = vmatprep.subr.mxu0 0.0
    %3257 = vmatpush1.msra.mxu0 0.0
    %3258 = vmatprep.subr.mxu0 0.0
    %3259 = vmatpush1.msra.mxu0 0.0
    %3260 = vmatprep.subr.mxu0 0.0
    %3261 = vmatpush1.msra.mxu0 0.0
    %3262 = vmatprep.subr.mxu0 0.0
    %3263 = vmatpush1.msra.mxu0 0.0
    %3264 = vmatprep.subr.mxu0 0.0
    %3265 = vmatpush1.msra.mxu0 0.0
    %3266 = vmatprep.subr.mxu0 0.0
    %3267 = vmatpush1.msra.mxu0 0.0
    %3268 = vmatprep.subr.mxu0 0.0
    %3269 = vmatpush1.msra.mxu0 0.0
    %3270 = vmatprep.subr.mxu0 0.0
    %3271 = vmatpush1.msra.mxu0 0.0
    %3272 = vmatprep.subr.mxu0 0.0
    %3273 = vmatpush1.msra.mxu0 0.0
    %3274 = vmatprep.subr.mxu0 0.0
    %3275 = vmatpush1.msra.mxu0 0.0
    %3276 = vmatprep.subr.mxu0 0.0
    %3277 = vmatpush1.msra.mxu0 0.0
    %3278 = vmatprep.subr.mxu0 0.0
    %3279 = vmatpush1.msra.mxu0 0.0
    %3280 = vmatprep.subr.mxu0 0.0
    %3281 = vmatpush1.msra.mxu0 0.0
    %3282 = vmatprep.subr.mxu0 0.0
    %3283 = vmatpush1.msra.mxu0 0.0
    %3284 = vmatprep.subr.mxu0 0.0
    %3285 = vmatpush1.msra.mxu0 0.0
    %3286 = vmatprep.subr.mxu0 0.0
    %3287 = vmatpush1.msra.mxu0 0.0
    %3288 = vmatprep.subr.mxu0 0.0
    %3289 = vmatpush1.msra.mxu0 0.0
    %3290 = vmatprep.subr.mxu0 0.0
    %3291 = vmatpush1.msra.mxu0 0.0
    %3292 = vmatprep.subr.mxu0 0.0
    %3293 = vmatpush1.msra.mxu0 0.0
    %3294 = vmatprep.subr.mxu0 0.0
    %3295 = vmatpush1.msra.mxu0 0.0
    %3296 = vmatprep.subr.mxu0 0.0
    %3297 = vmatpush1.msra.mxu0 0.0
    %3298 = vmatprep.subr.mxu0 0.0
    %3299 = vmatpush1.msra.mxu0 0.0
    %3300 = vmatprep.subr.mxu0 0.0
    %3301 = vmatpush1.msra.mxu0 0.0
    %3302 = vmatprep.subr.mxu0 0.0
    %3303 = vmatpush1.msra.mxu0 0.0
    %3304 = vmatprep.mubr.f32.mxu0 0.0
    %v3305 = vand.u32 %v2810, 4294901760
    %3306 = vmatmul.mubr.f32.gmra.mrb[0].mxu0 %v3305
    %v3307 = vpop.f32.mrb[0].mxu0
    %v3308 = vadd.f32 %v3229, %v3307
    %v3309 = vpop.f32.mrb[0].mxu0
    %3310 = vmatprep.mubr.f32.mxu0 0.0
    %v3311 = vand.u32 %v2813, 4294901760
    %3312 = vmatmul.mubr.f32.gmra.mrb[0].mxu0 %v3311
    %v3313 = vpop.f32.mrb[0].mxu0
    %v3314 = vadd.f32 %v3235, %v3313
    %v3315 = vpop.f32.mrb[0].mxu0
    %3316 = vdwg.mxu0
    %v3318 = vsel %vm2245, %v2265, 0
    %v3321 = vsel %vm2245, %v2267, 0
    %3323 = vmatprep.subr.mxu0 0.0
    %v3324 = vand.u32 %v2268, 4294901760
    %3325 = vmatpush1.msra.mxu0 %v3324
    %3326 = vmatprep.subr.mxu0 0.0
    %v3327 = vand.u32 %v2269, 4294901760
    %3328 = vmatpush1.msra.mxu0 %v3327
    %3329 = vmatprep.subr.mxu0 0.0
    %3330 = vmatpush1.msra.mxu0 0.0
    %3331 = vmatprep.subr.mxu0 0.0
    %3332 = vmatpush1.msra.mxu0 0.0
    %3333 = vmatprep.subr.mxu0 0.0
    %3334 = vmatpush1.msra.mxu0 0.0
    %3335 = vmatprep.subr.mxu0 0.0
    %3336 = vmatpush1.msra.mxu0 0.0
    %3337 = vmatprep.subr.mxu0 0.0
    %3338 = vmatpush1.msra.mxu0 0.0
    %3339 = vmatprep.subr.mxu0 0.0
    %3340 = vmatpush1.msra.mxu0 0.0
    %3341 = vmatprep.subr.mxu0 0.0
    %3342 = vmatpush1.msra.mxu0 0.0
    %3343 = vmatprep.subr.mxu0 0.0
    %3344 = vmatpush1.msra.mxu0 0.0
    %3345 = vmatprep.subr.mxu0 0.0
    %3346 = vmatpush1.msra.mxu0 0.0
    %3347 = vmatprep.subr.mxu0 0.0
    %3348 = vmatpush1.msra.mxu0 0.0
    %3349 = vmatprep.subr.mxu0 0.0
    %3350 = vmatpush1.msra.mxu0 0.0
    %3351 = vmatprep.subr.mxu0 0.0
    %3352 = vmatpush1.msra.mxu0 0.0
    %3353 = vmatprep.subr.mxu0 0.0
    %3354 = vmatpush1.msra.mxu0 0.0
    %3355 = vmatprep.subr.mxu0 0.0
    %3356 = vmatpush1.msra.mxu0 0.0
    %3357 = vmatprep.subr.mxu0 0.0
    %3358 = vmatpush1.msra.mxu0 0.0
    %3359 = vmatprep.subr.mxu0 0.0
    %3360 = vmatpush1.msra.mxu0 0.0
    %3361 = vmatprep.subr.mxu0 0.0
    %3362 = vmatpush1.msra.mxu0 0.0
    %3363 = vmatprep.subr.mxu0 0.0
    %3364 = vmatpush1.msra.mxu0 0.0
    %3365 = vmatprep.subr.mxu0 0.0
    %3366 = vmatpush1.msra.mxu0 0.0
    %3367 = vmatprep.subr.mxu0 0.0
    %3368 = vmatpush1.msra.mxu0 0.0
    %3369 = vmatprep.subr.mxu0 0.0
    %3370 = vmatpush1.msra.mxu0 0.0
    %3371 = vmatprep.subr.mxu0 0.0
    %3372 = vmatpush1.msra.mxu0 0.0
    %3373 = vmatprep.subr.mxu0 0.0
    %3374 = vmatpush1.msra.mxu0 0.0
    %3375 = vmatprep.subr.mxu0 0.0
    %3376 = vmatpush1.msra.mxu0 0.0
    %3377 = vmatprep.subr.mxu0 0.0
    %3378 = vmatpush1.msra.mxu0 0.0
    %3379 = vmatprep.subr.mxu0 0.0
    %3380 = vmatpush1.msra.mxu0 0.0
    %3381 = vmatprep.subr.mxu0 0.0
    %3382 = vmatpush1.msra.mxu0 0.0
    %3383 = vmatprep.subr.mxu0 0.0
    %3384 = vmatpush1.msra.mxu0 0.0
    %3385 = vmatprep.subr.mxu0 0.0
    %3386 = vmatpush1.msra.mxu0 0.0
    %3387 = vmatprep.subr.mxu0 0.0
    %3388 = vmatpush1.msra.mxu0 0.0
    %3389 = vmatprep.mubr.f32.mxu0 0.0
    %v3390 = vand.u32 %v3318, 4294901760
    %v3391 = vsub.f32 %v3318, %v3390
    %v3392 = vand.u32 %v3391, 4294901760
    %v3393 = vsub.f32 %v3391, %v3392
    %v3394 = vand.u32 %v3393, 4294901760
    %3395 = vmatmul.mubr.f32.gmra.mrb[0].mxu0 %v3394
    %v3396 = vpop.f32.mrb[0].mxu0
    %v3397 = vadd.f32 %v3308, %v3396
    %v3398 = vpop.f32.mrb[0].mxu0
    %3399 = vmatprep.mubr.f32.mxu0 0.0
    %v3400 = vand.u32 %v3321, 4294901760
    %v3401 = vsub.f32 %v3321, %v3400
    %v3402 = vand.u32 %v3401, 4294901760
    %v3403 = vsub.f32 %v3401, %v3402
    %v3404 = vand.u32 %v3403, 4294901760
    %3405 = vmatmul.mubr.f32.gmra.mrb[0].mxu0 %v3404
    %v3406 = vpop.f32.mrb[0].mxu0
    %v3407 = vadd.f32 %v3314, %v3406
    %v3408 = vpop.f32.mrb[0].mxu0
    %3409 = vdwg.mxu0
    %3410 = vmatprep.subr.mxu0 0.0
    %v3411 = vand.u32 %v2268, 4294901760
    %v3412 = vsub.f32 %v2268, %v3411
    %v3413 = vand.u32 %v3412, 4294901760
    %v3414 = vsub.f32 %v3412, %v3413
    %v3415 = vand.u32 %v3414, 4294901760
    %3416 = vmatpush1.msra.mxu0 %v3415
    %3417 = vmatprep.subr.mxu0 0.0
    %v3418 = vand.u32 %v2269, 4294901760
    %v3419 = vsub.f32 %v2269, %v3418
    %v3420 = vand.u32 %v3419, 4294901760
    %v3421 = vsub.f32 %v3419, %v3420
    %v3422 = vand.u32 %v3421, 4294901760
    %3423 = vmatpush1.msra.mxu0 %v3422
    %3424 = vmatprep.subr.mxu0 0.0
    %3425 = vmatpush1.msra.mxu0 0.0
    %3426 = vmatprep.subr.mxu0 0.0
    %3427 = vmatpush1.msra.mxu0 0.0
    %3428 = vmatprep.subr.mxu0 0.0
    %3429 = vmatpush1.msra.mxu0 0.0
    %3430 = vmatprep.subr.mxu0 0.0
    %3431 = vmatpush1.msra.mxu0 0.0
    %3432 = vmatprep.subr.mxu0 0.0
    %3433 = vmatpush1.msra.mxu0 0.0
    %3434 = vmatprep.subr.mxu0 0.0
    %3435 = vmatpush1.msra.mxu0 0.0
    %3436 = vmatprep.subr.mxu0 0.0
    %3437 = vmatpush1.msra.mxu0 0.0
    %3438 = vmatprep.subr.mxu0 0.0
    %3439 = vmatpush1.msra.mxu0 0.0
    %3440 = vmatprep.subr.mxu0 0.0
    %3441 = vmatpush1.msra.mxu0 0.0
    %3442 = vmatprep.subr.mxu0 0.0
    %3443 = vmatpush1.msra.mxu0 0.0
    %3444 = vmatprep.subr.mxu0 0.0
    %3445 = vmatpush1.msra.mxu0 0.0
    %3446 = vmatprep.subr.mxu0 0.0
    %3447 = vmatpush1.msra.mxu0 0.0
    %3448 = vmatprep.subr.mxu0 0.0
    %3449 = vmatpush1.msra.mxu0 0.0
    %3450 = vmatprep.subr.mxu0 0.0
    %3451 = vmatpush1.msra.mxu0 0.0
    %3452 = vmatprep.subr.mxu0 0.0
    %3453 = vmatpush1.msra.mxu0 0.0
    %3454 = vmatprep.subr.mxu0 0.0
    %3455 = vmatpush1.msra.mxu0 0.0
    %3456 = vmatprep.subr.mxu0 0.0
    %3457 = vmatpush1.msra.mxu0 0.0
    %3458 = vmatprep.subr.mxu0 0.0
    %3459 = vmatpush1.msra.mxu0 0.0
    %3460 = vmatprep.subr.mxu0 0.0
    %3461 = vmatpush1.msra.mxu0 0.0
    %3462 = vmatprep.subr.mxu0 0.0
    %3463 = vmatpush1.msra.mxu0 0.0
    %3464 = vmatprep.subr.mxu0 0.0
    %3465 = vmatpush1.msra.mxu0 0.0
    %3466 = vmatprep.subr.mxu0 0.0
    %3467 = vmatpush1.msra.mxu0 0.0
    %3468 = vmatprep.subr.mxu0 0.0
    %3469 = vmatpush1.msra.mxu0 0.0
    %3470 = vmatprep.subr.mxu0 0.0
    %3471 = vmatpush1.msra.mxu0 0.0
    %3472 = vmatprep.subr.mxu0 0.0
    %3473 = vmatpush1.msra.mxu0 0.0
    %3474 = vmatprep.subr.mxu0 0.0
    %3475 = vmatpush1.msra.mxu0 0.0
    %3476 = vmatprep.subr.mxu0 0.0
    %3477 = vmatpush1.msra.mxu0 0.0
    %3478 = vmatprep.subr.mxu0 0.0
    %3479 = vmatpush1.msra.mxu0 0.0
    %3480 = vmatprep.subr.mxu0 0.0
    %3481 = vmatpush1.msra.mxu0 0.0
    %3482 = vmatprep.subr.mxu0 0.0
    %3483 = vmatpush1.msra.mxu0 0.0
    %3484 = vmatprep.mubr.f32.mxu0 0.0
    %v3485 = vand.u32 %v3318, 4294901760
    %3486 = vmatmul.mubr.f32.gmra.mrb[0].mxu0 %v3485
    %v3487 = vpop.f32.mrb[0].mxu0
    %v3488 = vadd.f32 %v3397, %v3487
    %v3489 = vpop.f32.mrb[0].mxu0
    %3490 = vmatprep.mubr.f32.mxu0 0.0
    %v3491 = vand.u32 %v3321, 4294901760
    %3492 = vmatmul.mubr.f32.gmra.mrb[0].mxu0 %v3491
    %v3493 = vpop.f32.mrb[0].mxu0
    %v3494 = vadd.f32 %v3407, %v3493
    %v3495 = vpop.f32.mrb[0].mxu0
    %3496 = vdwg.mxu0
    %3497 = vmatprep.subr.mxu0 0.0
    %v3498 = vand.u32 %v2268, 4294901760
    %v3499 = vsub.f32 %v2268, %v3498
    %3500 = vmatpush1.msra.mxu0 %v3499
    %3501 = vmatprep.subr.mxu0 0.0
    %v3502 = vand.u32 %v2269, 4294901760
    %v3503 = vsub.f32 %v2269, %v3502
    %3504 = vmatpush1.msra.mxu0 %v3503
    %3505 = vmatprep.subr.mxu0 0.0
    %3506 = vmatpush1.msra.mxu0 0.0
    %3507 = vmatprep.subr.mxu0 0.0
    %3508 = vmatpush1.msra.mxu0 0.0
    %3509 = vmatprep.subr.mxu0 0.0
    %3510 = vmatpush1.msra.mxu0 0.0
    %3511 = vmatprep.subr.mxu0 0.0
    %3512 = vmatpush1.msra.mxu0 0.0
    %3513 = vmatprep.subr.mxu0 0.0
    %3514 = vmatpush1.msra.mxu0 0.0
    %3515 = vmatprep.subr.mxu0 0.0
    %3516 = vmatpush1.msra.mxu0 0.0
    %3517 = vmatprep.subr.mxu0 0.0
    %3518 = vmatpush1.msra.mxu0 0.0
    %3519 = vmatprep.subr.mxu0 0.0
    %3520 = vmatpush1.msra.mxu0 0.0
    %3521 = vmatprep.subr.mxu0 0.0
    %3522 = vmatpush1.msra.mxu0 0.0
    %3523 = vmatprep.subr.mxu0 0.0
    %3524 = vmatpush1.msra.mxu0 0.0
    %3525 = vmatprep.subr.mxu0 0.0
    %3526 = vmatpush1.msra.mxu0 0.0
    %3527 = vmatprep.subr.mxu0 0.0
    %3528 = vmatpush1.msra.mxu0 0.0
    %3529 = vmatprep.subr.mxu0 0.0
    %3530 = vmatpush1.msra.mxu0 0.0
    %3531 = vmatprep.subr.mxu0 0.0
    %3532 = vmatpush1.msra.mxu0 0.0
    %3533 = vmatprep.subr.mxu0 0.0
    %3534 = vmatpush1.msra.mxu0 0.0
    %3535 = vmatprep.subr.mxu0 0.0
    %3536 = vmatpush1.msra.mxu0 0.0
    %3537 = vmatprep.subr.mxu0 0.0
    %3538 = vmatpush1.msra.mxu0 0.0
    %3539 = vmatprep.subr.mxu0 0.0
    %3540 = vmatpush1.msra.mxu0 0.0
    %3541 = vmatprep.subr.mxu0 0.0
    %3542 = vmatpush1.msra.mxu0 0.0
    %3543 = vmatprep.subr.mxu0 0.0
    %3544 = vmatpush1.msra.mxu0 0.0
    %3545 = vmatprep.subr.mxu0 0.0
    %3546 = vmatpush1.msra.mxu0 0.0
    %3547 = vmatprep.subr.mxu0 0.0
    %3548 = vmatpush1.msra.mxu0 0.0
    %3549 = vmatprep.subr.mxu0 0.0
    %3550 = vmatpush1.msra.mxu0 0.0
    %3551 = vmatprep.subr.mxu0 0.0
    %3552 = vmatpush1.msra.mxu0 0.0
    %3553 = vmatprep.subr.mxu0 0.0
    %3554 = vmatpush1.msra.mxu0 0.0
    %3555 = vmatprep.subr.mxu0 0.0
    %3556 = vmatpush1.msra.mxu0 0.0
    %3557 = vmatprep.subr.mxu0 0.0
    %3558 = vmatpush1.msra.mxu0 0.0
    %3559 = vmatprep.subr.mxu0 0.0
    %3560 = vmatpush1.msra.mxu0 0.0
    %3561 = vmatprep.subr.mxu0 0.0
    %3562 = vmatpush1.msra.mxu0 0.0
    %3563 = vmatprep.subr.mxu0 0.0
    %3564 = vmatpush1.msra.mxu0 0.0
    %3565 = vmatprep.mubr.f32.mxu0 0.0
    %v3566 = vand.u32 %v3318, 4294901760
    %v3567 = vsub.f32 %v3318, %v3566
    %3568 = vmatmul.mubr.f32.gmra.mrb[0].mxu0 %v3567
    %v3569 = vpop.f32.mrb[0].mxu0
    %v3570 = vadd.f32 %v3488, %v3569
    %v3571 = vpop.f32.mrb[0].mxu0
    %3572 = vmatprep.mubr.f32.mxu0 0.0
    %v3573 = vand.u32 %v3321, 4294901760
    %v3574 = vsub.f32 %v3321, %v3573
    %3575 = vmatmul.mubr.f32.gmra.mrb[0].mxu0 %v3574
    %v3576 = vpop.f32.mrb[0].mxu0
    %v3577 = vadd.f32 %v3494, %v3576
    %v3578 = vpop.f32.mrb[0].mxu0
    %3579 = vdwg.mxu0
    %3580 = vmatprep.subr.mxu0 0.0
    %v3581 = vand.u32 %v2268, 4294901760
    %3582 = vmatpush1.msra.mxu0 %v3581
    %3583 = vmatprep.subr.mxu0 0.0
    %v3584 = vand.u32 %v2269, 4294901760
    %3585 = vmatpush1.msra.mxu0 %v3584
    %3586 = vmatprep.subr.mxu0 0.0
    %3587 = vmatpush1.msra.mxu0 0.0
    %3588 = vmatprep.subr.mxu0 0.0
    %3589 = vmatpush1.msra.mxu0 0.0
    %3590 = vmatprep.subr.mxu0 0.0
    %3591 = vmatpush1.msra.mxu0 0.0
    %3592 = vmatprep.subr.mxu0 0.0
    %3593 = vmatpush1.msra.mxu0 0.0
    %3594 = vmatprep.subr.mxu0 0.0
    %3595 = vmatpush1.msra.mxu0 0.0
    %3596 = vmatprep.subr.mxu0 0.0
    %3597 = vmatpush1.msra.mxu0 0.0
    %3598 = vmatprep.subr.mxu0 0.0
    %3599 = vmatpush1.msra.mxu0 0.0
    %3600 = vmatprep.subr.mxu0 0.0
    %3601 = vmatpush1.msra.mxu0 0.0
    %3602 = vmatprep.subr.mxu0 0.0
    %3603 = vmatpush1.msra.mxu0 0.0
    %3604 = vmatprep.subr.mxu0 0.0
    %3605 = vmatpush1.msra.mxu0 0.0
    %3606 = vmatprep.subr.mxu0 0.0
    %3607 = vmatpush1.msra.mxu0 0.0
    %3608 = vmatprep.subr.mxu0 0.0
    %3609 = vmatpush1.msra.mxu0 0.0
    %3610 = vmatprep.subr.mxu0 0.0
    %3611 = vmatpush1.msra.mxu0 0.0
    %3612 = vmatprep.subr.mxu0 0.0
    %3613 = vmatpush1.msra.mxu0 0.0
    %3614 = vmatprep.subr.mxu0 0.0
    %3615 = vmatpush1.msra.mxu0 0.0
    %3616 = vmatprep.subr.mxu0 0.0
    %3617 = vmatpush1.msra.mxu0 0.0
    %3618 = vmatprep.subr.mxu0 0.0
    %3619 = vmatpush1.msra.mxu0 0.0
    %3620 = vmatprep.subr.mxu0 0.0
    %3621 = vmatpush1.msra.mxu0 0.0
    %3622 = vmatprep.subr.mxu0 0.0
    %3623 = vmatpush1.msra.mxu0 0.0
    %3624 = vmatprep.subr.mxu0 0.0
    %3625 = vmatpush1.msra.mxu0 0.0
    %3626 = vmatprep.subr.mxu0 0.0
    %3627 = vmatpush1.msra.mxu0 0.0
    %3628 = vmatprep.subr.mxu0 0.0
    %3629 = vmatpush1.msra.mxu0 0.0
    %3630 = vmatprep.subr.mxu0 0.0
    %3631 = vmatpush1.msra.mxu0 0.0
    %3632 = vmatprep.subr.mxu0 0.0
    %3633 = vmatpush1.msra.mxu0 0.0
    %3634 = vmatprep.subr.mxu0 0.0
    %3635 = vmatpush1.msra.mxu0 0.0
    %3636 = vmatprep.subr.mxu0 0.0
    %3637 = vmatpush1.msra.mxu0 0.0
    %3638 = vmatprep.subr.mxu0 0.0
    %3639 = vmatpush1.msra.mxu0 0.0
    %3640 = vmatprep.subr.mxu0 0.0
    %3641 = vmatpush1.msra.mxu0 0.0
    %3642 = vmatprep.subr.mxu0 0.0
    %3643 = vmatpush1.msra.mxu0 0.0
    %3644 = vmatprep.subr.mxu0 0.0
    %3645 = vmatpush1.msra.mxu0 0.0
    %3646 = vmatprep.mubr.f32.mxu0 0.0
    %v3647 = vand.u32 %v3318, 4294901760
    %v3648 = vsub.f32 %v3318, %v3647
    %v3649 = vand.u32 %v3648, 4294901760
    %3650 = vmatmul.mubr.f32.gmra.mrb[0].mxu0 %v3649
    %v3651 = vpop.f32.mrb[0].mxu0
    %v3652 = vadd.f32 %v3570, %v3651
    %v3653 = vpop.f32.mrb[0].mxu0
    %3654 = vmatprep.mubr.f32.mxu0 0.0
    %v3655 = vand.u32 %v3321, 4294901760
    %v3656 = vsub.f32 %v3321, %v3655
    %v3657 = vand.u32 %v3656, 4294901760
    %3658 = vmatmul.mubr.f32.gmra.mrb[0].mxu0 %v3657
    %v3659 = vpop.f32.mrb[0].mxu0
    %v3660 = vadd.f32 %v3577, %v3659
    %v3661 = vpop.f32.mrb[0].mxu0
    %3662 = vdwg.mxu0
    %3663 = vmatprep.subr.mxu0 0.0
    %v3664 = vand.u32 %v2268, 4294901760
    %v3665 = vsub.f32 %v2268, %v3664
    %v3666 = vand.u32 %v3665, 4294901760
    %3667 = vmatpush1.msra.mxu0 %v3666
    %3668 = vmatprep.subr.mxu0 0.0
    %v3669 = vand.u32 %v2269, 4294901760
    %v3670 = vsub.f32 %v2269, %v3669
    %v3671 = vand.u32 %v3670, 4294901760
    %3672 = vmatpush1.msra.mxu0 %v3671
    %3673 = vmatprep.subr.mxu0 0.0
    %3674 = vmatpush1.msra.mxu0 0.0
    %3675 = vmatprep.subr.mxu0 0.0
    %3676 = vmatpush1.msra.mxu0 0.0
    %3677 = vmatprep.subr.mxu0 0.0
    %3678 = vmatpush1.msra.mxu0 0.0
    %3679 = vmatprep.subr.mxu0 0.0
    %3680 = vmatpush1.msra.mxu0 0.0
    %3681 = vmatprep.subr.mxu0 0.0
    %3682 = vmatpush1.msra.mxu0 0.0
    %3683 = vmatprep.subr.mxu0 0.0
    %3684 = vmatpush1.msra.mxu0 0.0
    %3685 = vmatprep.subr.mxu0 0.0
    %3686 = vmatpush1.msra.mxu0 0.0
    %3687 = vmatprep.subr.mxu0 0.0
    %3688 = vmatpush1.msra.mxu0 0.0
    %3689 = vmatprep.subr.mxu0 0.0
    %3690 = vmatpush1.msra.mxu0 0.0
    %3691 = vmatprep.subr.mxu0 0.0
    %3692 = vmatpush1.msra.mxu0 0.0
    %3693 = vmatprep.subr.mxu0 0.0
    %3694 = vmatpush1.msra.mxu0 0.0
    %3695 = vmatprep.subr.mxu0 0.0
    %3696 = vmatpush1.msra.mxu0 0.0
    %3697 = vmatprep.subr.mxu0 0.0
    %3698 = vmatpush1.msra.mxu0 0.0
    %3699 = vmatprep.subr.mxu0 0.0
    %3700 = vmatpush1.msra.mxu0 0.0
    %3701 = vmatprep.subr.mxu0 0.0
    %3702 = vmatpush1.msra.mxu0 0.0
    %3703 = vmatprep.subr.mxu0 0.0
    %3704 = vmatpush1.msra.mxu0 0.0
    %3705 = vmatprep.subr.mxu0 0.0
    %3706 = vmatpush1.msra.mxu0 0.0
    %3707 = vmatprep.subr.mxu0 0.0
    %3708 = vmatpush1.msra.mxu0 0.0
    %3709 = vmatprep.subr.mxu0 0.0
    %3710 = vmatpush1.msra.mxu0 0.0
    %3711 = vmatprep.subr.mxu0 0.0
    %3712 = vmatpush1.msra.mxu0 0.0
    %3713 = vmatprep.subr.mxu0 0.0
    %3714 = vmatpush1.msra.mxu0 0.0
    %3715 = vmatprep.subr.mxu0 0.0
    %3716 = vmatpush1.msra.mxu0 0.0
    %3717 = vmatprep.subr.mxu0 0.0
    %3718 = vmatpush1.msra.mxu0 0.0
    %3719 = vmatprep.subr.mxu0 0.0
    %3720 = vmatpush1.msra.mxu0 0.0
    %3721 = vmatprep.subr.mxu0 0.0
    %3722 = vmatpush1.msra.mxu0 0.0
    %3723 = vmatprep.subr.mxu0 0.0
    %3724 = vmatpush1.msra.mxu0 0.0
    %3725 = vmatprep.subr.mxu0 0.0
    %3726 = vmatpush1.msra.mxu0 0.0
    %3727 = vmatprep.subr.mxu0 0.0
    %3728 = vmatpush1.msra.mxu0 0.0
    %3729 = vmatprep.subr.mxu0 0.0
    %3730 = vmatpush1.msra.mxu0 0.0
    %3731 = vmatprep.subr.mxu0 0.0
    %3732 = vmatpush1.msra.mxu0 0.0
    %3733 = vmatprep.mubr.f32.mxu0 0.0
    %v3734 = vand.u32 %v3318, 4294901760
    %3735 = vmatmul.mubr.f32.gmra.mrb[0].mxu0 %v3734
    %v3736 = vpop.f32.mrb[0].mxu0
    %v3737 = vadd.f32 %v3652, %v3736
    %v3738 = vpop.f32.mrb[0].mxu0
    %3739 = vmatprep.mubr.f32.mxu0 0.0
    %v3740 = vand.u32 %v3321, 4294901760
    %3741 = vmatmul.mubr.f32.gmra.mrb[0].mxu0 %v3740
    %v3742 = vpop.f32.mrb[0].mxu0
    %v3743 = vadd.f32 %v3660, %v3742
    %v3744 = vpop.f32.mrb[0].mxu0
    %3745 = vdwg.mxu0
    %3746 = vmatprep.subr.mxu0 0.0
    %v3747 = vand.u32 %v2268, 4294901760
    %3748 = vmatpush1.msra.mxu0 %v3747
    %3749 = vmatprep.subr.mxu0 0.0
    %v3750 = vand.u32 %v2269, 4294901760
    %3751 = vmatpush1.msra.mxu0 %v3750
    %3752 = vmatprep.subr.mxu0 0.0
    %3753 = vmatpush1.msra.mxu0 0.0
    %3754 = vmatprep.subr.mxu0 0.0
    %3755 = vmatpush1.msra.mxu0 0.0
    %3756 = vmatprep.subr.mxu0 0.0
    %3757 = vmatpush1.msra.mxu0 0.0
    %3758 = vmatprep.subr.mxu0 0.0
    %3759 = vmatpush1.msra.mxu0 0.0
    %3760 = vmatprep.subr.mxu0 0.0
    %3761 = vmatpush1.msra.mxu0 0.0
    %3762 = vmatprep.subr.mxu0 0.0
    %3763 = vmatpush1.msra.mxu0 0.0
    %3764 = vmatprep.subr.mxu0 0.0
    %3765 = vmatpush1.msra.mxu0 0.0
    %3766 = vmatprep.subr.mxu0 0.0
    %3767 = vmatpush1.msra.mxu0 0.0
    %3768 = vmatprep.subr.mxu0 0.0
    %3769 = vmatpush1.msra.mxu0 0.0
    %3770 = vmatprep.subr.mxu0 0.0
    %3771 = vmatpush1.msra.mxu0 0.0
    %3772 = vmatprep.subr.mxu0 0.0
    %3773 = vmatpush1.msra.mxu0 0.0
    %3774 = vmatprep.subr.mxu0 0.0
    %3775 = vmatpush1.msra.mxu0 0.0
    %3776 = vmatprep.subr.mxu0 0.0
    %3777 = vmatpush1.msra.mxu0 0.0
    %3778 = vmatprep.subr.mxu0 0.0
    %3779 = vmatpush1.msra.mxu0 0.0
    %3780 = vmatprep.subr.mxu0 0.0
    %3781 = vmatpush1.msra.mxu0 0.0
    %3782 = vmatprep.subr.mxu0 0.0
    %3783 = vmatpush1.msra.mxu0 0.0
    %3784 = vmatprep.subr.mxu0 0.0
    %3785 = vmatpush1.msra.mxu0 0.0
    %3786 = vmatprep.subr.mxu0 0.0
    %3787 = vmatpush1.msra.mxu0 0.0
    %3788 = vmatprep.subr.mxu0 0.0
    %3789 = vmatpush1.msra.mxu0 0.0
    %3790 = vmatprep.subr.mxu0 0.0
    %3791 = vmatpush1.msra.mxu0 0.0
    %3792 = vmatprep.subr.mxu0 0.0
    %3793 = vmatpush1.msra.mxu0 0.0
    %3794 = vmatprep.subr.mxu0 0.0
    %3795 = vmatpush1.msra.mxu0 0.0
    %3796 = vmatprep.subr.mxu0 0.0
    %3797 = vmatpush1.msra.mxu0 0.0
    %3798 = vmatprep.subr.mxu0 0.0
    %3799 = vmatpush1.msra.mxu0 0.0
    %3800 = vmatprep.subr.mxu0 0.0
    %3801 = vmatpush1.msra.mxu0 0.0
    %3802 = vmatprep.subr.mxu0 0.0
    %3803 = vmatpush1.msra.mxu0 0.0
    %3804 = vmatprep.subr.mxu0 0.0
    %3805 = vmatpush1.msra.mxu0 0.0
    %3806 = vmatprep.subr.mxu0 0.0
    %3807 = vmatpush1.msra.mxu0 0.0
    %3808 = vmatprep.subr.mxu0 0.0
    %3809 = vmatpush1.msra.mxu0 0.0
    %3810 = vmatprep.subr.mxu0 0.0
    %3811 = vmatpush1.msra.mxu0 0.0
    %3812 = vmatprep.mubr.f32.mxu0 0.0
    %v3813 = vand.u32 %v3318, 4294901760
    %3814 = vmatmul.mubr.f32.gmra.mrb[0].mxu0 %v3813
    %v3815 = vpop.f32.mrb[0].mxu0
    %v3816 = vadd.f32 %v3737, %v3815
    %v3817 = vpop.f32.mrb[0].mxu0
    %3818 = vmatprep.mubr.f32.mxu0 0.0
    %v3819 = vand.u32 %v3321, 4294901760
    %3820 = vmatmul.mubr.f32.gmra.mrb[0].mxu0 %v3819
    %v3821 = vpop.f32.mrb[0].mxu0
    %v3822 = vadd.f32 %v3743, %v3821
    %v3823 = vpop.f32.mrb[0].mxu0
    %3824 = vdwg.mxu0
    %v3825 = vld [vmem:[#allocation5 + $0x102] sm:$0x1]
    %v3826 = vlaneseq
    %v3827 = vshrl.u32 %v3826, 7
    %v3828 = vsub.s32 0, %v3827
    %v3829 = vrot.slane %v3825, %v3828
    %v3830 = vmul.f32 %v1183, %v3829
    %v3831 = vmul.f32 %v1189, %v3829
    %v3833 = vsel %vm82, %v3830, 0
    %v3836 = vsel %vm82, %v3831, 0
    %3838 = vmatprep.subr.mxu0 0.0
    %v3839 = vand.u32 %v3833, 4294901760
    %3840 = vmatpush1.xpose.msra.mxu0 %v3839
    %3841 = vmatprep.subr.mxu0 0.0
    %v3842 = vand.u32 %v3836, 4294901760
    %3843 = vmatpush1.xpose.msra.mxu0 %v3842
    %3844 = vmatprep.subr.mxu0 0.0
    %3845 = vmatpush1.xpose.msra.mxu0 0.0
    %3846 = vmatprep.subr.mxu0 0.0
    %3847 = vmatpush1.xpose.msra.mxu0 0.0
    %3848 = vmatprep.subr.mxu0 0.0
    %3849 = vmatpush1.xpose.msra.mxu0 0.0
    %3850 = vmatprep.subr.mxu0 0.0
    %3851 = vmatpush1.xpose.msra.mxu0 0.0
    %3852 = vmatprep.subr.mxu0 0.0
    %3853 = vmatpush1.xpose.msra.mxu0 0.0
    %3854 = vmatprep.subr.mxu0 0.0
    %3855 = vmatpush1.xpose.msra.mxu0 0.0
    %3856 = vmatprep.subr.mxu0 0.0
    %3857 = vmatpush1.xpose.msra.mxu0 0.0
    %3858 = vmatprep.subr.mxu0 0.0
    %3859 = vmatpush1.xpose.msra.mxu0 0.0
    %3860 = vmatprep.subr.mxu0 0.0
    %3861 = vmatpush1.xpose.msra.mxu0 0.0
    %3862 = vmatprep.subr.mxu0 0.0
    %3863 = vmatpush1.xpose.msra.mxu0 0.0
    %3864 = vmatprep.subr.mxu0 0.0
    %3865 = vmatpush1.xpose.msra.mxu0 0.0
    %3866 = vmatprep.subr.mxu0 0.0
    %3867 = vmatpush1.xpose.msra.mxu0 0.0
    %3868 = vmatprep.subr.mxu0 0.0
    %3869 = vmatpush1.xpose.msra.mxu0 0.0
    %3870 = vmatprep.subr.mxu0 0.0
    %3871 = vmatpush1.xpose.msra.mxu0 0.0
    %3872 = vmatprep.subr.mxu0 0.0
    %3873 = vmatpush1.xpose.msra.mxu0 0.0
    %3874 = vmatprep.subr.mxu0 0.0
    %3875 = vmatpush1.xpose.msra.mxu0 0.0
    %3876 = vmatprep.subr.mxu0 0.0
    %3877 = vmatpush1.xpose.msra.mxu0 0.0
    %3878 = vmatprep.subr.mxu0 0.0
    %3879 = vmatpush1.xpose.msra.mxu0 0.0
    %3880 = vmatprep.subr.mxu0 0.0
    %3881 = vmatpush1.xpose.msra.mxu0 0.0
    %3882 = vmatprep.subr.mxu0 0.0
    %3883 = vmatpush1.xpose.msra.mxu0 0.0
    %3884 = vmatprep.subr.mxu0 0.0
    %3885 = vmatpush1.xpose.msra.mxu0 0.0
    %3886 = vmatprep.subr.mxu0 0.0
    %3887 = vmatpush1.xpose.msra.mxu0 0.0
    %3888 = vmatprep.subr.mxu0 0.0
    %3889 = vmatpush1.xpose.msra.mxu0 0.0
    %3890 = vmatprep.subr.mxu0 0.0
    %3891 = vmatpush1.xpose.msra.mxu0 0.0
    %3892 = vmatprep.subr.mxu0 0.0
    %3893 = vmatpush1.xpose.msra.mxu0 0.0
    %3894 = vmatprep.subr.mxu0 0.0
    %3895 = vmatpush1.xpose.msra.mxu0 0.0
    %3896 = vmatprep.subr.mxu0 0.0
    %3897 = vmatpush1.xpose.msra.mxu0 0.0
    %3898 = vmatprep.subr.mxu0 0.0
    %3899 = vmatpush1.xpose.msra.mxu0 0.0
    %3900 = vmatprep.subr.mxu0 0.0
    %3901 = vmatpush1.xpose.msra.mxu0 0.0
    %3902 = vmatprep.subr.mxu0 0.0
    %3903 = vmatpush1.xpose.msra.mxu0 0.0
    %3904 = vmatprep.mubr.f32.mxu0 0.0
    %v3905 = vand.u32 %v1732, 4294901760
    %v3906 = vsub.f32 %v1732, %v3905
    %v3907 = vand.u32 %v3906, 4294901760
    %v3908 = vsub.f32 %v3906, %v3907
    %v3909 = vand.u32 %v3908, 4294901760
    %3910 = vmatmul.mubr.f32.gmra.mrb[0].mxu0 %v3909
    %v3911 = vpop.f32.mrb[0].mxu0
    %v3912 = vadd.f32 %v80, %v3911
    %v3913 = vpop.f32.mrb[0].mxu0
    %3914 = vmatprep.mubr.f32.mxu0 0.0
    %v3915 = vand.u32 %v1735, 4294901760
    %v3916 = vsub.f32 %v1735, %v3915
    %v3917 = vand.u32 %v3916, 4294901760
    %v3918 = vsub.f32 %v3916, %v3917
    %v3919 = vand.u32 %v3918, 4294901760
    %3920 = vmatmul.mubr.f32.gmra.mrb[0].mxu0 %v3919
    %v3921 = vpop.f32.mrb[0].mxu0
    %v3922 = vadd.f32 %v81, %v3921
    %v3923 = vpop.f32.mrb[0].mxu0
    %3924 = vdwg.mxu0
    %3925 = vmatprep.subr.mxu0 0.0
    %v3926 = vand.u32 %v3833, 4294901760
    %v3927 = vsub.f32 %v3833, %v3926
    %v3928 = vand.u32 %v3927, 4294901760
    %v3929 = vsub.f32 %v3927, %v3928
    %v3930 = vand.u32 %v3929, 4294901760
    %3931 = vmatpush1.xpose.msra.mxu0 %v3930
    %3932 = vmatprep.subr.mxu0 0.0
    %v3933 = vand.u32 %v3836, 4294901760
    %v3934 = vsub.f32 %v3836, %v3933
    %v3935 = vand.u32 %v3934, 4294901760
    %v3936 = vsub.f32 %v3934, %v3935
    %v3937 = vand.u32 %v3936, 4294901760
    %3938 = vmatpush1.xpose.msra.mxu0 %v3937
    %3939 = vmatprep.subr.mxu0 0.0
    %3940 = vmatpush1.xpose.msra.mxu0 0.0
    %3941 = vmatprep.subr.mxu0 0.0
    %3942 = vmatpush1.xpose.msra.mxu0 0.0
    %3943 = vmatprep.subr.mxu0 0.0
    %3944 = vmatpush1.xpose.msra.mxu0 0.0
    %3945 = vmatprep.subr.mxu0 0.0
    %3946 = vmatpush1.xpose.msra.mxu0 0.0
    %3947 = vmatprep.subr.mxu0 0.0
    %3948 = vmatpush1.xpose.msra.mxu0 0.0
    %3949 = vmatprep.subr.mxu0 0.0
    %3950 = vmatpush1.xpose.msra.mxu0 0.0
    %3951 = vmatprep.subr.mxu0 0.0
    %3952 = vmatpush1.xpose.msra.mxu0 0.0
    %3953 = vmatprep.subr.mxu0 0.0
    %3954 = vmatpush1.xpose.msra.mxu0 0.0
    %3955 = vmatprep.subr.mxu0 0.0
    %3956 = vmatpush1.xpose.msra.mxu0 0.0
    %3957 = vmatprep.subr.mxu0 0.0
    %3958 = vmatpush1.xpose.msra.mxu0 0.0
    %3959 = vmatprep.subr.mxu0 0.0
    %3960 = vmatpush1.xpose.msra.mxu0 0.0
    %3961 = vmatprep.subr.mxu0 0.0
    %3962 = vmatpush1.xpose.msra.mxu0 0.0
    %3963 = vmatprep.subr.mxu0 0.0
    %3964 = vmatpush1.xpose.msra.mxu0 0.0
    %3965 = vmatprep.subr.mxu0 0.0
    %3966 = vmatpush1.xpose.msra.mxu0 0.0
    %3967 = vmatprep.subr.mxu0 0.0
    %3968 = vmatpush1.xpose.msra.mxu0 0.0
    %3969 = vmatprep.subr.mxu0 0.0
    %3970 = vmatpush1.xpose.msra.mxu0 0.0
    %3971 = vmatprep.subr.mxu0 0.0
    %3972 = vmatpush1.xpose.msra.mxu0 0.0
    %3973 = vmatprep.subr.mxu0 0.0
    %3974 = vmatpush1.xpose.msra.mxu0 0.0
    %3975 = vmatprep.subr.mxu0 0.0
    %3976 = vmatpush1.xpose.msra.mxu0 0.0
    %3977 = vmatprep.subr.mxu0 0.0
    %3978 = vmatpush1.xpose.msra.mxu0 0.0
    %3979 = vmatprep.subr.mxu0 0.0
    %3980 = vmatpush1.xpose.msra.mxu0 0.0
    %3981 = vmatprep.subr.mxu0 0.0
    %3982 = vmatpush1.xpose.msra.mxu0 0.0
    %3983 = vmatprep.subr.mxu0 0.0
    %3984 = vmatpush1.xpose.msra.mxu0 0.0
    %3985 = vmatprep.subr.mxu0 0.0
    %3986 = vmatpush1.xpose.msra.mxu0 0.0
    %3987 = vmatprep.subr.mxu0 0.0
    %3988 = vmatpush1.xpose.msra.mxu0 0.0
    %3989 = vmatprep.subr.mxu0 0.0
    %3990 = vmatpush1.xpose.msra.mxu0 0.0
    %3991 = vmatprep.subr.mxu0 0.0
    %3992 = vmatpush1.xpose.msra.mxu0 0.0
    %3993 = vmatprep.subr.mxu0 0.0
    %3994 = vmatpush1.xpose.msra.mxu0 0.0
    %3995 = vmatprep.subr.mxu0 0.0
    %3996 = vmatpush1.xpose.msra.mxu0 0.0
    %3997 = vmatprep.subr.mxu0 0.0
    %3998 = vmatpush1.xpose.msra.mxu0 0.0
    %3999 = vmatprep.mubr.f32.mxu0 0.0
    %v4000 = vand.u32 %v1732, 4294901760
    %4001 = vmatmul.mubr.f32.gmra.mrb[0].mxu0 %v4000
    %v4002 = vpop.f32.mrb[0].mxu0
    %v4003 = vadd.f32 %v3912, %v4002
    %v4004 = vpop.f32.mrb[0].mxu0
    %4005 = vmatprep.mubr.f32.mxu0 0.0
    %v4006 = vand.u32 %v1735, 4294901760
    %4007 = vmatmul.mubr.f32.gmra.mrb[0].mxu0 %v4006
    %v4008 = vpop.f32.mrb[0].mxu0
    %v4009 = vadd.f32 %v3922, %v4008
    %v4010 = vpop.f32.mrb[0].mxu0
    %4011 = vdwg.mxu0
    %4012 = vmatprep.subr.mxu0 0.0
    %v4013 = vand.u32 %v3833, 4294901760
    %v4014 = vsub.f32 %v3833, %v4013
    %4015 = vmatpush1.xpose.msra.mxu0 %v4014
    %4016 = vmatprep.subr.mxu0 0.0
    %v4017 = vand.u32 %v3836, 4294901760
    %v4018 = vsub.f32 %v3836, %v4017
    %4019 = vmatpush1.xpose.msra.mxu0 %v4018
    %4020 = vmatprep.subr.mxu0 0.0
    %4021 = vmatpush1.xpose.msra.mxu0 0.0
    %4022 = vmatprep.subr.mxu0 0.0
    %4023 = vmatpush1.xpose.msra.mxu0 0.0
    %4024 = vmatprep.subr.mxu0 0.0
    %4025 = vmatpush1.xpose.msra.mxu0 0.0
    %4026 = vmatprep.subr.mxu0 0.0
    %4027 = vmatpush1.xpose.msra.mxu0 0.0
    %4028 = vmatprep.subr.mxu0 0.0
    %4029 = vmatpush1.xpose.msra.mxu0 0.0
    %4030 = vmatprep.subr.mxu0 0.0
    %4031 = vmatpush1.xpose.msra.mxu0 0.0
    %4032 = vmatprep.subr.mxu0 0.0
    %4033 = vmatpush1.xpose.msra.mxu0 0.0
    %4034 = vmatprep.subr.mxu0 0.0
    %4035 = vmatpush1.xpose.msra.mxu0 0.0
    %4036 = vmatprep.subr.mxu0 0.0
    %4037 = vmatpush1.xpose.msra.mxu0 0.0
    %4038 = vmatprep.subr.mxu0 0.0
    %4039 = vmatpush1.xpose.msra.mxu0 0.0
    %4040 = vmatprep.subr.mxu0 0.0
    %4041 = vmatpush1.xpose.msra.mxu0 0.0
    %4042 = vmatprep.subr.mxu0 0.0
    %4043 = vmatpush1.xpose.msra.mxu0 0.0
    %4044 = vmatprep.subr.mxu0 0.0
    %4045 = vmatpush1.xpose.msra.mxu0 0.0
    %4046 = vmatprep.subr.mxu0 0.0
    %4047 = vmatpush1.xpose.msra.mxu0 0.0
    %4048 = vmatprep.subr.mxu0 0.0
    %4049 = vmatpush1.xpose.msra.mxu0 0.0
    %4050 = vmatprep.subr.mxu0 0.0
    %4051 = vmatpush1.xpose.msra.mxu0 0.0
    %4052 = vmatprep.subr.mxu0 0.0
    %4053 = vmatpush1.xpose.msra.mxu0 0.0
    %4054 = vmatprep.subr.mxu0 0.0
    %4055 = vmatpush1.xpose.msra.mxu0 0.0
    %4056 = vmatprep.subr.mxu0 0.0
    %4057 = vmatpush1.xpose.msra.mxu0 0.0
    %4058 = vmatprep.subr.mxu0 0.0
    %4059 = vmatpush1.xpose.msra.mxu0 0.0
    %4060 = vmatprep.subr.mxu0 0.0
    %4061 = vmatpush1.xpose.msra.mxu0 0.0
    %4062 = vmatprep.subr.mxu0 0.0
    %4063 = vmatpush1.xpose.msra.mxu0 0.0
    %4064 = vmatprep.subr.mxu0 0.0
    %4065 = vmatpush1.xpose.msra.mxu0 0.0
    %4066 = vmatprep.subr.mxu0 0.0
    %4067 = vmatpush1.xpose.msra.mxu0 0.0
    %4068 = vmatprep.subr.mxu0 0.0
    %4069 = vmatpush1.xpose.msra.mxu0 0.0
    %4070 = vmatprep.subr.mxu0 0.0
    %4071 = vmatpush1.xpose.msra.mxu0 0.0
    %4072 = vmatprep.subr.mxu0 0.0
    %4073 = vmatpush1.xpose.msra.mxu0 0.0
    %4074 = vmatprep.subr.mxu0 0.0
    %4075 = vmatpush1.xpose.msra.mxu0 0.0
    %4076 = vmatprep.subr.mxu0 0.0
    %4077 = vmatpush1.xpose.msra.mxu0 0.0
    %4078 = vmatprep.subr.mxu0 0.0
    %4079 = vmatpush1.xpose.msra.mxu0 0.0
    %4080 = vmatprep.mubr.f32.mxu0 0.0
    %v4081 = vand.u32 %v1732, 4294901760
    %v4082 = vsub.f32 %v1732, %v4081
    %4083 = vmatmul.mubr.f32.gmra.mrb[0].mxu0 %v4082
    %v4084 = vpop.f32.mrb[0].mxu0
    %v4085 = vadd.f32 %v4003, %v4084
    %v4086 = vpop.f32.mrb[0].mxu0
    %4087 = vmatprep.mubr.f32.mxu0 0.0
    %v4088 = vand.u32 %v1735, 4294901760
    %v4089 = vsub.f32 %v1735, %v4088
    %4090 = vmatmul.mubr.f32.gmra.mrb[0].mxu0 %v4089
    %v4091 = vpop.f32.mrb[0].mxu0
    %v4092 = vadd.f32 %v4009, %v4091
    %v4093 = vpop.f32.mrb[0].mxu0
    %4094 = vdwg.mxu0
    %4095 = vmatprep.subr.mxu0 0.0
    %v4096 = vand.u32 %v3833, 4294901760
    %4097 = vmatpush1.xpose.msra.mxu0 %v4096
    %4098 = vmatprep.subr.mxu0 0.0
    %v4099 = vand.u32 %v3836, 4294901760
    %4100 = vmatpush1.xpose.msra.mxu0 %v4099
    %4101 = vmatprep.subr.mxu0 0.0
    %4102 = vmatpush1.xpose.msra.mxu0 0.0
    %4103 = vmatprep.subr.mxu0 0.0
    %4104 = vmatpush1.xpose.msra.mxu0 0.0
    %4105 = vmatprep.subr.mxu0 0.0
    %4106 = vmatpush1.xpose.msra.mxu0 0.0
    %4107 = vmatprep.subr.mxu0 0.0
    %4108 = vmatpush1.xpose.msra.mxu0 0.0
    %4109 = vmatprep.subr.mxu0 0.0
    %4110 = vmatpush1.xpose.msra.mxu0 0.0
    %4111 = vmatprep.subr.mxu0 0.0
    %4112 = vmatpush1.xpose.msra.mxu0 0.0
    %4113 = vmatprep.subr.mxu0 0.0
    %4114 = vmatpush1.xpose.msra.mxu0 0.0
    %4115 = vmatprep.subr.mxu0 0.0
    %4116 = vmatpush1.xpose.msra.mxu0 0.0
    %4117 = vmatprep.subr.mxu0 0.0
    %4118 = vmatpush1.xpose.msra.mxu0 0.0
    %4119 = vmatprep.subr.mxu0 0.0
    %4120 = vmatpush1.xpose.msra.mxu0 0.0
    %4121 = vmatprep.subr.mxu0 0.0
    %4122 = vmatpush1.xpose.msra.mxu0 0.0
    %4123 = vmatprep.subr.mxu0 0.0
    %4124 = vmatpush1.xpose.msra.mxu0 0.0
    %4125 = vmatprep.subr.mxu0 0.0
    %4126 = vmatpush1.xpose.msra.mxu0 0.0
    %4127 = vmatprep.subr.mxu0 0.0
    %4128 = vmatpush1.xpose.msra.mxu0 0.0
    %4129 = vmatprep.subr.mxu0 0.0
    %4130 = vmatpush1.xpose.msra.mxu0 0.0
    %4131 = vmatprep.subr.mxu0 0.0
    %4132 = vmatpush1.xpose.msra.mxu0 0.0
    %4133 = vmatprep.subr.mxu0 0.0
    %4134 = vmatpush1.xpose.msra.mxu0 0.0
    %4135 = vmatprep.subr.mxu0 0.0
    %4136 = vmatpush1.xpose.msra.mxu0 0.0
    %4137 = vmatprep.subr.mxu0 0.0
    %4138 = vmatpush1.xpose.msra.mxu0 0.0
    %4139 = vmatprep.subr.mxu0 0.0
    %4140 = vmatpush1.xpose.msra.mxu0 0.0
    %4141 = vmatprep.subr.mxu0 0.0
    %4142 = vmatpush1.xpose.msra.mxu0 0.0
    %4143 = vmatprep.subr.mxu0 0.0
    %4144 = vmatpush1.xpose.msra.mxu0 0.0
    %4145 = vmatprep.subr.mxu0 0.0
    %4146 = vmatpush1.xpose.msra.mxu0 0.0
    %4147 = vmatprep.subr.mxu0 0.0
    %4148 = vmatpush1.xpose.msra.mxu0 0.0
    %4149 = vmatprep.subr.mxu0 0.0
    %4150 = vmatpush1.xpose.msra.mxu0 0.0
    %4151 = vmatprep.subr.mxu0 0.0
    %4152 = vmatpush1.xpose.msra.mxu0 0.0
    %4153 = vmatprep.subr.mxu0 0.0
    %4154 = vmatpush1.xpose.msra.mxu0 0.0
    %4155 = vmatprep.subr.mxu0 0.0
    %4156 = vmatpush1.xpose.msra.mxu0 0.0
    %4157 = vmatprep.subr.mxu0 0.0
    %4158 = vmatpush1.xpose.msra.mxu0 0.0
    %4159 = vmatprep.subr.mxu0 0.0
    %4160 = vmatpush1.xpose.msra.mxu0 0.0
    %4161 = vmatprep.mubr.f32.mxu0 0.0
    %v4162 = vand.u32 %v1732, 4294901760
    %v4163 = vsub.f32 %v1732, %v4162
    %v4164 = vand.u32 %v4163, 4294901760
    %4165 = vmatmul.mubr.f32.gmra.mrb[0].mxu0 %v4164
    %v4166 = vpop.f32.mrb[0].mxu0
    %v4167 = vadd.f32 %v4085, %v4166
    %v4168 = vpop.f32.mrb[0].mxu0
    %4169 = vmatprep.mubr.f32.mxu0 0.0
    %v4170 = vand.u32 %v1735, 4294901760
    %v4171 = vsub.f32 %v1735, %v4170
    %v4172 = vand.u32 %v4171, 4294901760
    %4173 = vmatmul.mubr.f32.gmra.mrb[0].mxu0 %v4172
    %v4174 = vpop.f32.mrb[0].mxu0
    %v4175 = vadd.f32 %v4092, %v4174
    %v4176 = vpop.f32.mrb[0].mxu0
    %4177 = vdwg.mxu0
    %4178 = vmatprep.subr.mxu0 0.0
    %v4179 = vand.u32 %v3833, 4294901760
    %v4180 = vsub.f32 %v3833, %v4179
    %v4181 = vand.u32 %v4180, 4294901760
    %4182 = vmatpush1.xpose.msra.mxu0 %v4181
    %4183 = vmatprep.subr.mxu0 0.0
    %v4184 = vand.u32 %v3836, 4294901760
    %v4185 = vsub.f32 %v3836, %v4184
    %v4186 = vand.u32 %v4185, 4294901760
    %4187 = vmatpush1.xpose.msra.mxu0 %v4186
    %4188 = vmatprep.subr.mxu0 0.0
    %4189 = vmatpush1.xpose.msra.mxu0 0.0
    %4190 = vmatprep.subr.mxu0 0.0
    %4191 = vmatpush1.xpose.msra.mxu0 0.0
    %4192 = vmatprep.subr.mxu0 0.0
    %4193 = vmatpush1.xpose.msra.mxu0 0.0
    %4194 = vmatprep.subr.mxu0 0.0
    %4195 = vmatpush1.xpose.msra.mxu0 0.0
    %4196 = vmatprep.subr.mxu0 0.0
    %4197 = vmatpush1.xpose.msra.mxu0 0.0
    %4198 = vmatprep.subr.mxu0 0.0
    %4199 = vmatpush1.xpose.msra.mxu0 0.0
    %4200 = vmatprep.subr.mxu0 0.0
    %4201 = vmatpush1.xpose.msra.mxu0 0.0
    %4202 = vmatprep.subr.mxu0 0.0
    %4203 = vmatpush1.xpose.msra.mxu0 0.0
    %4204 = vmatprep.subr.mxu0 0.0
    %4205 = vmatpush1.xpose.msra.mxu0 0.0
    %4206 = vmatprep.subr.mxu0 0.0
    %4207 = vmatpush1.xpose.msra.mxu0 0.0
    %4208 = vmatprep.subr.mxu0 0.0
    %4209 = vmatpush1.xpose.msra.mxu0 0.0
    %4210 = vmatprep.subr.mxu0 0.0
    %4211 = vmatpush1.xpose.msra.mxu0 0.0
    %4212 = vmatprep.subr.mxu0 0.0
    %4213 = vmatpush1.xpose.msra.mxu0 0.0
    %4214 = vmatprep.subr.mxu0 0.0
    %4215 = vmatpush1.xpose.msra.mxu0 0.0
    %4216 = vmatprep.subr.mxu0 0.0
    %4217 = vmatpush1.xpose.msra.mxu0 0.0
    %4218 = vmatprep.subr.mxu0 0.0
    %4219 = vmatpush1.xpose.msra.mxu0 0.0
    %4220 = vmatprep.subr.mxu0 0.0
    %4221 = vmatpush1.xpose.msra.mxu0 0.0
    %4222 = vmatprep.subr.mxu0 0.0
    %4223 = vmatpush1.xpose.msra.mxu0 0.0
    %4224 = vmatprep.subr.mxu0 0.0
    %4225 = vmatpush1.xpose.msra.mxu0 0.0
    %4226 = vmatprep.subr.mxu0 0.0
    %4227 = vmatpush1.xpose.msra.mxu0 0.0
    %4228 = vmatprep.subr.mxu0 0.0
    %4229 = vmatpush1.xpose.msra.mxu0 0.0
    %4230 = vmatprep.subr.mxu0 0.0
    %4231 = vmatpush1.xpose.msra.mxu0 0.0
    %4232 = vmatprep.subr.mxu0 0.0
    %4233 = vmatpush1.xpose.msra.mxu0 0.0
    %4234 = vmatprep.subr.mxu0 0.0
    %4235 = vmatpush1.xpose.msra.mxu0 0.0
    %4236 = vmatprep.subr.mxu0 0.0
    %4237 = vmatpush1.xpose.msra.mxu0 0.0
    %4238 = vmatprep.subr.mxu0 0.0
    %4239 = vmatpush1.xpose.msra.mxu0 0.0
    %4240 = vmatprep.subr.mxu0 0.0
    %4241 = vmatpush1.xpose.msra.mxu0 0.0
    %4242 = vmatprep.subr.mxu0 0.0
    %4243 = vmatpush1.xpose.msra.mxu0 0.0
    %4244 = vmatprep.subr.mxu0 0.0
    %4245 = vmatpush1.xpose.msra.mxu0 0.0
    %4246 = vmatprep.subr.mxu0 0.0
    %4247 = vmatpush1.xpose.msra.mxu0 0.0
    %4248 = vmatprep.mubr.f32.mxu0 0.0
    %v4249 = vand.u32 %v1732, 4294901760
    %4250 = vmatmul.mubr.f32.gmra.mrb[0].mxu0 %v4249
    %v4251 = vpop.f32.mrb[0].mxu0
    %v4252 = vadd.f32 %v4167, %v4251
    %v4253 = vpop.f32.mrb[0].mxu0
    %4254 = vmatprep.mubr.f32.mxu0 0.0
    %v4255 = vand.u32 %v1735, 4294901760
    %4256 = vmatmul.mubr.f32.gmra.mrb[0].mxu0 %v4255
    %v4257 = vpop.f32.mrb[0].mxu0
    %v4258 = vadd.f32 %v4175, %v4257
    %v4259 = vpop.f32.mrb[0].mxu0
    %4260 = vdwg.mxu0
    %4261 = vmatprep.subr.mxu0 0.0
    %v4262 = vand.u32 %v3833, 4294901760
    %4263 = vmatpush1.xpose.msra.mxu0 %v4262
    %4264 = vmatprep.subr.mxu0 0.0
    %v4265 = vand.u32 %v3836, 4294901760
    %4266 = vmatpush1.xpose.msra.mxu0 %v4265
    %4267 = vmatprep.subr.mxu0 0.0
    %4268 = vmatpush1.xpose.msra.mxu0 0.0
    %4269 = vmatprep.subr.mxu0 0.0
    %4270 = vmatpush1.xpose.msra.mxu0 0.0
    %4271 = vmatprep.subr.mxu0 0.0
    %4272 = vmatpush1.xpose.msra.mxu0 0.0
    %4273 = vmatprep.subr.mxu0 0.0
    %4274 = vmatpush1.xpose.msra.mxu0 0.0
    %4275 = vmatprep.subr.mxu0 0.0
    %4276 = vmatpush1.xpose.msra.mxu0 0.0
    %4277 = vmatprep.subr.mxu0 0.0
    %4278 = vmatpush1.xpose.msra.mxu0 0.0
    %4279 = vmatprep.subr.mxu0 0.0
    %4280 = vmatpush1.xpose.msra.mxu0 0.0
    %4281 = vmatprep.subr.mxu0 0.0
    %4282 = vmatpush1.xpose.msra.mxu0 0.0
    %4283 = vmatprep.subr.mxu0 0.0
    %4284 = vmatpush1.xpose.msra.mxu0 0.0
    %4285 = vmatprep.subr.mxu0 0.0
    %4286 = vmatpush1.xpose.msra.mxu0 0.0
    %4287 = vmatprep.subr.mxu0 0.0
    %4288 = vmatpush1.xpose.msra.mxu0 0.0
    %4289 = vmatprep.subr.mxu0 0.0
    %4290 = vmatpush1.xpose.msra.mxu0 0.0
    %4291 = vmatprep.subr.mxu0 0.0
    %4292 = vmatpush1.xpose.msra.mxu0 0.0
    %4293 = vmatprep.subr.mxu0 0.0
    %4294 = vmatpush1.xpose.msra.mxu0 0.0
    %4295 = vmatprep.subr.mxu0 0.0
    %4296 = vmatpush1.xpose.msra.mxu0 0.0
    %4297 = vmatprep.subr.mxu0 0.0
    %4298 = vmatpush1.xpose.msra.mxu0 0.0
    %4299 = vmatprep.subr.mxu0 0.0
    %4300 = vmatpush1.xpose.msra.mxu0 0.0
    %4301 = vmatprep.subr.mxu0 0.0
    %4302 = vmatpush1.xpose.msra.mxu0 0.0
    %4303 = vmatprep.subr.mxu0 0.0
    %4304 = vmatpush1.xpose.msra.mxu0 0.0
    %4305 = vmatprep.subr.mxu0 0.0
    %4306 = vmatpush1.xpose.msra.mxu0 0.0
    %4307 = vmatprep.subr.mxu0 0.0
    %4308 = vmatpush1.xpose.msra.mxu0 0.0
    %4309 = vmatprep.subr.mxu0 0.0
    %4310 = vmatpush1.xpose.msra.mxu0 0.0
    %4311 = vmatprep.subr.mxu0 0.0
    %4312 = vmatpush1.xpose.msra.mxu0 0.0
    %4313 = vmatprep.subr.mxu0 0.0
    %4314 = vmatpush1.xpose.msra.mxu0 0.0
    %4315 = vmatprep.subr.mxu0 0.0
    %4316 = vmatpush1.xpose.msra.mxu0 0.0
    %4317 = vmatprep.subr.mxu0 0.0
    %4318 = vmatpush1.xpose.msra.mxu0 0.0
    %4319 = vmatprep.subr.mxu0 0.0
    %4320 = vmatpush1.xpose.msra.mxu0 0.0
    %4321 = vmatprep.subr.mxu0 0.0
    %4322 = vmatpush1.xpose.msra.mxu0 0.0
    %4323 = vmatprep.subr.mxu0 0.0
    %4324 = vmatpush1.xpose.msra.mxu0 0.0
    %4325 = vmatprep.subr.mxu0 0.0
    %4326 = vmatpush1.xpose.msra.mxu0 0.0
    %4327 = vmatprep.mubr.f32.mxu0 0.0
    %v4328 = vand.u32 %v1732, 4294901760
    %4329 = vmatmul.mubr.f32.gmra.mrb[0].mxu0 %v4328
    %v4330 = vpop.f32.mrb[0].mxu0
    %v4331 = vadd.f32 %v4252, %v4330
    %v4332 = vpop.f32.mrb[0].mxu0
    %4333 = vmatprep.mubr.f32.mxu0 0.0
    %v4334 = vand.u32 %v1735, 4294901760
    %4335 = vmatmul.mubr.f32.gmra.mrb[0].mxu0 %v4334
    %v4336 = vpop.f32.mrb[0].mxu0
    %v4337 = vadd.f32 %v4258, %v4336
    %v4338 = vpop.f32.mrb[0].mxu0
    %4339 = vdwg.mxu0
    %v4340 = vsel %vm2245, %v4331, -inf
    %4341 = vmax.xlane.f32.xlu0 %v4340
    %v4342 = vpop.xlane.xlu0 %4341
    %v4343 = vsel %vm2245, %v4337, -inf
    %4344 = vmax.xlane.f32.xlu0 %v4343
    %v4345 = vpop.xlane.xlu0 %4344
    %v4346 = vsub.f32 %v4331, %v4342
    %v4347 = vsub.f32 %v4337, %v4345
    %v4348 = vmul.f32 %v4346, 1.442695
    %v4349 = vpow.pop %v4348
    %v4350 = vmul.f32 %v4347, 1.442695
    %v4351 = vpow.pop %v4350
    %v4352 = vsel %vm2245, %v4349, 0.0
    %4353 = vadd.xlane.f32.xlu0 %v4352
    %v4354 = vpop.xlane.xlu0 %4353
    %v4355 = vsel %vm2245, %v4351, 0.0
    %4356 = vadd.xlane.f32.xlu0 %v4355
    %v4357 = vpop.xlane.xlu0 %4356
    %v4358 = vrcp.pop %v4354
    %v4359 = vmul.f32 %v4349, %v4358
    %v4360 = vrcp.pop %v4357
    %v4361 = vmul.f32 %v4351, %v4360
    %v4362 = vmul.f32 %v1715, %v3829
    %v4363 = vmul.f32 %v1721, %v3829
    %v4365 = vsel %vm2245, %v4359, 0
    %v4368 = vsel %vm2245, %v4361, 0
    %4370 = vmatprep.subr.mxu0 0.0
    %v4371 = vand.u32 %v4362, 4294901760
    %4372 = vmatpush1.msra.mxu0 %v4371
    %4373 = vmatprep.subr.mxu0 0.0
    %v4374 = vand.u32 %v4363, 4294901760
    %4375 = vmatpush1.msra.mxu0 %v4374
    %4376 = vmatprep.subr.mxu0 0.0
    %4377 = vmatpush1.msra.mxu0 0.0
    %4378 = vmatprep.subr.mxu0 0.0
    %4379 = vmatpush1.msra.mxu0 0.0
    %4380 = vmatprep.subr.mxu0 0.0
    %4381 = vmatpush1.msra.mxu0 0.0
    %4382 = vmatprep.subr.mxu0 0.0
    %4383 = vmatpush1.msra.mxu0 0.0
    %4384 = vmatprep.subr.mxu0 0.0
    %4385 = vmatpush1.msra.mxu0 0.0
    %4386 = vmatprep.subr.mxu0 0.0
    %4387 = vmatpush1.msra.mxu0 0.0
    %4388 = vmatprep.subr.mxu0 0.0
    %4389 = vmatpush1.msra.mxu0 0.0
    %4390 = vmatprep.subr.mxu0 0.0
    %4391 = vmatpush1.msra.mxu0 0.0
    %4392 = vmatprep.subr.mxu0 0.0
    %4393 = vmatpush1.msra.mxu0 0.0
    %4394 = vmatprep.subr.mxu0 0.0
    %4395 = vmatpush1.msra.mxu0 0.0
    %4396 = vmatprep.subr.mxu0 0.0
    %4397 = vmatpush1.msra.mxu0 0.0
    %4398 = vmatprep.subr.mxu0 0.0
    %4399 = vmatpush1.msra.mxu0 0.0
    %4400 = vmatprep.subr.mxu0 0.0
    %4401 = vmatpush1.msra.mxu0 0.0
    %4402 = vmatprep.subr.mxu0 0.0
    %4403 = vmatpush1.msra.mxu0 0.0
    %4404 = vmatprep.subr.mxu0 0.0
    %4405 = vmatpush1.msra.mxu0 0.0
    %4406 = vmatprep.subr.mxu0 0.0
    %4407 = vmatpush1.msra.mxu0 0.0
    %4408 = vmatprep.subr.mxu0 0.0
    %4409 = vmatpush1.msra.mxu0 0.0
    %4410 = vmatprep.subr.mxu0 0.0
    %4411 = vmatpush1.msra.mxu0 0.0
    %4412 = vmatprep.subr.mxu0 0.0
    %4413 = vmatpush1.msra.mxu0 0.0
    %4414 = vmatprep.subr.mxu0 0.0
    %4415 = vmatpush1.msra.mxu0 0.0
    %4416 = vmatprep.subr.mxu0 0.0
    %4417 = vmatpush1.msra.mxu0 0.0
    %4418 = vmatprep.subr.mxu0 0.0
    %4419 = vmatpush1.msra.mxu0 0.0
    %4420 = vmatprep.subr.mxu0 0.0
    %4421 = vmatpush1.msra.mxu0 0.0
    %4422 = vmatprep.subr.mxu0 0.0
    %4423 = vmatpush1.msra.mxu0 0.0
    %4424 = vmatprep.subr.mxu0 0.0
    %4425 = vmatpush1.msra.mxu0 0.0
    %4426 = vmatprep.subr.mxu0 0.0
    %4427 = vmatpush1.msra.mxu0 0.0
    %4428 = vmatprep.subr.mxu0 0.0
    %4429 = vmatpush1.msra.mxu0 0.0
    %4430 = vmatprep.subr.mxu0 0.0
    %4431 = vmatpush1.msra.mxu0 0.0
    %4432 = vmatprep.subr.mxu0 0.0
    %4433 = vmatpush1.msra.mxu0 0.0
    %4434 = vmatprep.subr.mxu0 0.0
    %4435 = vmatpush1.msra.mxu0 0.0
    %4436 = vmatprep.mubr.f32.mxu0 0.0
    %v4437 = vand.u32 %v4365, 4294901760
    %v4438 = vsub.f32 %v4365, %v4437
    %v4439 = vand.u32 %v4438, 4294901760
    %v4440 = vsub.f32 %v4438, %v4439
    %v4441 = vand.u32 %v4440, 4294901760
    %4442 = vmatmul.mubr.f32.gmra.mrb[0].mxu0 %v4441
    %v4443 = vpop.f32.mrb[0].mxu0
    %v4444 = vadd.f32 0.0, %v4443
    %v4445 = vpop.f32.mrb[0].mxu0
    %4446 = vmatprep.mubr.f32.mxu0 0.0
    %v4447 = vand.u32 %v4368, 4294901760
    %v4448 = vsub.f32 %v4368, %v4447
    %v4449 = vand.u32 %v4448, 4294901760
    %v4450 = vsub.f32 %v4448, %v4449
    %v4451 = vand.u32 %v4450, 4294901760
    %4452 = vmatmul.mubr.f32.gmra.mrb[0].mxu0 %v4451
    %v4453 = vpop.f32.mrb[0].mxu0
    %v4454 = vadd.f32 0.0, %v4453
    %v4455 = vpop.f32.mrb[0].mxu0
    %4456 = vdwg.mxu0
    %4457 = vmatprep.subr.mxu0 0.0
    %v4458 = vand.u32 %v4362, 4294901760
    %v4459 = vsub.f32 %v4362, %v4458
    %v4460 = vand.u32 %v4459, 4294901760
    %v4461 = vsub.f32 %v4459, %v4460
    %v4462 = vand.u32 %v4461, 4294901760
    %4463 = vmatpush1.msra.mxu0 %v4462
    %4464 = vmatprep.subr.mxu0 0.0
    %v4465 = vand.u32 %v4363, 4294901760
    %v4466 = vsub.f32 %v4363, %v4465
    %v4467 = vand.u32 %v4466, 4294901760
    %v4468 = vsub.f32 %v4466, %v4467
    %v4469 = vand.u32 %v4468, 4294901760
    %4470 = vmatpush1.msra.mxu0 %v4469
    %4471 = vmatprep.subr.mxu0 0.0
    %4472 = vmatpush1.msra.mxu0 0.0
    %4473 = vmatprep.subr.mxu0 0.0
    %4474 = vmatpush1.msra.mxu0 0.0
    %4475 = vmatprep.subr.mxu0 0.0
    %4476 = vmatpush1.msra.mxu0 0.0
    %4477 = vmatprep.subr.mxu0 0.0
    %4478 = vmatpush1.msra.mxu0 0.0
    %4479 = vmatprep.subr.mxu0 0.0
    %4480 = vmatpush1.msra.mxu0 0.0
    %4481 = vmatprep.subr.mxu0 0.0
    %4482 = vmatpush1.msra.mxu0 0.0
    %4483 = vmatprep.subr.mxu0 0.0
    %4484 = vmatpush1.msra.mxu0 0.0
    %4485 = vmatprep.subr.mxu0 0.0
    %4486 = vmatpush1.msra.mxu0 0.0
    %4487 = vmatprep.subr.mxu0 0.0
    %4488 = vmatpush1.msra.mxu0 0.0
    %4489 = vmatprep.subr.mxu0 0.0
    %4490 = vmatpush1.msra.mxu0 0.0
    %4491 = vmatprep.subr.mxu0 0.0
    %4492 = vmatpush1.msra.mxu0 0.0
    %4493 = vmatprep.subr.mxu0 0.0
    %4494 = vmatpush1.msra.mxu0 0.0
    %4495 = vmatprep.subr.mxu0 0.0
    %4496 = vmatpush1.msra.mxu0 0.0
    %4497 = vmatprep.subr.mxu0 0.0
    %4498 = vmatpush1.msra.mxu0 0.0
    %4499 = vmatprep.subr.mxu0 0.0
    %4500 = vmatpush1.msra.mxu0 0.0
    %4501 = vmatprep.subr.mxu0 0.0
    %4502 = vmatpush1.msra.mxu0 0.0
    %4503 = vmatprep.subr.mxu0 0.0
    %4504 = vmatpush1.msra.mxu0 0.0
    %4505 = vmatprep.subr.mxu0 0.0
    %4506 = vmatpush1.msra.mxu0 0.0
    %4507 = vmatprep.subr.mxu0 0.0
    %4508 = vmatpush1.msra.mxu0 0.0
    %4509 = vmatprep.subr.mxu0 0.0
    %4510 = vmatpush1.msra.mxu0 0.0
    %4511 = vmatprep.subr.mxu0 0.0
    %4512 = vmatpush1.msra.mxu0 0.0
    %4513 = vmatprep.subr.mxu0 0.0
    %4514 = vmatpush1.msra.mxu0 0.0
    %4515 = vmatprep.subr.mxu0 0.0
    %4516 = vmatpush1.msra.mxu0 0.0
    %4517 = vmatprep.subr.mxu0 0.0
    %4518 = vmatpush1.msra.mxu0 0.0
    %4519 = vmatprep.subr.mxu0 0.0
    %4520 = vmatpush1.msra.mxu0 0.0
    %4521 = vmatprep.subr.mxu0 0.0
    %4522 = vmatpush1.msra.mxu0 0.0
    %4523 = vmatprep.subr.mxu0 0.0
    %4524 = vmatpush1.msra.mxu0 0.0
    %4525 = vmatprep.subr.mxu0 0.0
    %4526 = vmatpush1.msra.mxu0 0.0
    %4527 = vmatprep.subr.mxu0 0.0
    %4528 = vmatpush1.msra.mxu0 0.0
    %4529 = vmatprep.subr.mxu0 0.0
    %4530 = vmatpush1.msra.mxu0 0.0
    %4531 = vmatprep.mubr.f32.mxu0 0.0
    %v4532 = vand.u32 %v4365, 4294901760
    %4533 = vmatmul.mubr.f32.gmra.mrb[0].mxu0 %v4532
    %v4534 = vpop.f32.mrb[0].mxu0
    %v4535 = vadd.f32 %v4444, %v4534
    %v4536 = vpop.f32.mrb[0].mxu0
    %4537 = vmatprep.mubr.f32.mxu0 0.0
    %v4538 = vand.u32 %v4368, 4294901760
    %4539 = vmatmul.mubr.f32.gmra.mrb[0].mxu0 %v4538
    %v4540 = vpop.f32.mrb[0].mxu0
    %v4541 = vadd.f32 %v4454, %v4540
    %v4542 = vpop.f32.mrb[0].mxu0
    %4543 = vdwg.mxu0
    %4544 = vmatprep.subr.mxu0 0.0
    %v4545 = vand.u32 %v4362, 4294901760
    %v4546 = vsub.f32 %v4362, %v4545
    %4547 = vmatpush1.msra.mxu0 %v4546
    %4548 = vmatprep.subr.mxu0 0.0
    %v4549 = vand.u32 %v4363, 4294901760
    %v4550 = vsub.f32 %v4363, %v4549
    %4551 = vmatpush1.msra.mxu0 %v4550
    %4552 = vmatprep.subr.mxu0 0.0
    %4553 = vmatpush1.msra.mxu0 0.0
    %4554 = vmatprep.subr.mxu0 0.0
    %4555 = vmatpush1.msra.mxu0 0.0
    %4556 = vmatprep.subr.mxu0 0.0
    %4557 = vmatpush1.msra.mxu0 0.0
    %4558 = vmatprep.subr.mxu0 0.0
    %4559 = vmatpush1.msra.mxu0 0.0
    %4560 = vmatprep.subr.mxu0 0.0
    %4561 = vmatpush1.msra.mxu0 0.0
    %4562 = vmatprep.subr.mxu0 0.0
    %4563 = vmatpush1.msra.mxu0 0.0
    %4564 = vmatprep.subr.mxu0 0.0
    %4565 = vmatpush1.msra.mxu0 0.0
    %4566 = vmatprep.subr.mxu0 0.0
    %4567 = vmatpush1.msra.mxu0 0.0
    %4568 = vmatprep.subr.mxu0 0.0
    %4569 = vmatpush1.msra.mxu0 0.0
    %4570 = vmatprep.subr.mxu0 0.0
    %4571 = vmatpush1.msra.mxu0 0.0
    %4572 = vmatprep.subr.mxu0 0.0
    %4573 = vmatpush1.msra.mxu0 0.0
    %4574 = vmatprep.subr.mxu0 0.0
    %4575 = vmatpush1.msra.mxu0 0.0
    %4576 = vmatprep.subr.mxu0 0.0
    %4577 = vmatpush1.msra.mxu0 0.0
    %4578 = vmatprep.subr.mxu0 0.0
    %4579 = vmatpush1.msra.mxu0 0.0
    %4580 = vmatprep.subr.mxu0 0.0
    %4581 = vmatpush1.msra.mxu0 0.0
    %4582 = vmatprep.subr.mxu0 0.0
    %4583 = vmatpush1.msra.mxu0 0.0
    %4584 = vmatprep.subr.mxu0 0.0
    %4585 = vmatpush1.msra.mxu0 0.0
    %4586 = vmatprep.subr.mxu0 0.0
    %4587 = vmatpush1.msra.mxu0 0.0
    %4588 = vmatprep.subr.mxu0 0.0
    %4589 = vmatpush1.msra.mxu0 0.0
    %4590 = vmatprep.subr.mxu0 0.0
    %4591 = vmatpush1.msra.mxu0 0.0
    %4592 = vmatprep.subr.mxu0 0.0
    %4593 = vmatpush1.msra.mxu0 0.0
    %4594 = vmatprep.subr.mxu0 0.0
    %4595 = vmatpush1.msra.mxu0 0.0
    %4596 = vmatprep.subr.mxu0 0.0
    %4597 = vmatpush1.msra.mxu0 0.0
    %4598 = vmatprep.subr.mxu0 0.0
    %4599 = vmatpush1.msra.mxu0 0.0
    %4600 = vmatprep.subr.mxu0 0.0
    %4601 = vmatpush1.msra.mxu0 0.0
    %4602 = vmatprep.subr.mxu0 0.0
    %4603 = vmatpush1.msra.mxu0 0.0
    %4604 = vmatprep.subr.mxu0 0.0
    %4605 = vmatpush1.msra.mxu0 0.0
    %4606 = vmatprep.subr.mxu0 0.0
    %4607 = vmatpush1.msra.mxu0 0.0
    %4608 = vmatprep.subr.mxu0 0.0
    %4609 = vmatpush1.msra.mxu0 0.0
    %4610 = vmatprep.subr.mxu0 0.0
    %4611 = vmatpush1.msra.mxu0 0.0
    %4612 = vmatprep.mubr.f32.mxu0 0.0
    %v4613 = vand.u32 %v4365, 4294901760
    %v4614 = vsub.f32 %v4365, %v4613
    %4615 = vmatmul.mubr.f32.gmra.mrb[0].mxu0 %v4614
    %v4616 = vpop.f32.mrb[0].mxu0
    %v4617 = vadd.f32 %v4535, %v4616
    %v4618 = vpop.f32.mrb[0].mxu0
    %4619 = vmatprep.mubr.f32.mxu0 0.0
    %v4620 = vand.u32 %v4368, 4294901760
    %v4621 = vsub.f32 %v4368, %v4620
    %4622 = vmatmul.mubr.f32.gmra.mrb[0].mxu0 %v4621
    %v4623 = vpop.f32.mrb[0].mxu0
    %v4624 = vadd.f32 %v4541, %v4623
    %v4625 = vpop.f32.mrb[0].mxu0
    %4626 = vdwg.mxu0
    %4627 = vmatprep.subr.mxu0 0.0
    %v4628 = vand.u32 %v4362, 4294901760
    %4629 = vmatpush1.msra.mxu0 %v4628
    %4630 = vmatprep.subr.mxu0 0.0
    %v4631 = vand.u32 %v4363, 4294901760
    %4632 = vmatpush1.msra.mxu0 %v4631
    %4633 = vmatprep.subr.mxu0 0.0
    %4634 = vmatpush1.msra.mxu0 0.0
    %4635 = vmatprep.subr.mxu0 0.0
    %4636 = vmatpush1.msra.mxu0 0.0
    %4637 = vmatprep.subr.mxu0 0.0
    %4638 = vmatpush1.msra.mxu0 0.0
    %4639 = vmatprep.subr.mxu0 0.0
    %4640 = vmatpush1.msra.mxu0 0.0
    %4641 = vmatprep.subr.mxu0 0.0
    %4642 = vmatpush1.msra.mxu0 0.0
    %4643 = vmatprep.subr.mxu0 0.0
    %4644 = vmatpush1.msra.mxu0 0.0
    %4645 = vmatprep.subr.mxu0 0.0
    %4646 = vmatpush1.msra.mxu0 0.0
    %4647 = vmatprep.subr.mxu0 0.0
    %4648 = vmatpush1.msra.mxu0 0.0
    %4649 = vmatprep.subr.mxu0 0.0
    %4650 = vmatpush1.msra.mxu0 0.0
    %4651 = vmatprep.subr.mxu0 0.0
    %4652 = vmatpush1.msra.mxu0 0.0
    %4653 = vmatprep.subr.mxu0 0.0
    %4654 = vmatpush1.msra.mxu0 0.0
    %4655 = vmatprep.subr.mxu0 0.0
    %4656 = vmatpush1.msra.mxu0 0.0
    %4657 = vmatprep.subr.mxu0 0.0
    %4658 = vmatpush1.msra.mxu0 0.0
    %4659 = vmatprep.subr.mxu0 0.0
    %4660 = vmatpush1.msra.mxu0 0.0
    %4661 = vmatprep.subr.mxu0 0.0
    %4662 = vmatpush1.msra.mxu0 0.0
    %4663 = vmatprep.subr.mxu0 0.0
    %4664 = vmatpush1.msra.mxu0 0.0
    %4665 = vmatprep.subr.mxu0 0.0
    %4666 = vmatpush1.msra.mxu0 0.0
    %4667 = vmatprep.subr.mxu0 0.0
    %4668 = vmatpush1.msra.mxu0 0.0
    %4669 = vmatprep.subr.mxu0 0.0
    %4670 = vmatpush1.msra.mxu0 0.0
    %4671 = vmatprep.subr.mxu0 0.0
    %4672 = vmatpush1.msra.mxu0 0.0
    %4673 = vmatprep.subr.mxu0 0.0
    %4674 = vmatpush1.msra.mxu0 0.0
    %4675 = vmatprep.subr.mxu0 0.0
    %4676 = vmatpush1.msra.mxu0 0.0
    %4677 = vmatprep.subr.mxu0 0.0
    %4678 = vmatpush1.msra.mxu0 0.0
    %4679 = vmatprep.subr.mxu0 0.0
    %4680 = vmatpush1.msra.mxu0 0.0
    %4681 = vmatprep.subr.mxu0 0.0
    %4682 = vmatpush1.msra.mxu0 0.0
    %4683 = vmatprep.subr.mxu0 0.0
    %4684 = vmatpush1.msra.mxu0 0.0
    %4685 = vmatprep.subr.mxu0 0.0
    %4686 = vmatpush1.msra.mxu0 0.0
    %4687 = vmatprep.subr.mxu0 0.0
    %4688 = vmatpush1.msra.mxu0 0.0
    %4689 = vmatprep.subr.mxu0 0.0
    %4690 = vmatpush1.msra.mxu0 0.0
    %4691 = vmatprep.subr.mxu0 0.0
    %4692 = vmatpush1.msra.mxu0 0.0
    %4693 = vmatprep.mubr.f32.mxu0 0.0
    %v4694 = vand.u32 %v4365, 4294901760
    %v4695 = vsub.f32 %v4365, %v4694
    %v4696 = vand.u32 %v4695, 4294901760
    %4697 = vmatmul.mubr.f32.gmra.mrb[0].mxu0 %v4696
    %v4698 = vpop.f32.mrb[0].mxu0
    %v4699 = vadd.f32 %v4617, %v4698
    %v4700 = vpop.f32.mrb[0].mxu0
    %4701 = vmatprep.mubr.f32.mxu0 0.0
    %v4702 = vand.u32 %v4368, 4294901760
    %v4703 = vsub.f32 %v4368, %v4702
    %v4704 = vand.u32 %v4703, 4294901760
    %4705 = vmatmul.mubr.f32.gmra.mrb[0].mxu0 %v4704
    %v4706 = vpop.f32.mrb[0].mxu0
    %v4707 = vadd.f32 %v4624, %v4706
    %v4708 = vpop.f32.mrb[0].mxu0
    %4709 = vdwg.mxu0
    %4710 = vmatprep.subr.mxu0 0.0
    %v4711 = vand.u32 %v4362, 4294901760
    %v4712 = vsub.f32 %v4362, %v4711
    %v4713 = vand.u32 %v4712, 4294901760
    %4714 = vmatpush1.msra.mxu0 %v4713
    %4715 = vmatprep.subr.mxu0 0.0
    %v4716 = vand.u32 %v4363, 4294901760
    %v4717 = vsub.f32 %v4363, %v4716
    %v4718 = vand.u32 %v4717, 4294901760
    %4719 = vmatpush1.msra.mxu0 %v4718
    %4720 = vmatprep.subr.mxu0 0.0
    %4721 = vmatpush1.msra.mxu0 0.0
    %4722 = vmatprep.subr.mxu0 0.0
    %4723 = vmatpush1.msra.mxu0 0.0
    %4724 = vmatprep.subr.mxu0 0.0
    %4725 = vmatpush1.msra.mxu0 0.0
    %4726 = vmatprep.subr.mxu0 0.0
    %4727 = vmatpush1.msra.mxu0 0.0
    %4728 = vmatprep.subr.mxu0 0.0
    %4729 = vmatpush1.msra.mxu0 0.0
    %4730 = vmatprep.subr.mxu0 0.0
    %4731 = vmatpush1.msra.mxu0 0.0
    %4732 = vmatprep.subr.mxu0 0.0
    %4733 = vmatpush1.msra.mxu0 0.0
    %4734 = vmatprep.subr.mxu0 0.0
    %4735 = vmatpush1.msra.mxu0 0.0
    %4736 = vmatprep.subr.mxu0 0.0
    %4737 = vmatpush1.msra.mxu0 0.0
    %4738 = vmatprep.subr.mxu0 0.0
    %4739 = vmatpush1.msra.mxu0 0.0
    %4740 = vmatprep.subr.mxu0 0.0
    %4741 = vmatpush1.msra.mxu0 0.0
    %4742 = vmatprep.subr.mxu0 0.0
    %4743 = vmatpush1.msra.mxu0 0.0
    %4744 = vmatprep.subr.mxu0 0.0
    %4745 = vmatpush1.msra.mxu0 0.0
    %4746 = vmatprep.subr.mxu0 0.0
    %4747 = vmatpush1.msra.mxu0 0.0
    %4748 = vmatprep.subr.mxu0 0.0
    %4749 = vmatpush1.msra.mxu0 0.0
    %4750 = vmatprep.subr.mxu0 0.0
    %4751 = vmatpush1.msra.mxu0 0.0
    %4752 = vmatprep.subr.mxu0 0.0
    %4753 = vmatpush1.msra.mxu0 0.0
    %4754 = vmatprep.subr.mxu0 0.0
    %4755 = vmatpush1.msra.mxu0 0.0
    %4756 = vmatprep.subr.mxu0 0.0
    %4757 = vmatpush1.msra.mxu0 0.0
    %4758 = vmatprep.subr.mxu0 0.0
    %4759 = vmatpush1.msra.mxu0 0.0
    %4760 = vmatprep.subr.mxu0 0.0
    %4761 = vmatpush1.msra.mxu0 0.0
    %4762 = vmatprep.subr.mxu0 0.0
    %4763 = vmatpush1.msra.mxu0 0.0
    %4764 = vmatprep.subr.mxu0 0.0
    %4765 = vmatpush1.msra.mxu0 0.0
    %4766 = vmatprep.subr.mxu0 0.0
    %4767 = vmatpush1.msra.mxu0 0.0
    %4768 = vmatprep.subr.mxu0 0.0
    %4769 = vmatpush1.msra.mxu0 0.0
    %4770 = vmatprep.subr.mxu0 0.0
    %4771 = vmatpush1.msra.mxu0 0.0
    %4772 = vmatprep.subr.mxu0 0.0
    %4773 = vmatpush1.msra.mxu0 0.0
    %4774 = vmatprep.subr.mxu0 0.0
    %4775 = vmatpush1.msra.mxu0 0.0
    %4776 = vmatprep.subr.mxu0 0.0
    %4777 = vmatpush1.msra.mxu0 0.0
    %4778 = vmatprep.subr.mxu0 0.0
    %4779 = vmatpush1.msra.mxu0 0.0
    %4780 = vmatprep.mubr.f32.mxu0 0.0
    %v4781 = vand.u32 %v4365, 4294901760
    %4782 = vmatmul.mubr.f32.gmra.mrb[0].mxu0 %v4781
    %v4783 = vpop.f32.mrb[0].mxu0
    %v4784 = vadd.f32 %v4699, %v4783
    %v4785 = vpop.f32.mrb[0].mxu0
    %4786 = vmatprep.mubr.f32.mxu0 0.0
    %v4787 = vand.u32 %v4368, 4294901760
    %4788 = vmatmul.mubr.f32.gmra.mrb[0].mxu0 %v4787
    %v4789 = vpop.f32.mrb[0].mxu0
    %v4790 = vadd.f32 %v4707, %v4789
    %v4791 = vpop.f32.mrb[0].mxu0
    %4792 = vdwg.mxu0
    %4793 = vmatprep.subr.mxu0 0.0
    %v4794 = vand.u32 %v4362, 4294901760
    %4795 = vmatpush1.msra.mxu0 %v4794
    %4796 = vmatprep.subr.mxu0 0.0
    %v4797 = vand.u32 %v4363, 4294901760
    %4798 = vmatpush1.msra.mxu0 %v4797
    %4799 = vmatprep.subr.mxu0 0.0
    %4800 = vmatpush1.msra.mxu0 0.0
    %4801 = vmatprep.subr.mxu0 0.0
    %4802 = vmatpush1.msra.mxu0 0.0
    %4803 = vmatprep.subr.mxu0 0.0
    %4804 = vmatpush1.msra.mxu0 0.0
    %4805 = vmatprep.subr.mxu0 0.0
    %4806 = vmatpush1.msra.mxu0 0.0
    %4807 = vmatprep.subr.mxu0 0.0
    %4808 = vmatpush1.msra.mxu0 0.0
    %4809 = vmatprep.subr.mxu0 0.0
    %4810 = vmatpush1.msra.mxu0 0.0
    %4811 = vmatprep.subr.mxu0 0.0
    %4812 = vmatpush1.msra.mxu0 0.0
    %4813 = vmatprep.subr.mxu0 0.0
    %4814 = vmatpush1.msra.mxu0 0.0
    %4815 = vmatprep.subr.mxu0 0.0
    %4816 = vmatpush1.msra.mxu0 0.0
    %4817 = vmatprep.subr.mxu0 0.0
    %4818 = vmatpush1.msra.mxu0 0.0
    %4819 = vmatprep.subr.mxu0 0.0
    %4820 = vmatpush1.msra.mxu0 0.0
    %4821 = vmatprep.subr.mxu0 0.0
    %4822 = vmatpush1.msra.mxu0 0.0
    %4823 = vmatprep.subr.mxu0 0.0
    %4824 = vmatpush1.msra.mxu0 0.0
    %4825 = vmatprep.subr.mxu0 0.0
    %4826 = vmatpush1.msra.mxu0 0.0
    %4827 = vmatprep.subr.mxu0 0.0
    %4828 = vmatpush1.msra.mxu0 0.0
    %4829 = vmatprep.subr.mxu0 0.0
    %4830 = vmatpush1.msra.mxu0 0.0
    %4831 = vmatprep.subr.mxu0 0.0
    %4832 = vmatpush1.msra.mxu0 0.0
    %4833 = vmatprep.subr.mxu0 0.0
    %4834 = vmatpush1.msra.mxu0 0.0
    %4835 = vmatprep.subr.mxu0 0.0
    %4836 = vmatpush1.msra.mxu0 0.0
    %4837 = vmatprep.subr.mxu0 0.0
    %4838 = vmatpush1.msra.mxu0 0.0
    %4839 = vmatprep.subr.mxu0 0.0
    %4840 = vmatpush1.msra.mxu0 0.0
    %4841 = vmatprep.subr.mxu0 0.0
    %4842 = vmatpush1.msra.mxu0 0.0
    %4843 = vmatprep.subr.mxu0 0.0
    %4844 = vmatpush1.msra.mxu0 0.0
    %4845 = vmatprep.subr.mxu0 0.0
    %4846 = vmatpush1.msra.mxu0 0.0
    %4847 = vmatprep.subr.mxu0 0.0
    %4848 = vmatpush1.msra.mxu0 0.0
    %4849 = vmatprep.subr.mxu0 0.0
    %4850 = vmatpush1.msra.mxu0 0.0
    %4851 = vmatprep.subr.mxu0 0.0
    %4852 = vmatpush1.msra.mxu0 0.0
    %4853 = vmatprep.subr.mxu0 0.0
    %4854 = vmatpush1.msra.mxu0 0.0
    %4855 = vmatprep.subr.mxu0 0.0
    %4856 = vmatpush1.msra.mxu0 0.0
    %4857 = vmatprep.subr.mxu0 0.0
    %4858 = vmatpush1.msra.mxu0 0.0
    %4859 = vmatprep.mubr.f32.mxu0 0.0
    %v4860 = vand.u32 %v4365, 4294901760
    %4861 = vmatmul.mubr.f32.gmra.mrb[0].mxu0 %v4860
    %v4862 = vpop.f32.mrb[0].mxu0
    %v4863 = vadd.f32 %v4784, %v4862
    %v4864 = vpop.f32.mrb[0].mxu0
    %4865 = vmatprep.mubr.f32.mxu0 0.0
    %v4866 = vand.u32 %v4368, 4294901760
    %4867 = vmatmul.mubr.f32.gmra.mrb[0].mxu0 %v4866
    %v4868 = vpop.f32.mrb[0].mxu0
    %v4869 = vadd.f32 %v4790, %v4868
    %v4870 = vpop.f32.mrb[0].mxu0
    %4871 = vdwg.mxu0
    %v4872 = vadd.f32 %v3816, %v4863
    %v4873 = vadd.f32 %v3822, %v4869
    %v4874 = vld [vmem:[#allocation5 + $0x103] sm:$0x1]
    %v4875 = vlaneseq
    %v4876 = vshrl.u32 %v4875, 7
    %v4877 = vsub.s32 0, %v4876
    %v4878 = vrot.slane %v4874, %v4877
    %v4879 = vmul.f32 %v1183, %v4878
    %v4880 = vmul.f32 %v1189, %v4878
    %v4882 = vsel %vm82, %v4879, 0
    %v4885 = vsel %vm82, %v4880, 0
    %4887 = vmatprep.subr.mxu0 0.0
    %v4888 = vand.u32 %v4882, 4294901760
    %4889 = vmatpush1.xpose.msra.mxu0 %v4888
    %4890 = vmatprep.subr.mxu0 0.0
    %v4891 = vand.u32 %v4885, 4294901760
    %4892 = vmatpush1.xpose.msra.mxu0 %v4891
    %4893 = vmatprep.subr.mxu0 0.0
    %4894 = vmatpush1.xpose.msra.mxu0 0.0
    %4895 = vmatprep.subr.mxu0 0.0
    %4896 = vmatpush1.xpose.msra.mxu0 0.0
    %4897 = vmatprep.subr.mxu0 0.0
    %4898 = vmatpush1.xpose.msra.mxu0 0.0
    %4899 = vmatprep.subr.mxu0 0.0
    %4900 = vmatpush1.xpose.msra.mxu0 0.0
    %4901 = vmatprep.subr.mxu0 0.0
    %4902 = vmatpush1.xpose.msra.mxu0 0.0
    %4903 = vmatprep.subr.mxu0 0.0
    %4904 = vmatpush1.xpose.msra.mxu0 0.0
    %4905 = vmatprep.subr.mxu0 0.0
    %4906 = vmatpush1.xpose.msra.mxu0 0.0
    %4907 = vmatprep.subr.mxu0 0.0
    %4908 = vmatpush1.xpose.msra.mxu0 0.0
    %4909 = vmatprep.subr.mxu0 0.0
    %4910 = vmatpush1.xpose.msra.mxu0 0.0
    %4911 = vmatprep.subr.mxu0 0.0
    %4912 = vmatpush1.xpose.msra.mxu0 0.0
    %4913 = vmatprep.subr.mxu0 0.0
    %4914 = vmatpush1.xpose.msra.mxu0 0.0
    %4915 = vmatprep.subr.mxu0 0.0
    %4916 = vmatpush1.xpose.msra.mxu0 0.0
    %4917 = vmatprep.subr.mxu0 0.0
    %4918 = vmatpush1.xpose.msra.mxu0 0.0
    %4919 = vmatprep.subr.mxu0 0.0
    %4920 = vmatpush1.xpose.msra.mxu0 0.0
    %4921 = vmatprep.subr.mxu0 0.0
    %4922 = vmatpush1.xpose.msra.mxu0 0.0
    %4923 = vmatprep.subr.mxu0 0.0
    %4924 = vmatpush1.xpose.msra.mxu0 0.0
    %4925 = vmatprep.subr.mxu0 0.0
    %4926 = vmatpush1.xpose.msra.mxu0 0.0
    %4927 = vmatprep.subr.mxu0 0.0
    %4928 = vmatpush1.xpose.msra.mxu0 0.0
    %4929 = vmatprep.subr.mxu0 0.0
    %4930 = vmatpush1.xpose.msra.mxu0 0.0
    %4931 = vmatprep.subr.mxu0 0.0
    %4932 = vmatpush1.xpose.msra.mxu0 0.0
    %4933 = vmatprep.subr.mxu0 0.0
    %4934 = vmatpush1.xpose.msra.mxu0 0.0
    %4935 = vmatprep.subr.mxu0 0.0
    %4936 = vmatpush1.xpose.msra.mxu0 0.0
    %4937 = vmatprep.subr.mxu0 0.0
    %4938 = vmatpush1.xpose.msra.mxu0 0.0
    %4939 = vmatprep.subr.mxu0 0.0
    %4940 = vmatpush1.xpose.msra.mxu0 0.0
    %4941 = vmatprep.subr.mxu0 0.0
    %4942 = vmatpush1.xpose.msra.mxu0 0.0
    %4943 = vmatprep.subr.mxu0 0.0
    %4944 = vmatpush1.xpose.msra.mxu0 0.0
    %4945 = vmatprep.subr.mxu0 0.0
    %4946 = vmatpush1.xpose.msra.mxu0 0.0
    %4947 = vmatprep.subr.mxu0 0.0
    %4948 = vmatpush1.xpose.msra.mxu0 0.0
    %4949 = vmatprep.subr.mxu0 0.0
    %4950 = vmatpush1.xpose.msra.mxu0 0.0
    %4951 = vmatprep.subr.mxu0 0.0
    %4952 = vmatpush1.xpose.msra.mxu0 0.0
    %4953 = vmatprep.mubr.f32.mxu0 0.0
    %v4954 = vand.u32 %v1732, 4294901760
    %v4955 = vsub.f32 %v1732, %v4954
    %v4956 = vand.u32 %v4955, 4294901760
    %v4957 = vsub.f32 %v4955, %v4956
    %v4958 = vand.u32 %v4957, 4294901760
    %4959 = vmatmul.mubr.f32.gmra.mrb[0].mxu0 %v4958
    %v4960 = vpop.f32.mrb[0].mxu0
    %v4961 = vadd.f32 %v80, %v4960
    %v4962 = vpop.f32.mrb[0].mxu0
    %4963 = vmatprep.mubr.f32.mxu0 0.0
    %v4964 = vand.u32 %v1735, 4294901760
    %v4965 = vsub.f32 %v1735, %v4964
    %v4966 = vand.u32 %v4965, 4294901760
    %v4967 = vsub.f32 %v4965, %v4966
    %v4968 = vand.u32 %v4967, 4294901760
    %4969 = vmatmul.mubr.f32.gmra.mrb[0].mxu0 %v4968
    %v4970 = vpop.f32.mrb[0].mxu0
    %v4971 = vadd.f32 %v81, %v4970
    %v4972 = vpop.f32.mrb[0].mxu0
    %4973 = vdwg.mxu0
    %4974 = vmatprep.subr.mxu0 0.0
    %v4975 = vand.u32 %v4882, 4294901760
    %v4976 = vsub.f32 %v4882, %v4975
    %v4977 = vand.u32 %v4976, 4294901760
    %v4978 = vsub.f32 %v4976, %v4977
    %v4979 = vand.u32 %v4978, 4294901760
    %4980 = vmatpush1.xpose.msra.mxu0 %v4979
    %4981 = vmatprep.subr.mxu0 0.0
    %v4982 = vand.u32 %v4885, 4294901760
    %v4983 = vsub.f32 %v4885, %v4982
    %v4984 = vand.u32 %v4983, 4294901760
    %v4985 = vsub.f32 %v4983, %v4984
    %v4986 = vand.u32 %v4985, 4294901760
    %4987 = vmatpush1.xpose.msra.mxu0 %v4986
    %4988 = vmatprep.subr.mxu0 0.0
    %4989 = vmatpush1.xpose.msra.mxu0 0.0
    %4990 = vmatprep.subr.mxu0 0.0
    %4991 = vmatpush1.xpose.msra.mxu0 0.0
    %4992 = vmatprep.subr.mxu0 0.0
    %4993 = vmatpush1.xpose.msra.mxu0 0.0
    %4994 = vmatprep.subr.mxu0 0.0
    %4995 = vmatpush1.xpose.msra.mxu0 0.0
    %4996 = vmatprep.subr.mxu0 0.0
    %4997 = vmatpush1.xpose.msra.mxu0 0.0
    %4998 = vmatprep.subr.mxu0 0.0
    %4999 = vmatpush1.xpose.msra.mxu0 0.0
    %5000 = vmatprep.subr.mxu0 0.0
    %5001 = vmatpush1.xpose.msra.mxu0 0.0
    %5002 = vmatprep.subr.mxu0 0.0
    %5003 = vmatpush1.xpose.msra.mxu0 0.0
    %5004 = vmatprep.subr.mxu0 0.0
    %5005 = vmatpush1.xpose.msra.mxu0 0.0
    %5006 = vmatprep.subr.mxu0 0.0
    %5007 = vmatpush1.xpose.msra.mxu0 0.0
    %5008 = vmatprep.subr.mxu0 0.0
    %5009 = vmatpush1.xpose.msra.mxu0 0.0
    %5010 = vmatprep.subr.mxu0 0.0
    %5011 = vmatpush1.xpose.msra.mxu0 0.0
    %5012 = vmatprep.subr.mxu0 0.0
    %5013 = vmatpush1.xpose.msra.mxu0 0.0
    %5014 = vmatprep.subr.mxu0 0.0
    %5015 = vmatpush1.xpose.msra.mxu0 0.0
    %5016 = vmatprep.subr.mxu0 0.0
    %5017 = vmatpush1.xpose.msra.mxu0 0.0
    %5018 = vmatprep.subr.mxu0 0.0
    %5019 = vmatpush1.xpose.msra.mxu0 0.0
    %5020 = vmatprep.subr.mxu0 0.0
    %5021 = vmatpush1.xpose.msra.mxu0 0.0
    %5022 = vmatprep.subr.mxu0 0.0
    %5023 = vmatpush1.xpose.msra.mxu0 0.0
    %5024 = vmatprep.subr.mxu0 0.0
    %5025 = vmatpush1.xpose.msra.mxu0 0.0
    %5026 = vmatprep.subr.mxu0 0.0
    %5027 = vmatpush1.xpose.msra.mxu0 0.0
    %5028 = vmatprep.subr.mxu0 0.0
    %5029 = vmatpush1.xpose.msra.mxu0 0.0
    %5030 = vmatprep.subr.mxu0 0.0
    %5031 = vmatpush1.xpose.msra.mxu0 0.0
    %5032 = vmatprep.subr.mxu0 0.0
    %5033 = vmatpush1.xpose.msra.mxu0 0.0
    %5034 = vmatprep.subr.mxu0 0.0
    %5035 = vmatpush1.xpose.msra.mxu0 0.0
    %5036 = vmatprep.subr.mxu0 0.0
    %5037 = vmatpush1.xpose.msra.mxu0 0.0
    %5038 = vmatprep.subr.mxu0 0.0
    %5039 = vmatpush1.xpose.msra.mxu0 0.0
    %5040 = vmatprep.subr.mxu0 0.0
    %5041 = vmatpush1.xpose.msra.mxu0 0.0
    %5042 = vmatprep.subr.mxu0 0.0
    %5043 = vmatpush1.xpose.msra.mxu0 0.0
    %5044 = vmatprep.subr.mxu0 0.0
    %5045 = vmatpush1.xpose.msra.mxu0 0.0
    %5046 = vmatprep.subr.mxu0 0.0
    %5047 = vmatpush1.xpose.msra.mxu0 0.0
    %5048 = vmatprep.mubr.f32.mxu0 0.0
    %v5049 = vand.u32 %v1732, 4294901760
    %5050 = vmatmul.mubr.f32.gmra.mrb[0].mxu0 %v5049
    %v5051 = vpop.f32.mrb[0].mxu0
    %v5052 = vadd.f32 %v4961, %v5051
    %v5053 = vpop.f32.mrb[0].mxu0
    %5054 = vmatprep.mubr.f32.mxu0 0.0
    %v5055 = vand.u32 %v1735, 4294901760
    %5056 = vmatmul.mubr.f32.gmra.mrb[0].mxu0 %v5055
    %v5057 = vpop.f32.mrb[0].mxu0
    %v5058 = vadd.f32 %v4971, %v5057
    %v5059 = vpop.f32.mrb[0].mxu0
    %5060 = vdwg.mxu0
    %5061 = vmatprep.subr.mxu0 0.0
    %v5062 = vand.u32 %v4882, 4294901760
    %v5063 = vsub.f32 %v4882, %v5062
    %5064 = vmatpush1.xpose.msra.mxu0 %v5063
    %5065 = vmatprep.subr.mxu0 0.0
    %v5066 = vand.u32 %v4885, 4294901760
    %v5067 = vsub.f32 %v4885, %v5066
    %5068 = vmatpush1.xpose.msra.mxu0 %v5067
    %5069 = vmatprep.subr.mxu0 0.0
    %5070 = vmatpush1.xpose.msra.mxu0 0.0
    %5071 = vmatprep.subr.mxu0 0.0
    %5072 = vmatpush1.xpose.msra.mxu0 0.0
    %5073 = vmatprep.subr.mxu0 0.0
    %5074 = vmatpush1.xpose.msra.mxu0 0.0
    %5075 = vmatprep.subr.mxu0 0.0
    %5076 = vmatpush1.xpose.msra.mxu0 0.0
    %5077 = vmatprep.subr.mxu0 0.0
    %5078 = vmatpush1.xpose.msra.mxu0 0.0
    %5079 = vmatprep.subr.mxu0 0.0
    %5080 = vmatpush1.xpose.msra.mxu0 0.0
    %5081 = vmatprep.subr.mxu0 0.0
    %5082 = vmatpush1.xpose.msra.mxu0 0.0
    %5083 = vmatprep.subr.mxu0 0.0
    %5084 = vmatpush1.xpose.msra.mxu0 0.0
    %5085 = vmatprep.subr.mxu0 0.0
    %5086 = vmatpush1.xpose.msra.mxu0 0.0
    %5087 = vmatprep.subr.mxu0 0.0
    %5088 = vmatpush1.xpose.msra.mxu0 0.0
    %5089 = vmatprep.subr.mxu0 0.0
    %5090 = vmatpush1.xpose.msra.mxu0 0.0
    %5091 = vmatprep.subr.mxu0 0.0
    %5092 = vmatpush1.xpose.msra.mxu0 0.0
    %5093 = vmatprep.subr.mxu0 0.0
    %5094 = vmatpush1.xpose.msra.mxu0 0.0
    %5095 = vmatprep.subr.mxu0 0.0
    %5096 = vmatpush1.xpose.msra.mxu0 0.0
    %5097 = vmatprep.subr.mxu0 0.0
    %5098 = vmatpush1.xpose.msra.mxu0 0.0
    %5099 = vmatprep.subr.mxu0 0.0
    %5100 = vmatpush1.xpose.msra.mxu0 0.0
    %5101 = vmatprep.subr.mxu0 0.0
    %5102 = vmatpush1.xpose.msra.mxu0 0.0
    %5103 = vmatprep.subr.mxu0 0.0
    %5104 = vmatpush1.xpose.msra.mxu0 0.0
    %5105 = vmatprep.subr.mxu0 0.0
    %5106 = vmatpush1.xpose.msra.mxu0 0.0
    %5107 = vmatprep.subr.mxu0 0.0
    %5108 = vmatpush1.xpose.msra.mxu0 0.0
    %5109 = vmatprep.subr.mxu0 0.0
    %5110 = vmatpush1.xpose.msra.mxu0 0.0
    %5111 = vmatprep.subr.mxu0 0.0
    %5112 = vmatpush1.xpose.msra.mxu0 0.0
    %5113 = vmatprep.subr.mxu0 0.0
    %5114 = vmatpush1.xpose.msra.mxu0 0.0
    %5115 = vmatprep.subr.mxu0 0.0
    %5116 = vmatpush1.xpose.msra.mxu0 0.0
    %5117 = vmatprep.subr.mxu0 0.0
    %5118 = vmatpush1.xpose.msra.mxu0 0.0
    %5119 = vmatprep.subr.mxu0 0.0
    %5120 = vmatpush1.xpose.msra.mxu0 0.0
    %5121 = vmatprep.subr.mxu0 0.0
    %5122 = vmatpush1.xpose.msra.mxu0 0.0
    %5123 = vmatprep.subr.mxu0 0.0
    %5124 = vmatpush1.xpose.msra.mxu0 0.0
    %5125 = vmatprep.subr.mxu0 0.0
    %5126 = vmatpush1.xpose.msra.mxu0 0.0
    %5127 = vmatprep.subr.mxu0 0.0
    %5128 = vmatpush1.xpose.msra.mxu0 0.0
    %5129 = vmatprep.mubr.f32.mxu0 0.0
    %v5130 = vand.u32 %v1732, 4294901760
    %v5131 = vsub.f32 %v1732, %v5130
    %5132 = vmatmul.mubr.f32.gmra.mrb[0].mxu0 %v5131
    %v5133 = vpop.f32.mrb[0].mxu0
    %v5134 = vadd.f32 %v5052, %v5133
    %v5135 = vpop.f32.mrb[0].mxu0
    %5136 = vmatprep.mubr.f32.mxu0 0.0
    %v5137 = vand.u32 %v1735, 4294901760
    %v5138 = vsub.f32 %v1735, %v5137
    %5139 = vmatmul.mubr.f32.gmra.mrb[0].mxu0 %v5138
    %v5140 = vpop.f32.mrb[0].mxu0
    %v5141 = vadd.f32 %v5058, %v5140
    %v5142 = vpop.f32.mrb[0].mxu0
    %5143 = vdwg.mxu0
    %5144 = vmatprep.subr.mxu0 0.0
    %v5145 = vand.u32 %v4882, 4294901760
    %5146 = vmatpush1.xpose.msra.mxu0 %v5145
    %5147 = vmatprep.subr.mxu0 0.0
    %v5148 = vand.u32 %v4885, 4294901760
    %5149 = vmatpush1.xpose.msra.mxu0 %v5148
    %5150 = vmatprep.subr.mxu0 0.0
    %5151 = vmatpush1.xpose.msra.mxu0 0.0
    %5152 = vmatprep.subr.mxu0 0.0
    %5153 = vmatpush1.xpose.msra.mxu0 0.0
    %5154 = vmatprep.subr.mxu0 0.0
    %5155 = vmatpush1.xpose.msra.mxu0 0.0
    %5156 = vmatprep.subr.mxu0 0.0
    %5157 = vmatpush1.xpose.msra.mxu0 0.0
    %5158 = vmatprep.subr.mxu0 0.0
    %5159 = vmatpush1.xpose.msra.mxu0 0.0
    %5160 = vmatprep.subr.mxu0 0.0
    %5161 = vmatpush1.xpose.msra.mxu0 0.0
    %5162 = vmatprep.subr.mxu0 0.0
    %5163 = vmatpush1.xpose.msra.mxu0 0.0
    %5164 = vmatprep.subr.mxu0 0.0
    %5165 = vmatpush1.xpose.msra.mxu0 0.0
    %5166 = vmatprep.subr.mxu0 0.0
    %5167 = vmatpush1.xpose.msra.mxu0 0.0
    %5168 = vmatprep.subr.mxu0 0.0
    %5169 = vmatpush1.xpose.msra.mxu0 0.0
    %5170 = vmatprep.subr.mxu0 0.0
    %5171 = vmatpush1.xpose.msra.mxu0 0.0
    %5172 = vmatprep.subr.mxu0 0.0
    %5173 = vmatpush1.xpose.msra.mxu0 0.0
    %5174 = vmatprep.subr.mxu0 0.0
    %5175 = vmatpush1.xpose.msra.mxu0 0.0
    %5176 = vmatprep.subr.mxu0 0.0
    %5177 = vmatpush1.xpose.msra.mxu0 0.0
    %5178 = vmatprep.subr.mxu0 0.0
    %5179 = vmatpush1.xpose.msra.mxu0 0.0
    %5180 = vmatprep.subr.mxu0 0.0
    %5181 = vmatpush1.xpose.msra.mxu0 0.0
    %5182 = vmatprep.subr.mxu0 0.0
    %5183 = vmatpush1.xpose.msra.mxu0 0.0
    %5184 = vmatprep.subr.mxu0 0.0
    %5185 = vmatpush1.xpose.msra.mxu0 0.0
    %5186 = vmatprep.subr.mxu0 0.0
    %5187 = vmatpush1.xpose.msra.mxu0 0.0
    %5188 = vmatprep.subr.mxu0 0.0
    %5189 = vmatpush1.xpose.msra.mxu0 0.0
    %5190 = vmatprep.subr.mxu0 0.0
    %5191 = vmatpush1.xpose.msra.mxu0 0.0
    %5192 = vmatprep.subr.mxu0 0.0
    %5193 = vmatpush1.xpose.msra.mxu0 0.0
    %5194 = vmatprep.subr.mxu0 0.0
    %5195 = vmatpush1.xpose.msra.mxu0 0.0
    %5196 = vmatprep.subr.mxu0 0.0
    %5197 = vmatpush1.xpose.msra.mxu0 0.0
    %5198 = vmatprep.subr.mxu0 0.0
    %5199 = vmatpush1.xpose.msra.mxu0 0.0
    %5200 = vmatprep.subr.mxu0 0.0
    %5201 = vmatpush1.xpose.msra.mxu0 0.0
    %5202 = vmatprep.subr.mxu0 0.0
    %5203 = vmatpush1.xpose.msra.mxu0 0.0
    %5204 = vmatprep.subr.mxu0 0.0
    %5205 = vmatpush1.xpose.msra.mxu0 0.0
    %5206 = vmatprep.subr.mxu0 0.0
    %5207 = vmatpush1.xpose.msra.mxu0 0.0
    %5208 = vmatprep.subr.mxu0 0.0
    %5209 = vmatpush1.xpose.msra.mxu0 0.0
    %5210 = vmatprep.mubr.f32.mxu0 0.0
    %v5211 = vand.u32 %v1732, 4294901760
    %v5212 = vsub.f32 %v1732, %v5211
    %v5213 = vand.u32 %v5212, 4294901760
    %5214 = vmatmul.mubr.f32.gmra.mrb[0].mxu0 %v5213
    %v5215 = vpop.f32.mrb[0].mxu0
    %v5216 = vadd.f32 %v5134, %v5215
    %v5217 = vpop.f32.mrb[0].mxu0
    %5218 = vmatprep.mubr.f32.mxu0 0.0
    %v5219 = vand.u32 %v1735, 4294901760
    %v5220 = vsub.f32 %v1735, %v5219
    %v5221 = vand.u32 %v5220, 4294901760
    %5222 = vmatmul.mubr.f32.gmra.mrb[0].mxu0 %v5221
    %v5223 = vpop.f32.mrb[0].mxu0
    %v5224 = vadd.f32 %v5141, %v5223
    %v5225 = vpop.f32.mrb[0].mxu0
    %5226 = vdwg.mxu0
    %5227 = vmatprep.subr.mxu0 0.0
    %v5228 = vand.u32 %v4882, 4294901760
    %v5229 = vsub.f32 %v4882, %v5228
    %v5230 = vand.u32 %v5229, 4294901760
    %5231 = vmatpush1.xpose.msra.mxu0 %v5230
    %5232 = vmatprep.subr.mxu0 0.0
    %v5233 = vand.u32 %v4885, 4294901760
    %v5234 = vsub.f32 %v4885, %v5233
    %v5235 = vand.u32 %v5234, 4294901760
    %5236 = vmatpush1.xpose.msra.mxu0 %v5235
    %5237 = vmatprep.subr.mxu0 0.0
    %5238 = vmatpush1.xpose.msra.mxu0 0.0
    %5239 = vmatprep.subr.mxu0 0.0
    %5240 = vmatpush1.xpose.msra.mxu0 0.0
    %5241 = vmatprep.subr.mxu0 0.0
    %5242 = vmatpush1.xpose.msra.mxu0 0.0
    %5243 = vmatprep.subr.mxu0 0.0
    %5244 = vmatpush1.xpose.msra.mxu0 0.0
    %5245 = vmatprep.subr.mxu0 0.0
    %5246 = vmatpush1.xpose.msra.mxu0 0.0
    %5247 = vmatprep.subr.mxu0 0.0
    %5248 = vmatpush1.xpose.msra.mxu0 0.0
    %5249 = vmatprep.subr.mxu0 0.0
    %5250 = vmatpush1.xpose.msra.mxu0 0.0
    %5251 = vmatprep.subr.mxu0 0.0
    %5252 = vmatpush1.xpose.msra.mxu0 0.0
    %5253 = vmatprep.subr.mxu0 0.0
    %5254 = vmatpush1.xpose.msra.mxu0 0.0
    %5255 = vmatprep.subr.mxu0 0.0
    %5256 = vmatpush1.xpose.msra.mxu0 0.0
    %5257 = vmatprep.subr.mxu0 0.0
    %5258 = vmatpush1.xpose.msra.mxu0 0.0
    %5259 = vmatprep.subr.mxu0 0.0
    %5260 = vmatpush1.xpose.msra.mxu0 0.0
    %5261 = vmatprep.subr.mxu0 0.0
    %5262 = vmatpush1.xpose.msra.mxu0 0.0
    %5263 = vmatprep.subr.mxu0 0.0
    %5264 = vmatpush1.xpose.msra.mxu0 0.0
    %5265 = vmatprep.subr.mxu0 0.0
    %5266 = vmatpush1.xpose.msra.mxu0 0.0
    %5267 = vmatprep.subr.mxu0 0.0
    %5268 = vmatpush1.xpose.msra.mxu0 0.0
    %5269 = vmatprep.subr.mxu0 0.0
    %5270 = vmatpush1.xpose.msra.mxu0 0.0
    %5271 = vmatprep.subr.mxu0 0.0
    %5272 = vmatpush1.xpose.msra.mxu0 0.0
    %5273 = vmatprep.subr.mxu0 0.0
    %5274 = vmatpush1.xpose.msra.mxu0 0.0
    %5275 = vmatprep.subr.mxu0 0.0
    %5276 = vmatpush1.xpose.msra.mxu0 0.0
    %5277 = vmatprep.subr.mxu0 0.0
    %5278 = vmatpush1.xpose.msra.mxu0 0.0
    %5279 = vmatprep.subr.mxu0 0.0
    %5280 = vmatpush1.xpose.msra.mxu0 0.0
    %5281 = vmatprep.subr.mxu0 0.0
    %5282 = vmatpush1.xpose.msra.mxu0 0.0
    %5283 = vmatprep.subr.mxu0 0.0
    %5284 = vmatpush1.xpose.msra.mxu0 0.0
    %5285 = vmatprep.subr.mxu0 0.0
    %5286 = vmatpush1.xpose.msra.mxu0 0.0
    %5287 = vmatprep.subr.mxu0 0.0
    %5288 = vmatpush1.xpose.msra.mxu0 0.0
    %5289 = vmatprep.subr.mxu0 0.0
    %5290 = vmatpush1.xpose.msra.mxu0 0.0
    %5291 = vmatprep.subr.mxu0 0.0
    %5292 = vmatpush1.xpose.msra.mxu0 0.0
    %5293 = vmatprep.subr.mxu0 0.0
    %5294 = vmatpush1.xpose.msra.mxu0 0.0
    %5295 = vmatprep.subr.mxu0 0.0
    %5296 = vmatpush1.xpose.msra.mxu0 0.0
    %5297 = vmatprep.mubr.f32.mxu0 0.0
    %v5298 = vand.u32 %v1732, 4294901760
    %5299 = vmatmul.mubr.f32.gmra.mrb[0].mxu0 %v5298
    %v5300 = vpop.f32.mrb[0].mxu0
    %v5301 = vadd.f32 %v5216, %v5300
    %v5302 = vpop.f32.mrb[0].mxu0
    %5303 = vmatprep.mubr.f32.mxu0 0.0
    %v5304 = vand.u32 %v1735, 4294901760
    %5305 = vmatmul.mubr.f32.gmra.mrb[0].mxu0 %v5304
    %v5306 = vpop.f32.mrb[0].mxu0
    %v5307 = vadd.f32 %v5224, %v5306
    %v5308 = vpop.f32.mrb[0].mxu0
    %5309 = vdwg.mxu0
    %5310 = vmatprep.subr.mxu0 0.0
    %v5311 = vand.u32 %v4882, 4294901760
    %5312 = vmatpush1.xpose.msra.mxu0 %v5311
    %5313 = vmatprep.subr.mxu0 0.0
    %v5314 = vand.u32 %v4885, 4294901760
    %5315 = vmatpush1.xpose.msra.mxu0 %v5314
    %5316 = vmatprep.subr.mxu0 0.0
    %5317 = vmatpush1.xpose.msra.mxu0 0.0
    %5318 = vmatprep.subr.mxu0 0.0
    %5319 = vmatpush1.xpose.msra.mxu0 0.0
    %5320 = vmatprep.subr.mxu0 0.0
    %5321 = vmatpush1.xpose.msra.mxu0 0.0
    %5322 = vmatprep.subr.mxu0 0.0
    %5323 = vmatpush1.xpose.msra.mxu0 0.0
    %5324 = vmatprep.subr.mxu0 0.0
    %5325 = vmatpush1.xpose.msra.mxu0 0.0
    %5326 = vmatprep.subr.mxu0 0.0
    %5327 = vmatpush1.xpose.msra.mxu0 0.0
    %5328 = vmatprep.subr.mxu0 0.0
    %5329 = vmatpush1.xpose.msra.mxu0 0.0
    %5330 = vmatprep.subr.mxu0 0.0
    %5331 = vmatpush1.xpose.msra.mxu0 0.0
    %5332 = vmatprep.subr.mxu0 0.0
    %5333 = vmatpush1.xpose.msra.mxu0 0.0
    %5334 = vmatprep.subr.mxu0 0.0
    %5335 = vmatpush1.xpose.msra.mxu0 0.0
    %5336 = vmatprep.subr.mxu0 0.0
    %5337 = vmatpush1.xpose.msra.mxu0 0.0
    %5338 = vmatprep.subr.mxu0 0.0
    %5339 = vmatpush1.xpose.msra.mxu0 0.0
    %5340 = vmatprep.subr.mxu0 0.0
    %5341 = vmatpush1.xpose.msra.mxu0 0.0
    %5342 = vmatprep.subr.mxu0 0.0
    %5343 = vmatpush1.xpose.msra.mxu0 0.0
    %5344 = vmatprep.subr.mxu0 0.0
    %5345 = vmatpush1.xpose.msra.mxu0 0.0
    %5346 = vmatprep.subr.mxu0 0.0
    %5347 = vmatpush1.xpose.msra.mxu0 0.0
    %5348 = vmatprep.subr.mxu0 0.0
    %5349 = vmatpush1.xpose.msra.mxu0 0.0
    %5350 = vmatprep.subr.mxu0 0.0
    %5351 = vmatpush1.xpose.msra.mxu0 0.0
    %5352 = vmatprep.subr.mxu0 0.0
    %5353 = vmatpush1.xpose.msra.mxu0 0.0
    %5354 = vmatprep.subr.mxu0 0.0
    %5355 = vmatpush1.xpose.msra.mxu0 0.0
    %5356 = vmatprep.subr.mxu0 0.0
    %5357 = vmatpush1.xpose.msra.mxu0 0.0
    %5358 = vmatprep.subr.mxu0 0.0
    %5359 = vmatpush1.xpose.msra.mxu0 0.0
    %5360 = vmatprep.subr.mxu0 0.0
    %5361 = vmatpush1.xpose.msra.mxu0 0.0
    %5362 = vmatprep.subr.mxu0 0.0
    %5363 = vmatpush1.xpose.msra.mxu0 0.0
    %5364 = vmatprep.subr.mxu0 0.0
    %5365 = vmatpush1.xpose.msra.mxu0 0.0
    %5366 = vmatprep.subr.mxu0 0.0
    %5367 = vmatpush1.xpose.msra.mxu0 0.0
    %5368 = vmatprep.subr.mxu0 0.0
    %5369 = vmatpush1.xpose.msra.mxu0 0.0
    %5370 = vmatprep.subr.mxu0 0.0
    %5371 = vmatpush1.xpose.msra.mxu0 0.0
    %5372 = vmatprep.subr.mxu0 0.0
    %5373 = vmatpush1.xpose.msra.mxu0 0.0
    %5374 = vmatprep.subr.mxu0 0.0
    %5375 = vmatpush1.xpose.msra.mxu0 0.0
    %5376 = vmatprep.mubr.f32.mxu0 0.0
    %v5377 = vand.u32 %v1732, 4294901760
    %5378 = vmatmul.mubr.f32.gmra.mrb[0].mxu0 %v5377
    %v5379 = vpop.f32.mrb[0].mxu0
    %v5380 = vadd.f32 %v5301, %v5379
    %v5381 = vpop.f32.mrb[0].mxu0
    %5382 = vmatprep.mubr.f32.mxu0 0.0
    %v5383 = vand.u32 %v1735, 4294901760
    %5384 = vmatmul.mubr.f32.gmra.mrb[0].mxu0 %v5383
    %v5385 = vpop.f32.mrb[0].mxu0
    %v5386 = vadd.f32 %v5307, %v5385
    %v5387 = vpop.f32.mrb[0].mxu0
    %5388 = vdwg.mxu0
    %v5389 = vsel %vm2245, %v5380, -inf
    %5390 = vmax.xlane.f32.xlu0 %v5389
    %v5391 = vpop.xlane.xlu0 %5390
    %v5392 = vsel %vm2245, %v5386, -inf
    %5393 = vmax.xlane.f32.xlu0 %v5392
    %v5394 = vpop.xlane.xlu0 %5393
    %v5395 = vsub.f32 %v5380, %v5391
    %v5396 = vsub.f32 %v5386, %v5394
    %v5397 = vmul.f32 %v5395, 1.442695
    %v5398 = vpow.pop %v5397
    %v5399 = vmul.f32 %v5396, 1.442695
    %v5400 = vpow.pop %v5399
    %v5401 = vsel %vm2245, %v5398, 0.0
    %5402 = vadd.xlane.f32.xlu0 %v5401
    %v5403 = vpop.xlane.xlu0 %5402
    %v5404 = vsel %vm2245, %v5400, 0.0
    %5405 = vadd.xlane.f32.xlu0 %v5404
    %v5406 = vpop.xlane.xlu0 %5405
    %v5407 = vrcp.pop %v5403
    %v5408 = vmul.f32 %v5398, %v5407
    %v5409 = vrcp.pop %v5406
    %v5410 = vmul.f32 %v5400, %v5409
    %v5411 = vmul.f32 %v1715, %v4878
    %v5412 = vmul.f32 %v1721, %v4878
    %v5414 = vsel %vm2245, %v5408, 0
    %v5417 = vsel %vm2245, %v5410, 0
    %5419 = vmatprep.subr.mxu0 0.0
    %v5420 = vand.u32 %v5411, 4294901760
    %5421 = vmatpush1.msra.mxu0 %v5420
    %5422 = vmatprep.subr.mxu0 0.0
    %v5423 = vand.u32 %v5412, 4294901760
    %5424 = vmatpush1.msra.mxu0 %v5423
    %5425 = vmatprep.subr.mxu0 0.0
    %5426 = vmatpush1.msra.mxu0 0.0
    %5427 = vmatprep.subr.mxu0 0.0
    %5428 = vmatpush1.msra.mxu0 0.0
    %5429 = vmatprep.subr.mxu0 0.0
    %5430 = vmatpush1.msra.mxu0 0.0
    %5431 = vmatprep.subr.mxu0 0.0
    %5432 = vmatpush1.msra.mxu0 0.0
    %5433 = vmatprep.subr.mxu0 0.0
    %5434 = vmatpush1.msra.mxu0 0.0
    %5435 = vmatprep.subr.mxu0 0.0
    %5436 = vmatpush1.msra.mxu0 0.0
    %5437 = vmatprep.subr.mxu0 0.0
    %5438 = vmatpush1.msra.mxu0 0.0
    %5439 = vmatprep.subr.mxu0 0.0
    %5440 = vmatpush1.msra.mxu0 0.0
    %5441 = vmatprep.subr.mxu0 0.0
    %5442 = vmatpush1.msra.mxu0 0.0
    %5443 = vmatprep.subr.mxu0 0.0
    %5444 = vmatpush1.msra.mxu0 0.0
    %5445 = vmatprep.subr.mxu0 0.0
    %5446 = vmatpush1.msra.mxu0 0.0
    %5447 = vmatprep.subr.mxu0 0.0
    %5448 = vmatpush1.msra.mxu0 0.0
    %5449 = vmatprep.subr.mxu0 0.0
    %5450 = vmatpush1.msra.mxu0 0.0
    %5451 = vmatprep.subr.mxu0 0.0
    %5452 = vmatpush1.msra.mxu0 0.0
    %5453 = vmatprep.subr.mxu0 0.0
    %5454 = vmatpush1.msra.mxu0 0.0
    %5455 = vmatprep.subr.mxu0 0.0
    %5456 = vmatpush1.msra.mxu0 0.0
    %5457 = vmatprep.subr.mxu0 0.0
    %5458 = vmatpush1.msra.mxu0 0.0
    %5459 = vmatprep.subr.mxu0 0.0
    %5460 = vmatpush1.msra.mxu0 0.0
    %5461 = vmatprep.subr.mxu0 0.0
    %5462 = vmatpush1.msra.mxu0 0.0
    %5463 = vmatprep.subr.mxu0 0.0
    %5464 = vmatpush1.msra.mxu0 0.0
    %5465 = vmatprep.subr.mxu0 0.0
    %5466 = vmatpush1.msra.mxu0 0.0
    %5467 = vmatprep.subr.mxu0 0.0
    %5468 = vmatpush1.msra.mxu0 0.0
    %5469 = vmatprep.subr.mxu0 0.0
    %5470 = vmatpush1.msra.mxu0 0.0
    %5471 = vmatprep.subr.mxu0 0.0
    %5472 = vmatpush1.msra.mxu0 0.0
    %5473 = vmatprep.subr.mxu0 0.0
    %5474 = vmatpush1.msra.mxu0 0.0
    %5475 = vmatprep.subr.mxu0 0.0
    %5476 = vmatpush1.msra.mxu0 0.0
    %5477 = vmatprep.subr.mxu0 0.0
    %5478 = vmatpush1.msra.mxu0 0.0
    %5479 = vmatprep.subr.mxu0 0.0
    %5480 = vmatpush1.msra.mxu0 0.0
    %5481 = vmatprep.subr.mxu0 0.0
    %5482 = vmatpush1.msra.mxu0 0.0
    %5483 = vmatprep.subr.mxu0 0.0
    %5484 = vmatpush1.msra.mxu0 0.0
    %5485 = vmatprep.mubr.f32.mxu0 0.0
    %v5486 = vand.u32 %v5414, 4294901760
    %v5487 = vsub.f32 %v5414, %v5486
    %v5488 = vand.u32 %v5487, 4294901760
    %v5489 = vsub.f32 %v5487, %v5488
    %v5490 = vand.u32 %v5489, 4294901760
    %5491 = vmatmul.mubr.f32.gmra.mrb[0].mxu0 %v5490
    %v5492 = vpop.f32.mrb[0].mxu0
    %v5493 = vadd.f32 0.0, %v5492
    %v5494 = vpop.f32.mrb[0].mxu0
    %5495 = vmatprep.mubr.f32.mxu0 0.0
    %v5496 = vand.u32 %v5417, 4294901760
    %v5497 = vsub.f32 %v5417, %v5496
    %v5498 = vand.u32 %v5497, 4294901760
    %v5499 = vsub.f32 %v5497, %v5498
    %v5500 = vand.u32 %v5499, 4294901760
    %5501 = vmatmul.mubr.f32.gmra.mrb[0].mxu0 %v5500
    %v5502 = vpop.f32.mrb[0].mxu0
    %v5503 = vadd.f32 0.0, %v5502
    %v5504 = vpop.f32.mrb[0].mxu0
    %5505 = vdwg.mxu0
    %5506 = vmatprep.subr.mxu0 0.0
    %v5507 = vand.u32 %v5411, 4294901760
    %v5508 = vsub.f32 %v5411, %v5507
    %v5509 = vand.u32 %v5508, 4294901760
    %v5510 = vsub.f32 %v5508, %v5509
    %v5511 = vand.u32 %v5510, 4294901760
    %5512 = vmatpush1.msra.mxu0 %v5511
    %5513 = vmatprep.subr.mxu0 0.0
    %v5514 = vand.u32 %v5412, 4294901760
    %v5515 = vsub.f32 %v5412, %v5514
    %v5516 = vand.u32 %v5515, 4294901760
    %v5517 = vsub.f32 %v5515, %v5516
    %v5518 = vand.u32 %v5517, 4294901760
    %5519 = vmatpush1.msra.mxu0 %v5518
    %5520 = vmatprep.subr.mxu0 0.0
    %5521 = vmatpush1.msra.mxu0 0.0
    %5522 = vmatprep.subr.mxu0 0.0
    %5523 = vmatpush1.msra.mxu0 0.0
    %5524 = vmatprep.subr.mxu0 0.0
    %5525 = vmatpush1.msra.mxu0 0.0
    %5526 = vmatprep.subr.mxu0 0.0
    %5527 = vmatpush1.msra.mxu0 0.0
    %5528 = vmatprep.subr.mxu0 0.0
    %5529 = vmatpush1.msra.mxu0 0.0
    %5530 = vmatprep.subr.mxu0 0.0
    %5531 = vmatpush1.msra.mxu0 0.0
    %5532 = vmatprep.subr.mxu0 0.0
    %5533 = vmatpush1.msra.mxu0 0.0
    %5534 = vmatprep.subr.mxu0 0.0
    %5535 = vmatpush1.msra.mxu0 0.0
    %5536 = vmatprep.subr.mxu0 0.0
    %5537 = vmatpush1.msra.mxu0 0.0
    %5538 = vmatprep.subr.mxu0 0.0
    %5539 = vmatpush1.msra.mxu0 0.0
    %5540 = vmatprep.subr.mxu0 0.0
    %5541 = vmatpush1.msra.mxu0 0.0
    %5542 = vmatprep.subr.mxu0 0.0
    %5543 = vmatpush1.msra.mxu0 0.0
    %5544 = vmatprep.subr.mxu0 0.0
    %5545 = vmatpush1.msra.mxu0 0.0
    %5546 = vmatprep.subr.mxu0 0.0
    %5547 = vmatpush1.msra.mxu0 0.0
    %5548 = vmatprep.subr.mxu0 0.0
    %5549 = vmatpush1.msra.mxu0 0.0
    %5550 = vmatprep.subr.mxu0 0.0
    %5551 = vmatpush1.msra.mxu0 0.0
    %5552 = vmatprep.subr.mxu0 0.0
    %5553 = vmatpush1.msra.mxu0 0.0
    %5554 = vmatprep.subr.mxu0 0.0
    %5555 = vmatpush1.msra.mxu0 0.0
    %5556 = vmatprep.subr.mxu0 0.0
    %5557 = vmatpush1.msra.mxu0 0.0
    %5558 = vmatprep.subr.mxu0 0.0
    %5559 = vmatpush1.msra.mxu0 0.0
    %5560 = vmatprep.subr.mxu0 0.0
    %5561 = vmatpush1.msra.mxu0 0.0
    %5562 = vmatprep.subr.mxu0 0.0
    %5563 = vmatpush1.msra.mxu0 0.0
    %5564 = vmatprep.subr.mxu0 0.0
    %5565 = vmatpush1.msra.mxu0 0.0
    %5566 = vmatprep.subr.mxu0 0.0
    %5567 = vmatpush1.msra.mxu0 0.0
    %5568 = vmatprep.subr.mxu0 0.0
    %5569 = vmatpush1.msra.mxu0 0.0
    %5570 = vmatprep.subr.mxu0 0.0
    %5571 = vmatpush1.msra.mxu0 0.0
    %5572 = vmatprep.subr.mxu0 0.0
    %5573 = vmatpush1.msra.mxu0 0.0
    %5574 = vmatprep.subr.mxu0 0.0
    %5575 = vmatpush1.msra.mxu0 0.0
    %5576 = vmatprep.subr.mxu0 0.0
    %5577 = vmatpush1.msra.mxu0 0.0
    %5578 = vmatprep.subr.mxu0 0.0
    %5579 = vmatpush1.msra.mxu0 0.0
    %5580 = vmatprep.mubr.f32.mxu0 0.0
    %v5581 = vand.u32 %v5414, 4294901760
    %5582 = vmatmul.mubr.f32.gmra.mrb[0].mxu0 %v5581
    %v5583 = vpop.f32.mrb[0].mxu0
    %v5584 = vadd.f32 %v5493, %v5583
    %v5585 = vpop.f32.mrb[0].mxu0
    %5586 = vmatprep.mubr.f32.mxu0 0.0
    %v5587 = vand.u32 %v5417, 4294901760
    %5588 = vmatmul.mubr.f32.gmra.mrb[0].mxu0 %v5587
    %v5589 = vpop.f32.mrb[0].mxu0
    %v5590 = vadd.f32 %v5503, %v5589
    %v5591 = vpop.f32.mrb[0].mxu0
    %5592 = vdwg.mxu0
    %5593 = vmatprep.subr.mxu0 0.0
    %v5594 = vand.u32 %v5411, 4294901760
    %v5595 = vsub.f32 %v5411, %v5594
    %5596 = vmatpush1.msra.mxu0 %v5595
    %5597 = vmatprep.subr.mxu0 0.0
    %v5598 = vand.u32 %v5412, 4294901760
    %v5599 = vsub.f32 %v5412, %v5598
    %5600 = vmatpush1.msra.mxu0 %v5599
    %5601 = vmatprep.subr.mxu0 0.0
    %5602 = vmatpush1.msra.mxu0 0.0
    %5603 = vmatprep.subr.mxu0 0.0
    %5604 = vmatpush1.msra.mxu0 0.0
    %5605 = vmatprep.subr.mxu0 0.0
    %5606 = vmatpush1.msra.mxu0 0.0
    %5607 = vmatprep.subr.mxu0 0.0
    %5608 = vmatpush1.msra.mxu0 0.0
    %5609 = vmatprep.subr.mxu0 0.0
    %5610 = vmatpush1.msra.mxu0 0.0
    %5611 = vmatprep.subr.mxu0 0.0
    %5612 = vmatpush1.msra.mxu0 0.0
    %5613 = vmatprep.subr.mxu0 0.0
    %5614 = vmatpush1.msra.mxu0 0.0
    %5615 = vmatprep.subr.mxu0 0.0
    %5616 = vmatpush1.msra.mxu0 0.0
    %5617 = vmatprep.subr.mxu0 0.0
    %5618 = vmatpush1.msra.mxu0 0.0
    %5619 = vmatprep.subr.mxu0 0.0
    %5620 = vmatpush1.msra.mxu0 0.0
    %5621 = vmatprep.subr.mxu0 0.0
    %5622 = vmatpush1.msra.mxu0 0.0
    %5623 = vmatprep.subr.mxu0 0.0
    %5624 = vmatpush1.msra.mxu0 0.0
    %5625 = vmatprep.subr.mxu0 0.0
    %5626 = vmatpush1.msra.mxu0 0.0
    %5627 = vmatprep.subr.mxu0 0.0
    %5628 = vmatpush1.msra.mxu0 0.0
    %5629 = vmatprep.subr.mxu0 0.0
    %5630 = vmatpush1.msra.mxu0 0.0
    %5631 = vmatprep.subr.mxu0 0.0
    %5632 = vmatpush1.msra.mxu0 0.0
    %5633 = vmatprep.subr.mxu0 0.0
    %5634 = vmatpush1.msra.mxu0 0.0
    %5635 = vmatprep.subr.mxu0 0.0
    %5636 = vmatpush1.msra.mxu0 0.0
    %5637 = vmatprep.subr.mxu0 0.0
    %5638 = vmatpush1.msra.mxu0 0.0
    %5639 = vmatprep.subr.mxu0 0.0
    %5640 = vmatpush1.msra.mxu0 0.0
    %5641 = vmatprep.subr.mxu0 0.0
    %5642 = vmatpush1.msra.mxu0 0.0
    %5643 = vmatprep.subr.mxu0 0.0
    %5644 = vmatpush1.msra.mxu0 0.0
    %5645 = vmatprep.subr.mxu0 0.0
    %5646 = vmatpush1.msra.mxu0 0.0
    %5647 = vmatprep.subr.mxu0 0.0
    %5648 = vmatpush1.msra.mxu0 0.0
    %5649 = vmatprep.subr.mxu0 0.0
    %5650 = vmatpush1.msra.mxu0 0.0
    %5651 = vmatprep.subr.mxu0 0.0
    %5652 = vmatpush1.msra.mxu0 0.0
    %5653 = vmatprep.subr.mxu0 0.0
    %5654 = vmatpush1.msra.mxu0 0.0
    %5655 = vmatprep.subr.mxu0 0.0
    %5656 = vmatpush1.msra.mxu0 0.0
    %5657 = vmatprep.subr.mxu0 0.0
    %5658 = vmatpush1.msra.mxu0 0.0
    %5659 = vmatprep.subr.mxu0 0.0
    %5660 = vmatpush1.msra.mxu0 0.0
    %5661 = vmatprep.mubr.f32.mxu0 0.0
    %v5662 = vand.u32 %v5414, 4294901760
    %v5663 = vsub.f32 %v5414, %v5662
    %5664 = vmatmul.mubr.f32.gmra.mrb[0].mxu0 %v5663
    %v5665 = vpop.f32.mrb[0].mxu0
    %v5666 = vadd.f32 %v5584, %v5665
    %v5667 = vpop.f32.mrb[0].mxu0
    %5668 = vmatprep.mubr.f32.mxu0 0.0
    %v5669 = vand.u32 %v5417, 4294901760
    %v5670 = vsub.f32 %v5417, %v5669
    %5671 = vmatmul.mubr.f32.gmra.mrb[0].mxu0 %v5670
    %v5672 = vpop.f32.mrb[0].mxu0
    %v5673 = vadd.f32 %v5590, %v5672
    %v5674 = vpop.f32.mrb[0].mxu0
    %5675 = vdwg.mxu0
    %5676 = vmatprep.subr.mxu0 0.0
    %v5677 = vand.u32 %v5411, 4294901760
    %5678 = vmatpush1.msra.mxu0 %v5677
    %5679 = vmatprep.subr.mxu0 0.0
    %v5680 = vand.u32 %v5412, 4294901760
    %5681 = vmatpush1.msra.mxu0 %v5680
    %5682 = vmatprep.subr.mxu0 0.0
    %5683 = vmatpush1.msra.mxu0 0.0
    %5684 = vmatprep.subr.mxu0 0.0
    %5685 = vmatpush1.msra.mxu0 0.0
    %5686 = vmatprep.subr.mxu0 0.0
    %5687 = vmatpush1.msra.mxu0 0.0
    %5688 = vmatprep.subr.mxu0 0.0
    %5689 = vmatpush1.msra.mxu0 0.0
    %5690 = vmatprep.subr.mxu0 0.0
    %5691 = vmatpush1.msra.mxu0 0.0
    %5692 = vmatprep.subr.mxu0 0.0
    %5693 = vmatpush1.msra.mxu0 0.0
    %5694 = vmatprep.subr.mxu0 0.0
    %5695 = vmatpush1.msra.mxu0 0.0
    %5696 = vmatprep.subr.mxu0 0.0
    %5697 = vmatpush1.msra.mxu0 0.0
    %5698 = vmatprep.subr.mxu0 0.0
    %5699 = vmatpush1.msra.mxu0 0.0
    %5700 = vmatprep.subr.mxu0 0.0
    %5701 = vmatpush1.msra.mxu0 0.0
    %5702 = vmatprep.subr.mxu0 0.0
    %5703 = vmatpush1.msra.mxu0 0.0
    %5704 = vmatprep.subr.mxu0 0.0
    %5705 = vmatpush1.msra.mxu0 0.0
    %5706 = vmatprep.subr.mxu0 0.0
    %5707 = vmatpush1.msra.mxu0 0.0
    %5708 = vmatprep.subr.mxu0 0.0
    %5709 = vmatpush1.msra.mxu0 0.0
    %5710 = vmatprep.subr.mxu0 0.0
    %5711 = vmatpush1.msra.mxu0 0.0
    %5712 = vmatprep.subr.mxu0 0.0
    %5713 = vmatpush1.msra.mxu0 0.0
    %5714 = vmatprep.subr.mxu0 0.0
    %5715 = vmatpush1.msra.mxu0 0.0
    %5716 = vmatprep.subr.mxu0 0.0
    %5717 = vmatpush1.msra.mxu0 0.0
    %5718 = vmatprep.subr.mxu0 0.0
    %5719 = vmatpush1.msra.mxu0 0.0
    %5720 = vmatprep.subr.mxu0 0.0
    %5721 = vmatpush1.msra.mxu0 0.0
    %5722 = vmatprep.subr.mxu0 0.0
    %5723 = vmatpush1.msra.mxu0 0.0
    %5724 = vmatprep.subr.mxu0 0.0
    %5725 = vmatpush1.msra.mxu0 0.0
    %5726 = vmatprep.subr.mxu0 0.0
    %5727 = vmatpush1.msra.mxu0 0.0
    %5728 = vmatprep.subr.mxu0 0.0
    %5729 = vmatpush1.msra.mxu0 0.0
    %5730 = vmatprep.subr.mxu0 0.0
    %5731 = vmatpush1.msra.mxu0 0.0
    %5732 = vmatprep.subr.mxu0 0.0
    %5733 = vmatpush1.msra.mxu0 0.0
    %5734 = vmatprep.subr.mxu0 0.0
    %5735 = vmatpush1.msra.mxu0 0.0
    %5736 = vmatprep.subr.mxu0 0.0
    %5737 = vmatpush1.msra.mxu0 0.0
    %5738 = vmatprep.subr.mxu0 0.0
    %5739 = vmatpush1.msra.mxu0 0.0
    %5740 = vmatprep.subr.mxu0 0.0
    %5741 = vmatpush1.msra.mxu0 0.0
    %5742 = vmatprep.mubr.f32.mxu0 0.0
    %v5743 = vand.u32 %v5414, 4294901760
    %v5744 = vsub.f32 %v5414, %v5743
    %v5745 = vand.u32 %v5744, 4294901760
    %5746 = vmatmul.mubr.f32.gmra.mrb[0].mxu0 %v5745
    %v5747 = vpop.f32.mrb[0].mxu0
    %v5748 = vadd.f32 %v5666, %v5747
    %v5749 = vpop.f32.mrb[0].mxu0
    %5750 = vmatprep.mubr.f32.mxu0 0.0
    %v5751 = vand.u32 %v5417, 4294901760
    %v5752 = vsub.f32 %v5417, %v5751
    %v5753 = vand.u32 %v5752, 4294901760
    %5754 = vmatmul.mubr.f32.gmra.mrb[0].mxu0 %v5753
    %v5755 = vpop.f32.mrb[0].mxu0
    %v5756 = vadd.f32 %v5673, %v5755
    %v5757 = vpop.f32.mrb[0].mxu0
    %5758 = vdwg.mxu0
    %5759 = vmatprep.subr.mxu0 0.0
    %v5760 = vand.u32 %v5411, 4294901760
    %v5761 = vsub.f32 %v5411, %v5760
    %v5762 = vand.u32 %v5761, 4294901760
    %5763 = vmatpush1.msra.mxu0 %v5762
    %5764 = vmatprep.subr.mxu0 0.0
    %v5765 = vand.u32 %v5412, 4294901760
    %v5766 = vsub.f32 %v5412, %v5765
    %v5767 = vand.u32 %v5766, 4294901760
    %5768 = vmatpush1.msra.mxu0 %v5767
    %5769 = vmatprep.subr.mxu0 0.0
    %5770 = vmatpush1.msra.mxu0 0.0
    %5771 = vmatprep.subr.mxu0 0.0
    %5772 = vmatpush1.msra.mxu0 0.0
    %5773 = vmatprep.subr.mxu0 0.0
    %5774 = vmatpush1.msra.mxu0 0.0
    %5775 = vmatprep.subr.mxu0 0.0
    %5776 = vmatpush1.msra.mxu0 0.0
    %5777 = vmatprep.subr.mxu0 0.0
    %5778 = vmatpush1.msra.mxu0 0.0
    %5779 = vmatprep.subr.mxu0 0.0
    %5780 = vmatpush1.msra.mxu0 0.0
    %5781 = vmatprep.subr.mxu0 0.0
    %5782 = vmatpush1.msra.mxu0 0.0
    %5783 = vmatprep.subr.mxu0 0.0
    %5784 = vmatpush1.msra.mxu0 0.0
    %5785 = vmatprep.subr.mxu0 0.0
    %5786 = vmatpush1.msra.mxu0 0.0
    %5787 = vmatprep.subr.mxu0 0.0
    %5788 = vmatpush1.msra.mxu0 0.0
    %5789 = vmatprep.subr.mxu0 0.0
    %5790 = vmatpush1.msra.mxu0 0.0
    %5791 = vmatprep.subr.mxu0 0.0
    %5792 = vmatpush1.msra.mxu0 0.0
    %5793 = vmatprep.subr.mxu0 0.0
    %5794 = vmatpush1.msra.mxu0 0.0
    %5795 = vmatprep.subr.mxu0 0.0
    %5796 = vmatpush1.msra.mxu0 0.0
    %5797 = vmatprep.subr.mxu0 0.0
    %5798 = vmatpush1.msra.mxu0 0.0
    %5799 = vmatprep.subr.mxu0 0.0
    %5800 = vmatpush1.msra.mxu0 0.0
    %5801 = vmatprep.subr.mxu0 0.0
    %5802 = vmatpush1.msra.mxu0 0.0
    %5803 = vmatprep.subr.mxu0 0.0
    %5804 = vmatpush1.msra.mxu0 0.0
    %5805 = vmatprep.subr.mxu0 0.0
    %5806 = vmatpush1.msra.mxu0 0.0
    %5807 = vmatprep.subr.mxu0 0.0
    %5808 = vmatpush1.msra.mxu0 0.0
    %5809 = vmatprep.subr.mxu0 0.0
    %5810 = vmatpush1.msra.mxu0 0.0
    %5811 = vmatprep.subr.mxu0 0.0
    %5812 = vmatpush1.msra.mxu0 0.0
    %5813 = vmatprep.subr.mxu0 0.0
    %5814 = vmatpush1.msra.mxu0 0.0
    %5815 = vmatprep.subr.mxu0 0.0
    %5816 = vmatpush1.msra.mxu0 0.0
    %5817 = vmatprep.subr.mxu0 0.0
    %5818 = vmatpush1.msra.mxu0 0.0
    %5819 = vmatprep.subr.mxu0 0.0
    %5820 = vmatpush1.msra.mxu0 0.0
    %5821 = vmatprep.subr.mxu0 0.0
    %5822 = vmatpush1.msra.mxu0 0.0
    %5823 = vmatprep.subr.mxu0 0.0
    %5824 = vmatpush1.msra.mxu0 0.0
    %5825 = vmatprep.subr.mxu0 0.0
    %5826 = vmatpush1.msra.mxu0 0.0
    %5827 = vmatprep.subr.mxu0 0.0
    %5828 = vmatpush1.msra.mxu0 0.0
    %5829 = vmatprep.mubr.f32.mxu0 0.0
    %v5830 = vand.u32 %v5414, 4294901760
    %5831 = vmatmul.mubr.f32.gmra.mrb[0].mxu0 %v5830
    %v5832 = vpop.f32.mrb[0].mxu0
    %v5833 = vadd.f32 %v5748, %v5832
    %v5834 = vpop.f32.mrb[0].mxu0
    %5835 = vmatprep.mubr.f32.mxu0 0.0
    %v5836 = vand.u32 %v5417, 4294901760
    %5837 = vmatmul.mubr.f32.gmra.mrb[0].mxu0 %v5836
    %v5838 = vpop.f32.mrb[0].mxu0
    %v5839 = vadd.f32 %v5756, %v5838
    %v5840 = vpop.f32.mrb[0].mxu0
    %5841 = vdwg.mxu0
    %5842 = vmatprep.subr.mxu0 0.0
    %v5843 = vand.u32 %v5411, 4294901760
    %5844 = vmatpush1.msra.mxu0 %v5843
    %5845 = vmatprep.subr.mxu0 0.0
    %v5846 = vand.u32 %v5412, 4294901760
    %5847 = vmatpush1.msra.mxu0 %v5846
    %5848 = vmatprep.subr.mxu0 0.0
    %5849 = vmatpush1.msra.mxu0 0.0
    %5850 = vmatprep.subr.mxu0 0.0
    %5851 = vmatpush1.msra.mxu0 0.0
    %5852 = vmatprep.subr.mxu0 0.0
    %5853 = vmatpush1.msra.mxu0 0.0
    %5854 = vmatprep.subr.mxu0 0.0
    %5855 = vmatpush1.msra.mxu0 0.0
    %5856 = vmatprep.subr.mxu0 0.0
    %5857 = vmatpush1.msra.mxu0 0.0
    %5858 = vmatprep.subr.mxu0 0.0
    %5859 = vmatpush1.msra.mxu0 0.0
    %5860 = vmatprep.subr.mxu0 0.0
    %5861 = vmatpush1.msra.mxu0 0.0
    %5862 = vmatprep.subr.mxu0 0.0
    %5863 = vmatpush1.msra.mxu0 0.0
    %5864 = vmatprep.subr.mxu0 0.0
    %5865 = vmatpush1.msra.mxu0 0.0
    %5866 = vmatprep.subr.mxu0 0.0
    %5867 = vmatpush1.msra.mxu0 0.0
    %5868 = vmatprep.subr.mxu0 0.0
    %5869 = vmatpush1.msra.mxu0 0.0
    %5870 = vmatprep.subr.mxu0 0.0
    %5871 = vmatpush1.msra.mxu0 0.0
    %5872 = vmatprep.subr.mxu0 0.0
    %5873 = vmatpush1.msra.mxu0 0.0
    %5874 = vmatprep.subr.mxu0 0.0
    %5875 = vmatpush1.msra.mxu0 0.0
    %5876 = vmatprep.subr.mxu0 0.0
    %5877 = vmatpush1.msra.mxu0 0.0
    %5878 = vmatprep.subr.mxu0 0.0
    %5879 = vmatpush1.msra.mxu0 0.0
    %5880 = vmatprep.subr.mxu0 0.0
    %5881 = vmatpush1.msra.mxu0 0.0
    %5882 = vmatprep.subr.mxu0 0.0
    %5883 = vmatpush1.msra.mxu0 0.0
    %5884 = vmatprep.subr.mxu0 0.0
    %5885 = vmatpush1.msra.mxu0 0.0
    %5886 = vmatprep.subr.mxu0 0.0
    %5887 = vmatpush1.msra.mxu0 0.0
    %5888 = vmatprep.subr.mxu0 0.0
    %5889 = vmatpush1.msra.mxu0 0.0
    %5890 = vmatprep.subr.mxu0 0.0
    %5891 = vmatpush1.msra.mxu0 0.0
    %5892 = vmatprep.subr.mxu0 0.0
    %5893 = vmatpush1.msra.mxu0 0.0
    %5894 = vmatprep.subr.mxu0 0.0
    %5895 = vmatpush1.msra.mxu0 0.0
    %5896 = vmatprep.subr.mxu0 0.0
    %5897 = vmatpush1.msra.mxu0 0.0
    %5898 = vmatprep.subr.mxu0 0.0
    %5899 = vmatpush1.msra.mxu0 0.0
    %5900 = vmatprep.subr.mxu0 0.0
    %5901 = vmatpush1.msra.mxu0 0.0
    %5902 = vmatprep.subr.mxu0 0.0
    %5903 = vmatpush1.msra.mxu0 0.0
    %5904 = vmatprep.subr.mxu0 0.0
    %5905 = vmatpush1.msra.mxu0 0.0
    %5906 = vmatprep.subr.mxu0 0.0
    %5907 = vmatpush1.msra.mxu0 0.0
    %5908 = vmatprep.mubr.f32.mxu0 0.0
    %v5909 = vand.u32 %v5414, 4294901760
    %5910 = vmatmul.mubr.f32.gmra.mrb[0].mxu0 %v5909
    %v5911 = vpop.f32.mrb[0].mxu0
    %v5912 = vadd.f32 %v5833, %v5911
    %v5913 = vpop.f32.mrb[0].mxu0
    %5914 = vmatprep.mubr.f32.mxu0 0.0
    %v5915 = vand.u32 %v5417, 4294901760
    %5916 = vmatmul.mubr.f32.gmra.mrb[0].mxu0 %v5915
    %v5917 = vpop.f32.mrb[0].mxu0
    %v5918 = vadd.f32 %v5839, %v5917
    %v5919 = vpop.f32.mrb[0].mxu0
    %5920 = vdwg.mxu0
    %v5921 = vadd.f32 %v4872, %v5912
    %v5922 = vadd.f32 %v4873, %v5918
    %v5923 = vlaneseq
    %v5924 = vshrl.u32 %v5923, 7
    %v5925 = vsub.s32 0, %v5924
    %v5926 = vrot.slane %v74, %v5925
    %v5928 = vsel %vm82, %v5921, 0
    %v5931 = vsel %vm82, %v5922, 0
    %5933 = vmatprep.subr.mxu0 0.0
    %v5934 = vand.u32 %v54, 4294901760
    %5935 = vmatpush1.msra.mxu0 %v5934
    %5936 = vmatprep.subr.mxu0 0.0
    %v5937 = vand.u32 %v55, 4294901760
    %5938 = vmatpush1.msra.mxu0 %v5937
    %5939 = vmatprep.subr.mxu0 0.0
    %v5940 = vand.u32 %v56, 4294901760
    %5941 = vmatpush1.msra.mxu0 %v5940
    %5942 = vmatprep.subr.mxu0 0.0
    %v5943 = vand.u32 %v57, 4294901760
    %5944 = vmatpush1.msra.mxu0 %v5943
    %5945 = vmatprep.subr.mxu0 0.0
    %5946 = vmatpush1.msra.mxu0 0.0
    %5947 = vmatprep.subr.mxu0 0.0
    %5948 = vmatpush1.msra.mxu0 0.0
    %5949 = vmatprep.subr.mxu0 0.0
    %5950 = vmatpush1.msra.mxu0 0.0
    %5951 = vmatprep.subr.mxu0 0.0
    %5952 = vmatpush1.msra.mxu0 0.0
    %5953 = vmatprep.subr.mxu0 0.0
    %5954 = vmatpush1.msra.mxu0 0.0
    %5955 = vmatprep.subr.mxu0 0.0
    %5956 = vmatpush1.msra.mxu0 0.0
    %5957 = vmatprep.subr.mxu0 0.0
    %5958 = vmatpush1.msra.mxu0 0.0
    %5959 = vmatprep.subr.mxu0 0.0
    %5960 = vmatpush1.msra.mxu0 0.0
    %5961 = vmatprep.subr.mxu0 0.0
    %5962 = vmatpush1.msra.mxu0 0.0
    %5963 = vmatprep.subr.mxu0 0.0
    %5964 = vmatpush1.msra.mxu0 0.0
    %5965 = vmatprep.subr.mxu0 0.0
    %5966 = vmatpush1.msra.mxu0 0.0
    %5967 = vmatprep.subr.mxu0 0.0
    %5968 = vmatpush1.msra.mxu0 0.0
    %5969 = vmatprep.subr.mxu0 0.0
    %5970 = vmatpush1.msra.mxu0 0.0
    %5971 = vmatprep.subr.mxu0 0.0
    %5972 = vmatpush1.msra.mxu0 0.0
    %5973 = vmatprep.subr.mxu0 0.0
    %5974 = vmatpush1.msra.mxu0 0.0
    %5975 = vmatprep.subr.mxu0 0.0
    %5976 = vmatpush1.msra.mxu0 0.0
    %5977 = vmatprep.subr.mxu0 0.0
    %5978 = vmatpush1.msra.mxu0 0.0
    %5979 = vmatprep.subr.mxu0 0.0
    %5980 = vmatpush1.msra.mxu0 0.0
    %5981 = vmatprep.subr.mxu0 0.0
    %5982 = vmatpush1.msra.mxu0 0.0
    %5983 = vmatprep.subr.mxu0 0.0
    %5984 = vmatpush1.msra.mxu0 0.0
    %5985 = vmatprep.subr.mxu0 0.0
    %5986 = vmatpush1.msra.mxu0 0.0
    %5987 = vmatprep.subr.mxu0 0.0
    %5988 = vmatpush1.msra.mxu0 0.0
    %5989 = vmatprep.subr.mxu0 0.0
    %5990 = vmatpush1.msra.mxu0 0.0
    %5991 = vmatprep.subr.mxu0 0.0
    %5992 = vmatpush1.msra.mxu0 0.0
    %5993 = vmatprep.subr.mxu0 0.0
    %5994 = vmatpush1.msra.mxu0 0.0
    %5995 = vmatprep.subr.mxu0 0.0
    %5996 = vmatpush1.msra.mxu0 0.0
    %5997 = vmatprep.subr.mxu0 0.0
    %5998 = vmatpush1.msra.mxu0 0.0
    %5999 = vmatprep.subr.mxu0 0.0
    %6000 = vmatpush1.msra.mxu0 0.0
    %6001 = vmatprep.mubr.f32.mxu0 0.0
    %v6002 = vand.u32 %v5928, 4294901760
    %v6003 = vsub.f32 %v5928, %v6002
    %v6004 = vand.u32 %v6003, 4294901760
    %v6005 = vsub.f32 %v6003, %v6004
    %v6006 = vand.u32 %v6005, 4294901760
    %6007 = vmatmul.mubr.f32.gmra.mrb[0].mxu0 %v6006
    %v6008 = vpop.f32.mrb[0].mxu0
    %v6009 = vadd.f32 %v5926, %v6008
    %v6010 = vpop.f32.mrb[0].mxu0
    %6011 = vmatprep.mubr.f32.mxu0 0.0
    %v6012 = vand.u32 %v5931, 4294901760
    %v6013 = vsub.f32 %v5931, %v6012
    %v6014 = vand.u32 %v6013, 4294901760
    %v6015 = vsub.f32 %v6013, %v6014
    %v6016 = vand.u32 %v6015, 4294901760
    %6017 = vmatmul.mubr.f32.gmra.mrb[0].mxu0 %v6016
    %v6018 = vpop.f32.mrb[0].mxu0
    %v6019 = vadd.f32 %v5926, %v6018
    %v6020 = vpop.f32.mrb[0].mxu0
    %6021 = vdwg.mxu0
    %6022 = vmatprep.subr.mxu0 0.0
    %v6023 = vand.u32 %v54, 4294901760
    %v6024 = vsub.f32 %v54, %v6023
    %v6025 = vand.u32 %v6024, 4294901760
    %v6026 = vsub.f32 %v6024, %v6025
    %v6027 = vand.u32 %v6026, 4294901760
    %6028 = vmatpush1.msra.mxu0 %v6027
    %6029 = vmatprep.subr.mxu0 0.0
    %v6030 = vand.u32 %v55, 4294901760
    %v6031 = vsub.f32 %v55, %v6030
    %v6032 = vand.u32 %v6031, 4294901760
    %v6033 = vsub.f32 %v6031, %v6032
    %v6034 = vand.u32 %v6033, 4294901760
    %6035 = vmatpush1.msra.mxu0 %v6034
    %6036 = vmatprep.subr.mxu0 0.0
    %v6037 = vand.u32 %v56, 4294901760
    %v6038 = vsub.f32 %v56, %v6037
    %v6039 = vand.u32 %v6038, 4294901760
    %v6040 = vsub.f32 %v6038, %v6039
    %v6041 = vand.u32 %v6040, 4294901760
    %6042 = vmatpush1.msra.mxu0 %v6041
    %6043 = vmatprep.subr.mxu0 0.0
    %v6044 = vand.u32 %v57, 4294901760
    %v6045 = vsub.f32 %v57, %v6044
    %v6046 = vand.u32 %v6045, 4294901760
    %v6047 = vsub.f32 %v6045, %v6046
    %v6048 = vand.u32 %v6047, 4294901760
    %6049 = vmatpush1.msra.mxu0 %v6048
    %6050 = vmatprep.subr.mxu0 0.0
    %6051 = vmatpush1.msra.mxu0 0.0
    %6052 = vmatprep.subr.mxu0 0.0
    %6053 = vmatpush1.msra.mxu0 0.0
    %6054 = vmatprep.subr.mxu0 0.0
    %6055 = vmatpush1.msra.mxu0 0.0
    %6056 = vmatprep.subr.mxu0 0.0
    %6057 = vmatpush1.msra.mxu0 0.0
    %6058 = vmatprep.subr.mxu0 0.0
    %6059 = vmatpush1.msra.mxu0 0.0
    %6060 = vmatprep.subr.mxu0 0.0
    %6061 = vmatpush1.msra.mxu0 0.0
    %6062 = vmatprep.subr.mxu0 0.0
    %6063 = vmatpush1.msra.mxu0 0.0
    %6064 = vmatprep.subr.mxu0 0.0
    %6065 = vmatpush1.msra.mxu0 0.0
    %6066 = vmatprep.subr.mxu0 0.0
    %6067 = vmatpush1.msra.mxu0 0.0
    %6068 = vmatprep.subr.mxu0 0.0
    %6069 = vmatpush1.msra.mxu0 0.0
    %6070 = vmatprep.subr.mxu0 0.0
    %6071 = vmatpush1.msra.mxu0 0.0
    %6072 = vmatprep.subr.mxu0 0.0
    %6073 = vmatpush1.msra.mxu0 0.0
    %6074 = vmatprep.subr.mxu0 0.0
    %6075 = vmatpush1.msra.mxu0 0.0
    %6076 = vmatprep.subr.mxu0 0.0
    %6077 = vmatpush1.msra.mxu0 0.0
    %6078 = vmatprep.subr.mxu0 0.0
    %6079 = vmatpush1.msra.mxu0 0.0
    %6080 = vmatprep.subr.mxu0 0.0
    %6081 = vmatpush1.msra.mxu0 0.0
    %6082 = vmatprep.subr.mxu0 0.0
    %6083 = vmatpush1.msra.mxu0 0.0
    %6084 = vmatprep.subr.mxu0 0.0
    %6085 = vmatpush1.msra.mxu0 0.0
    %6086 = vmatprep.subr.mxu0 0.0
    %6087 = vmatpush1.msra.mxu0 0.0
    %6088 = vmatprep.subr.mxu0 0.0
    %6089 = vmatpush1.msra.mxu0 0.0
    %6090 = vmatprep.subr.mxu0 0.0
    %6091 = vmatpush1.msra.mxu0 0.0
    %6092 = vmatprep.subr.mxu0 0.0
    %6093 = vmatpush1.msra.mxu0 0.0
    %6094 = vmatprep.subr.mxu0 0.0
    %6095 = vmatpush1.msra.mxu0 0.0
    %6096 = vmatprep.subr.mxu0 0.0
    %6097 = vmatpush1.msra.mxu0 0.0
    %6098 = vmatprep.subr.mxu0 0.0
    %6099 = vmatpush1.msra.mxu0 0.0
    %6100 = vmatprep.subr.mxu0 0.0
    %6101 = vmatpush1.msra.mxu0 0.0
    %6102 = vmatprep.subr.mxu0 0.0
    %6103 = vmatpush1.msra.mxu0 0.0
    %6104 = vmatprep.subr.mxu0 0.0
    %6105 = vmatpush1.msra.mxu0 0.0
    %6106 = vmatprep.mubr.f32.mxu0 0.0
    %v6107 = vand.u32 %v5928, 4294901760
    %6108 = vmatmul.mubr.f32.gmra.mrb[0].mxu0 %v6107
    %v6109 = vpop.f32.mrb[0].mxu0
    %v6110 = vadd.f32 %v6009, %v6109
    %v6111 = vpop.f32.mrb[0].mxu0
    %6112 = vmatprep.mubr.f32.mxu0 0.0
    %v6113 = vand.u32 %v5931, 4294901760
    %6114 = vmatmul.mubr.f32.gmra.mrb[0].mxu0 %v6113
    %v6115 = vpop.f32.mrb[0].mxu0
    %v6116 = vadd.f32 %v6019, %v6115
    %v6117 = vpop.f32.mrb[0].mxu0
    %6118 = vdwg.mxu0
    %6119 = vmatprep.subr.mxu0 0.0
    %v6120 = vand.u32 %v54, 4294901760
    %v6121 = vsub.f32 %v54, %v6120
    %6122 = vmatpush1.msra.mxu0 %v6121
    %6123 = vmatprep.subr.mxu0 0.0
    %v6124 = vand.u32 %v55, 4294901760
    %v6125 = vsub.f32 %v55, %v6124
    %6126 = vmatpush1.msra.mxu0 %v6125
    %6127 = vmatprep.subr.mxu0 0.0
    %v6128 = vand.u32 %v56, 4294901760
    %v6129 = vsub.f32 %v56, %v6128
    %6130 = vmatpush1.msra.mxu0 %v6129
    %6131 = vmatprep.subr.mxu0 0.0
    %v6132 = vand.u32 %v57, 4294901760
    %v6133 = vsub.f32 %v57, %v6132
    %6134 = vmatpush1.msra.mxu0 %v6133
    %6135 = vmatprep.subr.mxu0 0.0
    %6136 = vmatpush1.msra.mxu0 0.0
    %6137 = vmatprep.subr.mxu0 0.0
    %6138 = vmatpush1.msra.mxu0 0.0
    %6139 = vmatprep.subr.mxu0 0.0
    %6140 = vmatpush1.msra.mxu0 0.0
    %6141 = vmatprep.subr.mxu0 0.0
    %6142 = vmatpush1.msra.mxu0 0.0
    %6143 = vmatprep.subr.mxu0 0.0
    %6144 = vmatpush1.msra.mxu0 0.0
    %6145 = vmatprep.subr.mxu0 0.0
    %6146 = vmatpush1.msra.mxu0 0.0
    %6147 = vmatprep.subr.mxu0 0.0
    %6148 = vmatpush1.msra.mxu0 0.0
    %6149 = vmatprep.subr.mxu0 0.0
    %6150 = vmatpush1.msra.mxu0 0.0
    %6151 = vmatprep.subr.mxu0 0.0
    %6152 = vmatpush1.msra.mxu0 0.0
    %6153 = vmatprep.subr.mxu0 0.0
    %6154 = vmatpush1.msra.mxu0 0.0
    %6155 = vmatprep.subr.mxu0 0.0
    %6156 = vmatpush1.msra.mxu0 0.0
    %6157 = vmatprep.subr.mxu0 0.0
    %6158 = vmatpush1.msra.mxu0 0.0
    %6159 = vmatprep.subr.mxu0 0.0
    %6160 = vmatpush1.msra.mxu0 0.0
    %6161 = vmatprep.subr.mxu0 0.0
    %6162 = vmatpush1.msra.mxu0 0.0
    %6163 = vmatprep.subr.mxu0 0.0
    %6164 = vmatpush1.msra.mxu0 0.0
    %6165 = vmatprep.subr.mxu0 0.0
    %6166 = vmatpush1.msra.mxu0 0.0
    %6167 = vmatprep.subr.mxu0 0.0
    %6168 = vmatpush1.msra.mxu0 0.0
    %6169 = vmatprep.subr.mxu0 0.0
    %6170 = vmatpush1.msra.mxu0 0.0
    %6171 = vmatprep.subr.mxu0 0.0
    %6172 = vmatpush1.msra.mxu0 0.0
    %6173 = vmatprep.subr.mxu0 0.0
    %6174 = vmatpush1.msra.mxu0 0.0
    %6175 = vmatprep.subr.mxu0 0.0
    %6176 = vmatpush1.msra.mxu0 0.0
    %6177 = vmatprep.subr.mxu0 0.0
    %6178 = vmatpush1.msra.mxu0 0.0
    %6179 = vmatprep.subr.mxu0 0.0
    %6180 = vmatpush1.msra.mxu0 0.0
    %6181 = vmatprep.subr.mxu0 0.0
    %6182 = vmatpush1.msra.mxu0 0.0
    %6183 = vmatprep.subr.mxu0 0.0
    %6184 = vmatpush1.msra.mxu0 0.0
    %6185 = vmatprep.subr.mxu0 0.0
    %6186 = vmatpush1.msra.mxu0 0.0
    %6187 = vmatprep.subr.mxu0 0.0
    %6188 = vmatpush1.msra.mxu0 0.0
    %6189 = vmatprep.subr.mxu0 0.0
    %6190 = vmatpush1.msra.mxu0 0.0
    %6191 = vmatprep.mubr.f32.mxu0 0.0
    %v6192 = vand.u32 %v5928, 4294901760
    %v6193 = vsub.f32 %v5928, %v6192
    %6194 = vmatmul.mubr.f32.gmra.mrb[0].mxu0 %v6193
    %v6195 = vpop.f32.mrb[0].mxu0
    %v6196 = vadd.f32 %v6110, %v6195
    %v6197 = vpop.f32.mrb[0].mxu0
    %6198 = vmatprep.mubr.f32.mxu0 0.0
    %v6199 = vand.u32 %v5931, 4294901760
    %v6200 = vsub.f32 %v5931, %v6199
    %6201 = vmatmul.mubr.f32.gmra.mrb[0].mxu0 %v6200
    %v6202 = vpop.f32.mrb[0].mxu0
    %v6203 = vadd.f32 %v6116, %v6202
    %v6204 = vpop.f32.mrb[0].mxu0
    %6205 = vdwg.mxu0
    %6206 = vmatprep.subr.mxu0 0.0
    %v6207 = vand.u32 %v54, 4294901760
    %6208 = vmatpush1.msra.mxu0 %v6207
    %6209 = vmatprep.subr.mxu0 0.0
    %v6210 = vand.u32 %v55, 4294901760
    %6211 = vmatpush1.msra.mxu0 %v6210
    %6212 = vmatprep.subr.mxu0 0.0
    %v6213 = vand.u32 %v56, 4294901760
    %6214 = vmatpush1.msra.mxu0 %v6213
    %6215 = vmatprep.subr.mxu0 0.0
    %v6216 = vand.u32 %v57, 4294901760
    %6217 = vmatpush1.msra.mxu0 %v6216
    %6218 = vmatprep.subr.mxu0 0.0
    %6219 = vmatpush1.msra.mxu0 0.0
    %6220 = vmatprep.subr.mxu0 0.0
    %6221 = vmatpush1.msra.mxu0 0.0
    %6222 = vmatprep.subr.mxu0 0.0
    %6223 = vmatpush1.msra.mxu0 0.0
    %6224 = vmatprep.subr.mxu0 0.0
    %6225 = vmatpush1.msra.mxu0 0.0
    %6226 = vmatprep.subr.mxu0 0.0
    %6227 = vmatpush1.msra.mxu0 0.0
    %6228 = vmatprep.subr.mxu0 0.0
    %6229 = vmatpush1.msra.mxu0 0.0
    %6230 = vmatprep.subr.mxu0 0.0
    %6231 = vmatpush1.msra.mxu0 0.0
    %6232 = vmatprep.subr.mxu0 0.0
    %6233 = vmatpush1.msra.mxu0 0.0
    %6234 = vmatprep.subr.mxu0 0.0
    %6235 = vmatpush1.msra.mxu0 0.0
    %6236 = vmatprep.subr.mxu0 0.0
    %6237 = vmatpush1.msra.mxu0 0.0
    %6238 = vmatprep.subr.mxu0 0.0
    %6239 = vmatpush1.msra.mxu0 0.0
    %6240 = vmatprep.subr.mxu0 0.0
    %6241 = vmatpush1.msra.mxu0 0.0
    %6242 = vmatprep.subr.mxu0 0.0
    %6243 = vmatpush1.msra.mxu0 0.0
    %6244 = vmatprep.subr.mxu0 0.0
    %6245 = vmatpush1.msra.mxu0 0.0
    %6246 = vmatprep.subr.mxu0 0.0
    %6247 = vmatpush1.msra.mxu0 0.0
    %6248 = vmatprep.subr.mxu0 0.0
    %6249 = vmatpush1.msra.mxu0 0.0
    %6250 = vmatprep.subr.mxu0 0.0
    %6251 = vmatpush1.msra.mxu0 0.0
    %6252 = vmatprep.subr.mxu0 0.0
    %6253 = vmatpush1.msra.mxu0 0.0
    %6254 = vmatprep.subr.mxu0 0.0
    %6255 = vmatpush1.msra.mxu0 0.0
    %6256 = vmatprep.subr.mxu0 0.0
    %6257 = vmatpush1.msra.mxu0 0.0
    %6258 = vmatprep.subr.mxu0 0.0
    %6259 = vmatpush1.msra.mxu0 0.0
    %6260 = vmatprep.subr.mxu0 0.0
    %6261 = vmatpush1.msra.mxu0 0.0
    %6262 = vmatprep.subr.mxu0 0.0
    %6263 = vmatpush1.msra.mxu0 0.0
    %6264 = vmatprep.subr.mxu0 0.0
    %6265 = vmatpush1.msra.mxu0 0.0
    %6266 = vmatprep.subr.mxu0 0.0
    %6267 = vmatpush1.msra.mxu0 0.0
    %6268 = vmatprep.subr.mxu0 0.0
    %6269 = vmatpush1.msra.mxu0 0.0
    %6270 = vmatprep.subr.mxu0 0.0
    %6271 = vmatpush1.msra.mxu0 0.0
    %6272 = vmatprep.subr.mxu0 0.0
    %6273 = vmatpush1.msra.mxu0 0.0
    %6274 = vmatprep.mubr.f32.mxu0 0.0
    %v6275 = vand.u32 %v5928, 4294901760
    %v6276 = vsub.f32 %v5928, %v6275
    %v6277 = vand.u32 %v6276, 4294901760
    %6278 = vmatmul.mubr.f32.gmra.mrb[0].mxu0 %v6277
    %v6279 = vpop.f32.mrb[0].mxu0
    %v6280 = vadd.f32 %v6196, %v6279
    %v6281 = vpop.f32.mrb[0].mxu0
    %6282 = vmatprep.mubr.f32.mxu0 0.0
    %v6283 = vand.u32 %v5931, 4294901760
    %v6284 = vsub.f32 %v5931, %v6283
    %v6285 = vand.u32 %v6284, 4294901760
    %6286 = vmatmul.mubr.f32.gmra.mrb[0].mxu0 %v6285
    %v6287 = vpop.f32.mrb[0].mxu0
    %v6288 = vadd.f32 %v6203, %v6287
    %v6289 = vpop.f32.mrb[0].mxu0
    %6290 = vdwg.mxu0
    %6291 = vmatprep.subr.mxu0 0.0
    %v6292 = vand.u32 %v54, 4294901760
    %v6293 = vsub.f32 %v54, %v6292
    %v6294 = vand.u32 %v6293, 4294901760
    %6295 = vmatpush1.msra.mxu0 %v6294
    %6296 = vmatprep.subr.mxu0 0.0
    %v6297 = vand.u32 %v55, 4294901760
    %v6298 = vsub.f32 %v55, %v6297
    %v6299 = vand.u32 %v6298, 4294901760
    %6300 = vmatpush1.msra.mxu0 %v6299
    %6301 = vmatprep.subr.mxu0 0.0
    %v6302 = vand.u32 %v56, 4294901760
    %v6303 = vsub.f32 %v56, %v6302
    %v6304 = vand.u32 %v6303, 4294901760
    %6305 = vmatpush1.msra.mxu0 %v6304
    %6306 = vmatprep.subr.mxu0 0.0
    %v6307 = vand.u32 %v57, 4294901760
    %v6308 = vsub.f32 %v57, %v6307
    %v6309 = vand.u32 %v6308, 4294901760
    %6310 = vmatpush1.msra.mxu0 %v6309
    %6311 = vmatprep.subr.mxu0 0.0
    %6312 = vmatpush1.msra.mxu0 0.0
    %6313 = vmatprep.subr.mxu0 0.0
    %6314 = vmatpush1.msra.mxu0 0.0
    %6315 = vmatprep.subr.mxu0 0.0
    %6316 = vmatpush1.msra.mxu0 0.0
    %6317 = vmatprep.subr.mxu0 0.0
    %6318 = vmatpush1.msra.mxu0 0.0
    %6319 = vmatprep.subr.mxu0 0.0
    %6320 = vmatpush1.msra.mxu0 0.0
    %6321 = vmatprep.subr.mxu0 0.0
    %6322 = vmatpush1.msra.mxu0 0.0
    %6323 = vmatprep.subr.mxu0 0.0
    %6324 = vmatpush1.msra.mxu0 0.0
    %6325 = vmatprep.subr.mxu0 0.0
    %6326 = vmatpush1.msra.mxu0 0.0
    %6327 = vmatprep.subr.mxu0 0.0
    %6328 = vmatpush1.msra.mxu0 0.0
    %6329 = vmatprep.subr.mxu0 0.0
    %6330 = vmatpush1.msra.mxu0 0.0
    %6331 = vmatprep.subr.mxu0 0.0
    %6332 = vmatpush1.msra.mxu0 0.0
    %6333 = vmatprep.subr.mxu0 0.0
    %6334 = vmatpush1.msra.mxu0 0.0
    %6335 = vmatprep.subr.mxu0 0.0
    %6336 = vmatpush1.msra.mxu0 0.0
    %6337 = vmatprep.subr.mxu0 0.0
    %6338 = vmatpush1.msra.mxu0 0.0
    %6339 = vmatprep.subr.mxu0 0.0
    %6340 = vmatpush1.msra.mxu0 0.0
    %6341 = vmatprep.subr.mxu0 0.0
    %6342 = vmatpush1.msra.mxu0 0.0
    %6343 = vmatprep.subr.mxu0 0.0
    %6344 = vmatpush1.msra.mxu0 0.0
    %6345 = vmatprep.subr.mxu0 0.0
    %6346 = vmatpush1.msra.mxu0 0.0
    %6347 = vmatprep.subr.mxu0 0.0
    %6348 = vmatpush1.msra.mxu0 0.0
    %6349 = vmatprep.subr.mxu0 0.0
    %6350 = vmatpush1.msra.mxu0 0.0
    %6351 = vmatprep.subr.mxu0 0.0
    %6352 = vmatpush1.msra.mxu0 0.0
    %6353 = vmatprep.subr.mxu0 0.0
    %6354 = vmatpush1.msra.mxu0 0.0
    %6355 = vmatprep.subr.mxu0 0.0
    %6356 = vmatpush1.msra.mxu0 0.0
    %6357 = vmatprep.subr.mxu0 0.0
    %6358 = vmatpush1.msra.mxu0 0.0
    %6359 = vmatprep.subr.mxu0 0.0
    %6360 = vmatpush1.msra.mxu0 0.0
    %6361 = vmatprep.subr.mxu0 0.0
    %6362 = vmatpush1.msra.mxu0 0.0
    %6363 = vmatprep.subr.mxu0 0.0
    %6364 = vmatpush1.msra.mxu0 0.0
    %6365 = vmatprep.subr.mxu0 0.0
    %6366 = vmatpush1.msra.mxu0 0.0
    %6367 = vmatprep.mubr.f32.mxu0 0.0
    %v6368 = vand.u32 %v5928, 4294901760
    %6369 = vmatmul.mubr.f32.gmra.mrb[0].mxu0 %v6368
    %v6370 = vpop.f32.mrb[0].mxu0
    %v6371 = vadd.f32 %v6280, %v6370
    %v6372 = vpop.f32.mrb[0].mxu0
    %6373 = vmatprep.mubr.f32.mxu0 0.0
    %v6374 = vand.u32 %v5931, 4294901760
    %6375 = vmatmul.mubr.f32.gmra.mrb[0].mxu0 %v6374
    %v6376 = vpop.f32.mrb[0].mxu0
    %v6377 = vadd.f32 %v6288, %v6376
    %v6378 = vpop.f32.mrb[0].mxu0
    %6379 = vdwg.mxu0
    %6380 = vmatprep.subr.mxu0 0.0
    %v6381 = vand.u32 %v54, 4294901760
    %6382 = vmatpush1.msra.mxu0 %v6381
    %6383 = vmatprep.subr.mxu0 0.0
    %v6384 = vand.u32 %v55, 4294901760
    %6385 = vmatpush1.msra.mxu0 %v6384
    %6386 = vmatprep.subr.mxu0 0.0
    %v6387 = vand.u32 %v56, 4294901760
    %6388 = vmatpush1.msra.mxu0 %v6387
    %6389 = vmatprep.subr.mxu0 0.0
    %v6390 = vand.u32 %v57, 4294901760
    %6391 = vmatpush1.msra.mxu0 %v6390
    %6392 = vmatprep.subr.mxu0 0.0
    %6393 = vmatpush1.msra.mxu0 0.0
    %6394 = vmatprep.subr.mxu0 0.0
    %6395 = vmatpush1.msra.mxu0 0.0
    %6396 = vmatprep.subr.mxu0 0.0
    %6397 = vmatpush1.msra.mxu0 0.0
    %6398 = vmatprep.subr.mxu0 0.0
    %6399 = vmatpush1.msra.mxu0 0.0
    %6400 = vmatprep.subr.mxu0 0.0
    %6401 = vmatpush1.msra.mxu0 0.0
    %6402 = vmatprep.subr.mxu0 0.0
    %6403 = vmatpush1.msra.mxu0 0.0
    %6404 = vmatprep.subr.mxu0 0.0
    %6405 = vmatpush1.msra.mxu0 0.0
    %6406 = vmatprep.subr.mxu0 0.0
    %6407 = vmatpush1.msra.mxu0 0.0
    %6408 = vmatprep.subr.mxu0 0.0
    %6409 = vmatpush1.msra.mxu0 0.0
    %6410 = vmatprep.subr.mxu0 0.0
    %6411 = vmatpush1.msra.mxu0 0.0
    %6412 = vmatprep.subr.mxu0 0.0
    %6413 = vmatpush1.msra.mxu0 0.0
    %6414 = vmatprep.subr.mxu0 0.0
    %6415 = vmatpush1.msra.mxu0 0.0
    %6416 = vmatprep.subr.mxu0 0.0
    %6417 = vmatpush1.msra.mxu0 0.0
    %6418 = vmatprep.subr.mxu0 0.0
    %6419 = vmatpush1.msra.mxu0 0.0
    %6420 = vmatprep.subr.mxu0 0.0
    %6421 = vmatpush1.msra.mxu0 0.0
    %6422 = vmatprep.subr.mxu0 0.0
    %6423 = vmatpush1.msra.mxu0 0.0
    %6424 = vmatprep.subr.mxu0 0.0
    %6425 = vmatpush1.msra.mxu0 0.0
    %6426 = vmatprep.subr.mxu0 0.0
    %6427 = vmatpush1.msra.mxu0 0.0
    %6428 = vmatprep.subr.mxu0 0.0
    %6429 = vmatpush1.msra.mxu0 0.0
    %6430 = vmatprep.subr.mxu0 0.0
    %6431 = vmatpush1.msra.mxu0 0.0
    %6432 = vmatprep.subr.mxu0 0.0
    %6433 = vmatpush1.msra.mxu0 0.0
    %6434 = vmatprep.subr.mxu0 0.0
    %6435 = vmatpush1.msra.mxu0 0.0
    %6436 = vmatprep.subr.mxu0 0.0
    %6437 = vmatpush1.msra.mxu0 0.0
    %6438 = vmatprep.subr.mxu0 0.0
    %6439 = vmatpush1.msra.mxu0 0.0
    %6440 = vmatprep.subr.mxu0 0.0
    %6441 = vmatpush1.msra.mxu0 0.0
    %6442 = vmatprep.subr.mxu0 0.0
    %6443 = vmatpush1.msra.mxu0 0.0
    %6444 = vmatprep.subr.mxu0 0.0
    %6445 = vmatpush1.msra.mxu0 0.0
    %6446 = vmatprep.subr.mxu0 0.0
    %6447 = vmatpush1.msra.mxu0 0.0
    %6448 = vmatprep.mubr.f32.mxu0 0.0
    %v6449 = vand.u32 %v5928, 4294901760
    %6450 = vmatmul.mubr.f32.gmra.mrb[0].mxu0 %v6449
    %v6451 = vpop.f32.mrb[0].mxu0
    %v6452 = vadd.f32 %v6371, %v6451
    %v6453 = vpop.f32.mrb[0].mxu0
    %6454 = vmatprep.mubr.f32.mxu0 0.0
    %v6455 = vand.u32 %v5931, 4294901760
    %6456 = vmatmul.mubr.f32.gmra.mrb[0].mxu0 %v6455
    %v6457 = vpop.f32.mrb[0].mxu0
    %v6458 = vadd.f32 %v6377, %v6457
    %v6459 = vpop.f32.mrb[0].mxu0
    %6460 = vdwg.mxu0
    %v6461 = vadd.f32 %v40, %v6452
    %v6462 = vadd.f32 %v41, %v6458
    %v6463 = vsel %vm82, %v6461, 0.0
    %6464 = vadd.xlane.f32.xlu0 %v6463
    %v6465 = vpop.xlane.xlu0 %6464
    %v6466 = vsel %vm82, %v6462, 0.0
    %6467 = vadd.xlane.f32.xlu0 %v6466
    %v6468 = vpop.xlane.xlu0 %6467
    %v6469 = vmul.f32 %v6465, %v89
    %v6470 = vmul.f32 %v6468, %v89
    %v6471 = vsub.f32 %v6461, %v6469
    %v6472 = vsub.f32 %v6462, %v6470
    %v6473 = vmul.f32 %v6471, %v6471
    %v6474 = vmul.f32 %v6472, %v6472
    %v6475 = vsel %vm82, %v6473, 0.0
    %6476 = vadd.xlane.f32.xlu0 %v6475
    %v6477 = vpop.xlane.xlu0 %6476
    %v6478 = vsel %vm82, %v6474, 0.0
    %6479 = vadd.xlane.f32.xlu0 %v6478
    %v6480 = vpop.xlane.xlu0 %6479
    %v6481 = vmul.f32 %v6477, %v89
    %v6482 = vmul.f32 %v6480, %v89
    %v6483 = vadd.f32 %v6481, 1e-05
    %v6484 = vadd.f32 %v6482, 1e-05
    %v6485 = vrsqrt.pop %v6483
    %v6486 = vrsqrt.pop %v6484
    %v6487 = vmul.f32 %v6471, %v6485
    %v6488 = vmul.f32 %v6472, %v6486
    %v6489 = vlaneseq
    %v6490 = vshrl.u32 %v6489, 7
    %v6491 = vsub.s32 0, %v6490
    %v6492 = vrot.slane %v72, %v6491
    %v6493 = vmul.f32 %v6487, %v6492
    %v6494 = vmul.f32 %v6488, %v6492
    %v6495 = vlaneseq
    %v6496 = vshrl.u32 %v6495, 7
    %v6497 = vsub.s32 0, %v6496
    %v6498 = vrot.slane %v73, %v6497
    %v6499 = vadd.f32 %v6493, %v6498
    %v6500 = vadd.f32 %v6494, %v6498
    %v6501 = vlaneseq
    %v6502 = vshrl.u32 %v6501, 7
    %v6503 = vsub.s32 0, %v6502
    %v6504 = vrot.slane %v76, %v6503
    %v6506 = vsel %vm82, %v6499, 0
    %v6509 = vsel %vm82, %v6500, 0
    %6511 = vmatprep.subr.mxu0 0.0
    %v6512 = vand.u32 %v58, 4294901760
    %6513 = vmatpush1.msra.mxu0 %v6512
    %6514 = vmatprep.subr.mxu0 0.0
    %v6515 = vand.u32 %v59, 4294901760
    %6516 = vmatpush1.msra.mxu0 %v6515
    %6517 = vmatprep.subr.mxu0 0.0
    %v6518 = vand.u32 %v60, 4294901760
    %6519 = vmatpush1.msra.mxu0 %v6518
    %6520 = vmatprep.subr.mxu0 0.0
    %v6521 = vand.u32 %v61, 4294901760
    %6522 = vmatpush1.msra.mxu0 %v6521
    %6523 = vmatprep.subr.mxu0 0.0
    %6524 = vmatpush1.msra.mxu0 0.0
    %6525 = vmatprep.subr.mxu0 0.0
    %6526 = vmatpush1.msra.mxu0 0.0
    %6527 = vmatprep.subr.mxu0 0.0
    %6528 = vmatpush1.msra.mxu0 0.0
    %6529 = vmatprep.subr.mxu0 0.0
    %6530 = vmatpush1.msra.mxu0 0.0
    %6531 = vmatprep.subr.mxu0 0.0
    %6532 = vmatpush1.msra.mxu0 0.0
    %6533 = vmatprep.subr.mxu0 0.0
    %6534 = vmatpush1.msra.mxu0 0.0
    %6535 = vmatprep.subr.mxu0 0.0
    %6536 = vmatpush1.msra.mxu0 0.0
    %6537 = vmatprep.subr.mxu0 0.0
    %6538 = vmatpush1.msra.mxu0 0.0
    %6539 = vmatprep.subr.mxu0 0.0
    %6540 = vmatpush1.msra.mxu0 0.0
    %6541 = vmatprep.subr.mxu0 0.0
    %6542 = vmatpush1.msra.mxu0 0.0
    %6543 = vmatprep.subr.mxu0 0.0
    %6544 = vmatpush1.msra.mxu0 0.0
    %6545 = vmatprep.subr.mxu0 0.0
    %6546 = vmatpush1.msra.mxu0 0.0
    %6547 = vmatprep.subr.mxu0 0.0
    %6548 = vmatpush1.msra.mxu0 0.0
    %6549 = vmatprep.subr.mxu0 0.0
    %6550 = vmatpush1.msra.mxu0 0.0
    %6551 = vmatprep.subr.mxu0 0.0
    %6552 = vmatpush1.msra.mxu0 0.0
    %6553 = vmatprep.subr.mxu0 0.0
    %6554 = vmatpush1.msra.mxu0 0.0
    %6555 = vmatprep.subr.mxu0 0.0
    %6556 = vmatpush1.msra.mxu0 0.0
    %6557 = vmatprep.subr.mxu0 0.0
    %6558 = vmatpush1.msra.mxu0 0.0
    %6559 = vmatprep.subr.mxu0 0.0
    %6560 = vmatpush1.msra.mxu0 0.0
    %6561 = vmatprep.subr.mxu0 0.0
    %6562 = vmatpush1.msra.mxu0 0.0
    %6563 = vmatprep.subr.mxu0 0.0
    %6564 = vmatpush1.msra.mxu0 0.0
    %6565 = vmatprep.subr.mxu0 0.0
    %6566 = vmatpush1.msra.mxu0 0.0
    %6567 = vmatprep.subr.mxu0 0.0
    %6568 = vmatpush1.msra.mxu0 0.0
    %6569 = vmatprep.subr.mxu0 0.0
    %6570 = vmatpush1.msra.mxu0 0.0
    %6571 = vmatprep.subr.mxu0 0.0
    %6572 = vmatpush1.msra.mxu0 0.0
    %6573 = vmatprep.subr.mxu0 0.0
    %6574 = vmatpush1.msra.mxu0 0.0
    %6575 = vmatprep.subr.mxu0 0.0
    %6576 = vmatpush1.msra.mxu0 0.0
    %6577 = vmatprep.subr.mxu0 0.0
    %6578 = vmatpush1.msra.mxu0 0.0
    %6579 = vmatprep.mubr.f32.mxu0 0.0
    %v6580 = vand.u32 %v6506, 4294901760
    %v6581 = vsub.f32 %v6506, %v6580
    %v6582 = vand.u32 %v6581, 4294901760
    %v6583 = vsub.f32 %v6581, %v6582
    %v6584 = vand.u32 %v6583, 4294901760
    %6585 = vmatmul.mubr.f32.gmra.mrb[0].mxu0 %v6584
    %v6586 = vpop.f32.mrb[0].mxu0
    %v6587 = vadd.f32 %v6504, %v6586
    %v6588 = vpop.f32.mrb[0].mxu0
    %6589 = vmatprep.mubr.f32.mxu0 0.0
    %v6590 = vand.u32 %v6509, 4294901760
    %v6591 = vsub.f32 %v6509, %v6590
    %v6592 = vand.u32 %v6591, 4294901760
    %v6593 = vsub.f32 %v6591, %v6592
    %v6594 = vand.u32 %v6593, 4294901760
    %6595 = vmatmul.mubr.f32.gmra.mrb[0].mxu0 %v6594
    %v6596 = vpop.f32.mrb[0].mxu0
    %v6597 = vadd.f32 %v6504, %v6596
    %v6598 = vpop.f32.mrb[0].mxu0
    %6599 = vdwg.mxu0
    %6600 = vmatprep.subr.mxu0 0.0
    %v6601 = vand.u32 %v58, 4294901760
    %v6602 = vsub.f32 %v58, %v6601
    %v6603 = vand.u32 %v6602, 4294901760
    %v6604 = vsub.f32 %v6602, %v6603
    %v6605 = vand.u32 %v6604, 4294901760
    %6606 = vmatpush1.msra.mxu0 %v6605
    %6607 = vmatprep.subr.mxu0 0.0
    %v6608 = vand.u32 %v59, 4294901760
    %v6609 = vsub.f32 %v59, %v6608
    %v6610 = vand.u32 %v6609, 4294901760
    %v6611 = vsub.f32 %v6609, %v6610
    %v6612 = vand.u32 %v6611, 4294901760
    %6613 = vmatpush1.msra.mxu0 %v6612
    %6614 = vmatprep.subr.mxu0 0.0
    %v6615 = vand.u32 %v60, 4294901760
    %v6616 = vsub.f32 %v60, %v6615
    %v6617 = vand.u32 %v6616, 4294901760
    %v6618 = vsub.f32 %v6616, %v6617
    %v6619 = vand.u32 %v6618, 4294901760
    %6620 = vmatpush1.msra.mxu0 %v6619
    %6621 = vmatprep.subr.mxu0 0.0
    %v6622 = vand.u32 %v61, 4294901760
    %v6623 = vsub.f32 %v61, %v6622
    %v6624 = vand.u32 %v6623, 4294901760
    %v6625 = vsub.f32 %v6623, %v6624
    %v6626 = vand.u32 %v6625, 4294901760
    %6627 = vmatpush1.msra.mxu0 %v6626
    %6628 = vmatprep.subr.mxu0 0.0
    %6629 = vmatpush1.msra.mxu0 0.0
    %6630 = vmatprep.subr.mxu0 0.0
    %6631 = vmatpush1.msra.mxu0 0.0
    %6632 = vmatprep.subr.mxu0 0.0
    %6633 = vmatpush1.msra.mxu0 0.0
    %6634 = vmatprep.subr.mxu0 0.0
    %6635 = vmatpush1.msra.mxu0 0.0
    %6636 = vmatprep.subr.mxu0 0.0
    %6637 = vmatpush1.msra.mxu0 0.0
    %6638 = vmatprep.subr.mxu0 0.0
    %6639 = vmatpush1.msra.mxu0 0.0
    %6640 = vmatprep.subr.mxu0 0.0
    %6641 = vmatpush1.msra.mxu0 0.0
    %6642 = vmatprep.subr.mxu0 0.0
    %6643 = vmatpush1.msra.mxu0 0.0
    %6644 = vmatprep.subr.mxu0 0.0
    %6645 = vmatpush1.msra.mxu0 0.0
    %6646 = vmatprep.subr.mxu0 0.0
    %6647 = vmatpush1.msra.mxu0 0.0
    %6648 = vmatprep.subr.mxu0 0.0
    %6649 = vmatpush1.msra.mxu0 0.0
    %6650 = vmatprep.subr.mxu0 0.0
    %6651 = vmatpush1.msra.mxu0 0.0
    %6652 = vmatprep.subr.mxu0 0.0
    %6653 = vmatpush1.msra.mxu0 0.0
    %6654 = vmatprep.subr.mxu0 0.0
    %6655 = vmatpush1.msra.mxu0 0.0
    %6656 = vmatprep.subr.mxu0 0.0
    %6657 = vmatpush1.msra.mxu0 0.0
    %6658 = vmatprep.subr.mxu0 0.0
    %6659 = vmatpush1.msra.mxu0 0.0
    %6660 = vmatprep.subr.mxu0 0.0
    %6661 = vmatpush1.msra.mxu0 0.0
    %6662 = vmatprep.subr.mxu0 0.0
    %6663 = vmatpush1.msra.mxu0 0.0
    %6664 = vmatprep.subr.mxu0 0.0
    %6665 = vmatpush1.msra.mxu0 0.0
    %6666 = vmatprep.subr.mxu0 0.0
    %6667 = vmatpush1.msra.mxu0 0.0
    %6668 = vmatprep.subr.mxu0 0.0
    %6669 = vmatpush1.msra.mxu0 0.0
    %6670 = vmatprep.subr.mxu0 0.0
    %6671 = vmatpush1.msra.mxu0 0.0
    %6672 = vmatprep.subr.mxu0 0.0
    %6673 = vmatpush1.msra.mxu0 0.0
    %6674 = vmatprep.subr.mxu0 0.0
    %6675 = vmatpush1.msra.mxu0 0.0
    %6676 = vmatprep.subr.mxu0 0.0
    %6677 = vmatpush1.msra.mxu0 0.0
    %6678 = vmatprep.subr.mxu0 0.0
    %6679 = vmatpush1.msra.mxu0 0.0
    %6680 = vmatprep.subr.mxu0 0.0
    %6681 = vmatpush1.msra.mxu0 0.0
    %6682 = vmatprep.subr.mxu0 0.0
    %6683 = vmatpush1.msra.mxu0 0.0
    %6684 = vmatprep.mubr.f32.mxu0 0.0
    %v6685 = vand.u32 %v6506, 4294901760
    %6686 = vmatmul.mubr.f32.gmra.mrb[0].mxu0 %v6685
    %v6687 = vpop.f32.mrb[0].mxu0
    %v6688 = vadd.f32 %v6587, %v6687
    %v6689 = vpop.f32.mrb[0].mxu0
    %6690 = vmatprep.mubr.f32.mxu0 0.0
    %v6691 = vand.u32 %v6509, 4294901760
    %6692 = vmatmul.mubr.f32.gmra.mrb[0].mxu0 %v6691
    %v6693 = vpop.f32.mrb[0].mxu0
    %v6694 = vadd.f32 %v6597, %v6693
    %v6695 = vpop.f32.mrb[0].mxu0
    %6696 = vdwg.mxu0
    %6697 = vmatprep.subr.mxu0 0.0
    %v6698 = vand.u32 %v58, 4294901760
    %v6699 = vsub.f32 %v58, %v6698
    %6700 = vmatpush1.msra.mxu0 %v6699
    %6701 = vmatprep.subr.mxu0 0.0
    %v6702 = vand.u32 %v59, 4294901760
    %v6703 = vsub.f32 %v59, %v6702
    %6704 = vmatpush1.msra.mxu0 %v6703
    %6705 = vmatprep.subr.mxu0 0.0
    %v6706 = vand.u32 %v60, 4294901760
    %v6707 = vsub.f32 %v60, %v6706
    %6708 = vmatpush1.msra.mxu0 %v6707
    %6709 = vmatprep.subr.mxu0 0.0
    %v6710 = vand.u32 %v61, 4294901760
    %v6711 = vsub.f32 %v61, %v6710
    %6712 = vmatpush1.msra.mxu0 %v6711
    %6713 = vmatprep.subr.mxu0 0.0
    %6714 = vmatpush1.msra.mxu0 0.0
    %6715 = vmatprep.subr.mxu0 0.0
    %6716 = vmatpush1.msra.mxu0 0.0
    %6717 = vmatprep.subr.mxu0 0.0
    %6718 = vmatpush1.msra.mxu0 0.0
    %6719 = vmatprep.subr.mxu0 0.0
    %6720 = vmatpush1.msra.mxu0 0.0
    %6721 = vmatprep.subr.mxu0 0.0
    %6722 = vmatpush1.msra.mxu0 0.0
    %6723 = vmatprep.subr.mxu0 0.0
    %6724 = vmatpush1.msra.mxu0 0.0
    %6725 = vmatprep.subr.mxu0 0.0
    %6726 = vmatpush1.msra.mxu0 0.0
    %6727 = vmatprep.subr.mxu0 0.0
    %6728 = vmatpush1.msra.mxu0 0.0
    %6729 = vmatprep.subr.mxu0 0.0
    %6730 = vmatpush1.msra.mxu0 0.0
    %6731 = vmatprep.subr.mxu0 0.0
    %6732 = vmatpush1.msra.mxu0 0.0
    %6733 = vmatprep.subr.mxu0 0.0
    %6734 = vmatpush1.msra.mxu0 0.0
    %6735 = vmatprep.subr.mxu0 0.0
    %6736 = vmatpush1.msra.mxu0 0.0
    %6737 = vmatprep.subr.mxu0 0.0
    %6738 = vmatpush1.msra.mxu0 0.0
    %6739 = vmatprep.subr.mxu0 0.0
    %6740 = vmatpush1.msra.mxu0 0.0
    %6741 = vmatprep.subr.mxu0 0.0
    %6742 = vmatpush1.msra.mxu0 0.0
    %6743 = vmatprep.subr.mxu0 0.0
    %6744 = vmatpush1.msra.mxu0 0.0
    %6745 = vmatprep.subr.mxu0 0.0
    %6746 = vmatpush1.msra.mxu0 0.0
    %6747 = vmatprep.subr.mxu0 0.0
    %6748 = vmatpush1.msra.mxu0 0.0
    %6749 = vmatprep.subr.mxu0 0.0
    %6750 = vmatpush1.msra.mxu0 0.0
    %6751 = vmatprep.subr.mxu0 0.0
    %6752 = vmatpush1.msra.mxu0 0.0
    %6753 = vmatprep.subr.mxu0 0.0
    %6754 = vmatpush1.msra.mxu0 0.0
    %6755 = vmatprep.subr.mxu0 0.0
    %6756 = vmatpush1.msra.mxu0 0.0
    %6757 = vmatprep.subr.mxu0 0.0
    %6758 = vmatpush1.msra.mxu0 0.0
    %6759 = vmatprep.subr.mxu0 0.0
    %6760 = vmatpush1.msra.mxu0 0.0
    %6761 = vmatprep.subr.mxu0 0.0
    %6762 = vmatpush1.msra.mxu0 0.0
    %6763 = vmatprep.subr.mxu0 0.0
    %6764 = vmatpush1.msra.mxu0 0.0
    %6765 = vmatprep.subr.mxu0 0.0
    %6766 = vmatpush1.msra.mxu0 0.0
    %6767 = vmatprep.subr.mxu0 0.0
    %6768 = vmatpush1.msra.mxu0 0.0
    %6769 = vmatprep.mubr.f32.mxu0 0.0
    %v6770 = vand.u32 %v6506, 4294901760
    %v6771 = vsub.f32 %v6506, %v6770
    %6772 = vmatmul.mubr.f32.gmra.mrb[0].mxu0 %v6771
    %v6773 = vpop.f32.mrb[0].mxu0
    %v6774 = vadd.f32 %v6688, %v6773
    %v6775 = vpop.f32.mrb[0].mxu0
    %6776 = vmatprep.mubr.f32.mxu0 0.0
    %v6777 = vand.u32 %v6509, 4294901760
    %v6778 = vsub.f32 %v6509, %v6777
    %6779 = vmatmul.mubr.f32.gmra.mrb[0].mxu0 %v6778
    %v6780 = vpop.f32.mrb[0].mxu0
    %v6781 = vadd.f32 %v6694, %v6780
    %v6782 = vpop.f32.mrb[0].mxu0
    %6783 = vdwg.mxu0
    %6784 = vmatprep.subr.mxu0 0.0
    %v6785 = vand.u32 %v58, 4294901760
    %6786 = vmatpush1.msra.mxu0 %v6785
    %6787 = vmatprep.subr.mxu0 0.0
    %v6788 = vand.u32 %v59, 4294901760
    %6789 = vmatpush1.msra.mxu0 %v6788
    %6790 = vmatprep.subr.mxu0 0.0
    %v6791 = vand.u32 %v60, 4294901760
    %6792 = vmatpush1.msra.mxu0 %v6791
    %6793 = vmatprep.subr.mxu0 0.0
    %v6794 = vand.u32 %v61, 4294901760
    %6795 = vmatpush1.msra.mxu0 %v6794
    %6796 = vmatprep.subr.mxu0 0.0
    %6797 = vmatpush1.msra.mxu0 0.0
    %6798 = vmatprep.subr.mxu0 0.0
    %6799 = vmatpush1.msra.mxu0 0.0
    %6800 = vmatprep.subr.mxu0 0.0
    %6801 = vmatpush1.msra.mxu0 0.0
    %6802 = vmatprep.subr.mxu0 0.0
    %6803 = vmatpush1.msra.mxu0 0.0
    %6804 = vmatprep.subr.mxu0 0.0
    %6805 = vmatpush1.msra.mxu0 0.0
    %6806 = vmatprep.subr.mxu0 0.0
    %6807 = vmatpush1.msra.mxu0 0.0
    %6808 = vmatprep.subr.mxu0 0.0
    %6809 = vmatpush1.msra.mxu0 0.0
    %6810 = vmatprep.subr.mxu0 0.0
    %6811 = vmatpush1.msra.mxu0 0.0
    %6812 = vmatprep.subr.mxu0 0.0
    %6813 = vmatpush1.msra.mxu0 0.0
    %6814 = vmatprep.subr.mxu0 0.0
    %6815 = vmatpush1.msra.mxu0 0.0
    %6816 = vmatprep.subr.mxu0 0.0
    %6817 = vmatpush1.msra.mxu0 0.0
    %6818 = vmatprep.subr.mxu0 0.0
    %6819 = vmatpush1.msra.mxu0 0.0
    %6820 = vmatprep.subr.mxu0 0.0
    %6821 = vmatpush1.msra.mxu0 0.0
    %6822 = vmatprep.subr.mxu0 0.0
    %6823 = vmatpush1.msra.mxu0 0.0
    %6824 = vmatprep.subr.mxu0 0.0
    %6825 = vmatpush1.msra.mxu0 0.0
    %6826 = vmatprep.subr.mxu0 0.0
    %6827 = vmatpush1.msra.mxu0 0.0
    %6828 = vmatprep.subr.mxu0 0.0
    %6829 = vmatpush1.msra.mxu0 0.0
    %6830 = vmatprep.subr.mxu0 0.0
    %6831 = vmatpush1.msra.mxu0 0.0
    %6832 = vmatprep.subr.mxu0 0.0
    %6833 = vmatpush1.msra.mxu0 0.0
    %6834 = vmatprep.subr.mxu0 0.0
    %6835 = vmatpush1.msra.mxu0 0.0
    %6836 = vmatprep.subr.mxu0 0.0
    %6837 = vmatpush1.msra.mxu0 0.0
    %6838 = vmatprep.subr.mxu0 0.0
    %6839 = vmatpush1.msra.mxu0 0.0
    %6840 = vmatprep.subr.mxu0 0.0
    %6841 = vmatpush1.msra.mxu0 0.0
    %6842 = vmatprep.subr.mxu0 0.0
    %6843 = vmatpush1.msra.mxu0 0.0
    %6844 = vmatprep.subr.mxu0 0.0
    %6845 = vmatpush1.msra.mxu0 0.0
    %6846 = vmatprep.subr.mxu0 0.0
    %6847 = vmatpush1.msra.mxu0 0.0
    %6848 = vmatprep.subr.mxu0 0.0
    %6849 = vmatpush1.msra.mxu0 0.0
    %6850 = vmatprep.subr.mxu0 0.0
    %6851 = vmatpush1.msra.mxu0 0.0
    %6852 = vmatprep.mubr.f32.mxu0 0.0
    %v6853 = vand.u32 %v6506, 4294901760
    %v6854 = vsub.f32 %v6506, %v6853
    %v6855 = vand.u32 %v6854, 4294901760
    %6856 = vmatmul.mubr.f32.gmra.mrb[0].mxu0 %v6855
    %v6857 = vpop.f32.mrb[0].mxu0
    %v6858 = vadd.f32 %v6774, %v6857
    %v6859 = vpop.f32.mrb[0].mxu0
    %6860 = vmatprep.mubr.f32.mxu0 0.0
    %v6861 = vand.u32 %v6509, 4294901760
    %v6862 = vsub.f32 %v6509, %v6861
    %v6863 = vand.u32 %v6862, 4294901760
    %6864 = vmatmul.mubr.f32.gmra.mrb[0].mxu0 %v6863
    %v6865 = vpop.f32.mrb[0].mxu0
    %v6866 = vadd.f32 %v6781, %v6865
    %v6867 = vpop.f32.mrb[0].mxu0
    %6868 = vdwg.mxu0
    %6869 = vmatprep.subr.mxu0 0.0
    %v6870 = vand.u32 %v58, 4294901760
    %v6871 = vsub.f32 %v58, %v6870
    %v6872 = vand.u32 %v6871, 4294901760
    %6873 = vmatpush1.msra.mxu0 %v6872
    %6874 = vmatprep.subr.mxu0 0.0
    %v6875 = vand.u32 %v59, 4294901760
    %v6876 = vsub.f32 %v59, %v6875
    %v6877 = vand.u32 %v6876, 4294901760
    %6878 = vmatpush1.msra.mxu0 %v6877
    %6879 = vmatprep.subr.mxu0 0.0
    %v6880 = vand.u32 %v60, 4294901760
    %v6881 = vsub.f32 %v60, %v6880
    %v6882 = vand.u32 %v6881, 4294901760
    %6883 = vmatpush1.msra.mxu0 %v6882
    %6884 = vmatprep.subr.mxu0 0.0
    %v6885 = vand.u32 %v61, 4294901760
    %v6886 = vsub.f32 %v61, %v6885
    %v6887 = vand.u32 %v6886, 4294901760
    %6888 = vmatpush1.msra.mxu0 %v6887
    %6889 = vmatprep.subr.mxu0 0.0
    %6890 = vmatpush1.msra.mxu0 0.0
    %6891 = vmatprep.subr.mxu0 0.0
    %6892 = vmatpush1.msra.mxu0 0.0
    %6893 = vmatprep.subr.mxu0 0.0
    %6894 = vmatpush1.msra.mxu0 0.0
    %6895 = vmatprep.subr.mxu0 0.0
    %6896 = vmatpush1.msra.mxu0 0.0
    %6897 = vmatprep.subr.mxu0 0.0
    %6898 = vmatpush1.msra.mxu0 0.0
    %6899 = vmatprep.subr.mxu0 0.0
    %6900 = vmatpush1.msra.mxu0 0.0
    %6901 = vmatprep.subr.mxu0 0.0
    %6902 = vmatpush1.msra.mxu0 0.0
    %6903 = vmatprep.subr.mxu0 0.0
    %6904 = vmatpush1.msra.mxu0 0.0
    %6905 = vmatprep.subr.mxu0 0.0
    %6906 = vmatpush1.msra.mxu0 0.0
    %6907 = vmatprep.subr.mxu0 0.0
    %6908 = vmatpush1.msra.mxu0 0.0
    %6909 = vmatprep.subr.mxu0 0.0
    %6910 = vmatpush1.msra.mxu0 0.0
    %6911 = vmatprep.subr.mxu0 0.0
    %6912 = vmatpush1.msra.mxu0 0.0
    %6913 = vmatprep.subr.mxu0 0.0
    %6914 = vmatpush1.msra.mxu0 0.0
    %6915 = vmatprep.subr.mxu0 0.0
    %6916 = vmatpush1.msra.mxu0 0.0
    %6917 = vmatprep.subr.mxu0 0.0
    %6918 = vmatpush1.msra.mxu0 0.0
    %6919 = vmatprep.subr.mxu0 0.0
    %6920 = vmatpush1.msra.mxu0 0.0
    %6921 = vmatprep.subr.mxu0 0.0
    %6922 = vmatpush1.msra.mxu0 0.0
    %6923 = vmatprep.subr.mxu0 0.0
    %6924 = vmatpush1.msra.mxu0 0.0
    %6925 = vmatprep.subr.mxu0 0.0
    %6926 = vmatpush1.msra.mxu0 0.0
    %6927 = vmatprep.subr.mxu0 0.0
    %6928 = vmatpush1.msra.mxu0 0.0
    %6929 = vmatprep.subr.mxu0 0.0
    %6930 = vmatpush1.msra.mxu0 0.0
    %6931 = vmatprep.subr.mxu0 0.0
    %6932 = vmatpush1.msra.mxu0 0.0
    %6933 = vmatprep.subr.mxu0 0.0
    %6934 = vmatpush1.msra.mxu0 0.0
    %6935 = vmatprep.subr.mxu0 0.0
    %6936 = vmatpush1.msra.mxu0 0.0
    %6937 = vmatprep.subr.mxu0 0.0
    %6938 = vmatpush1.msra.mxu0 0.0
    %6939 = vmatprep.subr.mxu0 0.0
    %6940 = vmatpush1.msra.mxu0 0.0
    %6941 = vmatprep.subr.mxu0 0.0
    %6942 = vmatpush1.msra.mxu0 0.0
    %6943 = vmatprep.subr.mxu0 0.0
    %6944 = vmatpush1.msra.mxu0 0.0
    %6945 = vmatprep.mubr.f32.mxu0 0.0
    %v6946 = vand.u32 %v6506, 4294901760
    %6947 = vmatmul.mubr.f32.gmra.mrb[0].mxu0 %v6946
    %v6948 = vpop.f32.mrb[0].mxu0
    %v6949 = vadd.f32 %v6858, %v6948
    %v6950 = vpop.f32.mrb[0].mxu0
    %6951 = vmatprep.mubr.f32.mxu0 0.0
    %v6952 = vand.u32 %v6509, 4294901760
    %6953 = vmatmul.mubr.f32.gmra.mrb[0].mxu0 %v6952
    %v6954 = vpop.f32.mrb[0].mxu0
    %v6955 = vadd.f32 %v6866, %v6954
    %v6956 = vpop.f32.mrb[0].mxu0
    %6957 = vdwg.mxu0
    %6958 = vmatprep.subr.mxu0 0.0
    %v6959 = vand.u32 %v58, 4294901760
    %6960 = vmatpush1.msra.mxu0 %v6959
    %6961 = vmatprep.subr.mxu0 0.0
    %v6962 = vand.u32 %v59, 4294901760
    %6963 = vmatpush1.msra.mxu0 %v6962
    %6964 = vmatprep.subr.mxu0 0.0
    %v6965 = vand.u32 %v60, 4294901760
    %6966 = vmatpush1.msra.mxu0 %v6965
    %6967 = vmatprep.subr.mxu0 0.0
    %v6968 = vand.u32 %v61, 4294901760
    %6969 = vmatpush1.msra.mxu0 %v6968
    %6970 = vmatprep.subr.mxu0 0.0
    %6971 = vmatpush1.msra.mxu0 0.0
    %6972 = vmatprep.subr.mxu0 0.0
    %6973 = vmatpush1.msra.mxu0 0.0
    %6974 = vmatprep.subr.mxu0 0.0
    %6975 = vmatpush1.msra.mxu0 0.0
    %6976 = vmatprep.subr.mxu0 0.0
    %6977 = vmatpush1.msra.mxu0 0.0
    %6978 = vmatprep.subr.mxu0 0.0
    %6979 = vmatpush1.msra.mxu0 0.0
    %6980 = vmatprep.subr.mxu0 0.0
    %6981 = vmatpush1.msra.mxu0 0.0
    %6982 = vmatprep.subr.mxu0 0.0
    %6983 = vmatpush1.msra.mxu0 0.0
    %6984 = vmatprep.subr.mxu0 0.0
    %6985 = vmatpush1.msra.mxu0 0.0
    %6986 = vmatprep.subr.mxu0 0.0
    %6987 = vmatpush1.msra.mxu0 0.0
    %6988 = vmatprep.subr.mxu0 0.0
    %6989 = vmatpush1.msra.mxu0 0.0
    %6990 = vmatprep.subr.mxu0 0.0
    %6991 = vmatpush1.msra.mxu0 0.0
    %6992 = vmatprep.subr.mxu0 0.0
    %6993 = vmatpush1.msra.mxu0 0.0
    %6994 = vmatprep.subr.mxu0 0.0
    %6995 = vmatpush1.msra.mxu0 0.0
    %6996 = vmatprep.subr.mxu0 0.0
    %6997 = vmatpush1.msra.mxu0 0.0
    %6998 = vmatprep.subr.mxu0 0.0
    %6999 = vmatpush1.msra.mxu0 0.0
    %7000 = vmatprep.subr.mxu0 0.0
    %7001 = vmatpush1.msra.mxu0 0.0
    %7002 = vmatprep.subr.mxu0 0.0
    %7003 = vmatpush1.msra.mxu0 0.0
    %7004 = vmatprep.subr.mxu0 0.0
    %7005 = vmatpush1.msra.mxu0 0.0
    %7006 = vmatprep.subr.mxu0 0.0
    %7007 = vmatpush1.msra.mxu0 0.0
    %7008 = vmatprep.subr.mxu0 0.0
    %7009 = vmatpush1.msra.mxu0 0.0
    %7010 = vmatprep.subr.mxu0 0.0
    %7011 = vmatpush1.msra.mxu0 0.0
    %7012 = vmatprep.subr.mxu0 0.0
    %7013 = vmatpush1.msra.mxu0 0.0
    %7014 = vmatprep.subr.mxu0 0.0
    %7015 = vmatpush1.msra.mxu0 0.0
    %7016 = vmatprep.subr.mxu0 0.0
    %7017 = vmatpush1.msra.mxu0 0.0
    %7018 = vmatprep.subr.mxu0 0.0
    %7019 = vmatpush1.msra.mxu0 0.0
    %7020 = vmatprep.subr.mxu0 0.0
    %7021 = vmatpush1.msra.mxu0 0.0
    %7022 = vmatprep.subr.mxu0 0.0
    %7023 = vmatpush1.msra.mxu0 0.0
    %7024 = vmatprep.subr.mxu0 0.0
    %7025 = vmatpush1.msra.mxu0 0.0
    %7026 = vmatprep.mubr.f32.mxu0 0.0
    %v7027 = vand.u32 %v6506, 4294901760
    %7028 = vmatmul.mubr.f32.gmra.mrb[0].mxu0 %v7027
    %v7029 = vpop.f32.mrb[0].mxu0
    %v7030 = vadd.f32 %v6949, %v7029
    %v7031 = vpop.f32.mrb[0].mxu0
    %7032 = vmatprep.mubr.f32.mxu0 0.0
    %v7033 = vand.u32 %v6509, 4294901760
    %7034 = vmatmul.mubr.f32.gmra.mrb[0].mxu0 %v7033
    %v7035 = vpop.f32.mrb[0].mxu0
    %v7036 = vadd.f32 %v6955, %v7035
    %v7037 = vpop.f32.mrb[0].mxu0
    %7038 = vdwg.mxu0
    %v7039 = vmax.f32 %v7030, 0.0
    %v7040 = vmax.f32 %v7036, 0.0
    %v7041 = vlaneseq
    %v7042 = vshrl.u32 %v7041, 7
    %v7043 = vsub.s32 0, %v7042
    %v7044 = vrot.slane %v75, %v7043
    %vm7045 = vcmask 523264
    %v7047 = vsel %vm7045, %v7039, 0
    %v7050 = vsel %vm7045, %v7040, 0
    %7052 = vmatprep.subr.mxu0 0.0
    %v7053 = vand.u32 %v62, 4294901760
    %7054 = vmatpush1.msra.mxu0 %v7053
    %7055 = vmatprep.subr.mxu0 0.0
    %v7056 = vand.u32 %v63, 4294901760
    %7057 = vmatpush1.msra.mxu0 %v7056
    %7058 = vmatprep.subr.mxu0 0.0
    %v7059 = vand.u32 %v64, 4294901760
    %7060 = vmatpush1.msra.mxu0 %v7059
    %7061 = vmatprep.subr.mxu0 0.0
    %v7062 = vand.u32 %v65, 4294901760
    %7063 = vmatpush1.msra.mxu0 %v7062
    %7064 = vmatprep.subr.mxu0 0.0
    %v7065 = vand.u32 %v66, 4294901760
    %7066 = vmatpush1.msra.mxu0 %v7065
    %7067 = vmatprep.subr.mxu0 0.0
    %v7068 = vand.u32 %v67, 4294901760
    %7069 = vmatpush1.msra.mxu0 %v7068
    %7070 = vmatprep.subr.mxu0 0.0
    %v7071 = vand.u32 %v68, 4294901760
    %7072 = vmatpush1.msra.mxu0 %v7071
    %7073 = vmatprep.subr.mxu0 0.0
    %v7074 = vand.u32 %v69, 4294901760
    %7075 = vmatpush1.msra.mxu0 %v7074
    %7076 = vmatprep.subr.mxu0 0.0
    %7077 = vmatpush1.msra.mxu0 0.0
    %7078 = vmatprep.subr.mxu0 0.0
    %7079 = vmatpush1.msra.mxu0 0.0
    %7080 = vmatprep.subr.mxu0 0.0
    %7081 = vmatpush1.msra.mxu0 0.0
    %7082 = vmatprep.subr.mxu0 0.0
    %7083 = vmatpush1.msra.mxu0 0.0
    %7084 = vmatprep.subr.mxu0 0.0
    %7085 = vmatpush1.msra.mxu0 0.0
    %7086 = vmatprep.subr.mxu0 0.0
    %7087 = vmatpush1.msra.mxu0 0.0
    %7088 = vmatprep.subr.mxu0 0.0
    %7089 = vmatpush1.msra.mxu0 0.0
    %7090 = vmatprep.subr.mxu0 0.0
    %7091 = vmatpush1.msra.mxu0 0.0
    %7092 = vmatprep.subr.mxu0 0.0
    %7093 = vmatpush1.msra.mxu0 0.0
    %7094 = vmatprep.subr.mxu0 0.0
    %7095 = vmatpush1.msra.mxu0 0.0
    %7096 = vmatprep.subr.mxu0 0.0
    %7097 = vmatpush1.msra.mxu0 0.0
    %7098 = vmatprep.subr.mxu0 0.0
    %7099 = vmatpush1.msra.mxu0 0.0
    %7100 = vmatprep.subr.mxu0 0.0
    %7101 = vmatpush1.msra.mxu0 0.0
    %7102 = vmatprep.subr.mxu0 0.0
    %7103 = vmatpush1.msra.mxu0 0.0
    %7104 = vmatprep.subr.mxu0 0.0
    %7105 = vmatpush1.msra.mxu0 0.0
    %7106 = vmatprep.subr.mxu0 0.0
    %7107 = vmatpush1.msra.mxu0 0.0
    %7108 = vmatprep.subr.mxu0 0.0
    %7109 = vmatpush1.msra.mxu0 0.0
    %7110 = vmatprep.subr.mxu0 0.0
    %7111 = vmatpush1.msra.mxu0 0.0
    %7112 = vmatprep.subr.mxu0 0.0
    %7113 = vmatpush1.msra.mxu0 0.0
    %7114 = vmatprep.subr.mxu0 0.0
    %7115 = vmatpush1.msra.mxu0 0.0
    %7116 = vmatprep.subr.mxu0 0.0
    %7117 = vmatpush1.msra.mxu0 0.0
    %7118 = vmatprep.subr.mxu0 0.0
    %7119 = vmatpush1.msra.mxu0 0.0
    %7120 = vmatprep.subr.mxu0 0.0
    %7121 = vmatpush1.msra.mxu0 0.0
    %7122 = vmatprep.subr.mxu0 0.0
    %7123 = vmatpush1.msra.mxu0 0.0
    %7124 = vmatprep.mubr.f32.mxu0 0.0
    %v7125 = vand.u32 %v7047, 4294901760
    %v7126 = vsub.f32 %v7047, %v7125
    %v7127 = vand.u32 %v7126, 4294901760
    %v7128 = vsub.f32 %v7126, %v7127
    %v7129 = vand.u32 %v7128, 4294901760
    %7130 = vmatmul.mubr.f32.gmra.mrb[0].mxu0 %v7129
    %v7131 = vpop.f32.mrb[0].mxu0
    %v7132 = vadd.f32 %v7044, %v7131
    %v7133 = vpop.f32.mrb[0].mxu0
    %7134 = vmatprep.mubr.f32.mxu0 0.0
    %v7135 = vand.u32 %v7050, 4294901760
    %v7136 = vsub.f32 %v7050, %v7135
    %v7137 = vand.u32 %v7136, 4294901760
    %v7138 = vsub.f32 %v7136, %v7137
    %v7139 = vand.u32 %v7138, 4294901760
    %7140 = vmatmul.mubr.f32.gmra.mrb[0].mxu0 %v7139
    %v7141 = vpop.f32.mrb[0].mxu0
    %v7142 = vadd.f32 %v7044, %v7141
    %v7143 = vpop.f32.mrb[0].mxu0
    %7144 = vdwg.mxu0
    %7145 = vmatprep.subr.mxu0 0.0
    %v7146 = vand.u32 %v62, 4294901760
    %v7147 = vsub.f32 %v62, %v7146
    %v7148 = vand.u32 %v7147, 4294901760
    %v7149 = vsub.f32 %v7147, %v7148
    %v7150 = vand.u32 %v7149, 4294901760
    %7151 = vmatpush1.msra.mxu0 %v7150
    %7152 = vmatprep.subr.mxu0 0.0
    %v7153 = vand.u32 %v63, 4294901760
    %v7154 = vsub.f32 %v63, %v7153
    %v7155 = vand.u32 %v7154, 4294901760
    %v7156 = vsub.f32 %v7154, %v7155
    %v7157 = vand.u32 %v7156, 4294901760
    %7158 = vmatpush1.msra.mxu0 %v7157
    %7159 = vmatprep.subr.mxu0 0.0
    %v7160 = vand.u32 %v64, 4294901760
    %v7161 = vsub.f32 %v64, %v7160
    %v7162 = vand.u32 %v7161, 4294901760
    %v7163 = vsub.f32 %v7161, %v7162
    %v7164 = vand.u32 %v7163, 4294901760
    %7165 = vmatpush1.msra.mxu0 %v7164
    %7166 = vmatprep.subr.mxu0 0.0
    %v7167 = vand.u32 %v65, 4294901760
    %v7168 = vsub.f32 %v65, %v7167
    %v7169 = vand.u32 %v7168, 4294901760
    %v7170 = vsub.f32 %v7168, %v7169
    %v7171 = vand.u32 %v7170, 4294901760
    %7172 = vmatpush1.msra.mxu0 %v7171
    %7173 = vmatprep.subr.mxu0 0.0
    %v7174 = vand.u32 %v66, 4294901760
    %v7175 = vsub.f32 %v66, %v7174
    %v7176 = vand.u32 %v7175, 4294901760
    %v7177 = vsub.f32 %v7175, %v7176
    %v7178 = vand.u32 %v7177, 4294901760
    %7179 = vmatpush1.msra.mxu0 %v7178
    %7180 = vmatprep.subr.mxu0 0.0
    %v7181 = vand.u32 %v67, 4294901760
    %v7182 = vsub.f32 %v67, %v7181
    %v7183 = vand.u32 %v7182, 4294901760
    %v7184 = vsub.f32 %v7182, %v7183
    %v7185 = vand.u32 %v7184, 4294901760
    %7186 = vmatpush1.msra.mxu0 %v7185
    %7187 = vmatprep.subr.mxu0 0.0
    %v7188 = vand.u32 %v68, 4294901760
    %v7189 = vsub.f32 %v68, %v7188
    %v7190 = vand.u32 %v7189, 4294901760
    %v7191 = vsub.f32 %v7189, %v7190
    %v7192 = vand.u32 %v7191, 4294901760
    %7193 = vmatpush1.msra.mxu0 %v7192
    %7194 = vmatprep.subr.mxu0 0.0
    %v7195 = vand.u32 %v69, 4294901760
    %v7196 = vsub.f32 %v69, %v7195
    %v7197 = vand.u32 %v7196, 4294901760
    %v7198 = vsub.f32 %v7196, %v7197
    %v7199 = vand.u32 %v7198, 4294901760
    %7200 = vmatpush1.msra.mxu0 %v7199
    %7201 = vmatprep.subr.mxu0 0.0
    %7202 = vmatpush1.msra.mxu0 0.0
    %7203 = vmatprep.subr.mxu0 0.0
    %7204 = vmatpush1.msra.mxu0 0.0
    %7205 = vmatprep.subr.mxu0 0.0
    %7206 = vmatpush1.msra.mxu0 0.0
    %7207 = vmatprep.subr.mxu0 0.0
    %7208 = vmatpush1.msra.mxu0 0.0
    %7209 = vmatprep.subr.mxu0 0.0
    %7210 = vmatpush1.msra.mxu0 0.0
    %7211 = vmatprep.subr.mxu0 0.0
    %7212 = vmatpush1.msra.mxu0 0.0
    %7213 = vmatprep.subr.mxu0 0.0
    %7214 = vmatpush1.msra.mxu0 0.0
    %7215 = vmatprep.subr.mxu0 0.0
    %7216 = vmatpush1.msra.mxu0 0.0
    %7217 = vmatprep.subr.mxu0 0.0
    %7218 = vmatpush1.msra.mxu0 0.0
    %7219 = vmatprep.subr.mxu0 0.0
    %7220 = vmatpush1.msra.mxu0 0.0
    %7221 = vmatprep.subr.mxu0 0.0
    %7222 = vmatpush1.msra.mxu0 0.0
    %7223 = vmatprep.subr.mxu0 0.0
    %7224 = vmatpush1.msra.mxu0 0.0
    %7225 = vmatprep.subr.mxu0 0.0
    %7226 = vmatpush1.msra.mxu0 0.0
    %7227 = vmatprep.subr.mxu0 0.0
    %7228 = vmatpush1.msra.mxu0 0.0
    %7229 = vmatprep.subr.mxu0 0.0
    %7230 = vmatpush1.msra.mxu0 0.0
    %7231 = vmatprep.subr.mxu0 0.0
    %7232 = vmatpush1.msra.mxu0 0.0
    %7233 = vmatprep.subr.mxu0 0.0
    %7234 = vmatpush1.msra.mxu0 0.0
    %7235 = vmatprep.subr.mxu0 0.0
    %7236 = vmatpush1.msra.mxu0 0.0
    %7237 = vmatprep.subr.mxu0 0.0
    %7238 = vmatpush1.msra.mxu0 0.0
    %7239 = vmatprep.subr.mxu0 0.0
    %7240 = vmatpush1.msra.mxu0 0.0
    %7241 = vmatprep.subr.mxu0 0.0
    %7242 = vmatpush1.msra.mxu0 0.0
    %7243 = vmatprep.subr.mxu0 0.0
    %7244 = vmatpush1.msra.mxu0 0.0
    %7245 = vmatprep.subr.mxu0 0.0
    %7246 = vmatpush1.msra.mxu0 0.0
    %7247 = vmatprep.subr.mxu0 0.0
    %7248 = vmatpush1.msra.mxu0 0.0
    %7249 = vmatprep.mubr.f32.mxu0 0.0
    %v7250 = vand.u32 %v7047, 4294901760
    %7251 = vmatmul.mubr.f32.gmra.mrb[0].mxu0 %v7250
    %v7252 = vpop.f32.mrb[0].mxu0
    %v7253 = vadd.f32 %v7132, %v7252
    %v7254 = vpop.f32.mrb[0].mxu0
    %7255 = vmatprep.mubr.f32.mxu0 0.0
    %v7256 = vand.u32 %v7050, 4294901760
    %7257 = vmatmul.mubr.f32.gmra.mrb[0].mxu0 %v7256
    %v7258 = vpop.f32.mrb[0].mxu0
    %v7259 = vadd.f32 %v7142, %v7258
    %v7260 = vpop.f32.mrb[0].mxu0
    %7261 = vdwg.mxu0
    %7262 = vmatprep.subr.mxu0 0.0
    %v7263 = vand.u32 %v62, 4294901760
    %v7264 = vsub.f32 %v62, %v7263
    %7265 = vmatpush1.msra.mxu0 %v7264
    %7266 = vmatprep.subr.mxu0 0.0
    %v7267 = vand.u32 %v63, 4294901760
    %v7268 = vsub.f32 %v63, %v7267
    %7269 = vmatpush1.msra.mxu0 %v7268
    %7270 = vmatprep.subr.mxu0 0.0
    %v7271 = vand.u32 %v64, 4294901760
    %v7272 = vsub.f32 %v64, %v7271
    %7273 = vmatpush1.msra.mxu0 %v7272
    %7274 = vmatprep.subr.mxu0 0.0
    %v7275 = vand.u32 %v65, 4294901760
    %v7276 = vsub.f32 %v65, %v7275
    %7277 = vmatpush1.msra.mxu0 %v7276
    %7278 = vmatprep.subr.mxu0 0.0
    %v7279 = vand.u32 %v66, 4294901760
    %v7280 = vsub.f32 %v66, %v7279
    %7281 = vmatpush1.msra.mxu0 %v7280
    %7282 = vmatprep.subr.mxu0 0.0
    %v7283 = vand.u32 %v67, 4294901760
    %v7284 = vsub.f32 %v67, %v7283
    %7285 = vmatpush1.msra.mxu0 %v7284
    %7286 = vmatprep.subr.mxu0 0.0
    %v7287 = vand.u32 %v68, 4294901760
    %v7288 = vsub.f32 %v68, %v7287
    %7289 = vmatpush1.msra.mxu0 %v7288
    %7290 = vmatprep.subr.mxu0 0.0
    %v7291 = vand.u32 %v69, 4294901760
    %v7292 = vsub.f32 %v69, %v7291
    %7293 = vmatpush1.msra.mxu0 %v7292
    %7294 = vmatprep.subr.mxu0 0.0
    %7295 = vmatpush1.msra.mxu0 0.0
    %7296 = vmatprep.subr.mxu0 0.0
    %7297 = vmatpush1.msra.mxu0 0.0
    %7298 = vmatprep.subr.mxu0 0.0
    %7299 = vmatpush1.msra.mxu0 0.0
    %7300 = vmatprep.subr.mxu0 0.0
    %7301 = vmatpush1.msra.mxu0 0.0
    %7302 = vmatprep.subr.mxu0 0.0
    %7303 = vmatpush1.msra.mxu0 0.0
    %7304 = vmatprep.subr.mxu0 0.0
    %7305 = vmatpush1.msra.mxu0 0.0
    %7306 = vmatprep.subr.mxu0 0.0
    %7307 = vmatpush1.msra.mxu0 0.0
    %7308 = vmatprep.subr.mxu0 0.0
    %7309 = vmatpush1.msra.mxu0 0.0
    %7310 = vmatprep.subr.mxu0 0.0
    %7311 = vmatpush1.msra.mxu0 0.0
    %7312 = vmatprep.subr.mxu0 0.0
    %7313 = vmatpush1.msra.mxu0 0.0
    %7314 = vmatprep.subr.mxu0 0.0
    %7315 = vmatpush1.msra.mxu0 0.0
    %7316 = vmatprep.subr.mxu0 0.0
    %7317 = vmatpush1.msra.mxu0 0.0
    %7318 = vmatprep.subr.mxu0 0.0
    %7319 = vmatpush1.msra.mxu0 0.0
    %7320 = vmatprep.subr.mxu0 0.0
    %7321 = vmatpush1.msra.mxu0 0.0
    %7322 = vmatprep.subr.mxu0 0.0
    %7323 = vmatpush1.msra.mxu0 0.0
    %7324 = vmatprep.subr.mxu0 0.0
    %7325 = vmatpush1.msra.mxu0 0.0
    %7326 = vmatprep.subr.mxu0 0.0
    %7327 = vmatpush1.msra.mxu0 0.0
    %7328 = vmatprep.subr.mxu0 0.0
    %7329 = vmatpush1.msra.mxu0 0.0
    %7330 = vmatprep.subr.mxu0 0.0
    %7331 = vmatpush1.msra.mxu0 0.0
    %7332 = vmatprep.subr.mxu0 0.0
    %7333 = vmatpush1.msra.mxu0 0.0
    %7334 = vmatprep.subr.mxu0 0.0
    %7335 = vmatpush1.msra.mxu0 0.0
    %7336 = vmatprep.subr.mxu0 0.0
    %7337 = vmatpush1.msra.mxu0 0.0
    %7338 = vmatprep.subr.mxu0 0.0
    %7339 = vmatpush1.msra.mxu0 0.0
    %7340 = vmatprep.subr.mxu0 0.0
    %7341 = vmatpush1.msra.mxu0 0.0
    %7342 = vmatprep.mubr.f32.mxu0 0.0
    %v7343 = vand.u32 %v7047, 4294901760
    %v7344 = vsub.f32 %v7047, %v7343
    %7345 = vmatmul.mubr.f32.gmra.mrb[0].mxu0 %v7344
    %v7346 = vpop.f32.mrb[0].mxu0
    %v7347 = vadd.f32 %v7253, %v7346
    %v7348 = vpop.f32.mrb[0].mxu0
    %7349 = vmatprep.mubr.f32.mxu0 0.0
    %v7350 = vand.u32 %v7050, 4294901760
    %v7351 = vsub.f32 %v7050, %v7350
    %7352 = vmatmul.mubr.f32.gmra.mrb[0].mxu0 %v7351
    %v7353 = vpop.f32.mrb[0].mxu0
    %v7354 = vadd.f32 %v7259, %v7353
    %v7355 = vpop.f32.mrb[0].mxu0
    %7356 = vdwg.mxu0
    %7357 = vmatprep.subr.mxu0 0.0
    %v7358 = vand.u32 %v62, 4294901760
    %7359 = vmatpush1.msra.mxu0 %v7358
    %7360 = vmatprep.subr.mxu0 0.0
    %v7361 = vand.u32 %v63, 4294901760
    %7362 = vmatpush1.msra.mxu0 %v7361
    %7363 = vmatprep.subr.mxu0 0.0
    %v7364 = vand.u32 %v64, 4294901760
    %7365 = vmatpush1.msra.mxu0 %v7364
    %7366 = vmatprep.subr.mxu0 0.0
    %v7367 = vand.u32 %v65, 4294901760
    %7368 = vmatpush1.msra.mxu0 %v7367
    %7369 = vmatprep.subr.mxu0 0.0
    %v7370 = vand.u32 %v66, 4294901760
    %7371 = vmatpush1.msra.mxu0 %v7370
    %7372 = vmatprep.subr.mxu0 0.0
    %v7373 = vand.u32 %v67, 4294901760
    %7374 = vmatpush1.msra.mxu0 %v7373
    %7375 = vmatprep.subr.mxu0 0.0
    %v7376 = vand.u32 %v68, 4294901760
    %7377 = vmatpush1.msra.mxu0 %v7376
    %7378 = vmatprep.subr.mxu0 0.0
    %v7379 = vand.u32 %v69, 4294901760
    %7380 = vmatpush1.msra.mxu0 %v7379
    %7381 = vmatprep.subr.mxu0 0.0
    %7382 = vmatpush1.msra.mxu0 0.0
    %7383 = vmatprep.subr.mxu0 0.0
    %7384 = vmatpush1.msra.mxu0 0.0
    %7385 = vmatprep.subr.mxu0 0.0
    %7386 = vmatpush1.msra.mxu0 0.0
    %7387 = vmatprep.subr.mxu0 0.0
    %7388 = vmatpush1.msra.mxu0 0.0
    %7389 = vmatprep.subr.mxu0 0.0
    %7390 = vmatpush1.msra.mxu0 0.0
    %7391 = vmatprep.subr.mxu0 0.0
    %7392 = vmatpush1.msra.mxu0 0.0
    %7393 = vmatprep.subr.mxu0 0.0
    %7394 = vmatpush1.msra.mxu0 0.0
    %7395 = vmatprep.subr.mxu0 0.0
    %7396 = vmatpush1.msra.mxu0 0.0
    %7397 = vmatprep.subr.mxu0 0.0
    %7398 = vmatpush1.msra.mxu0 0.0
    %7399 = vmatprep.subr.mxu0 0.0
    %7400 = vmatpush1.msra.mxu0 0.0
    %7401 = vmatprep.subr.mxu0 0.0
    %7402 = vmatpush1.msra.mxu0 0.0
    %7403 = vmatprep.subr.mxu0 0.0
    %7404 = vmatpush1.msra.mxu0 0.0
    %7405 = vmatprep.subr.mxu0 0.0
    %7406 = vmatpush1.msra.mxu0 0.0
    %7407 = vmatprep.subr.mxu0 0.0
    %7408 = vmatpush1.msra.mxu0 0.0
    %7409 = vmatprep.subr.mxu0 0.0
    %7410 = vmatpush1.msra.mxu0 0.0
    %7411 = vmatprep.subr.mxu0 0.0
    %7412 = vmatpush1.msra.mxu0 0.0
    %7413 = vmatprep.subr.mxu0 0.0
    %7414 = vmatpush1.msra.mxu0 0.0
    %7415 = vmatprep.subr.mxu0 0.0
    %7416 = vmatpush1.msra.mxu0 0.0
    %7417 = vmatprep.subr.mxu0 0.0
    %7418 = vmatpush1.msra.mxu0 0.0
    %7419 = vmatprep.subr.mxu0 0.0
    %7420 = vmatpush1.msra.mxu0 0.0
    %7421 = vmatprep.subr.mxu0 0.0
    %7422 = vmatpush1.msra.mxu0 0.0
    %7423 = vmatprep.subr.mxu0 0.0
    %7424 = vmatpush1.msra.mxu0 0.0
    %7425 = vmatprep.subr.mxu0 0.0
    %7426 = vmatpush1.msra.mxu0 0.0
    %7427 = vmatprep.subr.mxu0 0.0
    %7428 = vmatpush1.msra.mxu0 0.0
    %7429 = vmatprep.mubr.f32.mxu0 0.0
    %v7430 = vand.u32 %v7047, 4294901760
    %v7431 = vsub.f32 %v7047, %v7430
    %v7432 = vand.u32 %v7431, 4294901760
    %7433 = vmatmul.mubr.f32.gmra.mrb[0].mxu0 %v7432
    %v7434 = vpop.f32.mrb[0].mxu0
    %v7435 = vadd.f32 %v7347, %v7434
    %v7436 = vpop.f32.mrb[0].mxu0
    %7437 = vmatprep.mubr.f32.mxu0 0.0
    %v7438 = vand.u32 %v7050, 4294901760
    %v7439 = vsub.f32 %v7050, %v7438
    %v7440 = vand.u32 %v7439, 4294901760
    %7441 = vmatmul.mubr.f32.gmra.mrb[0].mxu0 %v7440
    %v7442 = vpop.f32.mrb[0].mxu0
    %v7443 = vadd.f32 %v7354, %v7442
    %v7444 = vpop.f32.mrb[0].mxu0
    %7445 = vdwg.mxu0
    %7446 = vmatprep.subr.mxu0 0.0
    %v7447 = vand.u32 %v62, 4294901760
    %v7448 = vsub.f32 %v62, %v7447
    %v7449 = vand.u32 %v7448, 4294901760
    %7450 = vmatpush1.msra.mxu0 %v7449
    %7451 = vmatprep.subr.mxu0 0.0
    %v7452 = vand.u32 %v63, 4294901760
    %v7453 = vsub.f32 %v63, %v7452
    %v7454 = vand.u32 %v7453, 4294901760
    %7455 = vmatpush1.msra.mxu0 %v7454
    %7456 = vmatprep.subr.mxu0 0.0
    %v7457 = vand.u32 %v64, 4294901760
    %v7458 = vsub.f32 %v64, %v7457
    %v7459 = vand.u32 %v7458, 4294901760
    %7460 = vmatpush1.msra.mxu0 %v7459
    %7461 = vmatprep.subr.mxu0 0.0
    %v7462 = vand.u32 %v65, 4294901760
    %v7463 = vsub.f32 %v65, %v7462
    %v7464 = vand.u32 %v7463, 4294901760
    %7465 = vmatpush1.msra.mxu0 %v7464
    %7466 = vmatprep.subr.mxu0 0.0
    %v7467 = vand.u32 %v66, 4294901760
    %v7468 = vsub.f32 %v66, %v7467
    %v7469 = vand.u32 %v7468, 4294901760
    %7470 = vmatpush1.msra.mxu0 %v7469
    %7471 = vmatprep.subr.mxu0 0.0
    %v7472 = vand.u32 %v67, 4294901760
    %v7473 = vsub.f32 %v67, %v7472
    %v7474 = vand.u32 %v7473, 4294901760
    %7475 = vmatpush1.msra.mxu0 %v7474
    %7476 = vmatprep.subr.mxu0 0.0
    %v7477 = vand.u32 %v68, 4294901760
    %v7478 = vsub.f32 %v68, %v7477
    %v7479 = vand.u32 %v7478, 4294901760
    %7480 = vmatpush1.msra.mxu0 %v7479
    %7481 = vmatprep.subr.mxu0 0.0
    %v7482 = vand.u32 %v69, 4294901760
    %v7483 = vsub.f32 %v69, %v7482
    %v7484 = vand.u32 %v7483, 4294901760
    %7485 = vmatpush1.msra.mxu0 %v7484
    %7486 = vmatprep.subr.mxu0 0.0
    %7487 = vmatpush1.msra.mxu0 0.0
    %7488 = vmatprep.subr.mxu0 0.0
    %7489 = vmatpush1.msra.mxu0 0.0
    %7490 = vmatprep.subr.mxu0 0.0
    %7491 = vmatpush1.msra.mxu0 0.0
    %7492 = vmatprep.subr.mxu0 0.0
    %7493 = vmatpush1.msra.mxu0 0.0
    %7494 = vmatprep.subr.mxu0 0.0
    %7495 = vmatpush1.msra.mxu0 0.0
    %7496 = vmatprep.subr.mxu0 0.0
    %7497 = vmatpush1.msra.mxu0 0.0
    %7498 = vmatprep.subr.mxu0 0.0
    %7499 = vmatpush1.msra.mxu0 0.0
    %7500 = vmatprep.subr.mxu0 0.0
    %7501 = vmatpush1.msra.mxu0 0.0
    %7502 = vmatprep.subr.mxu0 0.0
    %7503 = vmatpush1.msra.mxu0 0.0
    %7504 = vmatprep.subr.mxu0 0.0
    %7505 = vmatpush1.msra.mxu0 0.0
    %7506 = vmatprep.subr.mxu0 0.0
    %7507 = vmatpush1.msra.mxu0 0.0
    %7508 = vmatprep.subr.mxu0 0.0
    %7509 = vmatpush1.msra.mxu0 0.0
    %7510 = vmatprep.subr.mxu0 0.0
    %7511 = vmatpush1.msra.mxu0 0.0
    %7512 = vmatprep.subr.mxu0 0.0
    %7513 = vmatpush1.msra.mxu0 0.0
    %7514 = vmatprep.subr.mxu0 0.0
    %7515 = vmatpush1.msra.mxu0 0.0
    %7516 = vmatprep.subr.mxu0 0.0
    %7517 = vmatpush1.msra.mxu0 0.0
    %7518 = vmatprep.subr.mxu0 0.0
    %7519 = vmatpush1.msra.mxu0 0.0
    %7520 = vmatprep.subr.mxu0 0.0
    %7521 = vmatpush1.msra.mxu0 0.0
    %7522 = vmatprep.subr.mxu0 0.0
    %7523 = vmatpush1.msra.mxu0 0.0
    %7524 = vmatprep.subr.mxu0 0.0
    %7525 = vmatpush1.msra.mxu0 0.0
    %7526 = vmatprep.subr.mxu0 0.0
    %7527 = vmatpush1.msra.mxu0 0.0
    %7528 = vmatprep.subr.mxu0 0.0
    %7529 = vmatpush1.msra.mxu0 0.0
    %7530 = vmatprep.subr.mxu0 0.0
    %7531 = vmatpush1.msra.mxu0 0.0
    %7532 = vmatprep.subr.mxu0 0.0
    %7533 = vmatpush1.msra.mxu0 0.0
    %7534 = vmatprep.mubr.f32.mxu0 0.0
    %v7535 = vand.u32 %v7047, 4294901760
    %7536 = vmatmul.mubr.f32.gmra.mrb[0].mxu0 %v7535
    %v7537 = vpop.f32.mrb[0].mxu0
    %v7538 = vadd.f32 %v7435, %v7537
    %v7539 = vpop.f32.mrb[0].mxu0
    %7540 = vmatprep.mubr.f32.mxu0 0.0
    %v7541 = vand.u32 %v7050, 4294901760
    %7542 = vmatmul.mubr.f32.gmra.mrb[0].mxu0 %v7541
    %v7543 = vpop.f32.mrb[0].mxu0
    %v7544 = vadd.f32 %v7443, %v7543
    %v7545 = vpop.f32.mrb[0].mxu0
    %7546 = vdwg.mxu0
    %7547 = vmatprep.subr.mxu0 0.0
    %v7548 = vand.u32 %v62, 4294901760
    %7549 = vmatpush1.msra.mxu0 %v7548
    %7550 = vmatprep.subr.mxu0 0.0
    %v7551 = vand.u32 %v63, 4294901760
    %7552 = vmatpush1.msra.mxu0 %v7551
    %7553 = vmatprep.subr.mxu0 0.0
    %v7554 = vand.u32 %v64, 4294901760
    %7555 = vmatpush1.msra.mxu0 %v7554
    %7556 = vmatprep.subr.mxu0 0.0
    %v7557 = vand.u32 %v65, 4294901760
    %7558 = vmatpush1.msra.mxu0 %v7557
    %7559 = vmatprep.subr.mxu0 0.0
    %v7560 = vand.u32 %v66, 4294901760
    %7561 = vmatpush1.msra.mxu0 %v7560
    %7562 = vmatprep.subr.mxu0 0.0
    %v7563 = vand.u32 %v67, 4294901760
    %7564 = vmatpush1.msra.mxu0 %v7563
    %7565 = vmatprep.subr.mxu0 0.0
    %v7566 = vand.u32 %v68, 4294901760
    %7567 = vmatpush1.msra.mxu0 %v7566
    %7568 = vmatprep.subr.mxu0 0.0
    %v7569 = vand.u32 %v69, 4294901760
    %7570 = vmatpush1.msra.mxu0 %v7569
    %7571 = vmatprep.subr.mxu0 0.0
    %7572 = vmatpush1.msra.mxu0 0.0
    %7573 = vmatprep.subr.mxu0 0.0
    %7574 = vmatpush1.msra.mxu0 0.0
    %7575 = vmatprep.subr.mxu0 0.0
    %7576 = vmatpush1.msra.mxu0 0.0
    %7577 = vmatprep.subr.mxu0 0.0
    %7578 = vmatpush1.msra.mxu0 0.0
    %7579 = vmatprep.subr.mxu0 0.0
    %7580 = vmatpush1.msra.mxu0 0.0
    %7581 = vmatprep.subr.mxu0 0.0
    %7582 = vmatpush1.msra.mxu0 0.0
    %7583 = vmatprep.subr.mxu0 0.0
    %7584 = vmatpush1.msra.mxu0 0.0
    %7585 = vmatprep.subr.mxu0 0.0
    %7586 = vmatpush1.msra.mxu0 0.0
    %7587 = vmatprep.subr.mxu0 0.0
    %7588 = vmatpush1.msra.mxu0 0.0
    %7589 = vmatprep.subr.mxu0 0.0
    %7590 = vmatpush1.msra.mxu0 0.0
    %7591 = vmatprep.subr.mxu0 0.0
    %7592 = vmatpush1.msra.mxu0 0.0
    %7593 = vmatprep.subr.mxu0 0.0
    %7594 = vmatpush1.msra.mxu0 0.0
    %7595 = vmatprep.subr.mxu0 0.0
    %7596 = vmatpush1.msra.mxu0 0.0
    %7597 = vmatprep.subr.mxu0 0.0
    %7598 = vmatpush1.msra.mxu0 0.0
    %7599 = vmatprep.subr.mxu0 0.0
    %7600 = vmatpush1.msra.mxu0 0.0
    %7601 = vmatprep.subr.mxu0 0.0
    %7602 = vmatpush1.msra.mxu0 0.0
    %7603 = vmatprep.subr.mxu0 0.0
    %7604 = vmatpush1.msra.mxu0 0.0
    %7605 = vmatprep.subr.mxu0 0.0
    %7606 = vmatpush1.msra.mxu0 0.0
    %7607 = vmatprep.subr.mxu0 0.0
    %7608 = vmatpush1.msra.mxu0 0.0
    %7609 = vmatprep.subr.mxu0 0.0
    %7610 = vmatpush1.msra.mxu0 0.0
    %7611 = vmatprep.subr.mxu0 0.0
    %7612 = vmatpush1.msra.mxu0 0.0
    %7613 = vmatprep.subr.mxu0 0.0
    %7614 = vmatpush1.msra.mxu0 0.0
    %7615 = vmatprep.subr.mxu0 0.0
    %7616 = vmatpush1.msra.mxu0 0.0
    %7617 = vmatprep.subr.mxu0 0.0
    %7618 = vmatpush1.msra.mxu0 0.0
    %7619 = vmatprep.mubr.f32.mxu0 0.0
    %v7620 = vand.u32 %v7047, 4294901760
    %7621 = vmatmul.mubr.f32.gmra.mrb[0].mxu0 %v7620
    %v7622 = vpop.f32.mrb[0].mxu0
    %v7623 = vadd.f32 %v7538, %v7622
    %v7624 = vpop.f32.mrb[0].mxu0
    %7625 = vmatprep.mubr.f32.mxu0 0.0
    %v7626 = vand.u32 %v7050, 4294901760
    %7627 = vmatmul.mubr.f32.gmra.mrb[0].mxu0 %v7626
    %v7628 = vpop.f32.mrb[0].mxu0
    %v7629 = vadd.f32 %v7544, %v7628
    %v7630 = vpop.f32.mrb[0].mxu0
    %7631 = vdwg.mxu0
    %v7632 = vadd.f32 %v6461, %v7623
    %v7633 = vadd.f32 %v6462, %v7629
    %7634 = vst.msk [vmem:[#allocation7] sm:$0xff] %vm82, %v7632
    %7635 = vst.msk [vmem:[#allocation7 + $0x8] sm:$0xff] %vm82, %v7633
    // Predicated region
    $region18: #{tpu_custom_call.1} parent=1 // pred_check
      _
    $region19: #{tpu_custom_call.1} parent=1 // pred_check_branch
      %7637 = sbr.rel (0) target = $region21
    $region20: #{tpu_custom_call.1} parent=1 // pred_region
      %s7639 = ssub.s32 256, 256
      %7640 = vsyncadd [#allocation4], %s7639
      %s7641 = sshll.u32 [#allocation7], 4
      %s7642 = int_to_ptr.vmem [resolvable:$true] %s7641
      %7647 = dma.vmem_to_hbm [thread:$0]  %s7642, 256, %s2, [#allocation4], 128, 128, 8
    $region21: #{tpu_custom_call.1} parent=1 // pred_fallthru
      _
    // Predicated region
    $region22: #{tpu_custom_call.1} parent=1 // pred_check
      _
    $region23: #{tpu_custom_call.1} parent=1 // pred_check_branch
      %7649 = sbr.rel (0) target = $region25
    $region24: #{tpu_custom_call.1} parent=1 // pred_region
      %7650 = dma.done [#allocation4], 256
    $region25: #{tpu_custom_call.1} parent=1 // pred_fallthru
      _
    %7651 = vsyncpa [#allocation3], 1
    %7652 = vsyncpa [#allocation6], 1
    %7653 = vsyncpa [#allocation4], 1

</llo_original>
